<compile_context>
chip_gen: v5e
topology: v5e:2x2
jax: 0.10.0
libtpu: 0.0.40
codegen_flags: <defaults>
</compile_context>

<pallas_src>
import functools

import jax
import jax.numpy as jnp
from jax import lax
from jax.experimental import pallas as pl
from jax.experimental.pallas import tpu as pltpu


# --------------------------------------------------------------------------
# Shared trace-time helpers (wrapper weight slicing == kernel compute path)
# --------------------------------------------------------------------------
def _active_taps(H, W, dil):
    """Taps of the dilated 3x3 whose window intersects the unpadded input.

    Returns a tuple of (ky, kx, dy, dx, r0, r1, c0, c1): for tap (ky,kx) with
    spatial offset (dy,dx), output rows [r0,r1) / cols [c0,c1) read real data;
    everything else reads the zero halo and is skipped entirely.
    """
    taps = []
    for ky in range(3):
        for kx in range(3):
            dy = (ky - 1) * dil
            dx = (kx - 1) * dil
            r0, r1 = max(0, -dy), min(H, H - dy)
            c0, c1 = max(0, -dx), min(W, W - dx)
            if r0 < r1 and c0 < c1:
                taps.append((ky, kx, dy, dx, r0, r1, c0, c1))
    return tuple(taps)


def _single_full_tap(taps, H, W):
    """True iff exactly one tap is live and it covers the whole HxW output."""
    return len(taps) == 1 and taps[0][4:] == (0, H, 0, W)


# --------------------------------------------------------------------------
# Fused kernel: dilated 3x3 + ReLU -> 1x1 + ReLU -> 1x1 (interior only)
# --------------------------------------------------------------------------
def fused_classifier_kernel(x_ref, w1_ref, b1_ref, w2_ref, b2_ref,
                            w3_ref, b3_ref, o_ref, *scratch, taps, H, W):
    # x_ref:  (N, H, W, Cin)        bf16, unpadded, whole batch in one block
    # w1_ref: (n_taps, Cin, Cmid)   bf16 -- only the live 3x3 taps
    # b1_ref: (1, Cmid)             f32
    # w2_ref: (Cmid, Cmid)          bf16
    # b2_ref: (1, Cmid)             f32
    # w3_ref: (Cmid, Cpad)          bf16 (out channels zero-padded to 128 lanes)
    # b3_ref: (1, Cpad)             f32
    # o_ref:  (N, H, W, Cpad)       f32 -- interior of the final output only
    # scratch: optional (N, H, W, Cmid) f32 accumulator (general-tap path only)
    N = x_ref.shape[0]
    cin = x_ref.shape[-1]
    cmid = w1_ref.shape[-1]
    cpad = o_ref.shape[-1]
    M = N * H * W

    # ---- conv1: 3x3, dilation=dil, padding=dil, + ReLU (SAME spatial) ------
    if _single_full_tap(taps, H, W):
        # Only the centre tap touches real data (H, W < dilation): conv1 is a
        # single (N*H*W, Cin) @ (Cin, Cmid) matmul.
        y1 = jnp.dot(x_ref[...].reshape(M, cin), w1_ref[0],
                     preferred_element_type=jnp.float32)
    else:
        # General path: accumulate live taps into a VMEM scratch ref with
        # in-place slice adds (no functional .at[].add value copies).
        acc_ref = scratch[0]
        acc_ref[...] = jnp.zeros_like(acc_ref)
        for t, (ky, kx, dy, dx, r0, r1, c0, c1) in enumerate(taps):
            rh, rw = r1 - r0, c1 - c0
            patch = x_ref[:, r0 + dy:r1 + dy, c0 + dx:c1 + dx, :]
            contrib = jnp.dot(patch.reshape(N * rh * rw, cin), w1_ref[t],
                              preferred_element_type=jnp.float32)
            acc_ref[:, r0:r1, c0:c1, :] += contrib.reshape(N, rh, rw, cmid)
        y1 = acc_ref[...].reshape(M, cmid)

    y1 = jnp.maximum(y1 + b1_ref[...], 0.0)
    # TODO(synk): nn.Dropout2d(0.5) is identity in eval mode; training-mode
    # random channel dropout is not implemented here.

    # ---- conv2: 1x1 + ReLU. Only the HxW interior depends on data; the
    # pad=1 border (= relu(b2)) is handled in the wrapper. -------------------
    y2 = jnp.dot(y1.astype(jnp.bfloat16), w2_ref[...],
                 preferred_element_type=jnp.float32)
    y2 = jnp.maximum(y2 + b2_ref[...], 0.0)

    # ---- conv3: 1x1 -> num_classes (padded to cpad lanes) ------------------
    y3 = jnp.dot(y2.astype(jnp.bfloat16), w3_ref[...],
                 preferred_element_type=jnp.float32)
    y3 = y3 + b3_ref[...]
    o_ref[...] = y3.reshape(N, H, W, cpad).astype(o_ref.dtype)


# --------------------------------------------------------------------------
# Wrapper (NCHW in / NCHW out, like the PyTorch module)
# --------------------------------------------------------------------------
def classifier_forward(x_nchw, params):
    w1, b1, w2, b2, w3, b3 = params
    N, Cin, H, W = x_nchw.shape
    assert w1.shape[:3] == (3, 3, Cin)
    Cmid = w1.shape[-1]
    num_classes = w3.shape[-1]
    dil = 12
    Cpad = ((num_classes + 127) // 128) * 128  # lane-dense output channels

    # Live taps of the dilated 3x3 -- used for BOTH the weight slice and the
    # in-kernel compute so the two predicates can never drift apart.
    taps = _active_taps(H, W, dil)
    n_taps = len(taps)

    # NHWC activations in bf16 (MXU operand dtype); f32 accumulation in-kernel.
    x = jnp.transpose(x_nchw, (0, 2, 3, 1)).astype(jnp.bfloat16)

    # Ship only the live taps of w1 (centre tap only when H,W < dil).
    w1a = jnp.stack([w1[ky, kx] for (ky, kx, *_r) in taps], axis=0)
    w1a = w1a.astype(jnp.bfloat16)                        # (n_taps, Cin, Cmid)
    w2b = w2.astype(jnp.bfloat16)
    w3p = jnp.zeros((Cmid, Cpad), jnp.bfloat16)
    w3p = w3p.at[:, :num_classes].set(w3.astype(jnp.bfloat16))
    b1r = b1.reshape(1, Cmid).astype(jnp.float32)
    b2r = b2.reshape(1, Cmid).astype(jnp.float32)
    b3p = jnp.zeros((1, Cpad), jnp.float32).at[0, :num_classes].set(b3)

    # Scratch accumulator only needed on the general multi-tap path.
    scratch_shapes = ([] if _single_full_tap(taps, H, W)
                      else [pltpu.VMEM((N, H, W, Cmid), jnp.float32)])

    # Single grid step: the whole batch is folded into the matmul M dimension
    # (M = N*H*W), so weights are DMA'd exactly once (no megacore duplication
    # of the weight fetch on v7x, no serial grid loop on v5e/v6e).
    y_int = pl.pallas_call(
        functools.partial(fused_classifier_kernel, taps=taps, H=H, W=W),
        out_shape=jax.ShapeDtypeStruct((N, H, W, Cpad), jnp.float32),
        grid_spec=pltpu.PrefetchScalarGridSpec(
            num_scalar_prefetch=0,
            grid=(1,),
            in_specs=[
                pl.BlockSpec((N, H, W, Cin), lambda i: (0, 0, 0, 0)),
                pl.BlockSpec((n_taps, Cin, Cmid), lambda i: (0, 0, 0)),
                pl.BlockSpec((1, Cmid), lambda i: (0, 0)),
                pl.BlockSpec((Cmid, Cmid), lambda i: (0, 0)),
                pl.BlockSpec((1, Cmid), lambda i: (0, 0)),
                pl.BlockSpec((Cmid, Cpad), lambda i: (0, 0)),
                pl.BlockSpec((1, Cpad), lambda i: (0, 0)),
            ],
            out_specs=pl.BlockSpec((N, H, W, Cpad), lambda i: (0, 0, 0, 0)),
            scratch_shapes=scratch_shapes,
        ),
        compiler_params=pltpu.CompilerParams(
            dimension_semantics=("arbitrary",),
            vmem_limit_bytes=16 * 1024 * 1024),   # ~9 MiB live; fits v7x 64 MiB
    )(x, w1a, b1r, w2b, b2r, w3p, b3p)

    # Data-independent 1-pixel border of the final output
    # (conv2 pad=1 border = relu(b2); conv3 -> relu(b2) @ w3 + b3).
    border = jnp.dot(jnp.maximum(b2, 0.0), w3) + b3             # (num_classes,)
    out = jnp.broadcast_to(border[None, None, None, :],
                           (N, H + 2, W + 2, num_classes))
    out = out.at[:, 1:H + 1, 1:W + 1, :].set(y_int[..., :num_classes])
    return jnp.transpose(out, (0, 3, 1, 2))  # back to NCHW


# --------------------------------------------------------------------------
# Pure-JAX reference (eval-mode semantics of the PyTorch module, f32)
# --------------------------------------------------------------------------
def ref_forward(x, params):
    w1, b1, w2, b2, w3, b3 = params
    dn = ('NCHW', 'HWIO', 'NCHW')
    hp = lax.Precision.HIGHEST
    y = lax.conv_general_dilated(x, w1, (1, 1), ((12, 12), (12, 12)),
                                 rhs_dilation=(12, 12),
                                 dimension_numbers=dn, precision=hp)
    y = jnp.maximum(y + b1[None, :, None, None], 0.0)
    y = lax.conv_general_dilated(y, w2.reshape(1, 1, *w2.shape), (1, 1),
                                 ((1, 1), (1, 1)),
                                 dimension_numbers=dn, precision=hp)
    y = jnp.maximum(y + b2[None, :, None, None], 0.0)
    y = lax.conv_general_dilated(y, w3.reshape(1, 1, *w3.shape), (1, 1),
                                 ((0, 0), (0, 0)),
                                 dimension_numbers=dn, precision=hp)
    return y + b3[None, :, None, None]


if __name__ == "__main__":
    num_classes = 21
    N, Cin, H, W = 2, 512, 8, 8          # module fixes Cin=512; small spatial
    Cmid = 1024

    key = jax.random.PRNGKey(0)
    ks = jax.random.split(key, 7)
    w1 = jax.random.normal(ks[0], (3, 3, Cin, Cmid), jnp.float32) / (9 * Cin) ** 0.5
    b1 = jax.random.normal(ks[1], (Cmid,), jnp.float32) * 0.01
    w2 = jax.random.normal(ks[2], (Cmid, Cmid), jnp.float32) / Cmid ** 0.5
    b2 = jax.random.normal(ks[3], (Cmid,), jnp.float32) * 0.01
    w3 = jax.random.normal(ks[4], (Cmid, num_classes), jnp.float32) / Cmid ** 0.5
    b3 = jax.random.normal(ks[5], (num_classes,), jnp.float32) * 0.01
    x = jax.random.normal(ks[6], (N, Cin, H, W), jnp.float32)
    params = (w1, b1, w2, b2, w3, b3)

    out = jax.jit(classifier_forward)(x, params)
    out = jax.block_until_ready(out)

    assert out.shape == (N, num_classes, H + 2, W + 2), out.shape
    ref = ref_forward(x, params)
    err = float(jnp.max(jnp.abs(out - ref)))
    # bf16 MXU operands with f32 accumulation -> allow bf16-level tolerance.
    assert err < 3e-2, f"max abs error {err}"
    print("KERNEL_OK")
</pallas_src>

<mosaic_0001>
module attributes {stable_mosaic.version = 11 : i64} {
  func.func @fused_classifier_kernel(%arg0: i32, %arg1: memref<2x8x8x512xbf16, #tpu.memory_space<vmem>>, %arg2: memref<1x512x1024xbf16, #tpu.memory_space<vmem>>, %arg3: memref<1x1024xf32, #tpu.memory_space<vmem>>, %arg4: memref<1024x1024xbf16, #tpu.memory_space<vmem>>, %arg5: memref<1x1024xf32, #tpu.memory_space<vmem>>, %arg6: memref<1024x128xbf16, #tpu.memory_space<vmem>>, %arg7: memref<1x128xf32, #tpu.memory_space<vmem>>, %arg8: memref<2x8x8x128xf32, #tpu.memory_space<vmem>>) attributes {dimension_semantics = [#tpu.dimension_semantics<arbitrary>], iteration_bounds = array<i64: 1>, scalar_prefetch = 0 : i64, scratch_operands = 0 : i64, tpu.core_type = #tpu.core_type<tc>, window_params = [{pipeline_mode = #tpu.pipeline_mode<synchronous>, transform_indices = @transform_0, window_bounds = array<i64: 2, 8, 8, 512>}, {pipeline_mode = #tpu.pipeline_mode<synchronous>, transform_indices = @transform_1, window_bounds = array<i64: 1, 512, 1024>}, {pipeline_mode = #tpu.pipeline_mode<synchronous>, transform_indices = @transform_2, window_bounds = array<i64: 1, 1024>}, {pipeline_mode = #tpu.pipeline_mode<synchronous>, transform_indices = @transform_3, window_bounds = array<i64: 1024, 1024>}, {pipeline_mode = #tpu.pipeline_mode<synchronous>, transform_indices = @transform_4, window_bounds = array<i64: 1, 1024>}, {pipeline_mode = #tpu.pipeline_mode<synchronous>, transform_indices = @transform_5, window_bounds = array<i64: 1024, 128>}, {pipeline_mode = #tpu.pipeline_mode<synchronous>, transform_indices = @transform_6, window_bounds = array<i64: 1, 128>}, {pipeline_mode = #tpu.pipeline_mode<synchronous>, transform_indices = @transform_7, window_bounds = array<i64: 2, 8, 8, 128>}]} {
    %c0 = arith.constant 0 : index
    %c0_0 = arith.constant 0 : index
    %c0_1 = arith.constant 0 : index
    %c0_2 = arith.constant 0 : index
    %0 = vector.load %arg1[%c0, %c0_0, %c0_1, %c0_2] : memref<2x8x8x512xbf16, #tpu.memory_space<vmem>>, vector<2x8x8x512xbf16>
    %1 = vector.shape_cast %0 : vector<2x8x8x512xbf16> to vector<128x512xbf16>
    %c0_3 = arith.constant 0 : index
    %c0_4 = arith.constant 0 : index
    %c0_5 = arith.constant 0 : index
    %2 = vector.load %arg2[%c0_3, %c0_4, %c0_5] : memref<1x512x1024xbf16, #tpu.memory_space<vmem>>, vector<1x512x1024xbf16>
    %3 = vector.shape_cast %2 : vector<1x512x1024xbf16> to vector<512x1024xbf16>
    %cst = arith.constant dense<0.000000e+00> : vector<128x1024xf32>
    %4 = tpu.matmul %1, %3, %cst {dimension_numbers = #tpu.dot_dimension_numbers<[1], [0], [0], [1], [0, 0, 1, 1], [], []>} : vector<128x512xbf16>, vector<512x1024xbf16>, vector<128x1024xf32> -> vector<128x1024xf32>
    %c0_6 = arith.constant 0 : index
    %c0_7 = arith.constant 0 : index
    %5 = vector.load %arg3[%c0_6, %c0_7] : memref<1x1024xf32, #tpu.memory_space<vmem>>, vector<1x1024xf32>
    %6 = vector.broadcast %5 : vector<1x1024xf32> to vector<128x1024xf32>
    %7 = arith.addf %4, %6 : vector<128x1024xf32>
    %cst_8 = arith.constant 0.000000e+00 : f32
    %8 = vector.broadcast %cst_8 : f32 to vector<128x1024xf32>
    %9 = arith.maximumf %7, %8 : vector<128x1024xf32>
    %10 = arith.truncf %9 : vector<128x1024xf32> to vector<128x1024xbf16>
    %c0_9 = arith.constant 0 : index
    %c0_10 = arith.constant 0 : index
    %11 = vector.load %arg4[%c0_9, %c0_10] : memref<1024x1024xbf16, #tpu.memory_space<vmem>>, vector<1024x1024xbf16>
    %cst_11 = arith.constant dense<0.000000e+00> : vector<128x1024xf32>
    %12 = tpu.matmul %10, %11, %cst_11 {dimension_numbers = #tpu.dot_dimension_numbers<[1], [0], [0], [1], [0, 0, 1, 1], [], []>} : vector<128x1024xbf16>, vector<1024x1024xbf16>, vector<128x1024xf32> -> vector<128x1024xf32>
    %c0_12 = arith.constant 0 : index
    %c0_13 = arith.constant 0 : index
    %13 = vector.load %arg5[%c0_12, %c0_13] : memref<1x1024xf32, #tpu.memory_space<vmem>>, vector<1x1024xf32>
    %14 = vector.broadcast %13 : vector<1x1024xf32> to vector<128x1024xf32>
    %15 = arith.addf %12, %14 : vector<128x1024xf32>
    %cst_14 = arith.constant 0.000000e+00 : f32
    %16 = vector.broadcast %cst_14 : f32 to vector<128x1024xf32>
    %17 = arith.maximumf %15, %16 : vector<128x1024xf32>
    %18 = arith.truncf %17 : vector<128x1024xf32> to vector<128x1024xbf16>
    %c0_15 = arith.constant 0 : index
    %c0_16 = arith.constant 0 : index
    %19 = vector.load %arg6[%c0_15, %c0_16] : memref<1024x128xbf16, #tpu.memory_space<vmem>>, vector<1024x128xbf16>
    %cst_17 = arith.constant dense<0.000000e+00> : vector<128x128xf32>
    %20 = tpu.matmul %18, %19, %cst_17 {dimension_numbers = #tpu.dot_dimension_numbers<[1], [0], [0], [1], [0, 0, 1, 1], [], []>} : vector<128x1024xbf16>, vector<1024x128xbf16>, vector<128x128xf32> -> vector<128x128xf32>
    %c0_18 = arith.constant 0 : index
    %c0_19 = arith.constant 0 : index
    %21 = vector.load %arg7[%c0_18, %c0_19] : memref<1x128xf32, #tpu.memory_space<vmem>>, vector<1x128xf32>
    %22 = vector.broadcast %21 : vector<1x128xf32> to vector<128x128xf32>
    %23 = arith.addf %20, %22 : vector<128x128xf32>
    %24 = vector.shape_cast %23 : vector<128x128xf32> to vector<2x8x8x128xf32>
    %c0_20 = arith.constant 0 : index
    %c0_21 = arith.constant 0 : index
    %c0_22 = arith.constant 0 : index
    %c0_23 = arith.constant 0 : index
    %25 = vector.load %arg8[%c0_20, %c0_21, %c0_22, %c0_23] : memref<2x8x8x128xf32, #tpu.memory_space<vmem>>, vector<2x8x8x128xf32>
    tpu.vector_store %arg8[%c0_20, %c0_21, %c0_22, %c0_23], %24 {strides = array<i32>} : memref<2x8x8x128xf32, #tpu.memory_space<vmem>>, vector<2x8x8x128xf32>,
    return
  }
  func.func @transform_0(%arg0: i32) -> (i32, i32, i32, i32) {
    %c0_i32 = arith.constant 0 : i32
    %c0_i32_0 = arith.constant 0 : i32
    %c0_i32_1 = arith.constant 0 : i32
    %c0_i32_2 = arith.constant 0 : i32
    %c0_i32_3 = arith.constant 0 : i32
    return %c0_i32, %c0_i32_0, %c0_i32_1, %c0_i32_2 : i32, i32, i32, i32
  }
  func.func @transform_1(%arg0: i32) -> (i32, i32, i32) {
    %c0_i32 = arith.constant 0 : i32
    %c0_i32_0 = arith.constant 0 : i32
    %c0_i32_1 = arith.constant 0 : i32
    %c0_i32_2 = arith.constant 0 : i32
    return %c0_i32, %c0_i32_0, %c0_i32_1 : i32, i32, i32
  }
  func.func @transform_2(%arg0: i32) -> (i32, i32) {
    %c0_i32 = arith.constant 0 : i32
    %c0_i32_0 = arith.constant 0 : i32
    %c0_i32_1 = arith.constant 0 : i32
    return %c0_i32, %c0_i32_0 : i32, i32
  }
  func.func @transform_3(%arg0: i32) -> (i32, i32) {
    %c0_i32 = arith.constant 0 : i32
    %c0_i32_0 = arith.constant 0 : i32
    %c0_i32_1 = arith.constant 0 : i32
    return %c0_i32, %c0_i32_0 : i32, i32
  }
  func.func @transform_4(%arg0: i32) -> (i32, i32) {
    %c0_i32 = arith.constant 0 : i32
    %c0_i32_0 = arith.constant 0 : i32
    %c0_i32_1 = arith.constant 0 : i32
    return %c0_i32, %c0_i32_0 : i32, i32
  }
  func.func @transform_5(%arg0: i32) -> (i32, i32) {
    %c0_i32 = arith.constant 0 : i32
    %c0_i32_0 = arith.constant 0 : i32
    %c0_i32_1 = arith.constant 0 : i32
    return %c0_i32, %c0_i32_0 : i32, i32
  }
  func.func @transform_6(%arg0: i32) -> (i32, i32) {
    %c0_i32 = arith.constant 0 : i32
    %c0_i32_0 = arith.constant 0 : i32
    %c0_i32_1 = arith.constant 0 : i32
    return %c0_i32, %c0_i32_0 : i32, i32
  }
  func.func @transform_7(%arg0: i32) -> (i32, i32, i32, i32) {
    %c0_i32 = arith.constant 0 : i32
    %c0_i32_0 = arith.constant 0 : i32
    %c0_i32_1 = arith.constant 0 : i32
    %c0_i32_2 = arith.constant 0 : i32
    %c0_i32_3 = arith.constant 0 : i32
    return %c0_i32, %c0_i32_0, %c0_i32_1, %c0_i32_2 : i32, i32, i32, i32
  }
}

</mosaic_0001>

<llo_original>
// kernel: classifier_forward.1
$region0: #{classifier_forward.1}
  #allocation0 [shape = 'u32[]', space=smem, size = 0x4, offset = 0x4, fixed_abs, tag = 'smem constant byte address 0x4 - core index']
  #allocation1 [shape = 'u32[72,128]{1,0:T(1,128)}', space=vmem, size = 0x9000, scoped, tag = 'internal scratch']
  %s0 = inlined_call_operand.vmem [shape: bf16[2,8,8,512], index: 0, kind: input, shape index: {}]
  %s1 = inlined_call_operand.vmem [shape: bf16[1,512,1024], index: 1, kind: input, shape index: {}]
  %s2 = inlined_call_operand.hbm [shape: f32[1,1024], index: 2, kind: input, shape index: {}]
  %s3 = inlined_call_operand.vmem [shape: bf16[1024,1024], index: 3, kind: input, shape index: {}]
  %s4 = inlined_call_operand.hbm [shape: f32[1,1024], index: 4, kind: input, shape index: {}]
  %s5 = inlined_call_operand.vmem [shape: bf16[1024,128], index: 5, kind: input, shape index: {}]
  %s6 = inlined_call_operand.vmem [shape: f32[1,128], index: 6, kind: input, shape index: {}]
  %s7 = inlined_call_operand.vmem [shape: f32[2,8,8,128], index: 7, kind: output, shape index: {}]
  %s8 = sld [smem:[#allocation0]]
  $region46: #{classifier_forward.1} parent=0
    _
  %s10 = ssub.s32 1, %s8
  %s11 = scalar_select 0, %s10, %s8
  $region1: #{classifier_forward.1} parent=0
    #allocation2 [shape = 'u8[4096]{0}', space=vmem, size = 0x1000, scoped, tag = 'input window, operand 2, single buffered']
    #allocation3 [shape = 's32[1]{0}', space=sflag, size = 0x4, scoped, tag = 'scoped memory for classifier_forward.1']
    #allocation4 [shape = 'u8[4096]{0}', space=vmem, size = 0x1000, scoped, tag = 'input window, operand 4, single buffered']
    #allocation5 [shape = 's32[1]{0}', space=sflag, size = 0x4, scoped, tag = 'scoped memory for classifier_forward.1']
    %12 = vsyncpa [#allocation3], 0
    %13 = vsyncpa [#allocation5], 0
    // Predicated region
    $region2: #{classifier_forward.1} parent=1 // pred_check
      _
    $region3: #{classifier_forward.1} parent=1 // pred_check_branch
      %15 = sbr.rel (0) target = $region5
    $region4: #{classifier_forward.1} parent=1 // pred_region
      _
    $region5: #{classifier_forward.1} parent=1 // pred_fallthru
      _
    // Predicated region
    $region6: #{classifier_forward.1} parent=1 // pred_check
      _
    $region7: #{classifier_forward.1} parent=1 // pred_check_branch
      %17 = sbr.rel (0) target = $region9
    $region8: #{classifier_forward.1} parent=1 // pred_region
      _
    $region9: #{classifier_forward.1} parent=1 // pred_fallthru
      _
    // Predicated region
    $region10: #{classifier_forward.1} parent=1 // pred_check
      _
    $region11: #{classifier_forward.1} parent=1 // pred_check_branch
      %19 = sbr.rel (0) target = $region13
    $region12: #{classifier_forward.1} parent=1 // pred_region
      %21 = vsyncadd [#allocation3], 0
      %s23 = sshll.u32 %s2, 4
      %s24 = int_to_ptr.hbm [resolvable:$true] %s23
      %s25 = sshll.u32 [#allocation2], 4
      %s26 = int_to_ptr.vmem [resolvable:$true] %s25
      %28 = dma.hbm_to_vmem [thread:$0]  %s24, 128, %s26, [#allocation3]
    $region13: #{classifier_forward.1} parent=1 // pred_fallthru
      _
    // Predicated region
    $region14: #{classifier_forward.1} parent=1 // pred_check
      _
    $region15: #{classifier_forward.1} parent=1 // pred_check_branch
      %30 = sbr.rel (0) target = $region17
    $region16: #{classifier_forward.1} parent=1 // pred_region
      _
    $region17: #{classifier_forward.1} parent=1 // pred_fallthru
      _
    // Predicated region
    $region18: #{classifier_forward.1} parent=1 // pred_check
      _
    $region19: #{classifier_forward.1} parent=1 // pred_check_branch
      %32 = sbr.rel (0) target = $region21
    $region20: #{classifier_forward.1} parent=1 // pred_region
      %34 = vsyncadd [#allocation5], 0
      %s36 = sshll.u32 %s4, 4
      %s37 = int_to_ptr.hbm [resolvable:$true] %s36
      %s38 = sshll.u32 [#allocation4], 4
      %s39 = int_to_ptr.vmem [resolvable:$true] %s38
      %41 = dma.hbm_to_vmem [thread:$0]  %s37, 128, %s39, [#allocation5]
    $region21: #{classifier_forward.1} parent=1 // pred_fallthru
      _
    // Predicated region
    $region22: #{classifier_forward.1} parent=1 // pred_check
      _
    $region23: #{classifier_forward.1} parent=1 // pred_check_branch
      %43 = sbr.rel (0) target = $region25
    $region24: #{classifier_forward.1} parent=1 // pred_region
      _
    $region25: #{classifier_forward.1} parent=1 // pred_fallthru
      _
    // Predicated region
    $region26: #{classifier_forward.1} parent=1 // pred_check
      _
    $region27: #{classifier_forward.1} parent=1 // pred_check_branch
      %45 = sbr.rel (0) target = $region29
    $region28: #{classifier_forward.1} parent=1 // pred_region
      _
    $region29: #{classifier_forward.1} parent=1 // pred_fallthru
      _
    // Predicated region
    $region30: #{classifier_forward.1} parent=1 // pred_check
      _
    $region31: #{classifier_forward.1} parent=1 // pred_check_branch
      %47 = sbr.rel (0) target = $region33
    $region32: #{classifier_forward.1} parent=1 // pred_region
      %49 = dma.done [#allocation3], 128
    $region33: #{classifier_forward.1} parent=1 // pred_fallthru
      _
    // Predicated region
    $region34: #{classifier_forward.1} parent=1 // pred_check
      _
    $region35: #{classifier_forward.1} parent=1 // pred_check_branch
      %51 = sbr.rel (0) target = $region37
    $region36: #{classifier_forward.1} parent=1 // pred_region
      %53 = dma.done [#allocation5], 128
    $region37: #{classifier_forward.1} parent=1 // pred_fallthru
      _
    %v54 = vld [vmem:[%s0] sm:$0xff]
    %v55 = vld [vmem:[%s0 + $0x8] sm:$0xff]
    %v56 = vld [vmem:[%s0 + $0x10] sm:$0xff]
    %v57 = vld [vmem:[%s0 + $0x18] sm:$0xff]
    %v58 = vld [vmem:[%s0 + $0x20] sm:$0xff]
    %v59 = vld [vmem:[%s0 + $0x28] sm:$0xff]
    %v60 = vld [vmem:[%s0 + $0x30] sm:$0xff]
    %v61 = vld [vmem:[%s0 + $0x38] sm:$0xff]
    %v62 = vld [vmem:[%s0 + $0x40] sm:$0xff]
    %v63 = vld [vmem:[%s0 + $0x48] sm:$0xff]
    %v64 = vld [vmem:[%s0 + $0x50] sm:$0xff]
    %v65 = vld [vmem:[%s0 + $0x58] sm:$0xff]
    %v66 = vld [vmem:[%s0 + $0x60] sm:$0xff]
    %v67 = vld [vmem:[%s0 + $0x68] sm:$0xff]
    %v68 = vld [vmem:[%s0 + $0x70] sm:$0xff]
    %v69 = vld [vmem:[%s0 + $0x78] sm:$0xff]
    %v70 = vld [vmem:[%s0 + $0x80] sm:$0xff]
    %v71 = vld [vmem:[%s0 + $0x88] sm:$0xff]
    %v72 = vld [vmem:[%s0 + $0x90] sm:$0xff]
    %v73 = vld [vmem:[%s0 + $0x98] sm:$0xff]
    %v74 = vld [vmem:[%s0 + $0xa0] sm:$0xff]
    %v75 = vld [vmem:[%s0 + $0xa8] sm:$0xff]
    %v76 = vld [vmem:[%s0 + $0xb0] sm:$0xff]
    %v77 = vld [vmem:[%s0 + $0xb8] sm:$0xff]
    %v78 = vld [vmem:[%s0 + $0xc0] sm:$0xff]
    %v79 = vld [vmem:[%s0 + $0xc8] sm:$0xff]
    %v80 = vld [vmem:[%s0 + $0xd0] sm:$0xff]
    %v81 = vld [vmem:[%s0 + $0xd8] sm:$0xff]
    %v82 = vld [vmem:[%s0 + $0xe0] sm:$0xff]
    %v83 = vld [vmem:[%s0 + $0xe8] sm:$0xff]
    %v84 = vld [vmem:[%s0 + $0xf0] sm:$0xff]
    %v85 = vld [vmem:[%s0 + $0xf8] sm:$0xff]
    %v86 = vld [vmem:[%s1] sm:$0xff]
    %v87 = vld [vmem:[%s1 + $0x8] sm:$0xff]
    %v88 = vld [vmem:[%s1 + $0x10] sm:$0xff]
    %v89 = vld [vmem:[%s1 + $0x18] sm:$0xff]
    %v90 = vld [vmem:[%s1 + $0x20] sm:$0xff]
    %v91 = vld [vmem:[%s1 + $0x28] sm:$0xff]
    %v92 = vld [vmem:[%s1 + $0x30] sm:$0xff]
    %v93 = vld [vmem:[%s1 + $0x38] sm:$0xff]
    %v94 = vld [vmem:[%s1 + $0x40] sm:$0xff]
    %v95 = vld [vmem:[%s1 + $0x48] sm:$0xff]
    %v96 = vld [vmem:[%s1 + $0x50] sm:$0xff]
    %v97 = vld [vmem:[%s1 + $0x58] sm:$0xff]
    %v98 = vld [vmem:[%s1 + $0x60] sm:$0xff]
    %v99 = vld [vmem:[%s1 + $0x68] sm:$0xff]
    %v100 = vld [vmem:[%s1 + $0x70] sm:$0xff]
    %v101 = vld [vmem:[%s1 + $0x78] sm:$0xff]
    %v102 = vld [vmem:[%s1 + $0x80] sm:$0xff]
    %v103 = vld [vmem:[%s1 + $0x88] sm:$0xff]
    %v104 = vld [vmem:[%s1 + $0x90] sm:$0xff]
    %v105 = vld [vmem:[%s1 + $0x98] sm:$0xff]
    %v106 = vld [vmem:[%s1 + $0xa0] sm:$0xff]
    %v107 = vld [vmem:[%s1 + $0xa8] sm:$0xff]
    %v108 = vld [vmem:[%s1 + $0xb0] sm:$0xff]
    %v109 = vld [vmem:[%s1 + $0xb8] sm:$0xff]
    %v110 = vld [vmem:[%s1 + $0xc0] sm:$0xff]
    %v111 = vld [vmem:[%s1 + $0xc8] sm:$0xff]
    %v112 = vld [vmem:[%s1 + $0xd0] sm:$0xff]
    %v113 = vld [vmem:[%s1 + $0xd8] sm:$0xff]
    %v114 = vld [vmem:[%s1 + $0xe0] sm:$0xff]
    %v115 = vld [vmem:[%s1 + $0xe8] sm:$0xff]
    %v116 = vld [vmem:[%s1 + $0xf0] sm:$0xff]
    %v117 = vld [vmem:[%s1 + $0xf8] sm:$0xff]
    %v118 = vld [vmem:[%s1 + $0x100] sm:$0xff]
    %v119 = vld [vmem:[%s1 + $0x108] sm:$0xff]
    %v120 = vld [vmem:[%s1 + $0x110] sm:$0xff]
    %v121 = vld [vmem:[%s1 + $0x118] sm:$0xff]
    %v122 = vld [vmem:[%s1 + $0x120] sm:$0xff]
    %v123 = vld [vmem:[%s1 + $0x128] sm:$0xff]
    %v124 = vld [vmem:[%s1 + $0x130] sm:$0xff]
    %v125 = vld [vmem:[%s1 + $0x138] sm:$0xff]
    %v126 = vld [vmem:[%s1 + $0x140] sm:$0xff]
    %v127 = vld [vmem:[%s1 + $0x148] sm:$0xff]
    %v128 = vld [vmem:[%s1 + $0x150] sm:$0xff]
    %v129 = vld [vmem:[%s1 + $0x158] sm:$0xff]
    %v130 = vld [vmem:[%s1 + $0x160] sm:$0xff]
    %v131 = vld [vmem:[%s1 + $0x168] sm:$0xff]
    %v132 = vld [vmem:[%s1 + $0x170] sm:$0xff]
    %v133 = vld [vmem:[%s1 + $0x178] sm:$0xff]
    %v134 = vld [vmem:[%s1 + $0x180] sm:$0xff]
    %v135 = vld [vmem:[%s1 + $0x188] sm:$0xff]
    %v136 = vld [vmem:[%s1 + $0x190] sm:$0xff]
    %v137 = vld [vmem:[%s1 + $0x198] sm:$0xff]
    %v138 = vld [vmem:[%s1 + $0x1a0] sm:$0xff]
    %v139 = vld [vmem:[%s1 + $0x1a8] sm:$0xff]
    %v140 = vld [vmem:[%s1 + $0x1b0] sm:$0xff]
    %v141 = vld [vmem:[%s1 + $0x1b8] sm:$0xff]
    %v142 = vld [vmem:[%s1 + $0x1c0] sm:$0xff]
    %v143 = vld [vmem:[%s1 + $0x1c8] sm:$0xff]
    %v144 = vld [vmem:[%s1 + $0x1d0] sm:$0xff]
    %v145 = vld [vmem:[%s1 + $0x1d8] sm:$0xff]
    %v146 = vld [vmem:[%s1 + $0x1e0] sm:$0xff]
    %v147 = vld [vmem:[%s1 + $0x1e8] sm:$0xff]
    %v148 = vld [vmem:[%s1 + $0x1f0] sm:$0xff]
    %v149 = vld [vmem:[%s1 + $0x1f8] sm:$0xff]
    %v150 = vld [vmem:[%s1 + $0x200] sm:$0xff]
    %v151 = vld [vmem:[%s1 + $0x208] sm:$0xff]
    %v152 = vld [vmem:[%s1 + $0x210] sm:$0xff]
    %v153 = vld [vmem:[%s1 + $0x218] sm:$0xff]
    %v154 = vld [vmem:[%s1 + $0x220] sm:$0xff]
    %v155 = vld [vmem:[%s1 + $0x228] sm:$0xff]
    %v156 = vld [vmem:[%s1 + $0x230] sm:$0xff]
    %v157 = vld [vmem:[%s1 + $0x238] sm:$0xff]
    %v158 = vld [vmem:[%s1 + $0x240] sm:$0xff]
    %v159 = vld [vmem:[%s1 + $0x248] sm:$0xff]
    %v160 = vld [vmem:[%s1 + $0x250] sm:$0xff]
    %v161 = vld [vmem:[%s1 + $0x258] sm:$0xff]
    %v162 = vld [vmem:[%s1 + $0x260] sm:$0xff]
    %v163 = vld [vmem:[%s1 + $0x268] sm:$0xff]
    %v164 = vld [vmem:[%s1 + $0x270] sm:$0xff]
    %v165 = vld [vmem:[%s1 + $0x278] sm:$0xff]
    %v166 = vld [vmem:[%s1 + $0x280] sm:$0xff]
    %v167 = vld [vmem:[%s1 + $0x288] sm:$0xff]
    %v168 = vld [vmem:[%s1 + $0x290] sm:$0xff]
    %v169 = vld [vmem:[%s1 + $0x298] sm:$0xff]
    %v170 = vld [vmem:[%s1 + $0x2a0] sm:$0xff]
    %v171 = vld [vmem:[%s1 + $0x2a8] sm:$0xff]
    %v172 = vld [vmem:[%s1 + $0x2b0] sm:$0xff]
    %v173 = vld [vmem:[%s1 + $0x2b8] sm:$0xff]
    %v174 = vld [vmem:[%s1 + $0x2c0] sm:$0xff]
    %v175 = vld [vmem:[%s1 + $0x2c8] sm:$0xff]
    %v176 = vld [vmem:[%s1 + $0x2d0] sm:$0xff]
    %v177 = vld [vmem:[%s1 + $0x2d8] sm:$0xff]
    %v178 = vld [vmem:[%s1 + $0x2e0] sm:$0xff]
    %v179 = vld [vmem:[%s1 + $0x2e8] sm:$0xff]
    %v180 = vld [vmem:[%s1 + $0x2f0] sm:$0xff]
    %v181 = vld [vmem:[%s1 + $0x2f8] sm:$0xff]
    %v182 = vld [vmem:[%s1 + $0x300] sm:$0xff]
    %v183 = vld [vmem:[%s1 + $0x308] sm:$0xff]
    %v184 = vld [vmem:[%s1 + $0x310] sm:$0xff]
    %v185 = vld [vmem:[%s1 + $0x318] sm:$0xff]
    %v186 = vld [vmem:[%s1 + $0x320] sm:$0xff]
    %v187 = vld [vmem:[%s1 + $0x328] sm:$0xff]
    %v188 = vld [vmem:[%s1 + $0x330] sm:$0xff]
    %v189 = vld [vmem:[%s1 + $0x338] sm:$0xff]
    %v190 = vld [vmem:[%s1 + $0x340] sm:$0xff]
    %v191 = vld [vmem:[%s1 + $0x348] sm:$0xff]
    %v192 = vld [vmem:[%s1 + $0x350] sm:$0xff]
    %v193 = vld [vmem:[%s1 + $0x358] sm:$0xff]
    %v194 = vld [vmem:[%s1 + $0x360] sm:$0xff]
    %v195 = vld [vmem:[%s1 + $0x368] sm:$0xff]
    %v196 = vld [vmem:[%s1 + $0x370] sm:$0xff]
    %v197 = vld [vmem:[%s1 + $0x378] sm:$0xff]
    %v198 = vld [vmem:[%s1 + $0x380] sm:$0xff]
    %v199 = vld [vmem:[%s1 + $0x388] sm:$0xff]
    %v200 = vld [vmem:[%s1 + $0x390] sm:$0xff]
    %v201 = vld [vmem:[%s1 + $0x398] sm:$0xff]
    %v202 = vld [vmem:[%s1 + $0x3a0] sm:$0xff]
    %v203 = vld [vmem:[%s1 + $0x3a8] sm:$0xff]
    %v204 = vld [vmem:[%s1 + $0x3b0] sm:$0xff]
    %v205 = vld [vmem:[%s1 + $0x3b8] sm:$0xff]
    %v206 = vld [vmem:[%s1 + $0x3c0] sm:$0xff]
    %v207 = vld [vmem:[%s1 + $0x3c8] sm:$0xff]
    %v208 = vld [vmem:[%s1 + $0x3d0] sm:$0xff]
    %v209 = vld [vmem:[%s1 + $0x3d8] sm:$0xff]
    %v210 = vld [vmem:[%s1 + $0x3e0] sm:$0xff]
    %v211 = vld [vmem:[%s1 + $0x3e8] sm:$0xff]
    %v212 = vld [vmem:[%s1 + $0x3f0] sm:$0xff]
    %v213 = vld [vmem:[%s1 + $0x3f8] sm:$0xff]
    %v214 = vld [vmem:[%s1 + $0x400] sm:$0xff]
    %v215 = vld [vmem:[%s1 + $0x408] sm:$0xff]
    %v216 = vld [vmem:[%s1 + $0x410] sm:$0xff]
    %v217 = vld [vmem:[%s1 + $0x418] sm:$0xff]
    %v218 = vld [vmem:[%s1 + $0x420] sm:$0xff]
    %v219 = vld [vmem:[%s1 + $0x428] sm:$0xff]
    %v220 = vld [vmem:[%s1 + $0x430] sm:$0xff]
    %v221 = vld [vmem:[%s1 + $0x438] sm:$0xff]
    %v222 = vld [vmem:[%s1 + $0x440] sm:$0xff]
    %v223 = vld [vmem:[%s1 + $0x448] sm:$0xff]
    %v224 = vld [vmem:[%s1 + $0x450] sm:$0xff]
    %v225 = vld [vmem:[%s1 + $0x458] sm:$0xff]
    %v226 = vld [vmem:[%s1 + $0x460] sm:$0xff]
    %v227 = vld [vmem:[%s1 + $0x468] sm:$0xff]
    %v228 = vld [vmem:[%s1 + $0x470] sm:$0xff]
    %v229 = vld [vmem:[%s1 + $0x478] sm:$0xff]
    %v230 = vld [vmem:[%s1 + $0x480] sm:$0xff]
    %v231 = vld [vmem:[%s1 + $0x488] sm:$0xff]
    %v232 = vld [vmem:[%s1 + $0x490] sm:$0xff]
    %v233 = vld [vmem:[%s1 + $0x498] sm:$0xff]
    %v234 = vld [vmem:[%s1 + $0x4a0] sm:$0xff]
    %v235 = vld [vmem:[%s1 + $0x4a8] sm:$0xff]
    %v236 = vld [vmem:[%s1 + $0x4b0] sm:$0xff]
    %v237 = vld [vmem:[%s1 + $0x4b8] sm:$0xff]
    %v238 = vld [vmem:[%s1 + $0x4c0] sm:$0xff]
    %v239 = vld [vmem:[%s1 + $0x4c8] sm:$0xff]
    %v240 = vld [vmem:[%s1 + $0x4d0] sm:$0xff]
    %v241 = vld [vmem:[%s1 + $0x4d8] sm:$0xff]
    %v242 = vld [vmem:[%s1 + $0x4e0] sm:$0xff]
    %v243 = vld [vmem:[%s1 + $0x4e8] sm:$0xff]
    %v244 = vld [vmem:[%s1 + $0x4f0] sm:$0xff]
    %v245 = vld [vmem:[%s1 + $0x4f8] sm:$0xff]
    %v246 = vld [vmem:[%s1 + $0x500] sm:$0xff]
    %v247 = vld [vmem:[%s1 + $0x508] sm:$0xff]
    %v248 = vld [vmem:[%s1 + $0x510] sm:$0xff]
    %v249 = vld [vmem:[%s1 + $0x518] sm:$0xff]
    %v250 = vld [vmem:[%s1 + $0x520] sm:$0xff]
    %v251 = vld [vmem:[%s1 + $0x528] sm:$0xff]
    %v252 = vld [vmem:[%s1 + $0x530] sm:$0xff]
    %v253 = vld [vmem:[%s1 + $0x538] sm:$0xff]
    %v254 = vld [vmem:[%s1 + $0x540] sm:$0xff]
    %v255 = vld [vmem:[%s1 + $0x548] sm:$0xff]
    %v256 = vld [vmem:[%s1 + $0x550] sm:$0xff]
    %v257 = vld [vmem:[%s1 + $0x558] sm:$0xff]
    %v258 = vld [vmem:[%s1 + $0x560] sm:$0xff]
    %v259 = vld [vmem:[%s1 + $0x568] sm:$0xff]
    %v260 = vld [vmem:[%s1 + $0x570] sm:$0xff]
    %v261 = vld [vmem:[%s1 + $0x578] sm:$0xff]
    %v262 = vld [vmem:[%s1 + $0x580] sm:$0xff]
    %v263 = vld [vmem:[%s1 + $0x588] sm:$0xff]
    %v264 = vld [vmem:[%s1 + $0x590] sm:$0xff]
    %v265 = vld [vmem:[%s1 + $0x598] sm:$0xff]
    %v266 = vld [vmem:[%s1 + $0x5a0] sm:$0xff]
    %v267 = vld [vmem:[%s1 + $0x5a8] sm:$0xff]
    %v268 = vld [vmem:[%s1 + $0x5b0] sm:$0xff]
    %v269 = vld [vmem:[%s1 + $0x5b8] sm:$0xff]
    %v270 = vld [vmem:[%s1 + $0x5c0] sm:$0xff]
    %v271 = vld [vmem:[%s1 + $0x5c8] sm:$0xff]
    %v272 = vld [vmem:[%s1 + $0x5d0] sm:$0xff]
    %v273 = vld [vmem:[%s1 + $0x5d8] sm:$0xff]
    %v274 = vld [vmem:[%s1 + $0x5e0] sm:$0xff]
    %v275 = vld [vmem:[%s1 + $0x5e8] sm:$0xff]
    %v276 = vld [vmem:[%s1 + $0x5f0] sm:$0xff]
    %v277 = vld [vmem:[%s1 + $0x5f8] sm:$0xff]
    %v278 = vld [vmem:[%s1 + $0x600] sm:$0xff]
    %v279 = vld [vmem:[%s1 + $0x608] sm:$0xff]
    %v280 = vld [vmem:[%s1 + $0x610] sm:$0xff]
    %v281 = vld [vmem:[%s1 + $0x618] sm:$0xff]
    %v282 = vld [vmem:[%s1 + $0x620] sm:$0xff]
    %v283 = vld [vmem:[%s1 + $0x628] sm:$0xff]
    %v284 = vld [vmem:[%s1 + $0x630] sm:$0xff]
    %v285 = vld [vmem:[%s1 + $0x638] sm:$0xff]
    %v286 = vld [vmem:[%s1 + $0x640] sm:$0xff]
    %v287 = vld [vmem:[%s1 + $0x648] sm:$0xff]
    %v288 = vld [vmem:[%s1 + $0x650] sm:$0xff]
    %v289 = vld [vmem:[%s1 + $0x658] sm:$0xff]
    %v290 = vld [vmem:[%s1 + $0x660] sm:$0xff]
    %v291 = vld [vmem:[%s1 + $0x668] sm:$0xff]
    %v292 = vld [vmem:[%s1 + $0x670] sm:$0xff]
    %v293 = vld [vmem:[%s1 + $0x678] sm:$0xff]
    %v294 = vld [vmem:[%s1 + $0x680] sm:$0xff]
    %v295 = vld [vmem:[%s1 + $0x688] sm:$0xff]
    %v296 = vld [vmem:[%s1 + $0x690] sm:$0xff]
    %v297 = vld [vmem:[%s1 + $0x698] sm:$0xff]
    %v298 = vld [vmem:[%s1 + $0x6a0] sm:$0xff]
    %v299 = vld [vmem:[%s1 + $0x6a8] sm:$0xff]
    %v300 = vld [vmem:[%s1 + $0x6b0] sm:$0xff]
    %v301 = vld [vmem:[%s1 + $0x6b8] sm:$0xff]
    %v302 = vld [vmem:[%s1 + $0x6c0] sm:$0xff]
    %v303 = vld [vmem:[%s1 + $0x6c8] sm:$0xff]
    %v304 = vld [vmem:[%s1 + $0x6d0] sm:$0xff]
    %v305 = vld [vmem:[%s1 + $0x6d8] sm:$0xff]
    %v306 = vld [vmem:[%s1 + $0x6e0] sm:$0xff]
    %v307 = vld [vmem:[%s1 + $0x6e8] sm:$0xff]
    %v308 = vld [vmem:[%s1 + $0x6f0] sm:$0xff]
    %v309 = vld [vmem:[%s1 + $0x6f8] sm:$0xff]
    %v310 = vld [vmem:[%s1 + $0x700] sm:$0xff]
    %v311 = vld [vmem:[%s1 + $0x708] sm:$0xff]
    %v312 = vld [vmem:[%s1 + $0x710] sm:$0xff]
    %v313 = vld [vmem:[%s1 + $0x718] sm:$0xff]
    %v314 = vld [vmem:[%s1 + $0x720] sm:$0xff]
    %v315 = vld [vmem:[%s1 + $0x728] sm:$0xff]
    %v316 = vld [vmem:[%s1 + $0x730] sm:$0xff]
    %v317 = vld [vmem:[%s1 + $0x738] sm:$0xff]
    %v318 = vld [vmem:[%s1 + $0x740] sm:$0xff]
    %v319 = vld [vmem:[%s1 + $0x748] sm:$0xff]
    %v320 = vld [vmem:[%s1 + $0x750] sm:$0xff]
    %v321 = vld [vmem:[%s1 + $0x758] sm:$0xff]
    %v322 = vld [vmem:[%s1 + $0x760] sm:$0xff]
    %v323 = vld [vmem:[%s1 + $0x768] sm:$0xff]
    %v324 = vld [vmem:[%s1 + $0x770] sm:$0xff]
    %v325 = vld [vmem:[%s1 + $0x778] sm:$0xff]
    %v326 = vld [vmem:[%s1 + $0x780] sm:$0xff]
    %v327 = vld [vmem:[%s1 + $0x788] sm:$0xff]
    %v328 = vld [vmem:[%s1 + $0x790] sm:$0xff]
    %v329 = vld [vmem:[%s1 + $0x798] sm:$0xff]
    %v330 = vld [vmem:[%s1 + $0x7a0] sm:$0xff]
    %v331 = vld [vmem:[%s1 + $0x7a8] sm:$0xff]
    %v332 = vld [vmem:[%s1 + $0x7b0] sm:$0xff]
    %v333 = vld [vmem:[%s1 + $0x7b8] sm:$0xff]
    %v334 = vld [vmem:[%s1 + $0x7c0] sm:$0xff]
    %v335 = vld [vmem:[%s1 + $0x7c8] sm:$0xff]
    %v336 = vld [vmem:[%s1 + $0x7d0] sm:$0xff]
    %v337 = vld [vmem:[%s1 + $0x7d8] sm:$0xff]
    %v338 = vld [vmem:[%s1 + $0x7e0] sm:$0xff]
    %v339 = vld [vmem:[%s1 + $0x7e8] sm:$0xff]
    %v340 = vld [vmem:[%s1 + $0x7f0] sm:$0xff]
    %v341 = vld [vmem:[%s1 + $0x7f8] sm:$0xff]
    %v342 = vld [vmem:[#allocation2] sm:$0xff]
    %v344 = vperm.slane %v342, 0
    %v345 = vperm.slane %v342, 1
    %v346 = vperm.slane %v342, 2
    %v347 = vperm.slane %v342, 3
    %v348 = vperm.slane %v342, 4
    %v349 = vperm.slane %v342, 5
    %v350 = vperm.slane %v342, 6
    %v351 = vperm.slane %v342, 7
    %v392 = vunpack.c.l.b16 %v54
    %v393 = vunpack.c.h.b16 %v54
    %v394 = vunpack.c.l.b16 %v55
    %v395 = vunpack.c.h.b16 %v55
    %v396 = vunpack.c.l.b16 %v56
    %v397 = vunpack.c.h.b16 %v56
    %v398 = vunpack.c.l.b16 %v57
    %v399 = vunpack.c.h.b16 %v57
    %v400 = vunpack.c.l.b16 %v58
    %v401 = vunpack.c.h.b16 %v58
    %v402 = vunpack.c.l.b16 %v59
    %v403 = vunpack.c.h.b16 %v59
    %v404 = vunpack.c.l.b16 %v60
    %v405 = vunpack.c.h.b16 %v60
    %v406 = vunpack.c.l.b16 %v61
    %v407 = vunpack.c.h.b16 %v61
    %v408 = vunpack.c.l.b16 %v62
    %v409 = vunpack.c.h.b16 %v62
    %v410 = vunpack.c.l.b16 %v63
    %v411 = vunpack.c.h.b16 %v63
    %v412 = vunpack.c.l.b16 %v64
    %v413 = vunpack.c.h.b16 %v64
    %v414 = vunpack.c.l.b16 %v65
    %v415 = vunpack.c.h.b16 %v65
    %v416 = vunpack.c.l.b16 %v66
    %v417 = vunpack.c.h.b16 %v66
    %v418 = vunpack.c.l.b16 %v67
    %v419 = vunpack.c.h.b16 %v67
    %v420 = vunpack.c.l.b16 %v68
    %v421 = vunpack.c.h.b16 %v68
    %v422 = vunpack.c.l.b16 %v69
    %v423 = vunpack.c.h.b16 %v69
    %v424 = vunpack.c.l.b16 %v70
    %v425 = vunpack.c.h.b16 %v70
    %v426 = vunpack.c.l.b16 %v71
    %v427 = vunpack.c.h.b16 %v71
    %v428 = vunpack.c.l.b16 %v72
    %v429 = vunpack.c.h.b16 %v72
    %v430 = vunpack.c.l.b16 %v73
    %v431 = vunpack.c.h.b16 %v73
    %v432 = vunpack.c.l.b16 %v74
    %v433 = vunpack.c.h.b16 %v74
    %v434 = vunpack.c.l.b16 %v75
    %v435 = vunpack.c.h.b16 %v75
    %v436 = vunpack.c.l.b16 %v76
    %v437 = vunpack.c.h.b16 %v76
    %v438 = vunpack.c.l.b16 %v77
    %v439 = vunpack.c.h.b16 %v77
    %v440 = vunpack.c.l.b16 %v78
    %v441 = vunpack.c.h.b16 %v78
    %v442 = vunpack.c.l.b16 %v79
    %v443 = vunpack.c.h.b16 %v79
    %v444 = vunpack.c.l.b16 %v80
    %v445 = vunpack.c.h.b16 %v80
    %v446 = vunpack.c.l.b16 %v81
    %v447 = vunpack.c.h.b16 %v81
    %v448 = vunpack.c.l.b16 %v82
    %v449 = vunpack.c.h.b16 %v82
    %v450 = vunpack.c.l.b16 %v83
    %v451 = vunpack.c.h.b16 %v83
    %v452 = vunpack.c.l.b16 %v84
    %v453 = vunpack.c.h.b16 %v84
    %v454 = vunpack.c.l.b16 %v85
    %v455 = vunpack.c.h.b16 %v85
    %v456 = vpack.c.b16 %v396, %v392
    %v457 = vpack.c.b16 %v397, %v393
    %v458 = vpack.c.b16 %v398, %v394
    %v459 = vpack.c.b16 %v399, %v395
    %v460 = vpack.c.b16 %v404, %v400
    %v461 = vpack.c.b16 %v405, %v401
    %v462 = vpack.c.b16 %v406, %v402
    %v463 = vpack.c.b16 %v407, %v403
    %v464 = vpack.c.b16 %v412, %v408
    %v465 = vpack.c.b16 %v413, %v409
    %v466 = vpack.c.b16 %v414, %v410
    %v467 = vpack.c.b16 %v415, %v411
    %v468 = vpack.c.b16 %v420, %v416
    %v469 = vpack.c.b16 %v421, %v417
    %v470 = vpack.c.b16 %v422, %v418
    %v471 = vpack.c.b16 %v423, %v419
    %v472 = vpack.c.b16 %v428, %v424
    %v473 = vpack.c.b16 %v429, %v425
    %v474 = vpack.c.b16 %v430, %v426
    %v475 = vpack.c.b16 %v431, %v427
    %v476 = vpack.c.b16 %v436, %v432
    %v477 = vpack.c.b16 %v437, %v433
    %v478 = vpack.c.b16 %v438, %v434
    %v479 = vpack.c.b16 %v439, %v435
    %v480 = vpack.c.b16 %v444, %v440
    %v481 = vpack.c.b16 %v445, %v441
    %v482 = vpack.c.b16 %v446, %v442
    %v483 = vpack.c.b16 %v447, %v443
    %v484 = vpack.c.b16 %v452, %v448
    %v485 = vpack.c.b16 %v453, %v449
    %v486 = vpack.c.b16 %v454, %v450
    %v487 = vpack.c.b16 %v455, %v451
    %v776 = vunpack.c.l.b16 %v86
    %v777 = vunpack.c.h.b16 %v86
    %v778 = vunpack.c.l.b16 %v87
    %v779 = vunpack.c.h.b16 %v87
    %v780 = vunpack.c.l.b16 %v88
    %v781 = vunpack.c.h.b16 %v88
    %v782 = vunpack.c.l.b16 %v89
    %v783 = vunpack.c.h.b16 %v89
    %v784 = vunpack.c.l.b16 %v90
    %v785 = vunpack.c.h.b16 %v90
    %v786 = vunpack.c.l.b16 %v91
    %v787 = vunpack.c.h.b16 %v91
    %v788 = vunpack.c.l.b16 %v92
    %v789 = vunpack.c.h.b16 %v92
    %v790 = vunpack.c.l.b16 %v93
    %v791 = vunpack.c.h.b16 %v93
    %v792 = vunpack.c.l.b16 %v94
    %v793 = vunpack.c.h.b16 %v94
    %v794 = vunpack.c.l.b16 %v95
    %v795 = vunpack.c.h.b16 %v95
    %v796 = vunpack.c.l.b16 %v96
    %v797 = vunpack.c.h.b16 %v96
    %v798 = vunpack.c.l.b16 %v97
    %v799 = vunpack.c.h.b16 %v97
    %v800 = vunpack.c.l.b16 %v98
    %v801 = vunpack.c.h.b16 %v98
    %v802 = vunpack.c.l.b16 %v99
    %v803 = vunpack.c.h.b16 %v99
    %v804 = vunpack.c.l.b16 %v100
    %v805 = vunpack.c.h.b16 %v100
    %v806 = vunpack.c.l.b16 %v101
    %v807 = vunpack.c.h.b16 %v101
    %v808 = vunpack.c.l.b16 %v102
    %v809 = vunpack.c.h.b16 %v102
    %v810 = vunpack.c.l.b16 %v103
    %v811 = vunpack.c.h.b16 %v103
    %v812 = vunpack.c.l.b16 %v104
    %v813 = vunpack.c.h.b16 %v104
    %v814 = vunpack.c.l.b16 %v105
    %v815 = vunpack.c.h.b16 %v105
    %v816 = vunpack.c.l.b16 %v106
    %v817 = vunpack.c.h.b16 %v106
    %v818 = vunpack.c.l.b16 %v107
    %v819 = vunpack.c.h.b16 %v107
    %v820 = vunpack.c.l.b16 %v108
    %v821 = vunpack.c.h.b16 %v108
    %v822 = vunpack.c.l.b16 %v109
    %v823 = vunpack.c.h.b16 %v109
    %v824 = vunpack.c.l.b16 %v110
    %v825 = vunpack.c.h.b16 %v110
    %v826 = vunpack.c.l.b16 %v111
    %v827 = vunpack.c.h.b16 %v111
    %v828 = vunpack.c.l.b16 %v112
    %v829 = vunpack.c.h.b16 %v112
    %v830 = vunpack.c.l.b16 %v113
    %v831 = vunpack.c.h.b16 %v113
    %v832 = vunpack.c.l.b16 %v114
    %v833 = vunpack.c.h.b16 %v114
    %v834 = vunpack.c.l.b16 %v115
    %v835 = vunpack.c.h.b16 %v115
    %v836 = vunpack.c.l.b16 %v116
    %v837 = vunpack.c.h.b16 %v116
    %v838 = vunpack.c.l.b16 %v117
    %v839 = vunpack.c.h.b16 %v117
    %v840 = vunpack.c.l.b16 %v118
    %v841 = vunpack.c.h.b16 %v118
    %v842 = vunpack.c.l.b16 %v119
    %v843 = vunpack.c.h.b16 %v119
    %v844 = vunpack.c.l.b16 %v120
    %v845 = vunpack.c.h.b16 %v120
    %v846 = vunpack.c.l.b16 %v121
    %v847 = vunpack.c.h.b16 %v121
    %v848 = vunpack.c.l.b16 %v122
    %v849 = vunpack.c.h.b16 %v122
    %v850 = vunpack.c.l.b16 %v123
    %v851 = vunpack.c.h.b16 %v123
    %v852 = vunpack.c.l.b16 %v124
    %v853 = vunpack.c.h.b16 %v124
    %v854 = vunpack.c.l.b16 %v125
    %v855 = vunpack.c.h.b16 %v125
    %v856 = vunpack.c.l.b16 %v126
    %v857 = vunpack.c.h.b16 %v126
    %v858 = vunpack.c.l.b16 %v127
    %v859 = vunpack.c.h.b16 %v127
    %v860 = vunpack.c.l.b16 %v128
    %v861 = vunpack.c.h.b16 %v128
    %v862 = vunpack.c.l.b16 %v129
    %v863 = vunpack.c.h.b16 %v129
    %v864 = vunpack.c.l.b16 %v130
    %v865 = vunpack.c.h.b16 %v130
    %v866 = vunpack.c.l.b16 %v131
    %v867 = vunpack.c.h.b16 %v131
    %v868 = vunpack.c.l.b16 %v132
    %v869 = vunpack.c.h.b16 %v132
    %v870 = vunpack.c.l.b16 %v133
    %v871 = vunpack.c.h.b16 %v133
    %v872 = vunpack.c.l.b16 %v134
    %v873 = vunpack.c.h.b16 %v134
    %v874 = vunpack.c.l.b16 %v135
    %v875 = vunpack.c.h.b16 %v135
    %v876 = vunpack.c.l.b16 %v136
    %v877 = vunpack.c.h.b16 %v136
    %v878 = vunpack.c.l.b16 %v137
    %v879 = vunpack.c.h.b16 %v137
    %v880 = vunpack.c.l.b16 %v138
    %v881 = vunpack.c.h.b16 %v138
    %v882 = vunpack.c.l.b16 %v139
    %v883 = vunpack.c.h.b16 %v139
    %v884 = vunpack.c.l.b16 %v140
    %v885 = vunpack.c.h.b16 %v140
    %v886 = vunpack.c.l.b16 %v141
    %v887 = vunpack.c.h.b16 %v141
    %v888 = vunpack.c.l.b16 %v142
    %v889 = vunpack.c.h.b16 %v142
    %v890 = vunpack.c.l.b16 %v143
    %v891 = vunpack.c.h.b16 %v143
    %v892 = vunpack.c.l.b16 %v144
    %v893 = vunpack.c.h.b16 %v144
    %v894 = vunpack.c.l.b16 %v145
    %v895 = vunpack.c.h.b16 %v145
    %v896 = vunpack.c.l.b16 %v146
    %v897 = vunpack.c.h.b16 %v146
    %v898 = vunpack.c.l.b16 %v147
    %v899 = vunpack.c.h.b16 %v147
    %v900 = vunpack.c.l.b16 %v148
    %v901 = vunpack.c.h.b16 %v148
    %v902 = vunpack.c.l.b16 %v149
    %v903 = vunpack.c.h.b16 %v149
    %v904 = vunpack.c.l.b16 %v150
    %v905 = vunpack.c.h.b16 %v150
    %v906 = vunpack.c.l.b16 %v151
    %v907 = vunpack.c.h.b16 %v151
    %v908 = vunpack.c.l.b16 %v152
    %v909 = vunpack.c.h.b16 %v152
    %v910 = vunpack.c.l.b16 %v153
    %v911 = vunpack.c.h.b16 %v153
    %v912 = vunpack.c.l.b16 %v154
    %v913 = vunpack.c.h.b16 %v154
    %v914 = vunpack.c.l.b16 %v155
    %v915 = vunpack.c.h.b16 %v155
    %v916 = vunpack.c.l.b16 %v156
    %v917 = vunpack.c.h.b16 %v156
    %v918 = vunpack.c.l.b16 %v157
    %v919 = vunpack.c.h.b16 %v157
    %v920 = vunpack.c.l.b16 %v158
    %v921 = vunpack.c.h.b16 %v158
    %v922 = vunpack.c.l.b16 %v159
    %v923 = vunpack.c.h.b16 %v159
    %v924 = vunpack.c.l.b16 %v160
    %v925 = vunpack.c.h.b16 %v160
    %v926 = vunpack.c.l.b16 %v161
    %v927 = vunpack.c.h.b16 %v161
    %v928 = vunpack.c.l.b16 %v162
    %v929 = vunpack.c.h.b16 %v162
    %v930 = vunpack.c.l.b16 %v163
    %v931 = vunpack.c.h.b16 %v163
    %v932 = vunpack.c.l.b16 %v164
    %v933 = vunpack.c.h.b16 %v164
    %v934 = vunpack.c.l.b16 %v165
    %v935 = vunpack.c.h.b16 %v165
    %v936 = vunpack.c.l.b16 %v166
    %v937 = vunpack.c.h.b16 %v166
    %v938 = vunpack.c.l.b16 %v167
    %v939 = vunpack.c.h.b16 %v167
    %v940 = vunpack.c.l.b16 %v168
    %v941 = vunpack.c.h.b16 %v168
    %v942 = vunpack.c.l.b16 %v169
    %v943 = vunpack.c.h.b16 %v169
    %v944 = vunpack.c.l.b16 %v170
    %v945 = vunpack.c.h.b16 %v170
    %v946 = vunpack.c.l.b16 %v171
    %v947 = vunpack.c.h.b16 %v171
    %v948 = vunpack.c.l.b16 %v172
    %v949 = vunpack.c.h.b16 %v172
    %v950 = vunpack.c.l.b16 %v173
    %v951 = vunpack.c.h.b16 %v173
    %v952 = vunpack.c.l.b16 %v174
    %v953 = vunpack.c.h.b16 %v174
    %v954 = vunpack.c.l.b16 %v175
    %v955 = vunpack.c.h.b16 %v175
    %v956 = vunpack.c.l.b16 %v176
    %v957 = vunpack.c.h.b16 %v176
    %v958 = vunpack.c.l.b16 %v177
    %v959 = vunpack.c.h.b16 %v177
    %v960 = vunpack.c.l.b16 %v178
    %v961 = vunpack.c.h.b16 %v178
    %v962 = vunpack.c.l.b16 %v179
    %v963 = vunpack.c.h.b16 %v179
    %v964 = vunpack.c.l.b16 %v180
    %v965 = vunpack.c.h.b16 %v180
    %v966 = vunpack.c.l.b16 %v181
    %v967 = vunpack.c.h.b16 %v181
    %v968 = vunpack.c.l.b16 %v182
    %v969 = vunpack.c.h.b16 %v182
    %v970 = vunpack.c.l.b16 %v183
    %v971 = vunpack.c.h.b16 %v183
    %v972 = vunpack.c.l.b16 %v184
    %v973 = vunpack.c.h.b16 %v184
    %v974 = vunpack.c.l.b16 %v185
    %v975 = vunpack.c.h.b16 %v185
    %v976 = vunpack.c.l.b16 %v186
    %v977 = vunpack.c.h.b16 %v186
    %v978 = vunpack.c.l.b16 %v187
    %v979 = vunpack.c.h.b16 %v187
    %v980 = vunpack.c.l.b16 %v188
    %v981 = vunpack.c.h.b16 %v188
    %v982 = vunpack.c.l.b16 %v189
    %v983 = vunpack.c.h.b16 %v189
    %v984 = vunpack.c.l.b16 %v190
    %v985 = vunpack.c.h.b16 %v190
    %v986 = vunpack.c.l.b16 %v191
    %v987 = vunpack.c.h.b16 %v191
    %v988 = vunpack.c.l.b16 %v192
    %v989 = vunpack.c.h.b16 %v192
    %v990 = vunpack.c.l.b16 %v193
    %v991 = vunpack.c.h.b16 %v193
    %v992 = vunpack.c.l.b16 %v194
    %v993 = vunpack.c.h.b16 %v194
    %v994 = vunpack.c.l.b16 %v195
    %v995 = vunpack.c.h.b16 %v195
    %v996 = vunpack.c.l.b16 %v196
    %v997 = vunpack.c.h.b16 %v196
    %v998 = vunpack.c.l.b16 %v197
    %v999 = vunpack.c.h.b16 %v197
    %v1000 = vunpack.c.l.b16 %v198
    %v1001 = vunpack.c.h.b16 %v198
    %v1002 = vunpack.c.l.b16 %v199
    %v1003 = vunpack.c.h.b16 %v199
    %v1004 = vunpack.c.l.b16 %v200
    %v1005 = vunpack.c.h.b16 %v200
    %v1006 = vunpack.c.l.b16 %v201
    %v1007 = vunpack.c.h.b16 %v201
    %v1008 = vunpack.c.l.b16 %v202
    %v1009 = vunpack.c.h.b16 %v202
    %v1010 = vunpack.c.l.b16 %v203
    %v1011 = vunpack.c.h.b16 %v203
    %v1012 = vunpack.c.l.b16 %v204
    %v1013 = vunpack.c.h.b16 %v204
    %v1014 = vunpack.c.l.b16 %v205
    %v1015 = vunpack.c.h.b16 %v205
    %v1016 = vunpack.c.l.b16 %v206
    %v1017 = vunpack.c.h.b16 %v206
    %v1018 = vunpack.c.l.b16 %v207
    %v1019 = vunpack.c.h.b16 %v207
    %v1020 = vunpack.c.l.b16 %v208
    %v1021 = vunpack.c.h.b16 %v208
    %v1022 = vunpack.c.l.b16 %v209
    %v1023 = vunpack.c.h.b16 %v209
    %v1024 = vunpack.c.l.b16 %v210
    %v1025 = vunpack.c.h.b16 %v210
    %v1026 = vunpack.c.l.b16 %v211
    %v1027 = vunpack.c.h.b16 %v211
    %v1028 = vunpack.c.l.b16 %v212
    %v1029 = vunpack.c.h.b16 %v212
    %v1030 = vunpack.c.l.b16 %v213
    %v1031 = vunpack.c.h.b16 %v213
    %v1032 = vunpack.c.l.b16 %v214
    %v1033 = vunpack.c.h.b16 %v214
    %v1034 = vunpack.c.l.b16 %v215
    %v1035 = vunpack.c.h.b16 %v215
    %v1036 = vunpack.c.l.b16 %v216
    %v1037 = vunpack.c.h.b16 %v216
    %v1038 = vunpack.c.l.b16 %v217
    %v1039 = vunpack.c.h.b16 %v217
    %v1040 = vunpack.c.l.b16 %v218
    %v1041 = vunpack.c.h.b16 %v218
    %v1042 = vunpack.c.l.b16 %v219
    %v1043 = vunpack.c.h.b16 %v219
    %v1044 = vunpack.c.l.b16 %v220
    %v1045 = vunpack.c.h.b16 %v220
    %v1046 = vunpack.c.l.b16 %v221
    %v1047 = vunpack.c.h.b16 %v221
    %v1048 = vunpack.c.l.b16 %v222
    %v1049 = vunpack.c.h.b16 %v222
    %v1050 = vunpack.c.l.b16 %v223
    %v1051 = vunpack.c.h.b16 %v223
    %v1052 = vunpack.c.l.b16 %v224
    %v1053 = vunpack.c.h.b16 %v224
    %v1054 = vunpack.c.l.b16 %v225
    %v1055 = vunpack.c.h.b16 %v225
    %v1056 = vunpack.c.l.b16 %v226
    %v1057 = vunpack.c.h.b16 %v226
    %v1058 = vunpack.c.l.b16 %v227
    %v1059 = vunpack.c.h.b16 %v227
    %v1060 = vunpack.c.l.b16 %v228
    %v1061 = vunpack.c.h.b16 %v228
    %v1062 = vunpack.c.l.b16 %v229
    %v1063 = vunpack.c.h.b16 %v229
    %v1064 = vunpack.c.l.b16 %v230
    %v1065 = vunpack.c.h.b16 %v230
    %v1066 = vunpack.c.l.b16 %v231
    %v1067 = vunpack.c.h.b16 %v231
    %v1068 = vunpack.c.l.b16 %v232
    %v1069 = vunpack.c.h.b16 %v232
    %v1070 = vunpack.c.l.b16 %v233
    %v1071 = vunpack.c.h.b16 %v233
    %v1072 = vunpack.c.l.b16 %v234
    %v1073 = vunpack.c.h.b16 %v234
    %v1074 = vunpack.c.l.b16 %v235
    %v1075 = vunpack.c.h.b16 %v235
    %v1076 = vunpack.c.l.b16 %v236
    %v1077 = vunpack.c.h.b16 %v236
    %v1078 = vunpack.c.l.b16 %v237
    %v1079 = vunpack.c.h.b16 %v237
    %v1080 = vunpack.c.l.b16 %v238
    %v1081 = vunpack.c.h.b16 %v238
    %v1082 = vunpack.c.l.b16 %v239
    %v1083 = vunpack.c.h.b16 %v239
    %v1084 = vunpack.c.l.b16 %v240
    %v1085 = vunpack.c.h.b16 %v240
    %v1086 = vunpack.c.l.b16 %v241
    %v1087 = vunpack.c.h.b16 %v241
    %v1088 = vunpack.c.l.b16 %v242
    %v1089 = vunpack.c.h.b16 %v242
    %v1090 = vunpack.c.l.b16 %v243
    %v1091 = vunpack.c.h.b16 %v243
    %v1092 = vunpack.c.l.b16 %v244
    %v1093 = vunpack.c.h.b16 %v244
    %v1094 = vunpack.c.l.b16 %v245
    %v1095 = vunpack.c.h.b16 %v245
    %v1096 = vunpack.c.l.b16 %v246
    %v1097 = vunpack.c.h.b16 %v246
    %v1098 = vunpack.c.l.b16 %v247
    %v1099 = vunpack.c.h.b16 %v247
    %v1100 = vunpack.c.l.b16 %v248
    %v1101 = vunpack.c.h.b16 %v248
    %v1102 = vunpack.c.l.b16 %v249
    %v1103 = vunpack.c.h.b16 %v249
    %v1104 = vunpack.c.l.b16 %v250
    %v1105 = vunpack.c.h.b16 %v250
    %v1106 = vunpack.c.l.b16 %v251
    %v1107 = vunpack.c.h.b16 %v251
    %v1108 = vunpack.c.l.b16 %v252
    %v1109 = vunpack.c.h.b16 %v252
    %v1110 = vunpack.c.l.b16 %v253
    %v1111 = vunpack.c.h.b16 %v253
    %v1112 = vunpack.c.l.b16 %v254
    %v1113 = vunpack.c.h.b16 %v254
    %v1114 = vunpack.c.l.b16 %v255
    %v1115 = vunpack.c.h.b16 %v255
    %v1116 = vunpack.c.l.b16 %v256
    %v1117 = vunpack.c.h.b16 %v256
    %v1118 = vunpack.c.l.b16 %v257
    %v1119 = vunpack.c.h.b16 %v257
    %v1120 = vunpack.c.l.b16 %v258
    %v1121 = vunpack.c.h.b16 %v258
    %v1122 = vunpack.c.l.b16 %v259
    %v1123 = vunpack.c.h.b16 %v259
    %v1124 = vunpack.c.l.b16 %v260
    %v1125 = vunpack.c.h.b16 %v260
    %v1126 = vunpack.c.l.b16 %v261
    %v1127 = vunpack.c.h.b16 %v261
    %v1128 = vunpack.c.l.b16 %v262
    %v1129 = vunpack.c.h.b16 %v262
    %v1130 = vunpack.c.l.b16 %v263
    %v1131 = vunpack.c.h.b16 %v263
    %v1132 = vunpack.c.l.b16 %v264
    %v1133 = vunpack.c.h.b16 %v264
    %v1134 = vunpack.c.l.b16 %v265
    %v1135 = vunpack.c.h.b16 %v265
    %v1136 = vunpack.c.l.b16 %v266
    %v1137 = vunpack.c.h.b16 %v266
    %v1138 = vunpack.c.l.b16 %v267
    %v1139 = vunpack.c.h.b16 %v267
    %v1140 = vunpack.c.l.b16 %v268
    %v1141 = vunpack.c.h.b16 %v268
    %v1142 = vunpack.c.l.b16 %v269
    %v1143 = vunpack.c.h.b16 %v269
    %v1144 = vunpack.c.l.b16 %v270
    %v1145 = vunpack.c.h.b16 %v270
    %v1146 = vunpack.c.l.b16 %v271
    %v1147 = vunpack.c.h.b16 %v271
    %v1148 = vunpack.c.l.b16 %v272
    %v1149 = vunpack.c.h.b16 %v272
    %v1150 = vunpack.c.l.b16 %v273
    %v1151 = vunpack.c.h.b16 %v273
    %v1152 = vunpack.c.l.b16 %v274
    %v1153 = vunpack.c.h.b16 %v274
    %v1154 = vunpack.c.l.b16 %v275
    %v1155 = vunpack.c.h.b16 %v275
    %v1156 = vunpack.c.l.b16 %v276
    %v1157 = vunpack.c.h.b16 %v276
    %v1158 = vunpack.c.l.b16 %v277
    %v1159 = vunpack.c.h.b16 %v277
    %v1160 = vunpack.c.l.b16 %v278
    %v1161 = vunpack.c.h.b16 %v278
    %v1162 = vunpack.c.l.b16 %v279
    %v1163 = vunpack.c.h.b16 %v279
    %v1164 = vunpack.c.l.b16 %v280
    %v1165 = vunpack.c.h.b16 %v280
    %v1166 = vunpack.c.l.b16 %v281
    %v1167 = vunpack.c.h.b16 %v281
    %v1168 = vunpack.c.l.b16 %v282
    %v1169 = vunpack.c.h.b16 %v282
    %v1170 = vunpack.c.l.b16 %v283
    %v1171 = vunpack.c.h.b16 %v283
    %v1172 = vunpack.c.l.b16 %v284
    %v1173 = vunpack.c.h.b16 %v284
    %v1174 = vunpack.c.l.b16 %v285
    %v1175 = vunpack.c.h.b16 %v285
    %v1176 = vunpack.c.l.b16 %v286
    %v1177 = vunpack.c.h.b16 %v286
    %v1178 = vunpack.c.l.b16 %v287
    %v1179 = vunpack.c.h.b16 %v287
    %v1180 = vunpack.c.l.b16 %v288
    %v1181 = vunpack.c.h.b16 %v288
    %v1182 = vunpack.c.l.b16 %v289
    %v1183 = vunpack.c.h.b16 %v289
    %v1184 = vunpack.c.l.b16 %v290
    %v1185 = vunpack.c.h.b16 %v290
    %v1186 = vunpack.c.l.b16 %v291
    %v1187 = vunpack.c.h.b16 %v291
    %v1188 = vunpack.c.l.b16 %v292
    %v1189 = vunpack.c.h.b16 %v292
    %v1190 = vunpack.c.l.b16 %v293
    %v1191 = vunpack.c.h.b16 %v293
    %v1192 = vunpack.c.l.b16 %v294
    %v1193 = vunpack.c.h.b16 %v294
    %v1194 = vunpack.c.l.b16 %v295
    %v1195 = vunpack.c.h.b16 %v295
    %v1196 = vunpack.c.l.b16 %v296
    %v1197 = vunpack.c.h.b16 %v296
    %v1198 = vunpack.c.l.b16 %v297
    %v1199 = vunpack.c.h.b16 %v297
    %v1200 = vunpack.c.l.b16 %v298
    %v1201 = vunpack.c.h.b16 %v298
    %v1202 = vunpack.c.l.b16 %v299
    %v1203 = vunpack.c.h.b16 %v299
    %v1204 = vunpack.c.l.b16 %v300
    %v1205 = vunpack.c.h.b16 %v300
    %v1206 = vunpack.c.l.b16 %v301
    %v1207 = vunpack.c.h.b16 %v301
    %v1208 = vunpack.c.l.b16 %v302
    %v1209 = vunpack.c.h.b16 %v302
    %v1210 = vunpack.c.l.b16 %v303
    %v1211 = vunpack.c.h.b16 %v303
    %v1212 = vunpack.c.l.b16 %v304
    %v1213 = vunpack.c.h.b16 %v304
    %v1214 = vunpack.c.l.b16 %v305
    %v1215 = vunpack.c.h.b16 %v305
    %v1216 = vunpack.c.l.b16 %v306
    %v1217 = vunpack.c.h.b16 %v306
    %v1218 = vunpack.c.l.b16 %v307
    %v1219 = vunpack.c.h.b16 %v307
    %v1220 = vunpack.c.l.b16 %v308
    %v1221 = vunpack.c.h.b16 %v308
    %v1222 = vunpack.c.l.b16 %v309
    %v1223 = vunpack.c.h.b16 %v309
    %v1224 = vunpack.c.l.b16 %v310
    %v1225 = vunpack.c.h.b16 %v310
    %v1226 = vunpack.c.l.b16 %v311
    %v1227 = vunpack.c.h.b16 %v311
    %v1228 = vunpack.c.l.b16 %v312
    %v1229 = vunpack.c.h.b16 %v312
    %v1230 = vunpack.c.l.b16 %v313
    %v1231 = vunpack.c.h.b16 %v313
    %v1232 = vunpack.c.l.b16 %v314
    %v1233 = vunpack.c.h.b16 %v314
    %v1234 = vunpack.c.l.b16 %v315
    %v1235 = vunpack.c.h.b16 %v315
    %v1236 = vunpack.c.l.b16 %v316
    %v1237 = vunpack.c.h.b16 %v316
    %v1238 = vunpack.c.l.b16 %v317
    %v1239 = vunpack.c.h.b16 %v317
    %v1240 = vunpack.c.l.b16 %v318
    %v1241 = vunpack.c.h.b16 %v318
    %v1242 = vunpack.c.l.b16 %v319
    %v1243 = vunpack.c.h.b16 %v319
    %v1244 = vunpack.c.l.b16 %v320
    %v1245 = vunpack.c.h.b16 %v320
    %v1246 = vunpack.c.l.b16 %v321
    %v1247 = vunpack.c.h.b16 %v321
    %v1248 = vunpack.c.l.b16 %v322
    %v1249 = vunpack.c.h.b16 %v322
    %v1250 = vunpack.c.l.b16 %v323
    %v1251 = vunpack.c.h.b16 %v323
    %v1252 = vunpack.c.l.b16 %v324
    %v1253 = vunpack.c.h.b16 %v324
    %v1254 = vunpack.c.l.b16 %v325
    %v1255 = vunpack.c.h.b16 %v325
    %v1256 = vunpack.c.l.b16 %v326
    %v1257 = vunpack.c.h.b16 %v326
    %v1258 = vunpack.c.l.b16 %v327
    %v1259 = vunpack.c.h.b16 %v327
    %v1260 = vunpack.c.l.b16 %v328
    %v1261 = vunpack.c.h.b16 %v328
    %v1262 = vunpack.c.l.b16 %v329
    %v1263 = vunpack.c.h.b16 %v329
    %v1264 = vunpack.c.l.b16 %v330
    %v1265 = vunpack.c.h.b16 %v330
    %v1266 = vunpack.c.l.b16 %v331
    %v1267 = vunpack.c.h.b16 %v331
    %v1268 = vunpack.c.l.b16 %v332
    %v1269 = vunpack.c.h.b16 %v332
    %v1270 = vunpack.c.l.b16 %v333
    %v1271 = vunpack.c.h.b16 %v333
    %v1272 = vunpack.c.l.b16 %v334
    %v1273 = vunpack.c.h.b16 %v334
    %v1274 = vunpack.c.l.b16 %v335
    %v1275 = vunpack.c.h.b16 %v335
    %v1276 = vunpack.c.l.b16 %v336
    %v1277 = vunpack.c.h.b16 %v336
    %v1278 = vunpack.c.l.b16 %v337
    %v1279 = vunpack.c.h.b16 %v337
    %v1280 = vunpack.c.l.b16 %v338
    %v1281 = vunpack.c.h.b16 %v338
    %v1282 = vunpack.c.l.b16 %v339
    %v1283 = vunpack.c.h.b16 %v339
    %v1284 = vunpack.c.l.b16 %v340
    %v1285 = vunpack.c.h.b16 %v340
    %v1286 = vunpack.c.l.b16 %v341
    %v1287 = vunpack.c.h.b16 %v341
    %v1288 = vpack.c.b16 %v784, %v776
    %v1289 = vpack.c.b16 %v785, %v777
    %v1290 = vpack.c.b16 %v786, %v778
    %v1291 = vpack.c.b16 %v787, %v779
    %v1292 = vpack.c.b16 %v788, %v780
    %v1293 = vpack.c.b16 %v789, %v781
    %v1294 = vpack.c.b16 %v790, %v782
    %v1295 = vpack.c.b16 %v791, %v783
    %v1296 = vpack.c.b16 %v800, %v792
    %v1297 = vpack.c.b16 %v801, %v793
    %v1298 = vpack.c.b16 %v802, %v794
    %v1299 = vpack.c.b16 %v803, %v795
    %v1300 = vpack.c.b16 %v804, %v796
    %v1301 = vpack.c.b16 %v805, %v797
    %v1302 = vpack.c.b16 %v806, %v798
    %v1303 = vpack.c.b16 %v807, %v799
    %v1304 = vpack.c.b16 %v816, %v808
    %v1305 = vpack.c.b16 %v817, %v809
    %v1306 = vpack.c.b16 %v818, %v810
    %v1307 = vpack.c.b16 %v819, %v811
    %v1308 = vpack.c.b16 %v820, %v812
    %v1309 = vpack.c.b16 %v821, %v813
    %v1310 = vpack.c.b16 %v822, %v814
    %v1311 = vpack.c.b16 %v823, %v815
    %v1312 = vpack.c.b16 %v832, %v824
    %v1313 = vpack.c.b16 %v833, %v825
    %v1314 = vpack.c.b16 %v834, %v826
    %v1315 = vpack.c.b16 %v835, %v827
    %v1316 = vpack.c.b16 %v836, %v828
    %v1317 = vpack.c.b16 %v837, %v829
    %v1318 = vpack.c.b16 %v838, %v830
    %v1319 = vpack.c.b16 %v839, %v831
    %v1320 = vpack.c.b16 %v848, %v840
    %v1321 = vpack.c.b16 %v849, %v841
    %v1322 = vpack.c.b16 %v850, %v842
    %v1323 = vpack.c.b16 %v851, %v843
    %v1324 = vpack.c.b16 %v852, %v844
    %v1325 = vpack.c.b16 %v853, %v845
    %v1326 = vpack.c.b16 %v854, %v846
    %v1327 = vpack.c.b16 %v855, %v847
    %v1328 = vpack.c.b16 %v864, %v856
    %v1329 = vpack.c.b16 %v865, %v857
    %v1330 = vpack.c.b16 %v866, %v858
    %v1331 = vpack.c.b16 %v867, %v859
    %v1332 = vpack.c.b16 %v868, %v860
    %v1333 = vpack.c.b16 %v869, %v861
    %v1334 = vpack.c.b16 %v870, %v862
    %v1335 = vpack.c.b16 %v871, %v863
    %v1336 = vpack.c.b16 %v880, %v872
    %v1337 = vpack.c.b16 %v881, %v873
    %v1338 = vpack.c.b16 %v882, %v874
    %v1339 = vpack.c.b16 %v883, %v875
    %v1340 = vpack.c.b16 %v884, %v876
    %v1341 = vpack.c.b16 %v885, %v877
    %v1342 = vpack.c.b16 %v886, %v878
    %v1343 = vpack.c.b16 %v887, %v879
    %v1344 = vpack.c.b16 %v896, %v888
    %v1345 = vpack.c.b16 %v897, %v889
    %v1346 = vpack.c.b16 %v898, %v890
    %v1347 = vpack.c.b16 %v899, %v891
    %v1348 = vpack.c.b16 %v900, %v892
    %v1349 = vpack.c.b16 %v901, %v893
    %v1350 = vpack.c.b16 %v902, %v894
    %v1351 = vpack.c.b16 %v903, %v895
    %v1352 = vpack.c.b16 %v912, %v904
    %v1353 = vpack.c.b16 %v913, %v905
    %v1354 = vpack.c.b16 %v914, %v906
    %v1355 = vpack.c.b16 %v915, %v907
    %v1356 = vpack.c.b16 %v916, %v908
    %v1357 = vpack.c.b16 %v917, %v909
    %v1358 = vpack.c.b16 %v918, %v910
    %v1359 = vpack.c.b16 %v919, %v911
    %v1360 = vpack.c.b16 %v928, %v920
    %v1361 = vpack.c.b16 %v929, %v921
    %v1362 = vpack.c.b16 %v930, %v922
    %v1363 = vpack.c.b16 %v931, %v923
    %v1364 = vpack.c.b16 %v932, %v924
    %v1365 = vpack.c.b16 %v933, %v925
    %v1366 = vpack.c.b16 %v934, %v926
    %v1367 = vpack.c.b16 %v935, %v927
    %v1368 = vpack.c.b16 %v944, %v936
    %v1369 = vpack.c.b16 %v945, %v937
    %v1370 = vpack.c.b16 %v946, %v938
    %v1371 = vpack.c.b16 %v947, %v939
    %v1372 = vpack.c.b16 %v948, %v940
    %v1373 = vpack.c.b16 %v949, %v941
    %v1374 = vpack.c.b16 %v950, %v942
    %v1375 = vpack.c.b16 %v951, %v943
    %v1376 = vpack.c.b16 %v960, %v952
    %v1377 = vpack.c.b16 %v961, %v953
    %v1378 = vpack.c.b16 %v962, %v954
    %v1379 = vpack.c.b16 %v963, %v955
    %v1380 = vpack.c.b16 %v964, %v956
    %v1381 = vpack.c.b16 %v965, %v957
    %v1382 = vpack.c.b16 %v966, %v958
    %v1383 = vpack.c.b16 %v967, %v959
    %v1384 = vpack.c.b16 %v976, %v968
    %v1385 = vpack.c.b16 %v977, %v969
    %v1386 = vpack.c.b16 %v978, %v970
    %v1387 = vpack.c.b16 %v979, %v971
    %v1388 = vpack.c.b16 %v980, %v972
    %v1389 = vpack.c.b16 %v981, %v973
    %v1390 = vpack.c.b16 %v982, %v974
    %v1391 = vpack.c.b16 %v983, %v975
    %v1392 = vpack.c.b16 %v992, %v984
    %v1393 = vpack.c.b16 %v993, %v985
    %v1394 = vpack.c.b16 %v994, %v986
    %v1395 = vpack.c.b16 %v995, %v987
    %v1396 = vpack.c.b16 %v996, %v988
    %v1397 = vpack.c.b16 %v997, %v989
    %v1398 = vpack.c.b16 %v998, %v990
    %v1399 = vpack.c.b16 %v999, %v991
    %v1400 = vpack.c.b16 %v1008, %v1000
    %v1401 = vpack.c.b16 %v1009, %v1001
    %v1402 = vpack.c.b16 %v1010, %v1002
    %v1403 = vpack.c.b16 %v1011, %v1003
    %v1404 = vpack.c.b16 %v1012, %v1004
    %v1405 = vpack.c.b16 %v1013, %v1005
    %v1406 = vpack.c.b16 %v1014, %v1006
    %v1407 = vpack.c.b16 %v1015, %v1007
    %v1408 = vpack.c.b16 %v1024, %v1016
    %v1409 = vpack.c.b16 %v1025, %v1017
    %v1410 = vpack.c.b16 %v1026, %v1018
    %v1411 = vpack.c.b16 %v1027, %v1019
    %v1412 = vpack.c.b16 %v1028, %v1020
    %v1413 = vpack.c.b16 %v1029, %v1021
    %v1414 = vpack.c.b16 %v1030, %v1022
    %v1415 = vpack.c.b16 %v1031, %v1023
    %v1416 = vpack.c.b16 %v1040, %v1032
    %v1417 = vpack.c.b16 %v1041, %v1033
    %v1418 = vpack.c.b16 %v1042, %v1034
    %v1419 = vpack.c.b16 %v1043, %v1035
    %v1420 = vpack.c.b16 %v1044, %v1036
    %v1421 = vpack.c.b16 %v1045, %v1037
    %v1422 = vpack.c.b16 %v1046, %v1038
    %v1423 = vpack.c.b16 %v1047, %v1039
    %v1424 = vpack.c.b16 %v1056, %v1048
    %v1425 = vpack.c.b16 %v1057, %v1049
    %v1426 = vpack.c.b16 %v1058, %v1050
    %v1427 = vpack.c.b16 %v1059, %v1051
    %v1428 = vpack.c.b16 %v1060, %v1052
    %v1429 = vpack.c.b16 %v1061, %v1053
    %v1430 = vpack.c.b16 %v1062, %v1054
    %v1431 = vpack.c.b16 %v1063, %v1055
    %v1432 = vpack.c.b16 %v1072, %v1064
    %v1433 = vpack.c.b16 %v1073, %v1065
    %v1434 = vpack.c.b16 %v1074, %v1066
    %v1435 = vpack.c.b16 %v1075, %v1067
    %v1436 = vpack.c.b16 %v1076, %v1068
    %v1437 = vpack.c.b16 %v1077, %v1069
    %v1438 = vpack.c.b16 %v1078, %v1070
    %v1439 = vpack.c.b16 %v1079, %v1071
    %v1440 = vpack.c.b16 %v1088, %v1080
    %v1441 = vpack.c.b16 %v1089, %v1081
    %v1442 = vpack.c.b16 %v1090, %v1082
    %v1443 = vpack.c.b16 %v1091, %v1083
    %v1444 = vpack.c.b16 %v1092, %v1084
    %v1445 = vpack.c.b16 %v1093, %v1085
    %v1446 = vpack.c.b16 %v1094, %v1086
    %v1447 = vpack.c.b16 %v1095, %v1087
    %v1448 = vpack.c.b16 %v1104, %v1096
    %v1449 = vpack.c.b16 %v1105, %v1097
    %v1450 = vpack.c.b16 %v1106, %v1098
    %v1451 = vpack.c.b16 %v1107, %v1099
    %v1452 = vpack.c.b16 %v1108, %v1100
    %v1453 = vpack.c.b16 %v1109, %v1101
    %v1454 = vpack.c.b16 %v1110, %v1102
    %v1455 = vpack.c.b16 %v1111, %v1103
    %v1456 = vpack.c.b16 %v1120, %v1112
    %v1457 = vpack.c.b16 %v1121, %v1113
    %v1458 = vpack.c.b16 %v1122, %v1114
    %v1459 = vpack.c.b16 %v1123, %v1115
    %v1460 = vpack.c.b16 %v1124, %v1116
    %v1461 = vpack.c.b16 %v1125, %v1117
    %v1462 = vpack.c.b16 %v1126, %v1118
    %v1463 = vpack.c.b16 %v1127, %v1119
    %v1464 = vpack.c.b16 %v1136, %v1128
    %v1465 = vpack.c.b16 %v1137, %v1129
    %v1466 = vpack.c.b16 %v1138, %v1130
    %v1467 = vpack.c.b16 %v1139, %v1131
    %v1468 = vpack.c.b16 %v1140, %v1132
    %v1469 = vpack.c.b16 %v1141, %v1133
    %v1470 = vpack.c.b16 %v1142, %v1134
    %v1471 = vpack.c.b16 %v1143, %v1135
    %v1472 = vpack.c.b16 %v1152, %v1144
    %v1473 = vpack.c.b16 %v1153, %v1145
    %v1474 = vpack.c.b16 %v1154, %v1146
    %v1475 = vpack.c.b16 %v1155, %v1147
    %v1476 = vpack.c.b16 %v1156, %v1148
    %v1477 = vpack.c.b16 %v1157, %v1149
    %v1478 = vpack.c.b16 %v1158, %v1150
    %v1479 = vpack.c.b16 %v1159, %v1151
    %v1480 = vpack.c.b16 %v1168, %v1160
    %v1481 = vpack.c.b16 %v1169, %v1161
    %v1482 = vpack.c.b16 %v1170, %v1162
    %v1483 = vpack.c.b16 %v1171, %v1163
    %v1484 = vpack.c.b16 %v1172, %v1164
    %v1485 = vpack.c.b16 %v1173, %v1165
    %v1486 = vpack.c.b16 %v1174, %v1166
    %v1487 = vpack.c.b16 %v1175, %v1167
    %v1488 = vpack.c.b16 %v1184, %v1176
    %v1489 = vpack.c.b16 %v1185, %v1177
    %v1490 = vpack.c.b16 %v1186, %v1178
    %v1491 = vpack.c.b16 %v1187, %v1179
    %v1492 = vpack.c.b16 %v1188, %v1180
    %v1493 = vpack.c.b16 %v1189, %v1181
    %v1494 = vpack.c.b16 %v1190, %v1182
    %v1495 = vpack.c.b16 %v1191, %v1183
    %v1496 = vpack.c.b16 %v1200, %v1192
    %v1497 = vpack.c.b16 %v1201, %v1193
    %v1498 = vpack.c.b16 %v1202, %v1194
    %v1499 = vpack.c.b16 %v1203, %v1195
    %v1500 = vpack.c.b16 %v1204, %v1196
    %v1501 = vpack.c.b16 %v1205, %v1197
    %v1502 = vpack.c.b16 %v1206, %v1198
    %v1503 = vpack.c.b16 %v1207, %v1199
    %v1504 = vpack.c.b16 %v1216, %v1208
    %v1505 = vpack.c.b16 %v1217, %v1209
    %v1506 = vpack.c.b16 %v1218, %v1210
    %v1507 = vpack.c.b16 %v1219, %v1211
    %v1508 = vpack.c.b16 %v1220, %v1212
    %v1509 = vpack.c.b16 %v1221, %v1213
    %v1510 = vpack.c.b16 %v1222, %v1214
    %v1511 = vpack.c.b16 %v1223, %v1215
    %v1512 = vpack.c.b16 %v1232, %v1224
    %v1513 = vpack.c.b16 %v1233, %v1225
    %v1514 = vpack.c.b16 %v1234, %v1226
    %v1515 = vpack.c.b16 %v1235, %v1227
    %v1516 = vpack.c.b16 %v1236, %v1228
    %v1517 = vpack.c.b16 %v1237, %v1229
    %v1518 = vpack.c.b16 %v1238, %v1230
    %v1519 = vpack.c.b16 %v1239, %v1231
    %v1520 = vpack.c.b16 %v1248, %v1240
    %v1521 = vpack.c.b16 %v1249, %v1241
    %v1522 = vpack.c.b16 %v1250, %v1242
    %v1523 = vpack.c.b16 %v1251, %v1243
    %v1524 = vpack.c.b16 %v1252, %v1244
    %v1525 = vpack.c.b16 %v1253, %v1245
    %v1526 = vpack.c.b16 %v1254, %v1246
    %v1527 = vpack.c.b16 %v1255, %v1247
    %v1528 = vpack.c.b16 %v1264, %v1256
    %v1529 = vpack.c.b16 %v1265, %v1257
    %v1530 = vpack.c.b16 %v1266, %v1258
    %v1531 = vpack.c.b16 %v1267, %v1259
    %v1532 = vpack.c.b16 %v1268, %v1260
    %v1533 = vpack.c.b16 %v1269, %v1261
    %v1534 = vpack.c.b16 %v1270, %v1262
    %v1535 = vpack.c.b16 %v1271, %v1263
    %v1536 = vpack.c.b16 %v1280, %v1272
    %v1537 = vpack.c.b16 %v1281, %v1273
    %v1538 = vpack.c.b16 %v1282, %v1274
    %v1539 = vpack.c.b16 %v1283, %v1275
    %v1540 = vpack.c.b16 %v1284, %v1276
    %v1541 = vpack.c.b16 %v1285, %v1277
    %v1542 = vpack.c.b16 %v1286, %v1278
    %v1543 = vpack.c.b16 %v1287, %v1279
    %1800 = vmatpush.bf16.msra.mxu0 %v1344
    %1801 = vmatpush.bf16.msra.mxu0 %v1336
    %1802 = vmatpush.bf16.msra.mxu0 %v1328
    %1803 = vmatpush.bf16.msra.mxu0 %v1320
    %1804 = vmatpush.bf16.msra.mxu0 %v1312
    %1805 = vmatpush.bf16.msra.mxu0 %v1304
    %1806 = vmatpush.bf16.msra.mxu0 %v1296
    %1807 = vmatpush.bf16.msra.mxu0 %v1288
    %1808 = vmatmul.bf16.gmra.mxu0 %v456
    %v1809 = vpop.f32.mrf.mxu0
    %v1810 = vadd.f32 %v344, %v1809
    %v1811 = vpop.f32.mrf.mxu0
    %v1812 = vadd.f32 %v344, %v1811
    %1813 = vmatmul.bf16.gmra.mxu0 %v460
    %v1814 = vpop.f32.mrf.mxu0
    %v1815 = vadd.f32 %v344, %v1814
    %v1816 = vpop.f32.mrf.mxu0
    %v1817 = vadd.f32 %v344, %v1816
    %1818 = vmatmul.bf16.gmra.mxu0 %v464
    %v1819 = vpop.f32.mrf.mxu0
    %v1820 = vadd.f32 %v344, %v1819
    %v1821 = vpop.f32.mrf.mxu0
    %v1822 = vadd.f32 %v344, %v1821
    %1823 = vmatmul.bf16.gmra.mxu0 %v468
    %v1824 = vpop.f32.mrf.mxu0
    %v1825 = vadd.f32 %v344, %v1824
    %v1826 = vpop.f32.mrf.mxu0
    %v1827 = vadd.f32 %v344, %v1826
    %1828 = vmatmul.bf16.gmra.mxu0 %v472
    %v1829 = vpop.f32.mrf.mxu0
    %v1830 = vadd.f32 %v344, %v1829
    %v1831 = vpop.f32.mrf.mxu0
    %v1832 = vadd.f32 %v344, %v1831
    %1833 = vmatmul.bf16.gmra.mxu0 %v476
    %v1834 = vpop.f32.mrf.mxu0
    %v1835 = vadd.f32 %v344, %v1834
    %v1836 = vpop.f32.mrf.mxu0
    %v1837 = vadd.f32 %v344, %v1836
    %1838 = vmatmul.bf16.gmra.mxu0 %v480
    %v1839 = vpop.f32.mrf.mxu0
    %v1840 = vadd.f32 %v344, %v1839
    %v1841 = vpop.f32.mrf.mxu0
    %v1842 = vadd.f32 %v344, %v1841
    %1843 = vmatmul.bf16.gmra.mxu0 %v484
    %v1844 = vpop.f32.mrf.mxu0
    %v1845 = vadd.f32 %v344, %v1844
    %v1846 = vpop.f32.mrf.mxu0
    %v1847 = vadd.f32 %v344, %v1846
    %1848 = vdwg.mxu0
    %1849 = vmatpush.bf16.msra.mxu0 %v1408
    %1850 = vmatpush.bf16.msra.mxu0 %v1400
    %1851 = vmatpush.bf16.msra.mxu0 %v1392
    %1852 = vmatpush.bf16.msra.mxu0 %v1384
    %1853 = vmatpush.bf16.msra.mxu0 %v1376
    %1854 = vmatpush.bf16.msra.mxu0 %v1368
    %1855 = vmatpush.bf16.msra.mxu0 %v1360
    %1856 = vmatpush.bf16.msra.mxu0 %v1352
    %1857 = vmatmul.bf16.gmra.mxu0 %v457
    %v1858 = vpop.f32.mrf.mxu0
    %v1859 = vadd.f32 %v1810, %v1858
    %v1860 = vpop.f32.mrf.mxu0
    %v1861 = vadd.f32 %v1812, %v1860
    %1862 = vmatmul.bf16.gmra.mxu0 %v461
    %v1863 = vpop.f32.mrf.mxu0
    %v1864 = vadd.f32 %v1815, %v1863
    %v1865 = vpop.f32.mrf.mxu0
    %v1866 = vadd.f32 %v1817, %v1865
    %1867 = vmatmul.bf16.gmra.mxu0 %v465
    %v1868 = vpop.f32.mrf.mxu0
    %v1869 = vadd.f32 %v1820, %v1868
    %v1870 = vpop.f32.mrf.mxu0
    %v1871 = vadd.f32 %v1822, %v1870
    %1872 = vmatmul.bf16.gmra.mxu0 %v469
    %v1873 = vpop.f32.mrf.mxu0
    %v1874 = vadd.f32 %v1825, %v1873
    %v1875 = vpop.f32.mrf.mxu0
    %v1876 = vadd.f32 %v1827, %v1875
    %1877 = vmatmul.bf16.gmra.mxu0 %v473
    %v1878 = vpop.f32.mrf.mxu0
    %v1879 = vadd.f32 %v1830, %v1878
    %v1880 = vpop.f32.mrf.mxu0
    %v1881 = vadd.f32 %v1832, %v1880
    %1882 = vmatmul.bf16.gmra.mxu0 %v477
    %v1883 = vpop.f32.mrf.mxu0
    %v1884 = vadd.f32 %v1835, %v1883
    %v1885 = vpop.f32.mrf.mxu0
    %v1886 = vadd.f32 %v1837, %v1885
    %1887 = vmatmul.bf16.gmra.mxu0 %v481
    %v1888 = vpop.f32.mrf.mxu0
    %v1889 = vadd.f32 %v1840, %v1888
    %v1890 = vpop.f32.mrf.mxu0
    %v1891 = vadd.f32 %v1842, %v1890
    %1892 = vmatmul.bf16.gmra.mxu0 %v485
    %v1893 = vpop.f32.mrf.mxu0
    %v1894 = vadd.f32 %v1845, %v1893
    %v1895 = vpop.f32.mrf.mxu0
    %v1896 = vadd.f32 %v1847, %v1895
    %1897 = vdwg.mxu0
    %1898 = vmatpush.bf16.msra.mxu0 %v1472
    %1899 = vmatpush.bf16.msra.mxu0 %v1464
    %1900 = vmatpush.bf16.msra.mxu0 %v1456
    %1901 = vmatpush.bf16.msra.mxu0 %v1448
    %1902 = vmatpush.bf16.msra.mxu0 %v1440
    %1903 = vmatpush.bf16.msra.mxu0 %v1432
    %1904 = vmatpush.bf16.msra.mxu0 %v1424
    %1905 = vmatpush.bf16.msra.mxu0 %v1416
    %1906 = vmatmul.bf16.gmra.mxu0 %v458
    %v1907 = vpop.f32.mrf.mxu0
    %v1908 = vadd.f32 %v1859, %v1907
    %v1909 = vpop.f32.mrf.mxu0
    %v1910 = vadd.f32 %v1861, %v1909
    %1911 = vmatmul.bf16.gmra.mxu0 %v462
    %v1912 = vpop.f32.mrf.mxu0
    %v1913 = vadd.f32 %v1864, %v1912
    %v1914 = vpop.f32.mrf.mxu0
    %v1915 = vadd.f32 %v1866, %v1914
    %1916 = vmatmul.bf16.gmra.mxu0 %v466
    %v1917 = vpop.f32.mrf.mxu0
    %v1918 = vadd.f32 %v1869, %v1917
    %v1919 = vpop.f32.mrf.mxu0
    %v1920 = vadd.f32 %v1871, %v1919
    %1921 = vmatmul.bf16.gmra.mxu0 %v470
    %v1922 = vpop.f32.mrf.mxu0
    %v1923 = vadd.f32 %v1874, %v1922
    %v1924 = vpop.f32.mrf.mxu0
    %v1925 = vadd.f32 %v1876, %v1924
    %1926 = vmatmul.bf16.gmra.mxu0 %v474
    %v1927 = vpop.f32.mrf.mxu0
    %v1928 = vadd.f32 %v1879, %v1927
    %v1929 = vpop.f32.mrf.mxu0
    %v1930 = vadd.f32 %v1881, %v1929
    %1931 = vmatmul.bf16.gmra.mxu0 %v478
    %v1932 = vpop.f32.mrf.mxu0
    %v1933 = vadd.f32 %v1884, %v1932
    %v1934 = vpop.f32.mrf.mxu0
    %v1935 = vadd.f32 %v1886, %v1934
    %1936 = vmatmul.bf16.gmra.mxu0 %v482
    %v1937 = vpop.f32.mrf.mxu0
    %v1938 = vadd.f32 %v1889, %v1937
    %v1939 = vpop.f32.mrf.mxu0
    %v1940 = vadd.f32 %v1891, %v1939
    %1941 = vmatmul.bf16.gmra.mxu0 %v486
    %v1942 = vpop.f32.mrf.mxu0
    %v1943 = vadd.f32 %v1894, %v1942
    %v1944 = vpop.f32.mrf.mxu0
    %v1945 = vadd.f32 %v1896, %v1944
    %1946 = vdwg.mxu0
    %1947 = vmatpush.bf16.msra.mxu0 %v1536
    %1948 = vmatpush.bf16.msra.mxu0 %v1528
    %1949 = vmatpush.bf16.msra.mxu0 %v1520
    %1950 = vmatpush.bf16.msra.mxu0 %v1512
    %1951 = vmatpush.bf16.msra.mxu0 %v1504
    %1952 = vmatpush.bf16.msra.mxu0 %v1496
    %1953 = vmatpush.bf16.msra.mxu0 %v1488
    %1954 = vmatpush.bf16.msra.mxu0 %v1480
    %1955 = vmatmul.bf16.gmra.mxu0 %v459
    %v1956 = vpop.f32.mrf.mxu0
    %v1957 = vadd.f32 %v1908, %v1956
    %v1958 = vpop.f32.mrf.mxu0
    %v1959 = vadd.f32 %v1910, %v1958
    %1960 = vmatmul.bf16.gmra.mxu0 %v463
    %v1961 = vpop.f32.mrf.mxu0
    %v1962 = vadd.f32 %v1913, %v1961
    %v1963 = vpop.f32.mrf.mxu0
    %v1964 = vadd.f32 %v1915, %v1963
    %1965 = vmatmul.bf16.gmra.mxu0 %v467
    %v1966 = vpop.f32.mrf.mxu0
    %v1967 = vadd.f32 %v1918, %v1966
    %v1968 = vpop.f32.mrf.mxu0
    %v1969 = vadd.f32 %v1920, %v1968
    %1970 = vmatmul.bf16.gmra.mxu0 %v471
    %v1971 = vpop.f32.mrf.mxu0
    %v1972 = vadd.f32 %v1923, %v1971
    %v1973 = vpop.f32.mrf.mxu0
    %v1974 = vadd.f32 %v1925, %v1973
    %1975 = vmatmul.bf16.gmra.mxu0 %v475
    %v1976 = vpop.f32.mrf.mxu0
    %v1977 = vadd.f32 %v1928, %v1976
    %v1978 = vpop.f32.mrf.mxu0
    %v1979 = vadd.f32 %v1930, %v1978
    %1980 = vmatmul.bf16.gmra.mxu0 %v479
    %v1981 = vpop.f32.mrf.mxu0
    %v1982 = vadd.f32 %v1933, %v1981
    %v1983 = vpop.f32.mrf.mxu0
    %v1984 = vadd.f32 %v1935, %v1983
    %1985 = vmatmul.bf16.gmra.mxu0 %v483
    %v1986 = vpop.f32.mrf.mxu0
    %v1987 = vadd.f32 %v1938, %v1986
    %v1988 = vpop.f32.mrf.mxu0
    %v1989 = vadd.f32 %v1940, %v1988
    %1990 = vmatmul.bf16.gmra.mxu0 %v487
    %v1991 = vpop.f32.mrf.mxu0
    %v1992 = vadd.f32 %v1943, %v1991
    %v1993 = vpop.f32.mrf.mxu0
    %v1994 = vadd.f32 %v1945, %v1993
    %1995 = vdwg.mxu0
    %1996 = vmatpush.bf16.msra.mxu0 %v1345
    %1997 = vmatpush.bf16.msra.mxu0 %v1337
    %1998 = vmatpush.bf16.msra.mxu0 %v1329
    %1999 = vmatpush.bf16.msra.mxu0 %v1321
    %2000 = vmatpush.bf16.msra.mxu0 %v1313
    %2001 = vmatpush.bf16.msra.mxu0 %v1305
    %2002 = vmatpush.bf16.msra.mxu0 %v1297
    %2003 = vmatpush.bf16.msra.mxu0 %v1289
    %2004 = vmatmul.bf16.gmra.mxu0 %v456
    %v2005 = vpop.f32.mrf.mxu0
    %v2006 = vadd.f32 %v345, %v2005
    %v2007 = vpop.f32.mrf.mxu0
    %v2008 = vadd.f32 %v345, %v2007
    %2009 = vmatmul.bf16.gmra.mxu0 %v460
    %v2010 = vpop.f32.mrf.mxu0
    %v2011 = vadd.f32 %v345, %v2010
    %v2012 = vpop.f32.mrf.mxu0
    %v2013 = vadd.f32 %v345, %v2012
    %2014 = vmatmul.bf16.gmra.mxu0 %v464
    %v2015 = vpop.f32.mrf.mxu0
    %v2016 = vadd.f32 %v345, %v2015
    %v2017 = vpop.f32.mrf.mxu0
    %v2018 = vadd.f32 %v345, %v2017
    %2019 = vmatmul.bf16.gmra.mxu0 %v468
    %v2020 = vpop.f32.mrf.mxu0
    %v2021 = vadd.f32 %v345, %v2020
    %v2022 = vpop.f32.mrf.mxu0
    %v2023 = vadd.f32 %v345, %v2022
    %2024 = vmatmul.bf16.gmra.mxu0 %v472
    %v2025 = vpop.f32.mrf.mxu0
    %v2026 = vadd.f32 %v345, %v2025
    %v2027 = vpop.f32.mrf.mxu0
    %v2028 = vadd.f32 %v345, %v2027
    %2029 = vmatmul.bf16.gmra.mxu0 %v476
    %v2030 = vpop.f32.mrf.mxu0
    %v2031 = vadd.f32 %v345, %v2030
    %v2032 = vpop.f32.mrf.mxu0
    %v2033 = vadd.f32 %v345, %v2032
    %2034 = vmatmul.bf16.gmra.mxu0 %v480
    %v2035 = vpop.f32.mrf.mxu0
    %v2036 = vadd.f32 %v345, %v2035
    %v2037 = vpop.f32.mrf.mxu0
    %v2038 = vadd.f32 %v345, %v2037
    %2039 = vmatmul.bf16.gmra.mxu0 %v484
    %v2040 = vpop.f32.mrf.mxu0
    %v2041 = vadd.f32 %v345, %v2040
    %v2042 = vpop.f32.mrf.mxu0
    %v2043 = vadd.f32 %v345, %v2042
    %2044 = vdwg.mxu0
    %2045 = vmatpush.bf16.msra.mxu0 %v1409
    %2046 = vmatpush.bf16.msra.mxu0 %v1401
    %2047 = vmatpush.bf16.msra.mxu0 %v1393
    %2048 = vmatpush.bf16.msra.mxu0 %v1385
    %2049 = vmatpush.bf16.msra.mxu0 %v1377
    %2050 = vmatpush.bf16.msra.mxu0 %v1369
    %2051 = vmatpush.bf16.msra.mxu0 %v1361
    %2052 = vmatpush.bf16.msra.mxu0 %v1353
    %2053 = vmatmul.bf16.gmra.mxu0 %v457
    %v2054 = vpop.f32.mrf.mxu0
    %v2055 = vadd.f32 %v2006, %v2054
    %v2056 = vpop.f32.mrf.mxu0
    %v2057 = vadd.f32 %v2008, %v2056
    %2058 = vmatmul.bf16.gmra.mxu0 %v461
    %v2059 = vpop.f32.mrf.mxu0
    %v2060 = vadd.f32 %v2011, %v2059
    %v2061 = vpop.f32.mrf.mxu0
    %v2062 = vadd.f32 %v2013, %v2061
    %2063 = vmatmul.bf16.gmra.mxu0 %v465
    %v2064 = vpop.f32.mrf.mxu0
    %v2065 = vadd.f32 %v2016, %v2064
    %v2066 = vpop.f32.mrf.mxu0
    %v2067 = vadd.f32 %v2018, %v2066
    %2068 = vmatmul.bf16.gmra.mxu0 %v469
    %v2069 = vpop.f32.mrf.mxu0
    %v2070 = vadd.f32 %v2021, %v2069
    %v2071 = vpop.f32.mrf.mxu0
    %v2072 = vadd.f32 %v2023, %v2071
    %2073 = vmatmul.bf16.gmra.mxu0 %v473
    %v2074 = vpop.f32.mrf.mxu0
    %v2075 = vadd.f32 %v2026, %v2074
    %v2076 = vpop.f32.mrf.mxu0
    %v2077 = vadd.f32 %v2028, %v2076
    %2078 = vmatmul.bf16.gmra.mxu0 %v477
    %v2079 = vpop.f32.mrf.mxu0
    %v2080 = vadd.f32 %v2031, %v2079
    %v2081 = vpop.f32.mrf.mxu0
    %v2082 = vadd.f32 %v2033, %v2081
    %2083 = vmatmul.bf16.gmra.mxu0 %v481
    %v2084 = vpop.f32.mrf.mxu0
    %v2085 = vadd.f32 %v2036, %v2084
    %v2086 = vpop.f32.mrf.mxu0
    %v2087 = vadd.f32 %v2038, %v2086
    %2088 = vmatmul.bf16.gmra.mxu0 %v485
    %v2089 = vpop.f32.mrf.mxu0
    %v2090 = vadd.f32 %v2041, %v2089
    %v2091 = vpop.f32.mrf.mxu0
    %v2092 = vadd.f32 %v2043, %v2091
    %2093 = vdwg.mxu0
    %2094 = vmatpush.bf16.msra.mxu0 %v1473
    %2095 = vmatpush.bf16.msra.mxu0 %v1465
    %2096 = vmatpush.bf16.msra.mxu0 %v1457
    %2097 = vmatpush.bf16.msra.mxu0 %v1449
    %2098 = vmatpush.bf16.msra.mxu0 %v1441
    %2099 = vmatpush.bf16.msra.mxu0 %v1433
    %2100 = vmatpush.bf16.msra.mxu0 %v1425
    %2101 = vmatpush.bf16.msra.mxu0 %v1417
    %2102 = vmatmul.bf16.gmra.mxu0 %v458
    %v2103 = vpop.f32.mrf.mxu0
    %v2104 = vadd.f32 %v2055, %v2103
    %v2105 = vpop.f32.mrf.mxu0
    %v2106 = vadd.f32 %v2057, %v2105
    %2107 = vmatmul.bf16.gmra.mxu0 %v462
    %v2108 = vpop.f32.mrf.mxu0
    %v2109 = vadd.f32 %v2060, %v2108
    %v2110 = vpop.f32.mrf.mxu0
    %v2111 = vadd.f32 %v2062, %v2110
    %2112 = vmatmul.bf16.gmra.mxu0 %v466
    %v2113 = vpop.f32.mrf.mxu0
    %v2114 = vadd.f32 %v2065, %v2113
    %v2115 = vpop.f32.mrf.mxu0
    %v2116 = vadd.f32 %v2067, %v2115
    %2117 = vmatmul.bf16.gmra.mxu0 %v470
    %v2118 = vpop.f32.mrf.mxu0
    %v2119 = vadd.f32 %v2070, %v2118
    %v2120 = vpop.f32.mrf.mxu0
    %v2121 = vadd.f32 %v2072, %v2120
    %2122 = vmatmul.bf16.gmra.mxu0 %v474
    %v2123 = vpop.f32.mrf.mxu0
    %v2124 = vadd.f32 %v2075, %v2123
    %v2125 = vpop.f32.mrf.mxu0
    %v2126 = vadd.f32 %v2077, %v2125
    %2127 = vmatmul.bf16.gmra.mxu0 %v478
    %v2128 = vpop.f32.mrf.mxu0
    %v2129 = vadd.f32 %v2080, %v2128
    %v2130 = vpop.f32.mrf.mxu0
    %v2131 = vadd.f32 %v2082, %v2130
    %2132 = vmatmul.bf16.gmra.mxu0 %v482
    %v2133 = vpop.f32.mrf.mxu0
    %v2134 = vadd.f32 %v2085, %v2133
    %v2135 = vpop.f32.mrf.mxu0
    %v2136 = vadd.f32 %v2087, %v2135
    %2137 = vmatmul.bf16.gmra.mxu0 %v486
    %v2138 = vpop.f32.mrf.mxu0
    %v2139 = vadd.f32 %v2090, %v2138
    %v2140 = vpop.f32.mrf.mxu0
    %v2141 = vadd.f32 %v2092, %v2140
    %2142 = vdwg.mxu0
    %2143 = vmatpush.bf16.msra.mxu0 %v1537
    %2144 = vmatpush.bf16.msra.mxu0 %v1529
    %2145 = vmatpush.bf16.msra.mxu0 %v1521
    %2146 = vmatpush.bf16.msra.mxu0 %v1513
    %2147 = vmatpush.bf16.msra.mxu0 %v1505
    %2148 = vmatpush.bf16.msra.mxu0 %v1497
    %2149 = vmatpush.bf16.msra.mxu0 %v1489
    %2150 = vmatpush.bf16.msra.mxu0 %v1481
    %2151 = vmatmul.bf16.gmra.mxu0 %v459
    %v2152 = vpop.f32.mrf.mxu0
    %v2153 = vadd.f32 %v2104, %v2152
    %v2154 = vpop.f32.mrf.mxu0
    %v2155 = vadd.f32 %v2106, %v2154
    %2156 = vmatmul.bf16.gmra.mxu0 %v463
    %v2157 = vpop.f32.mrf.mxu0
    %v2158 = vadd.f32 %v2109, %v2157
    %v2159 = vpop.f32.mrf.mxu0
    %v2160 = vadd.f32 %v2111, %v2159
    %2161 = vmatmul.bf16.gmra.mxu0 %v467
    %v2162 = vpop.f32.mrf.mxu0
    %v2163 = vadd.f32 %v2114, %v2162
    %v2164 = vpop.f32.mrf.mxu0
    %v2165 = vadd.f32 %v2116, %v2164
    %2166 = vmatmul.bf16.gmra.mxu0 %v471
    %v2167 = vpop.f32.mrf.mxu0
    %v2168 = vadd.f32 %v2119, %v2167
    %v2169 = vpop.f32.mrf.mxu0
    %v2170 = vadd.f32 %v2121, %v2169
    %2171 = vmatmul.bf16.gmra.mxu0 %v475
    %v2172 = vpop.f32.mrf.mxu0
    %v2173 = vadd.f32 %v2124, %v2172
    %v2174 = vpop.f32.mrf.mxu0
    %v2175 = vadd.f32 %v2126, %v2174
    %2176 = vmatmul.bf16.gmra.mxu0 %v479
    %v2177 = vpop.f32.mrf.mxu0
    %v2178 = vadd.f32 %v2129, %v2177
    %v2179 = vpop.f32.mrf.mxu0
    %v2180 = vadd.f32 %v2131, %v2179
    %2181 = vmatmul.bf16.gmra.mxu0 %v483
    %v2182 = vpop.f32.mrf.mxu0
    %v2183 = vadd.f32 %v2134, %v2182
    %v2184 = vpop.f32.mrf.mxu0
    %v2185 = vadd.f32 %v2136, %v2184
    %2186 = vmatmul.bf16.gmra.mxu0 %v487
    %v2187 = vpop.f32.mrf.mxu0
    %v2188 = vadd.f32 %v2139, %v2187
    %v2189 = vpop.f32.mrf.mxu0
    %v2190 = vadd.f32 %v2141, %v2189
    %2191 = vdwg.mxu0
    %2192 = vmatpush.bf16.msra.mxu0 %v1346
    %2193 = vmatpush.bf16.msra.mxu0 %v1338
    %2194 = vmatpush.bf16.msra.mxu0 %v1330
    %2195 = vmatpush.bf16.msra.mxu0 %v1322
    %2196 = vmatpush.bf16.msra.mxu0 %v1314
    %2197 = vmatpush.bf16.msra.mxu0 %v1306
    %2198 = vmatpush.bf16.msra.mxu0 %v1298
    %2199 = vmatpush.bf16.msra.mxu0 %v1290
    %2200 = vmatmul.bf16.gmra.mxu0 %v456
    %v2201 = vpop.f32.mrf.mxu0
    %v2202 = vadd.f32 %v346, %v2201
    %v2203 = vpop.f32.mrf.mxu0
    %v2204 = vadd.f32 %v346, %v2203
    %2205 = vmatmul.bf16.gmra.mxu0 %v460
    %v2206 = vpop.f32.mrf.mxu0
    %v2207 = vadd.f32 %v346, %v2206
    %v2208 = vpop.f32.mrf.mxu0
    %v2209 = vadd.f32 %v346, %v2208
    %2210 = vmatmul.bf16.gmra.mxu0 %v464
    %v2211 = vpop.f32.mrf.mxu0
    %v2212 = vadd.f32 %v346, %v2211
    %v2213 = vpop.f32.mrf.mxu0
    %v2214 = vadd.f32 %v346, %v2213
    %2215 = vmatmul.bf16.gmra.mxu0 %v468
    %v2216 = vpop.f32.mrf.mxu0
    %v2217 = vadd.f32 %v346, %v2216
    %v2218 = vpop.f32.mrf.mxu0
    %v2219 = vadd.f32 %v346, %v2218
    %2220 = vmatmul.bf16.gmra.mxu0 %v472
    %v2221 = vpop.f32.mrf.mxu0
    %v2222 = vadd.f32 %v346, %v2221
    %v2223 = vpop.f32.mrf.mxu0
    %v2224 = vadd.f32 %v346, %v2223
    %2225 = vmatmul.bf16.gmra.mxu0 %v476
    %v2226 = vpop.f32.mrf.mxu0
    %v2227 = vadd.f32 %v346, %v2226
    %v2228 = vpop.f32.mrf.mxu0
    %v2229 = vadd.f32 %v346, %v2228
    %2230 = vmatmul.bf16.gmra.mxu0 %v480
    %v2231 = vpop.f32.mrf.mxu0
    %v2232 = vadd.f32 %v346, %v2231
    %v2233 = vpop.f32.mrf.mxu0
    %v2234 = vadd.f32 %v346, %v2233
    %2235 = vmatmul.bf16.gmra.mxu0 %v484
    %v2236 = vpop.f32.mrf.mxu0
    %v2237 = vadd.f32 %v346, %v2236
    %v2238 = vpop.f32.mrf.mxu0
    %v2239 = vadd.f32 %v346, %v2238
    %2240 = vdwg.mxu0
    %2241 = vmatpush.bf16.msra.mxu0 %v1410
    %2242 = vmatpush.bf16.msra.mxu0 %v1402
    %2243 = vmatpush.bf16.msra.mxu0 %v1394
    %2244 = vmatpush.bf16.msra.mxu0 %v1386
    %2245 = vmatpush.bf16.msra.mxu0 %v1378
    %2246 = vmatpush.bf16.msra.mxu0 %v1370
    %2247 = vmatpush.bf16.msra.mxu0 %v1362
    %2248 = vmatpush.bf16.msra.mxu0 %v1354
    %2249 = vmatmul.bf16.gmra.mxu0 %v457
    %v2250 = vpop.f32.mrf.mxu0
    %v2251 = vadd.f32 %v2202, %v2250
    %v2252 = vpop.f32.mrf.mxu0
    %v2253 = vadd.f32 %v2204, %v2252
    %2254 = vmatmul.bf16.gmra.mxu0 %v461
    %v2255 = vpop.f32.mrf.mxu0
    %v2256 = vadd.f32 %v2207, %v2255
    %v2257 = vpop.f32.mrf.mxu0
    %v2258 = vadd.f32 %v2209, %v2257
    %2259 = vmatmul.bf16.gmra.mxu0 %v465
    %v2260 = vpop.f32.mrf.mxu0
    %v2261 = vadd.f32 %v2212, %v2260
    %v2262 = vpop.f32.mrf.mxu0
    %v2263 = vadd.f32 %v2214, %v2262
    %2264 = vmatmul.bf16.gmra.mxu0 %v469
    %v2265 = vpop.f32.mrf.mxu0
    %v2266 = vadd.f32 %v2217, %v2265
    %v2267 = vpop.f32.mrf.mxu0
    %v2268 = vadd.f32 %v2219, %v2267
    %2269 = vmatmul.bf16.gmra.mxu0 %v473
    %v2270 = vpop.f32.mrf.mxu0
    %v2271 = vadd.f32 %v2222, %v2270
    %v2272 = vpop.f32.mrf.mxu0
    %v2273 = vadd.f32 %v2224, %v2272
    %2274 = vmatmul.bf16.gmra.mxu0 %v477
    %v2275 = vpop.f32.mrf.mxu0
    %v2276 = vadd.f32 %v2227, %v2275
    %v2277 = vpop.f32.mrf.mxu0
    %v2278 = vadd.f32 %v2229, %v2277
    %2279 = vmatmul.bf16.gmra.mxu0 %v481
    %v2280 = vpop.f32.mrf.mxu0
    %v2281 = vadd.f32 %v2232, %v2280
    %v2282 = vpop.f32.mrf.mxu0
    %v2283 = vadd.f32 %v2234, %v2282
    %2284 = vmatmul.bf16.gmra.mxu0 %v485
    %v2285 = vpop.f32.mrf.mxu0
    %v2286 = vadd.f32 %v2237, %v2285
    %v2287 = vpop.f32.mrf.mxu0
    %v2288 = vadd.f32 %v2239, %v2287
    %2289 = vdwg.mxu0
    %2290 = vmatpush.bf16.msra.mxu0 %v1474
    %2291 = vmatpush.bf16.msra.mxu0 %v1466
    %2292 = vmatpush.bf16.msra.mxu0 %v1458
    %2293 = vmatpush.bf16.msra.mxu0 %v1450
    %2294 = vmatpush.bf16.msra.mxu0 %v1442
    %2295 = vmatpush.bf16.msra.mxu0 %v1434
    %2296 = vmatpush.bf16.msra.mxu0 %v1426
    %2297 = vmatpush.bf16.msra.mxu0 %v1418
    %2298 = vmatmul.bf16.gmra.mxu0 %v458
    %v2299 = vpop.f32.mrf.mxu0
    %v2300 = vadd.f32 %v2251, %v2299
    %v2301 = vpop.f32.mrf.mxu0
    %v2302 = vadd.f32 %v2253, %v2301
    %2303 = vmatmul.bf16.gmra.mxu0 %v462
    %v2304 = vpop.f32.mrf.mxu0
    %v2305 = vadd.f32 %v2256, %v2304
    %v2306 = vpop.f32.mrf.mxu0
    %v2307 = vadd.f32 %v2258, %v2306
    %2308 = vmatmul.bf16.gmra.mxu0 %v466
    %v2309 = vpop.f32.mrf.mxu0
    %v2310 = vadd.f32 %v2261, %v2309
    %v2311 = vpop.f32.mrf.mxu0
    %v2312 = vadd.f32 %v2263, %v2311
    %2313 = vmatmul.bf16.gmra.mxu0 %v470
    %v2314 = vpop.f32.mrf.mxu0
    %v2315 = vadd.f32 %v2266, %v2314
    %v2316 = vpop.f32.mrf.mxu0
    %v2317 = vadd.f32 %v2268, %v2316
    %2318 = vmatmul.bf16.gmra.mxu0 %v474
    %v2319 = vpop.f32.mrf.mxu0
    %v2320 = vadd.f32 %v2271, %v2319
    %v2321 = vpop.f32.mrf.mxu0
    %v2322 = vadd.f32 %v2273, %v2321
    %2323 = vmatmul.bf16.gmra.mxu0 %v478
    %v2324 = vpop.f32.mrf.mxu0
    %v2325 = vadd.f32 %v2276, %v2324
    %v2326 = vpop.f32.mrf.mxu0
    %v2327 = vadd.f32 %v2278, %v2326
    %2328 = vmatmul.bf16.gmra.mxu0 %v482
    %v2329 = vpop.f32.mrf.mxu0
    %v2330 = vadd.f32 %v2281, %v2329
    %v2331 = vpop.f32.mrf.mxu0
    %v2332 = vadd.f32 %v2283, %v2331
    %2333 = vmatmul.bf16.gmra.mxu0 %v486
    %v2334 = vpop.f32.mrf.mxu0
    %v2335 = vadd.f32 %v2286, %v2334
    %v2336 = vpop.f32.mrf.mxu0
    %v2337 = vadd.f32 %v2288, %v2336
    %2338 = vdwg.mxu0
    %2339 = vmatpush.bf16.msra.mxu0 %v1538
    %2340 = vmatpush.bf16.msra.mxu0 %v1530
    %2341 = vmatpush.bf16.msra.mxu0 %v1522
    %2342 = vmatpush.bf16.msra.mxu0 %v1514
    %2343 = vmatpush.bf16.msra.mxu0 %v1506
    %2344 = vmatpush.bf16.msra.mxu0 %v1498
    %2345 = vmatpush.bf16.msra.mxu0 %v1490
    %2346 = vmatpush.bf16.msra.mxu0 %v1482
    %2347 = vmatmul.bf16.gmra.mxu0 %v459
    %v2348 = vpop.f32.mrf.mxu0
    %v2349 = vadd.f32 %v2300, %v2348
    %v2350 = vpop.f32.mrf.mxu0
    %v2351 = vadd.f32 %v2302, %v2350
    %2352 = vmatmul.bf16.gmra.mxu0 %v463
    %v2353 = vpop.f32.mrf.mxu0
    %v2354 = vadd.f32 %v2305, %v2353
    %v2355 = vpop.f32.mrf.mxu0
    %v2356 = vadd.f32 %v2307, %v2355
    %2357 = vmatmul.bf16.gmra.mxu0 %v467
    %v2358 = vpop.f32.mrf.mxu0
    %v2359 = vadd.f32 %v2310, %v2358
    %v2360 = vpop.f32.mrf.mxu0
    %v2361 = vadd.f32 %v2312, %v2360
    %2362 = vmatmul.bf16.gmra.mxu0 %v471
    %v2363 = vpop.f32.mrf.mxu0
    %v2364 = vadd.f32 %v2315, %v2363
    %v2365 = vpop.f32.mrf.mxu0
    %v2366 = vadd.f32 %v2317, %v2365
    %2367 = vmatmul.bf16.gmra.mxu0 %v475
    %v2368 = vpop.f32.mrf.mxu0
    %v2369 = vadd.f32 %v2320, %v2368
    %v2370 = vpop.f32.mrf.mxu0
    %v2371 = vadd.f32 %v2322, %v2370
    %2372 = vmatmul.bf16.gmra.mxu0 %v479
    %v2373 = vpop.f32.mrf.mxu0
    %v2374 = vadd.f32 %v2325, %v2373
    %v2375 = vpop.f32.mrf.mxu0
    %v2376 = vadd.f32 %v2327, %v2375
    %2377 = vmatmul.bf16.gmra.mxu0 %v483
    %v2378 = vpop.f32.mrf.mxu0
    %v2379 = vadd.f32 %v2330, %v2378
    %v2380 = vpop.f32.mrf.mxu0
    %v2381 = vadd.f32 %v2332, %v2380
    %2382 = vmatmul.bf16.gmra.mxu0 %v487
    %v2383 = vpop.f32.mrf.mxu0
    %v2384 = vadd.f32 %v2335, %v2383
    %v2385 = vpop.f32.mrf.mxu0
    %v2386 = vadd.f32 %v2337, %v2385
    %2387 = vdwg.mxu0
    %2388 = vmatpush.bf16.msra.mxu0 %v1347
    %2389 = vmatpush.bf16.msra.mxu0 %v1339
    %2390 = vmatpush.bf16.msra.mxu0 %v1331
    %2391 = vmatpush.bf16.msra.mxu0 %v1323
    %2392 = vmatpush.bf16.msra.mxu0 %v1315
    %2393 = vmatpush.bf16.msra.mxu0 %v1307
    %2394 = vmatpush.bf16.msra.mxu0 %v1299
    %2395 = vmatpush.bf16.msra.mxu0 %v1291
    %2396 = vmatmul.bf16.gmra.mxu0 %v456
    %v2397 = vpop.f32.mrf.mxu0
    %v2398 = vadd.f32 %v347, %v2397
    %v2399 = vpop.f32.mrf.mxu0
    %v2400 = vadd.f32 %v347, %v2399
    %2401 = vmatmul.bf16.gmra.mxu0 %v460
    %v2402 = vpop.f32.mrf.mxu0
    %v2403 = vadd.f32 %v347, %v2402
    %v2404 = vpop.f32.mrf.mxu0
    %v2405 = vadd.f32 %v347, %v2404
    %2406 = vmatmul.bf16.gmra.mxu0 %v464
    %v2407 = vpop.f32.mrf.mxu0
    %v2408 = vadd.f32 %v347, %v2407
    %v2409 = vpop.f32.mrf.mxu0
    %v2410 = vadd.f32 %v347, %v2409
    %2411 = vmatmul.bf16.gmra.mxu0 %v468
    %v2412 = vpop.f32.mrf.mxu0
    %v2413 = vadd.f32 %v347, %v2412
    %v2414 = vpop.f32.mrf.mxu0
    %v2415 = vadd.f32 %v347, %v2414
    %2416 = vmatmul.bf16.gmra.mxu0 %v472
    %v2417 = vpop.f32.mrf.mxu0
    %v2418 = vadd.f32 %v347, %v2417
    %v2419 = vpop.f32.mrf.mxu0
    %v2420 = vadd.f32 %v347, %v2419
    %2421 = vmatmul.bf16.gmra.mxu0 %v476
    %v2422 = vpop.f32.mrf.mxu0
    %v2423 = vadd.f32 %v347, %v2422
    %v2424 = vpop.f32.mrf.mxu0
    %v2425 = vadd.f32 %v347, %v2424
    %2426 = vmatmul.bf16.gmra.mxu0 %v480
    %v2427 = vpop.f32.mrf.mxu0
    %v2428 = vadd.f32 %v347, %v2427
    %v2429 = vpop.f32.mrf.mxu0
    %v2430 = vadd.f32 %v347, %v2429
    %2431 = vmatmul.bf16.gmra.mxu0 %v484
    %v2432 = vpop.f32.mrf.mxu0
    %v2433 = vadd.f32 %v347, %v2432
    %v2434 = vpop.f32.mrf.mxu0
    %v2435 = vadd.f32 %v347, %v2434
    %2436 = vdwg.mxu0
    %2437 = vmatpush.bf16.msra.mxu0 %v1411
    %2438 = vmatpush.bf16.msra.mxu0 %v1403
    %2439 = vmatpush.bf16.msra.mxu0 %v1395
    %2440 = vmatpush.bf16.msra.mxu0 %v1387
    %2441 = vmatpush.bf16.msra.mxu0 %v1379
    %2442 = vmatpush.bf16.msra.mxu0 %v1371
    %2443 = vmatpush.bf16.msra.mxu0 %v1363
    %2444 = vmatpush.bf16.msra.mxu0 %v1355
    %2445 = vmatmul.bf16.gmra.mxu0 %v457
    %v2446 = vpop.f32.mrf.mxu0
    %v2447 = vadd.f32 %v2398, %v2446
    %v2448 = vpop.f32.mrf.mxu0
    %v2449 = vadd.f32 %v2400, %v2448
    %2450 = vmatmul.bf16.gmra.mxu0 %v461
    %v2451 = vpop.f32.mrf.mxu0
    %v2452 = vadd.f32 %v2403, %v2451
    %v2453 = vpop.f32.mrf.mxu0
    %v2454 = vadd.f32 %v2405, %v2453
    %2455 = vmatmul.bf16.gmra.mxu0 %v465
    %v2456 = vpop.f32.mrf.mxu0
    %v2457 = vadd.f32 %v2408, %v2456
    %v2458 = vpop.f32.mrf.mxu0
    %v2459 = vadd.f32 %v2410, %v2458
    %2460 = vmatmul.bf16.gmra.mxu0 %v469
    %v2461 = vpop.f32.mrf.mxu0
    %v2462 = vadd.f32 %v2413, %v2461
    %v2463 = vpop.f32.mrf.mxu0
    %v2464 = vadd.f32 %v2415, %v2463
    %2465 = vmatmul.bf16.gmra.mxu0 %v473
    %v2466 = vpop.f32.mrf.mxu0
    %v2467 = vadd.f32 %v2418, %v2466
    %v2468 = vpop.f32.mrf.mxu0
    %v2469 = vadd.f32 %v2420, %v2468
    %2470 = vmatmul.bf16.gmra.mxu0 %v477
    %v2471 = vpop.f32.mrf.mxu0
    %v2472 = vadd.f32 %v2423, %v2471
    %v2473 = vpop.f32.mrf.mxu0
    %v2474 = vadd.f32 %v2425, %v2473
    %2475 = vmatmul.bf16.gmra.mxu0 %v481
    %v2476 = vpop.f32.mrf.mxu0
    %v2477 = vadd.f32 %v2428, %v2476
    %v2478 = vpop.f32.mrf.mxu0
    %v2479 = vadd.f32 %v2430, %v2478
    %2480 = vmatmul.bf16.gmra.mxu0 %v485
    %v2481 = vpop.f32.mrf.mxu0
    %v2482 = vadd.f32 %v2433, %v2481
    %v2483 = vpop.f32.mrf.mxu0
    %v2484 = vadd.f32 %v2435, %v2483
    %2485 = vdwg.mxu0
    %2486 = vmatpush.bf16.msra.mxu0 %v1475
    %2487 = vmatpush.bf16.msra.mxu0 %v1467
    %2488 = vmatpush.bf16.msra.mxu0 %v1459
    %2489 = vmatpush.bf16.msra.mxu0 %v1451
    %2490 = vmatpush.bf16.msra.mxu0 %v1443
    %2491 = vmatpush.bf16.msra.mxu0 %v1435
    %2492 = vmatpush.bf16.msra.mxu0 %v1427
    %2493 = vmatpush.bf16.msra.mxu0 %v1419
    %2494 = vmatmul.bf16.gmra.mxu0 %v458
    %v2495 = vpop.f32.mrf.mxu0
    %v2496 = vadd.f32 %v2447, %v2495
    %v2497 = vpop.f32.mrf.mxu0
    %v2498 = vadd.f32 %v2449, %v2497
    %2499 = vmatmul.bf16.gmra.mxu0 %v462
    %v2500 = vpop.f32.mrf.mxu0
    %v2501 = vadd.f32 %v2452, %v2500
    %v2502 = vpop.f32.mrf.mxu0
    %v2503 = vadd.f32 %v2454, %v2502
    %2504 = vmatmul.bf16.gmra.mxu0 %v466
    %v2505 = vpop.f32.mrf.mxu0
    %v2506 = vadd.f32 %v2457, %v2505
    %v2507 = vpop.f32.mrf.mxu0
    %v2508 = vadd.f32 %v2459, %v2507
    %2509 = vmatmul.bf16.gmra.mxu0 %v470
    %v2510 = vpop.f32.mrf.mxu0
    %v2511 = vadd.f32 %v2462, %v2510
    %v2512 = vpop.f32.mrf.mxu0
    %v2513 = vadd.f32 %v2464, %v2512
    %2514 = vmatmul.bf16.gmra.mxu0 %v474
    %v2515 = vpop.f32.mrf.mxu0
    %v2516 = vadd.f32 %v2467, %v2515
    %v2517 = vpop.f32.mrf.mxu0
    %v2518 = vadd.f32 %v2469, %v2517
    %2519 = vmatmul.bf16.gmra.mxu0 %v478
    %v2520 = vpop.f32.mrf.mxu0
    %v2521 = vadd.f32 %v2472, %v2520
    %v2522 = vpop.f32.mrf.mxu0
    %v2523 = vadd.f32 %v2474, %v2522
    %2524 = vmatmul.bf16.gmra.mxu0 %v482
    %v2525 = vpop.f32.mrf.mxu0
    %v2526 = vadd.f32 %v2477, %v2525
    %v2527 = vpop.f32.mrf.mxu0
    %v2528 = vadd.f32 %v2479, %v2527
    %2529 = vmatmul.bf16.gmra.mxu0 %v486
    %v2530 = vpop.f32.mrf.mxu0
    %v2531 = vadd.f32 %v2482, %v2530
    %v2532 = vpop.f32.mrf.mxu0
    %v2533 = vadd.f32 %v2484, %v2532
    %2534 = vdwg.mxu0
    %2535 = vmatpush.bf16.msra.mxu0 %v1539
    %2536 = vmatpush.bf16.msra.mxu0 %v1531
    %2537 = vmatpush.bf16.msra.mxu0 %v1523
    %2538 = vmatpush.bf16.msra.mxu0 %v1515
    %2539 = vmatpush.bf16.msra.mxu0 %v1507
    %2540 = vmatpush.bf16.msra.mxu0 %v1499
    %2541 = vmatpush.bf16.msra.mxu0 %v1491
    %2542 = vmatpush.bf16.msra.mxu0 %v1483
    %2543 = vmatmul.bf16.gmra.mxu0 %v459
    %v2544 = vpop.f32.mrf.mxu0
    %v2545 = vadd.f32 %v2496, %v2544
    %v2546 = vpop.f32.mrf.mxu0
    %v2547 = vadd.f32 %v2498, %v2546
    %2548 = vmatmul.bf16.gmra.mxu0 %v463
    %v2549 = vpop.f32.mrf.mxu0
    %v2550 = vadd.f32 %v2501, %v2549
    %v2551 = vpop.f32.mrf.mxu0
    %v2552 = vadd.f32 %v2503, %v2551
    %2553 = vmatmul.bf16.gmra.mxu0 %v467
    %v2554 = vpop.f32.mrf.mxu0
    %v2555 = vadd.f32 %v2506, %v2554
    %v2556 = vpop.f32.mrf.mxu0
    %v2557 = vadd.f32 %v2508, %v2556
    %2558 = vmatmul.bf16.gmra.mxu0 %v471
    %v2559 = vpop.f32.mrf.mxu0
    %v2560 = vadd.f32 %v2511, %v2559
    %v2561 = vpop.f32.mrf.mxu0
    %v2562 = vadd.f32 %v2513, %v2561
    %2563 = vmatmul.bf16.gmra.mxu0 %v475
    %v2564 = vpop.f32.mrf.mxu0
    %v2565 = vadd.f32 %v2516, %v2564
    %v2566 = vpop.f32.mrf.mxu0
    %v2567 = vadd.f32 %v2518, %v2566
    %2568 = vmatmul.bf16.gmra.mxu0 %v479
    %v2569 = vpop.f32.mrf.mxu0
    %v2570 = vadd.f32 %v2521, %v2569
    %v2571 = vpop.f32.mrf.mxu0
    %v2572 = vadd.f32 %v2523, %v2571
    %2573 = vmatmul.bf16.gmra.mxu0 %v483
    %v2574 = vpop.f32.mrf.mxu0
    %v2575 = vadd.f32 %v2526, %v2574
    %v2576 = vpop.f32.mrf.mxu0
    %v2577 = vadd.f32 %v2528, %v2576
    %2578 = vmatmul.bf16.gmra.mxu0 %v487
    %v2579 = vpop.f32.mrf.mxu0
    %v2580 = vadd.f32 %v2531, %v2579
    %v2581 = vpop.f32.mrf.mxu0
    %v2582 = vadd.f32 %v2533, %v2581
    %2583 = vdwg.mxu0
    %2584 = vmatpush.bf16.msra.mxu0 %v1348
    %2585 = vmatpush.bf16.msra.mxu0 %v1340
    %2586 = vmatpush.bf16.msra.mxu0 %v1332
    %2587 = vmatpush.bf16.msra.mxu0 %v1324
    %2588 = vmatpush.bf16.msra.mxu0 %v1316
    %2589 = vmatpush.bf16.msra.mxu0 %v1308
    %2590 = vmatpush.bf16.msra.mxu0 %v1300
    %2591 = vmatpush.bf16.msra.mxu0 %v1292
    %2592 = vmatmul.bf16.gmra.mxu0 %v456
    %v2593 = vpop.f32.mrf.mxu0
    %v2594 = vadd.f32 %v348, %v2593
    %v2595 = vpop.f32.mrf.mxu0
    %v2596 = vadd.f32 %v348, %v2595
    %2597 = vmatmul.bf16.gmra.mxu0 %v460
    %v2598 = vpop.f32.mrf.mxu0
    %v2599 = vadd.f32 %v348, %v2598
    %v2600 = vpop.f32.mrf.mxu0
    %v2601 = vadd.f32 %v348, %v2600
    %2602 = vmatmul.bf16.gmra.mxu0 %v464
    %v2603 = vpop.f32.mrf.mxu0
    %v2604 = vadd.f32 %v348, %v2603
    %v2605 = vpop.f32.mrf.mxu0
    %v2606 = vadd.f32 %v348, %v2605
    %2607 = vmatmul.bf16.gmra.mxu0 %v468
    %v2608 = vpop.f32.mrf.mxu0
    %v2609 = vadd.f32 %v348, %v2608
    %v2610 = vpop.f32.mrf.mxu0
    %v2611 = vadd.f32 %v348, %v2610
    %2612 = vmatmul.bf16.gmra.mxu0 %v472
    %v2613 = vpop.f32.mrf.mxu0
    %v2614 = vadd.f32 %v348, %v2613
    %v2615 = vpop.f32.mrf.mxu0
    %v2616 = vadd.f32 %v348, %v2615
    %2617 = vmatmul.bf16.gmra.mxu0 %v476
    %v2618 = vpop.f32.mrf.mxu0
    %v2619 = vadd.f32 %v348, %v2618
    %v2620 = vpop.f32.mrf.mxu0
    %v2621 = vadd.f32 %v348, %v2620
    %2622 = vmatmul.bf16.gmra.mxu0 %v480
    %v2623 = vpop.f32.mrf.mxu0
    %v2624 = vadd.f32 %v348, %v2623
    %v2625 = vpop.f32.mrf.mxu0
    %v2626 = vadd.f32 %v348, %v2625
    %2627 = vmatmul.bf16.gmra.mxu0 %v484
    %v2628 = vpop.f32.mrf.mxu0
    %v2629 = vadd.f32 %v348, %v2628
    %v2630 = vpop.f32.mrf.mxu0
    %v2631 = vadd.f32 %v348, %v2630
    %2632 = vdwg.mxu0
    %2633 = vmatpush.bf16.msra.mxu0 %v1412
    %2634 = vmatpush.bf16.msra.mxu0 %v1404
    %2635 = vmatpush.bf16.msra.mxu0 %v1396
    %2636 = vmatpush.bf16.msra.mxu0 %v1388
    %2637 = vmatpush.bf16.msra.mxu0 %v1380
    %2638 = vmatpush.bf16.msra.mxu0 %v1372
    %2639 = vmatpush.bf16.msra.mxu0 %v1364
    %2640 = vmatpush.bf16.msra.mxu0 %v1356
    %2641 = vmatmul.bf16.gmra.mxu0 %v457
    %v2642 = vpop.f32.mrf.mxu0
    %v2643 = vadd.f32 %v2594, %v2642
    %v2644 = vpop.f32.mrf.mxu0
    %v2645 = vadd.f32 %v2596, %v2644
    %2646 = vmatmul.bf16.gmra.mxu0 %v461
    %v2647 = vpop.f32.mrf.mxu0
    %v2648 = vadd.f32 %v2599, %v2647
    %v2649 = vpop.f32.mrf.mxu0
    %v2650 = vadd.f32 %v2601, %v2649
    %2651 = vmatmul.bf16.gmra.mxu0 %v465
    %v2652 = vpop.f32.mrf.mxu0
    %v2653 = vadd.f32 %v2604, %v2652
    %v2654 = vpop.f32.mrf.mxu0
    %v2655 = vadd.f32 %v2606, %v2654
    %2656 = vmatmul.bf16.gmra.mxu0 %v469
    %v2657 = vpop.f32.mrf.mxu0
    %v2658 = vadd.f32 %v2609, %v2657
    %v2659 = vpop.f32.mrf.mxu0
    %v2660 = vadd.f32 %v2611, %v2659
    %2661 = vmatmul.bf16.gmra.mxu0 %v473
    %v2662 = vpop.f32.mrf.mxu0
    %v2663 = vadd.f32 %v2614, %v2662
    %v2664 = vpop.f32.mrf.mxu0
    %v2665 = vadd.f32 %v2616, %v2664
    %2666 = vmatmul.bf16.gmra.mxu0 %v477
    %v2667 = vpop.f32.mrf.mxu0
    %v2668 = vadd.f32 %v2619, %v2667
    %v2669 = vpop.f32.mrf.mxu0
    %v2670 = vadd.f32 %v2621, %v2669
    %2671 = vmatmul.bf16.gmra.mxu0 %v481
    %v2672 = vpop.f32.mrf.mxu0
    %v2673 = vadd.f32 %v2624, %v2672
    %v2674 = vpop.f32.mrf.mxu0
    %v2675 = vadd.f32 %v2626, %v2674
    %2676 = vmatmul.bf16.gmra.mxu0 %v485
    %v2677 = vpop.f32.mrf.mxu0
    %v2678 = vadd.f32 %v2629, %v2677
    %v2679 = vpop.f32.mrf.mxu0
    %v2680 = vadd.f32 %v2631, %v2679
    %2681 = vdwg.mxu0
    %2682 = vmatpush.bf16.msra.mxu0 %v1476
    %2683 = vmatpush.bf16.msra.mxu0 %v1468
    %2684 = vmatpush.bf16.msra.mxu0 %v1460
    %2685 = vmatpush.bf16.msra.mxu0 %v1452
    %2686 = vmatpush.bf16.msra.mxu0 %v1444
    %2687 = vmatpush.bf16.msra.mxu0 %v1436
    %2688 = vmatpush.bf16.msra.mxu0 %v1428
    %2689 = vmatpush.bf16.msra.mxu0 %v1420
    %2690 = vmatmul.bf16.gmra.mxu0 %v458
    %v2691 = vpop.f32.mrf.mxu0
    %v2692 = vadd.f32 %v2643, %v2691
    %v2693 = vpop.f32.mrf.mxu0
    %v2694 = vadd.f32 %v2645, %v2693
    %2695 = vmatmul.bf16.gmra.mxu0 %v462
    %v2696 = vpop.f32.mrf.mxu0
    %v2697 = vadd.f32 %v2648, %v2696
    %v2698 = vpop.f32.mrf.mxu0
    %v2699 = vadd.f32 %v2650, %v2698
    %2700 = vmatmul.bf16.gmra.mxu0 %v466
    %v2701 = vpop.f32.mrf.mxu0
    %v2702 = vadd.f32 %v2653, %v2701
    %v2703 = vpop.f32.mrf.mxu0
    %v2704 = vadd.f32 %v2655, %v2703
    %2705 = vmatmul.bf16.gmra.mxu0 %v470
    %v2706 = vpop.f32.mrf.mxu0
    %v2707 = vadd.f32 %v2658, %v2706
    %v2708 = vpop.f32.mrf.mxu0
    %v2709 = vadd.f32 %v2660, %v2708
    %2710 = vmatmul.bf16.gmra.mxu0 %v474
    %v2711 = vpop.f32.mrf.mxu0
    %v2712 = vadd.f32 %v2663, %v2711
    %v2713 = vpop.f32.mrf.mxu0
    %v2714 = vadd.f32 %v2665, %v2713
    %2715 = vmatmul.bf16.gmra.mxu0 %v478
    %v2716 = vpop.f32.mrf.mxu0
    %v2717 = vadd.f32 %v2668, %v2716
    %v2718 = vpop.f32.mrf.mxu0
    %v2719 = vadd.f32 %v2670, %v2718
    %2720 = vmatmul.bf16.gmra.mxu0 %v482
    %v2721 = vpop.f32.mrf.mxu0
    %v2722 = vadd.f32 %v2673, %v2721
    %v2723 = vpop.f32.mrf.mxu0
    %v2724 = vadd.f32 %v2675, %v2723
    %2725 = vmatmul.bf16.gmra.mxu0 %v486
    %v2726 = vpop.f32.mrf.mxu0
    %v2727 = vadd.f32 %v2678, %v2726
    %v2728 = vpop.f32.mrf.mxu0
    %v2729 = vadd.f32 %v2680, %v2728
    %2730 = vdwg.mxu0
    %2731 = vmatpush.bf16.msra.mxu0 %v1540
    %2732 = vmatpush.bf16.msra.mxu0 %v1532
    %2733 = vmatpush.bf16.msra.mxu0 %v1524
    %2734 = vmatpush.bf16.msra.mxu0 %v1516
    %2735 = vmatpush.bf16.msra.mxu0 %v1508
    %2736 = vmatpush.bf16.msra.mxu0 %v1500
    %2737 = vmatpush.bf16.msra.mxu0 %v1492
    %2738 = vmatpush.bf16.msra.mxu0 %v1484
    %2739 = vmatmul.bf16.gmra.mxu0 %v459
    %v2740 = vpop.f32.mrf.mxu0
    %v2741 = vadd.f32 %v2692, %v2740
    %v2742 = vpop.f32.mrf.mxu0
    %v2743 = vadd.f32 %v2694, %v2742
    %2744 = vmatmul.bf16.gmra.mxu0 %v463
    %v2745 = vpop.f32.mrf.mxu0
    %v2746 = vadd.f32 %v2697, %v2745
    %v2747 = vpop.f32.mrf.mxu0
    %v2748 = vadd.f32 %v2699, %v2747
    %2749 = vmatmul.bf16.gmra.mxu0 %v467
    %v2750 = vpop.f32.mrf.mxu0
    %v2751 = vadd.f32 %v2702, %v2750
    %v2752 = vpop.f32.mrf.mxu0
    %v2753 = vadd.f32 %v2704, %v2752
    %2754 = vmatmul.bf16.gmra.mxu0 %v471
    %v2755 = vpop.f32.mrf.mxu0
    %v2756 = vadd.f32 %v2707, %v2755
    %v2757 = vpop.f32.mrf.mxu0
    %v2758 = vadd.f32 %v2709, %v2757
    %2759 = vmatmul.bf16.gmra.mxu0 %v475
    %v2760 = vpop.f32.mrf.mxu0
    %v2761 = vadd.f32 %v2712, %v2760
    %v2762 = vpop.f32.mrf.mxu0
    %v2763 = vadd.f32 %v2714, %v2762
    %2764 = vmatmul.bf16.gmra.mxu0 %v479
    %v2765 = vpop.f32.mrf.mxu0
    %v2766 = vadd.f32 %v2717, %v2765
    %v2767 = vpop.f32.mrf.mxu0
    %v2768 = vadd.f32 %v2719, %v2767
    %2769 = vmatmul.bf16.gmra.mxu0 %v483
    %v2770 = vpop.f32.mrf.mxu0
    %v2771 = vadd.f32 %v2722, %v2770
    %v2772 = vpop.f32.mrf.mxu0
    %v2773 = vadd.f32 %v2724, %v2772
    %2774 = vmatmul.bf16.gmra.mxu0 %v487
    %v2775 = vpop.f32.mrf.mxu0
    %v2776 = vadd.f32 %v2727, %v2775
    %v2777 = vpop.f32.mrf.mxu0
    %v2778 = vadd.f32 %v2729, %v2777
    %2779 = vdwg.mxu0
    %2780 = vmatpush.bf16.msra.mxu0 %v1349
    %2781 = vmatpush.bf16.msra.mxu0 %v1341
    %2782 = vmatpush.bf16.msra.mxu0 %v1333
    %2783 = vmatpush.bf16.msra.mxu0 %v1325
    %2784 = vmatpush.bf16.msra.mxu0 %v1317
    %2785 = vmatpush.bf16.msra.mxu0 %v1309
    %2786 = vmatpush.bf16.msra.mxu0 %v1301
    %2787 = vmatpush.bf16.msra.mxu0 %v1293
    %2788 = vmatmul.bf16.gmra.mxu0 %v456
    %v2789 = vpop.f32.mrf.mxu0
    %v2790 = vadd.f32 %v349, %v2789
    %v2791 = vpop.f32.mrf.mxu0
    %v2792 = vadd.f32 %v349, %v2791
    %2793 = vmatmul.bf16.gmra.mxu0 %v460
    %v2794 = vpop.f32.mrf.mxu0
    %v2795 = vadd.f32 %v349, %v2794
    %v2796 = vpop.f32.mrf.mxu0
    %v2797 = vadd.f32 %v349, %v2796
    %2798 = vmatmul.bf16.gmra.mxu0 %v464
    %v2799 = vpop.f32.mrf.mxu0
    %v2800 = vadd.f32 %v349, %v2799
    %v2801 = vpop.f32.mrf.mxu0
    %v2802 = vadd.f32 %v349, %v2801
    %2803 = vmatmul.bf16.gmra.mxu0 %v468
    %v2804 = vpop.f32.mrf.mxu0
    %v2805 = vadd.f32 %v349, %v2804
    %v2806 = vpop.f32.mrf.mxu0
    %v2807 = vadd.f32 %v349, %v2806
    %2808 = vmatmul.bf16.gmra.mxu0 %v472
    %v2809 = vpop.f32.mrf.mxu0
    %v2810 = vadd.f32 %v349, %v2809
    %v2811 = vpop.f32.mrf.mxu0
    %v2812 = vadd.f32 %v349, %v2811
    %2813 = vmatmul.bf16.gmra.mxu0 %v476
    %v2814 = vpop.f32.mrf.mxu0
    %v2815 = vadd.f32 %v349, %v2814
    %v2816 = vpop.f32.mrf.mxu0
    %v2817 = vadd.f32 %v349, %v2816
    %2818 = vmatmul.bf16.gmra.mxu0 %v480
    %v2819 = vpop.f32.mrf.mxu0
    %v2820 = vadd.f32 %v349, %v2819
    %v2821 = vpop.f32.mrf.mxu0
    %v2822 = vadd.f32 %v349, %v2821
    %2823 = vmatmul.bf16.gmra.mxu0 %v484
    %v2824 = vpop.f32.mrf.mxu0
    %v2825 = vadd.f32 %v349, %v2824
    %v2826 = vpop.f32.mrf.mxu0
    %v2827 = vadd.f32 %v349, %v2826
    %2828 = vdwg.mxu0
    %2829 = vmatpush.bf16.msra.mxu0 %v1413
    %2830 = vmatpush.bf16.msra.mxu0 %v1405
    %2831 = vmatpush.bf16.msra.mxu0 %v1397
    %2832 = vmatpush.bf16.msra.mxu0 %v1389
    %2833 = vmatpush.bf16.msra.mxu0 %v1381
    %2834 = vmatpush.bf16.msra.mxu0 %v1373
    %2835 = vmatpush.bf16.msra.mxu0 %v1365
    %2836 = vmatpush.bf16.msra.mxu0 %v1357
    %2837 = vmatmul.bf16.gmra.mxu0 %v457
    %v2838 = vpop.f32.mrf.mxu0
    %v2839 = vadd.f32 %v2790, %v2838
    %v2840 = vpop.f32.mrf.mxu0
    %v2841 = vadd.f32 %v2792, %v2840
    %2842 = vmatmul.bf16.gmra.mxu0 %v461
    %v2843 = vpop.f32.mrf.mxu0
    %v2844 = vadd.f32 %v2795, %v2843
    %v2845 = vpop.f32.mrf.mxu0
    %v2846 = vadd.f32 %v2797, %v2845
    %2847 = vmatmul.bf16.gmra.mxu0 %v465
    %v2848 = vpop.f32.mrf.mxu0
    %v2849 = vadd.f32 %v2800, %v2848
    %v2850 = vpop.f32.mrf.mxu0
    %v2851 = vadd.f32 %v2802, %v2850
    %2852 = vmatmul.bf16.gmra.mxu0 %v469
    %v2853 = vpop.f32.mrf.mxu0
    %v2854 = vadd.f32 %v2805, %v2853
    %v2855 = vpop.f32.mrf.mxu0
    %v2856 = vadd.f32 %v2807, %v2855
    %2857 = vmatmul.bf16.gmra.mxu0 %v473
    %v2858 = vpop.f32.mrf.mxu0
    %v2859 = vadd.f32 %v2810, %v2858
    %v2860 = vpop.f32.mrf.mxu0
    %v2861 = vadd.f32 %v2812, %v2860
    %2862 = vmatmul.bf16.gmra.mxu0 %v477
    %v2863 = vpop.f32.mrf.mxu0
    %v2864 = vadd.f32 %v2815, %v2863
    %v2865 = vpop.f32.mrf.mxu0
    %v2866 = vadd.f32 %v2817, %v2865
    %2867 = vmatmul.bf16.gmra.mxu0 %v481
    %v2868 = vpop.f32.mrf.mxu0
    %v2869 = vadd.f32 %v2820, %v2868
    %v2870 = vpop.f32.mrf.mxu0
    %v2871 = vadd.f32 %v2822, %v2870
    %2872 = vmatmul.bf16.gmra.mxu0 %v485
    %v2873 = vpop.f32.mrf.mxu0
    %v2874 = vadd.f32 %v2825, %v2873
    %v2875 = vpop.f32.mrf.mxu0
    %v2876 = vadd.f32 %v2827, %v2875
    %2877 = vdwg.mxu0
    %2878 = vmatpush.bf16.msra.mxu0 %v1477
    %2879 = vmatpush.bf16.msra.mxu0 %v1469
    %2880 = vmatpush.bf16.msra.mxu0 %v1461
    %2881 = vmatpush.bf16.msra.mxu0 %v1453
    %2882 = vmatpush.bf16.msra.mxu0 %v1445
    %2883 = vmatpush.bf16.msra.mxu0 %v1437
    %2884 = vmatpush.bf16.msra.mxu0 %v1429
    %2885 = vmatpush.bf16.msra.mxu0 %v1421
    %2886 = vmatmul.bf16.gmra.mxu0 %v458
    %v2887 = vpop.f32.mrf.mxu0
    %v2888 = vadd.f32 %v2839, %v2887
    %v2889 = vpop.f32.mrf.mxu0
    %v2890 = vadd.f32 %v2841, %v2889
    %2891 = vmatmul.bf16.gmra.mxu0 %v462
    %v2892 = vpop.f32.mrf.mxu0
    %v2893 = vadd.f32 %v2844, %v2892
    %v2894 = vpop.f32.mrf.mxu0
    %v2895 = vadd.f32 %v2846, %v2894
    %2896 = vmatmul.bf16.gmra.mxu0 %v466
    %v2897 = vpop.f32.mrf.mxu0
    %v2898 = vadd.f32 %v2849, %v2897
    %v2899 = vpop.f32.mrf.mxu0
    %v2900 = vadd.f32 %v2851, %v2899
    %2901 = vmatmul.bf16.gmra.mxu0 %v470
    %v2902 = vpop.f32.mrf.mxu0
    %v2903 = vadd.f32 %v2854, %v2902
    %v2904 = vpop.f32.mrf.mxu0
    %v2905 = vadd.f32 %v2856, %v2904
    %2906 = vmatmul.bf16.gmra.mxu0 %v474
    %v2907 = vpop.f32.mrf.mxu0
    %v2908 = vadd.f32 %v2859, %v2907
    %v2909 = vpop.f32.mrf.mxu0
    %v2910 = vadd.f32 %v2861, %v2909
    %2911 = vmatmul.bf16.gmra.mxu0 %v478
    %v2912 = vpop.f32.mrf.mxu0
    %v2913 = vadd.f32 %v2864, %v2912
    %v2914 = vpop.f32.mrf.mxu0
    %v2915 = vadd.f32 %v2866, %v2914
    %2916 = vmatmul.bf16.gmra.mxu0 %v482
    %v2917 = vpop.f32.mrf.mxu0
    %v2918 = vadd.f32 %v2869, %v2917
    %v2919 = vpop.f32.mrf.mxu0
    %v2920 = vadd.f32 %v2871, %v2919
    %2921 = vmatmul.bf16.gmra.mxu0 %v486
    %v2922 = vpop.f32.mrf.mxu0
    %v2923 = vadd.f32 %v2874, %v2922
    %v2924 = vpop.f32.mrf.mxu0
    %v2925 = vadd.f32 %v2876, %v2924
    %2926 = vdwg.mxu0
    %2927 = vmatpush.bf16.msra.mxu0 %v1541
    %2928 = vmatpush.bf16.msra.mxu0 %v1533
    %2929 = vmatpush.bf16.msra.mxu0 %v1525
    %2930 = vmatpush.bf16.msra.mxu0 %v1517
    %2931 = vmatpush.bf16.msra.mxu0 %v1509
    %2932 = vmatpush.bf16.msra.mxu0 %v1501
    %2933 = vmatpush.bf16.msra.mxu0 %v1493
    %2934 = vmatpush.bf16.msra.mxu0 %v1485
    %2935 = vmatmul.bf16.gmra.mxu0 %v459
    %v2936 = vpop.f32.mrf.mxu0
    %v2937 = vadd.f32 %v2888, %v2936
    %v2938 = vpop.f32.mrf.mxu0
    %v2939 = vadd.f32 %v2890, %v2938
    %2940 = vmatmul.bf16.gmra.mxu0 %v463
    %v2941 = vpop.f32.mrf.mxu0
    %v2942 = vadd.f32 %v2893, %v2941
    %v2943 = vpop.f32.mrf.mxu0
    %v2944 = vadd.f32 %v2895, %v2943
    %2945 = vmatmul.bf16.gmra.mxu0 %v467
    %v2946 = vpop.f32.mrf.mxu0
    %v2947 = vadd.f32 %v2898, %v2946
    %v2948 = vpop.f32.mrf.mxu0
    %v2949 = vadd.f32 %v2900, %v2948
    %2950 = vmatmul.bf16.gmra.mxu0 %v471
    %v2951 = vpop.f32.mrf.mxu0
    %v2952 = vadd.f32 %v2903, %v2951
    %v2953 = vpop.f32.mrf.mxu0
    %v2954 = vadd.f32 %v2905, %v2953
    %2955 = vmatmul.bf16.gmra.mxu0 %v475
    %v2956 = vpop.f32.mrf.mxu0
    %v2957 = vadd.f32 %v2908, %v2956
    %v2958 = vpop.f32.mrf.mxu0
    %v2959 = vadd.f32 %v2910, %v2958
    %2960 = vmatmul.bf16.gmra.mxu0 %v479
    %v2961 = vpop.f32.mrf.mxu0
    %v2962 = vadd.f32 %v2913, %v2961
    %v2963 = vpop.f32.mrf.mxu0
    %v2964 = vadd.f32 %v2915, %v2963
    %2965 = vmatmul.bf16.gmra.mxu0 %v483
    %v2966 = vpop.f32.mrf.mxu0
    %v2967 = vadd.f32 %v2918, %v2966
    %v2968 = vpop.f32.mrf.mxu0
    %v2969 = vadd.f32 %v2920, %v2968
    %2970 = vmatmul.bf16.gmra.mxu0 %v487
    %v2971 = vpop.f32.mrf.mxu0
    %v2972 = vadd.f32 %v2923, %v2971
    %v2973 = vpop.f32.mrf.mxu0
    %v2974 = vadd.f32 %v2925, %v2973
    %2975 = vdwg.mxu0
    %2976 = vmatpush.bf16.msra.mxu0 %v1350
    %2977 = vmatpush.bf16.msra.mxu0 %v1342
    %2978 = vmatpush.bf16.msra.mxu0 %v1334
    %2979 = vmatpush.bf16.msra.mxu0 %v1326
    %2980 = vmatpush.bf16.msra.mxu0 %v1318
    %2981 = vmatpush.bf16.msra.mxu0 %v1310
    %2982 = vmatpush.bf16.msra.mxu0 %v1302
    %2983 = vmatpush.bf16.msra.mxu0 %v1294
    %2984 = vmatmul.bf16.gmra.mxu0 %v456
    %v2985 = vpop.f32.mrf.mxu0
    %v2986 = vadd.f32 %v350, %v2985
    %v2987 = vpop.f32.mrf.mxu0
    %v2988 = vadd.f32 %v350, %v2987
    %2989 = vmatmul.bf16.gmra.mxu0 %v460
    %v2990 = vpop.f32.mrf.mxu0
    %v2991 = vadd.f32 %v350, %v2990
    %v2992 = vpop.f32.mrf.mxu0
    %v2993 = vadd.f32 %v350, %v2992
    %2994 = vmatmul.bf16.gmra.mxu0 %v464
    %v2995 = vpop.f32.mrf.mxu0
    %v2996 = vadd.f32 %v350, %v2995
    %v2997 = vpop.f32.mrf.mxu0
    %v2998 = vadd.f32 %v350, %v2997
    %2999 = vmatmul.bf16.gmra.mxu0 %v468
    %v3000 = vpop.f32.mrf.mxu0
    %v3001 = vadd.f32 %v350, %v3000
    %v3002 = vpop.f32.mrf.mxu0
    %v3003 = vadd.f32 %v350, %v3002
    %3004 = vmatmul.bf16.gmra.mxu0 %v472
    %v3005 = vpop.f32.mrf.mxu0
    %v3006 = vadd.f32 %v350, %v3005
    %v3007 = vpop.f32.mrf.mxu0
    %v3008 = vadd.f32 %v350, %v3007
    %3009 = vmatmul.bf16.gmra.mxu0 %v476
    %v3010 = vpop.f32.mrf.mxu0
    %v3011 = vadd.f32 %v350, %v3010
    %v3012 = vpop.f32.mrf.mxu0
    %v3013 = vadd.f32 %v350, %v3012
    %3014 = vmatmul.bf16.gmra.mxu0 %v480
    %v3015 = vpop.f32.mrf.mxu0
    %v3016 = vadd.f32 %v350, %v3015
    %v3017 = vpop.f32.mrf.mxu0
    %v3018 = vadd.f32 %v350, %v3017
    %3019 = vmatmul.bf16.gmra.mxu0 %v484
    %v3020 = vpop.f32.mrf.mxu0
    %v3021 = vadd.f32 %v350, %v3020
    %v3022 = vpop.f32.mrf.mxu0
    %v3023 = vadd.f32 %v350, %v3022
    %3024 = vdwg.mxu0
    %3025 = vmatpush.bf16.msra.mxu0 %v1414
    %3026 = vmatpush.bf16.msra.mxu0 %v1406
    %3027 = vmatpush.bf16.msra.mxu0 %v1398
    %3028 = vmatpush.bf16.msra.mxu0 %v1390
    %3029 = vmatpush.bf16.msra.mxu0 %v1382
    %3030 = vmatpush.bf16.msra.mxu0 %v1374
    %3031 = vmatpush.bf16.msra.mxu0 %v1366
    %3032 = vmatpush.bf16.msra.mxu0 %v1358
    %3033 = vmatmul.bf16.gmra.mxu0 %v457
    %v3034 = vpop.f32.mrf.mxu0
    %v3035 = vadd.f32 %v2986, %v3034
    %v3036 = vpop.f32.mrf.mxu0
    %v3037 = vadd.f32 %v2988, %v3036
    %3038 = vmatmul.bf16.gmra.mxu0 %v461
    %v3039 = vpop.f32.mrf.mxu0
    %v3040 = vadd.f32 %v2991, %v3039
    %v3041 = vpop.f32.mrf.mxu0
    %v3042 = vadd.f32 %v2993, %v3041
    %3043 = vmatmul.bf16.gmra.mxu0 %v465
    %v3044 = vpop.f32.mrf.mxu0
    %v3045 = vadd.f32 %v2996, %v3044
    %v3046 = vpop.f32.mrf.mxu0
    %v3047 = vadd.f32 %v2998, %v3046
    %3048 = vmatmul.bf16.gmra.mxu0 %v469
    %v3049 = vpop.f32.mrf.mxu0
    %v3050 = vadd.f32 %v3001, %v3049
    %v3051 = vpop.f32.mrf.mxu0
    %v3052 = vadd.f32 %v3003, %v3051
    %3053 = vmatmul.bf16.gmra.mxu0 %v473
    %v3054 = vpop.f32.mrf.mxu0
    %v3055 = vadd.f32 %v3006, %v3054
    %v3056 = vpop.f32.mrf.mxu0
    %v3057 = vadd.f32 %v3008, %v3056
    %3058 = vmatmul.bf16.gmra.mxu0 %v477
    %v3059 = vpop.f32.mrf.mxu0
    %v3060 = vadd.f32 %v3011, %v3059
    %v3061 = vpop.f32.mrf.mxu0
    %v3062 = vadd.f32 %v3013, %v3061
    %3063 = vmatmul.bf16.gmra.mxu0 %v481
    %v3064 = vpop.f32.mrf.mxu0
    %v3065 = vadd.f32 %v3016, %v3064
    %v3066 = vpop.f32.mrf.mxu0
    %v3067 = vadd.f32 %v3018, %v3066
    %3068 = vmatmul.bf16.gmra.mxu0 %v485
    %v3069 = vpop.f32.mrf.mxu0
    %v3070 = vadd.f32 %v3021, %v3069
    %v3071 = vpop.f32.mrf.mxu0
    %v3072 = vadd.f32 %v3023, %v3071
    %3073 = vdwg.mxu0
    %3074 = vmatpush.bf16.msra.mxu0 %v1478
    %3075 = vmatpush.bf16.msra.mxu0 %v1470
    %3076 = vmatpush.bf16.msra.mxu0 %v1462
    %3077 = vmatpush.bf16.msra.mxu0 %v1454
    %3078 = vmatpush.bf16.msra.mxu0 %v1446
    %3079 = vmatpush.bf16.msra.mxu0 %v1438
    %3080 = vmatpush.bf16.msra.mxu0 %v1430
    %3081 = vmatpush.bf16.msra.mxu0 %v1422
    %3082 = vmatmul.bf16.gmra.mxu0 %v458
    %v3083 = vpop.f32.mrf.mxu0
    %v3084 = vadd.f32 %v3035, %v3083
    %v3085 = vpop.f32.mrf.mxu0
    %v3086 = vadd.f32 %v3037, %v3085
    %3087 = vmatmul.bf16.gmra.mxu0 %v462
    %v3088 = vpop.f32.mrf.mxu0
    %v3089 = vadd.f32 %v3040, %v3088
    %v3090 = vpop.f32.mrf.mxu0
    %v3091 = vadd.f32 %v3042, %v3090
    %3092 = vmatmul.bf16.gmra.mxu0 %v466
    %v3093 = vpop.f32.mrf.mxu0
    %v3094 = vadd.f32 %v3045, %v3093
    %v3095 = vpop.f32.mrf.mxu0
    %v3096 = vadd.f32 %v3047, %v3095
    %3097 = vmatmul.bf16.gmra.mxu0 %v470
    %v3098 = vpop.f32.mrf.mxu0
    %v3099 = vadd.f32 %v3050, %v3098
    %v3100 = vpop.f32.mrf.mxu0
    %v3101 = vadd.f32 %v3052, %v3100
    %3102 = vmatmul.bf16.gmra.mxu0 %v474
    %v3103 = vpop.f32.mrf.mxu0
    %v3104 = vadd.f32 %v3055, %v3103
    %v3105 = vpop.f32.mrf.mxu0
    %v3106 = vadd.f32 %v3057, %v3105
    %3107 = vmatmul.bf16.gmra.mxu0 %v478
    %v3108 = vpop.f32.mrf.mxu0
    %v3109 = vadd.f32 %v3060, %v3108
    %v3110 = vpop.f32.mrf.mxu0
    %v3111 = vadd.f32 %v3062, %v3110
    %3112 = vmatmul.bf16.gmra.mxu0 %v482
    %v3113 = vpop.f32.mrf.mxu0
    %v3114 = vadd.f32 %v3065, %v3113
    %v3115 = vpop.f32.mrf.mxu0
    %v3116 = vadd.f32 %v3067, %v3115
    %3117 = vmatmul.bf16.gmra.mxu0 %v486
    %v3118 = vpop.f32.mrf.mxu0
    %v3119 = vadd.f32 %v3070, %v3118
    %v3120 = vpop.f32.mrf.mxu0
    %v3121 = vadd.f32 %v3072, %v3120
    %3122 = vdwg.mxu0
    %3123 = vmatpush.bf16.msra.mxu0 %v1542
    %3124 = vmatpush.bf16.msra.mxu0 %v1534
    %3125 = vmatpush.bf16.msra.mxu0 %v1526
    %3126 = vmatpush.bf16.msra.mxu0 %v1518
    %3127 = vmatpush.bf16.msra.mxu0 %v1510
    %3128 = vmatpush.bf16.msra.mxu0 %v1502
    %3129 = vmatpush.bf16.msra.mxu0 %v1494
    %3130 = vmatpush.bf16.msra.mxu0 %v1486
    %3131 = vmatmul.bf16.gmra.mxu0 %v459
    %v3132 = vpop.f32.mrf.mxu0
    %v3133 = vadd.f32 %v3084, %v3132
    %v3134 = vpop.f32.mrf.mxu0
    %v3135 = vadd.f32 %v3086, %v3134
    %3136 = vmatmul.bf16.gmra.mxu0 %v463
    %v3137 = vpop.f32.mrf.mxu0
    %v3138 = vadd.f32 %v3089, %v3137
    %v3139 = vpop.f32.mrf.mxu0
    %v3140 = vadd.f32 %v3091, %v3139
    %3141 = vmatmul.bf16.gmra.mxu0 %v467
    %v3142 = vpop.f32.mrf.mxu0
    %v3143 = vadd.f32 %v3094, %v3142
    %v3144 = vpop.f32.mrf.mxu0
    %v3145 = vadd.f32 %v3096, %v3144
    %3146 = vmatmul.bf16.gmra.mxu0 %v471
    %v3147 = vpop.f32.mrf.mxu0
    %v3148 = vadd.f32 %v3099, %v3147
    %v3149 = vpop.f32.mrf.mxu0
    %v3150 = vadd.f32 %v3101, %v3149
    %3151 = vmatmul.bf16.gmra.mxu0 %v475
    %v3152 = vpop.f32.mrf.mxu0
    %v3153 = vadd.f32 %v3104, %v3152
    %v3154 = vpop.f32.mrf.mxu0
    %v3155 = vadd.f32 %v3106, %v3154
    %3156 = vmatmul.bf16.gmra.mxu0 %v479
    %v3157 = vpop.f32.mrf.mxu0
    %v3158 = vadd.f32 %v3109, %v3157
    %v3159 = vpop.f32.mrf.mxu0
    %v3160 = vadd.f32 %v3111, %v3159
    %3161 = vmatmul.bf16.gmra.mxu0 %v483
    %v3162 = vpop.f32.mrf.mxu0
    %v3163 = vadd.f32 %v3114, %v3162
    %v3164 = vpop.f32.mrf.mxu0
    %v3165 = vadd.f32 %v3116, %v3164
    %3166 = vmatmul.bf16.gmra.mxu0 %v487
    %v3167 = vpop.f32.mrf.mxu0
    %v3168 = vadd.f32 %v3119, %v3167
    %v3169 = vpop.f32.mrf.mxu0
    %v3170 = vadd.f32 %v3121, %v3169
    %3171 = vdwg.mxu0
    %3172 = vmatpush.bf16.msra.mxu0 %v1351
    %3173 = vmatpush.bf16.msra.mxu0 %v1343
    %3174 = vmatpush.bf16.msra.mxu0 %v1335
    %3175 = vmatpush.bf16.msra.mxu0 %v1327
    %3176 = vmatpush.bf16.msra.mxu0 %v1319
    %3177 = vmatpush.bf16.msra.mxu0 %v1311
    %3178 = vmatpush.bf16.msra.mxu0 %v1303
    %3179 = vmatpush.bf16.msra.mxu0 %v1295
    %3180 = vmatmul.bf16.gmra.mxu0 %v456
    %v3181 = vpop.f32.mrf.mxu0
    %v3182 = vadd.f32 %v351, %v3181
    %v3183 = vpop.f32.mrf.mxu0
    %v3184 = vadd.f32 %v351, %v3183
    %3185 = vmatmul.bf16.gmra.mxu0 %v460
    %v3186 = vpop.f32.mrf.mxu0
    %v3187 = vadd.f32 %v351, %v3186
    %v3188 = vpop.f32.mrf.mxu0
    %v3189 = vadd.f32 %v351, %v3188
    %3190 = vmatmul.bf16.gmra.mxu0 %v464
    %v3191 = vpop.f32.mrf.mxu0
    %v3192 = vadd.f32 %v351, %v3191
    %v3193 = vpop.f32.mrf.mxu0
    %v3194 = vadd.f32 %v351, %v3193
    %3195 = vmatmul.bf16.gmra.mxu0 %v468
    %v3196 = vpop.f32.mrf.mxu0
    %v3197 = vadd.f32 %v351, %v3196
    %v3198 = vpop.f32.mrf.mxu0
    %v3199 = vadd.f32 %v351, %v3198
    %3200 = vmatmul.bf16.gmra.mxu0 %v472
    %v3201 = vpop.f32.mrf.mxu0
    %v3202 = vadd.f32 %v351, %v3201
    %v3203 = vpop.f32.mrf.mxu0
    %v3204 = vadd.f32 %v351, %v3203
    %3205 = vmatmul.bf16.gmra.mxu0 %v476
    %v3206 = vpop.f32.mrf.mxu0
    %v3207 = vadd.f32 %v351, %v3206
    %v3208 = vpop.f32.mrf.mxu0
    %v3209 = vadd.f32 %v351, %v3208
    %3210 = vmatmul.bf16.gmra.mxu0 %v480
    %v3211 = vpop.f32.mrf.mxu0
    %v3212 = vadd.f32 %v351, %v3211
    %v3213 = vpop.f32.mrf.mxu0
    %v3214 = vadd.f32 %v351, %v3213
    %3215 = vmatmul.bf16.gmra.mxu0 %v484
    %v3216 = vpop.f32.mrf.mxu0
    %v3217 = vadd.f32 %v351, %v3216
    %v3218 = vpop.f32.mrf.mxu0
    %v3219 = vadd.f32 %v351, %v3218
    %3220 = vdwg.mxu0
    %3221 = vmatpush.bf16.msra.mxu0 %v1415
    %3222 = vmatpush.bf16.msra.mxu0 %v1407
    %3223 = vmatpush.bf16.msra.mxu0 %v1399
    %3224 = vmatpush.bf16.msra.mxu0 %v1391
    %3225 = vmatpush.bf16.msra.mxu0 %v1383
    %3226 = vmatpush.bf16.msra.mxu0 %v1375
    %3227 = vmatpush.bf16.msra.mxu0 %v1367
    %3228 = vmatpush.bf16.msra.mxu0 %v1359
    %3229 = vmatmul.bf16.gmra.mxu0 %v457
    %v3230 = vpop.f32.mrf.mxu0
    %v3231 = vadd.f32 %v3182, %v3230
    %v3232 = vpop.f32.mrf.mxu0
    %v3233 = vadd.f32 %v3184, %v3232
    %3234 = vmatmul.bf16.gmra.mxu0 %v461
    %v3235 = vpop.f32.mrf.mxu0
    %v3236 = vadd.f32 %v3187, %v3235
    %v3237 = vpop.f32.mrf.mxu0
    %v3238 = vadd.f32 %v3189, %v3237
    %3239 = vmatmul.bf16.gmra.mxu0 %v465
    %v3240 = vpop.f32.mrf.mxu0
    %v3241 = vadd.f32 %v3192, %v3240
    %v3242 = vpop.f32.mrf.mxu0
    %v3243 = vadd.f32 %v3194, %v3242
    %3244 = vmatmul.bf16.gmra.mxu0 %v469
    %v3245 = vpop.f32.mrf.mxu0
    %v3246 = vadd.f32 %v3197, %v3245
    %v3247 = vpop.f32.mrf.mxu0
    %v3248 = vadd.f32 %v3199, %v3247
    %3249 = vmatmul.bf16.gmra.mxu0 %v473
    %v3250 = vpop.f32.mrf.mxu0
    %v3251 = vadd.f32 %v3202, %v3250
    %v3252 = vpop.f32.mrf.mxu0
    %v3253 = vadd.f32 %v3204, %v3252
    %3254 = vmatmul.bf16.gmra.mxu0 %v477
    %v3255 = vpop.f32.mrf.mxu0
    %v3256 = vadd.f32 %v3207, %v3255
    %v3257 = vpop.f32.mrf.mxu0
    %v3258 = vadd.f32 %v3209, %v3257
    %3259 = vmatmul.bf16.gmra.mxu0 %v481
    %v3260 = vpop.f32.mrf.mxu0
    %v3261 = vadd.f32 %v3212, %v3260
    %v3262 = vpop.f32.mrf.mxu0
    %v3263 = vadd.f32 %v3214, %v3262
    %3264 = vmatmul.bf16.gmra.mxu0 %v485
    %v3265 = vpop.f32.mrf.mxu0
    %v3266 = vadd.f32 %v3217, %v3265
    %v3267 = vpop.f32.mrf.mxu0
    %v3268 = vadd.f32 %v3219, %v3267
    %3269 = vdwg.mxu0
    %3270 = vmatpush.bf16.msra.mxu0 %v1479
    %3271 = vmatpush.bf16.msra.mxu0 %v1471
    %3272 = vmatpush.bf16.msra.mxu0 %v1463
    %3273 = vmatpush.bf16.msra.mxu0 %v1455
    %3274 = vmatpush.bf16.msra.mxu0 %v1447
    %3275 = vmatpush.bf16.msra.mxu0 %v1439
    %3276 = vmatpush.bf16.msra.mxu0 %v1431
    %3277 = vmatpush.bf16.msra.mxu0 %v1423
    %3278 = vmatmul.bf16.gmra.mxu0 %v458
    %v3279 = vpop.f32.mrf.mxu0
    %v3280 = vadd.f32 %v3231, %v3279
    %v3281 = vpop.f32.mrf.mxu0
    %v3282 = vadd.f32 %v3233, %v3281
    %3283 = vmatmul.bf16.gmra.mxu0 %v462
    %v3284 = vpop.f32.mrf.mxu0
    %v3285 = vadd.f32 %v3236, %v3284
    %v3286 = vpop.f32.mrf.mxu0
    %v3287 = vadd.f32 %v3238, %v3286
    %3288 = vmatmul.bf16.gmra.mxu0 %v466
    %v3289 = vpop.f32.mrf.mxu0
    %v3290 = vadd.f32 %v3241, %v3289
    %v3291 = vpop.f32.mrf.mxu0
    %v3292 = vadd.f32 %v3243, %v3291
    %3293 = vmatmul.bf16.gmra.mxu0 %v470
    %v3294 = vpop.f32.mrf.mxu0
    %v3295 = vadd.f32 %v3246, %v3294
    %v3296 = vpop.f32.mrf.mxu0
    %v3297 = vadd.f32 %v3248, %v3296
    %3298 = vmatmul.bf16.gmra.mxu0 %v474
    %v3299 = vpop.f32.mrf.mxu0
    %v3300 = vadd.f32 %v3251, %v3299
    %v3301 = vpop.f32.mrf.mxu0
    %v3302 = vadd.f32 %v3253, %v3301
    %3303 = vmatmul.bf16.gmra.mxu0 %v478
    %v3304 = vpop.f32.mrf.mxu0
    %v3305 = vadd.f32 %v3256, %v3304
    %v3306 = vpop.f32.mrf.mxu0
    %v3307 = vadd.f32 %v3258, %v3306
    %3308 = vmatmul.bf16.gmra.mxu0 %v482
    %v3309 = vpop.f32.mrf.mxu0
    %v3310 = vadd.f32 %v3261, %v3309
    %v3311 = vpop.f32.mrf.mxu0
    %v3312 = vadd.f32 %v3263, %v3311
    %3313 = vmatmul.bf16.gmra.mxu0 %v486
    %v3314 = vpop.f32.mrf.mxu0
    %v3315 = vadd.f32 %v3266, %v3314
    %v3316 = vpop.f32.mrf.mxu0
    %v3317 = vadd.f32 %v3268, %v3316
    %3318 = vdwg.mxu0
    %3319 = vmatpush.bf16.msra.mxu0 %v1543
    %3320 = vmatpush.bf16.msra.mxu0 %v1535
    %3321 = vmatpush.bf16.msra.mxu0 %v1527
    %3322 = vmatpush.bf16.msra.mxu0 %v1519
    %3323 = vmatpush.bf16.msra.mxu0 %v1511
    %3324 = vmatpush.bf16.msra.mxu0 %v1503
    %3325 = vmatpush.bf16.msra.mxu0 %v1495
    %3326 = vmatpush.bf16.msra.mxu0 %v1487
    %3327 = vmatmul.bf16.gmra.mxu0 %v459
    %v3328 = vpop.f32.mrf.mxu0
    %v3329 = vadd.f32 %v3280, %v3328
    %v3330 = vpop.f32.mrf.mxu0
    %v3331 = vadd.f32 %v3282, %v3330
    %3332 = vmatmul.bf16.gmra.mxu0 %v463
    %v3333 = vpop.f32.mrf.mxu0
    %v3334 = vadd.f32 %v3285, %v3333
    %v3335 = vpop.f32.mrf.mxu0
    %v3336 = vadd.f32 %v3287, %v3335
    %3337 = vmatmul.bf16.gmra.mxu0 %v467
    %v3338 = vpop.f32.mrf.mxu0
    %v3339 = vadd.f32 %v3290, %v3338
    %v3340 = vpop.f32.mrf.mxu0
    %v3341 = vadd.f32 %v3292, %v3340
    %3342 = vmatmul.bf16.gmra.mxu0 %v471
    %v3343 = vpop.f32.mrf.mxu0
    %v3344 = vadd.f32 %v3295, %v3343
    %v3345 = vpop.f32.mrf.mxu0
    %v3346 = vadd.f32 %v3297, %v3345
    %3347 = vmatmul.bf16.gmra.mxu0 %v475
    %v3348 = vpop.f32.mrf.mxu0
    %v3349 = vadd.f32 %v3300, %v3348
    %v3350 = vpop.f32.mrf.mxu0
    %v3351 = vadd.f32 %v3302, %v3350
    %3352 = vmatmul.bf16.gmra.mxu0 %v479
    %v3353 = vpop.f32.mrf.mxu0
    %v3354 = vadd.f32 %v3305, %v3353
    %v3355 = vpop.f32.mrf.mxu0
    %v3356 = vadd.f32 %v3307, %v3355
    %3357 = vmatmul.bf16.gmra.mxu0 %v483
    %v3358 = vpop.f32.mrf.mxu0
    %v3359 = vadd.f32 %v3310, %v3358
    %v3360 = vpop.f32.mrf.mxu0
    %v3361 = vadd.f32 %v3312, %v3360
    %3362 = vmatmul.bf16.gmra.mxu0 %v487
    %v3363 = vpop.f32.mrf.mxu0
    %v3364 = vadd.f32 %v3315, %v3363
    %v3365 = vpop.f32.mrf.mxu0
    %v3366 = vadd.f32 %v3317, %v3365
    %3367 = vdwg.mxu0
    %v3368 = vmax.f32 %v1957, 0.0
    %v3369 = vmax.f32 %v2153, 0.0
    %v3370 = vmax.f32 %v2349, 0.0
    %v3371 = vmax.f32 %v2545, 0.0
    %v3372 = vmax.f32 %v2741, 0.0
    %v3373 = vmax.f32 %v2937, 0.0
    %v3374 = vmax.f32 %v3133, 0.0
    %v3375 = vmax.f32 %v3329, 0.0
    %v3376 = vmax.f32 %v1959, 0.0
    %v3377 = vmax.f32 %v2155, 0.0
    %v3378 = vmax.f32 %v2351, 0.0
    %v3379 = vmax.f32 %v2547, 0.0
    %v3380 = vmax.f32 %v2743, 0.0
    %v3381 = vmax.f32 %v2939, 0.0
    %v3382 = vmax.f32 %v3135, 0.0
    %v3383 = vmax.f32 %v3331, 0.0
    %v3384 = vmax.f32 %v1962, 0.0
    %v3385 = vmax.f32 %v2158, 0.0
    %v3386 = vmax.f32 %v2354, 0.0
    %v3387 = vmax.f32 %v2550, 0.0
    %v3388 = vmax.f32 %v2746, 0.0
    %v3389 = vmax.f32 %v2942, 0.0
    %v3390 = vmax.f32 %v3138, 0.0
    %v3391 = vmax.f32 %v3334, 0.0
    %v3392 = vmax.f32 %v1964, 0.0
    %v3393 = vmax.f32 %v2160, 0.0
    %v3394 = vmax.f32 %v2356, 0.0
    %v3395 = vmax.f32 %v2552, 0.0
    %v3396 = vmax.f32 %v2748, 0.0
    %v3397 = vmax.f32 %v2944, 0.0
    %v3398 = vmax.f32 %v3140, 0.0
    %v3399 = vmax.f32 %v3336, 0.0
    %v3400 = vmax.f32 %v1967, 0.0
    %v3401 = vmax.f32 %v2163, 0.0
    %v3402 = vmax.f32 %v2359, 0.0
    %v3403 = vmax.f32 %v2555, 0.0
    %v3404 = vmax.f32 %v2751, 0.0
    %v3405 = vmax.f32 %v2947, 0.0
    %v3406 = vmax.f32 %v3143, 0.0
    %v3407 = vmax.f32 %v3339, 0.0
    %v3408 = vmax.f32 %v1969, 0.0
    %v3409 = vmax.f32 %v2165, 0.0
    %v3410 = vmax.f32 %v2361, 0.0
    %v3411 = vmax.f32 %v2557, 0.0
    %v3412 = vmax.f32 %v2753, 0.0
    %v3413 = vmax.f32 %v2949, 0.0
    %v3414 = vmax.f32 %v3145, 0.0
    %v3415 = vmax.f32 %v3341, 0.0
    %v3416 = vmax.f32 %v1972, 0.0
    %v3417 = vmax.f32 %v2168, 0.0
    %v3418 = vmax.f32 %v2364, 0.0
    %v3419 = vmax.f32 %v2560, 0.0
    %v3420 = vmax.f32 %v2756, 0.0
    %v3421 = vmax.f32 %v2952, 0.0
    %v3422 = vmax.f32 %v3148, 0.0
    %v3423 = vmax.f32 %v3344, 0.0
    %v3424 = vmax.f32 %v1974, 0.0
    %v3425 = vmax.f32 %v2170, 0.0
    %v3426 = vmax.f32 %v2366, 0.0
    %v3427 = vmax.f32 %v2562, 0.0
    %v3428 = vmax.f32 %v2758, 0.0
    %v3429 = vmax.f32 %v2954, 0.0
    %v3430 = vmax.f32 %v3150, 0.0
    %v3431 = vmax.f32 %v3346, 0.0
    %v3432 = vmax.f32 %v1977, 0.0
    %v3433 = vmax.f32 %v2173, 0.0
    %v3434 = vmax.f32 %v2369, 0.0
    %v3435 = vmax.f32 %v2565, 0.0
    %v3436 = vmax.f32 %v2761, 0.0
    %v3437 = vmax.f32 %v2957, 0.0
    %v3438 = vmax.f32 %v3153, 0.0
    %v3439 = vmax.f32 %v3349, 0.0
    %v3440 = vmax.f32 %v1979, 0.0
    %v3441 = vmax.f32 %v2175, 0.0
    %v3442 = vmax.f32 %v2371, 0.0
    %v3443 = vmax.f32 %v2567, 0.0
    %v3444 = vmax.f32 %v2763, 0.0
    %v3445 = vmax.f32 %v2959, 0.0
    %v3446 = vmax.f32 %v3155, 0.0
    %v3447 = vmax.f32 %v3351, 0.0
    %v3448 = vmax.f32 %v1982, 0.0
    %v3449 = vmax.f32 %v2178, 0.0
    %v3450 = vmax.f32 %v2374, 0.0
    %v3451 = vmax.f32 %v2570, 0.0
    %v3452 = vmax.f32 %v2766, 0.0
    %v3453 = vmax.f32 %v2962, 0.0
    %v3454 = vmax.f32 %v3158, 0.0
    %v3455 = vmax.f32 %v3354, 0.0
    %v3456 = vmax.f32 %v1984, 0.0
    %v3457 = vmax.f32 %v2180, 0.0
    %v3458 = vmax.f32 %v2376, 0.0
    %v3459 = vmax.f32 %v2572, 0.0
    %v3460 = vmax.f32 %v2768, 0.0
    %v3461 = vmax.f32 %v2964, 0.0
    %v3462 = vmax.f32 %v3160, 0.0
    %v3463 = vmax.f32 %v3356, 0.0
    %v3464 = vmax.f32 %v1987, 0.0
    %v3465 = vmax.f32 %v2183, 0.0
    %v3466 = vmax.f32 %v2379, 0.0
    %v3467 = vmax.f32 %v2575, 0.0
    %v3468 = vmax.f32 %v2771, 0.0
    %v3469 = vmax.f32 %v2967, 0.0
    %v3470 = vmax.f32 %v3163, 0.0
    %v3471 = vmax.f32 %v3359, 0.0
    %v3472 = vmax.f32 %v1989, 0.0
    %v3473 = vmax.f32 %v2185, 0.0
    %v3474 = vmax.f32 %v2381, 0.0
    %v3475 = vmax.f32 %v2577, 0.0
    %v3476 = vmax.f32 %v2773, 0.0
    %v3477 = vmax.f32 %v2969, 0.0
    %v3478 = vmax.f32 %v3165, 0.0
    %v3479 = vmax.f32 %v3361, 0.0
    %v3480 = vmax.f32 %v1992, 0.0
    %v3481 = vmax.f32 %v2188, 0.0
    %v3482 = vmax.f32 %v2384, 0.0
    %v3483 = vmax.f32 %v2580, 0.0
    %v3484 = vmax.f32 %v2776, 0.0
    %v3485 = vmax.f32 %v2972, 0.0
    %v3486 = vmax.f32 %v3168, 0.0
    %v3487 = vmax.f32 %v3364, 0.0
    %v3488 = vmax.f32 %v1994, 0.0
    %v3489 = vmax.f32 %v2190, 0.0
    %v3490 = vmax.f32 %v2386, 0.0
    %v3491 = vmax.f32 %v2582, 0.0
    %v3492 = vmax.f32 %v2778, 0.0
    %v3493 = vmax.f32 %v2974, 0.0
    %v3494 = vmax.f32 %v3170, 0.0
    %v3495 = vmax.f32 %v3366, 0.0
    %v3496 = vpack.c.bf16 %v3376, %v3368
    %v3497 = vpack.c.bf16 %v3377, %v3369
    %v3498 = vpack.c.bf16 %v3378, %v3370
    %v3499 = vpack.c.bf16 %v3379, %v3371
    %v3500 = vpack.c.bf16 %v3380, %v3372
    %v3501 = vpack.c.bf16 %v3381, %v3373
    %v3502 = vpack.c.bf16 %v3382, %v3374
    %v3503 = vpack.c.bf16 %v3383, %v3375
    %v3504 = vpack.c.bf16 %v3392, %v3384
    %v3505 = vpack.c.bf16 %v3393, %v3385
    %v3506 = vpack.c.bf16 %v3394, %v3386
    %v3507 = vpack.c.bf16 %v3395, %v3387
    %v3508 = vpack.c.bf16 %v3396, %v3388
    %v3509 = vpack.c.bf16 %v3397, %v3389
    %v3510 = vpack.c.bf16 %v3398, %v3390
    %v3511 = vpack.c.bf16 %v3399, %v3391
    %v3512 = vpack.c.bf16 %v3408, %v3400
    %v3513 = vpack.c.bf16 %v3409, %v3401
    %v3514 = vpack.c.bf16 %v3410, %v3402
    %v3515 = vpack.c.bf16 %v3411, %v3403
    %v3516 = vpack.c.bf16 %v3412, %v3404
    %v3517 = vpack.c.bf16 %v3413, %v3405
    %v3518 = vpack.c.bf16 %v3414, %v3406
    %v3519 = vpack.c.bf16 %v3415, %v3407
    %v3520 = vpack.c.bf16 %v3424, %v3416
    %v3521 = vpack.c.bf16 %v3425, %v3417
    %v3522 = vpack.c.bf16 %v3426, %v3418
    %v3523 = vpack.c.bf16 %v3427, %v3419
    %v3524 = vpack.c.bf16 %v3428, %v3420
    %v3525 = vpack.c.bf16 %v3429, %v3421
    %v3526 = vpack.c.bf16 %v3430, %v3422
    %v3527 = vpack.c.bf16 %v3431, %v3423
    %v3528 = vpack.c.bf16 %v3440, %v3432
    %v3529 = vpack.c.bf16 %v3441, %v3433
    %v3530 = vpack.c.bf16 %v3442, %v3434
    %v3531 = vpack.c.bf16 %v3443, %v3435
    %v3532 = vpack.c.bf16 %v3444, %v3436
    %v3533 = vpack.c.bf16 %v3445, %v3437
    %v3534 = vpack.c.bf16 %v3446, %v3438
    %v3535 = vpack.c.bf16 %v3447, %v3439
    %v3536 = vpack.c.bf16 %v3456, %v3448
    %v3537 = vpack.c.bf16 %v3457, %v3449
    %v3538 = vpack.c.bf16 %v3458, %v3450
    %v3539 = vpack.c.bf16 %v3459, %v3451
    %v3540 = vpack.c.bf16 %v3460, %v3452
    %v3541 = vpack.c.bf16 %v3461, %v3453
    %v3542 = vpack.c.bf16 %v3462, %v3454
    %v3543 = vpack.c.bf16 %v3463, %v3455
    %v3544 = vpack.c.bf16 %v3472, %v3464
    %v3545 = vpack.c.bf16 %v3473, %v3465
    %v3546 = vpack.c.bf16 %v3474, %v3466
    %v3547 = vpack.c.bf16 %v3475, %v3467
    %v3548 = vpack.c.bf16 %v3476, %v3468
    %v3549 = vpack.c.bf16 %v3477, %v3469
    %v3550 = vpack.c.bf16 %v3478, %v3470
    %v3551 = vpack.c.bf16 %v3479, %v3471
    %v3552 = vpack.c.bf16 %v3488, %v3480
    %v3553 = vpack.c.bf16 %v3489, %v3481
    %v3554 = vpack.c.bf16 %v3490, %v3482
    %v3555 = vpack.c.bf16 %v3491, %v3483
    %v3556 = vpack.c.bf16 %v3492, %v3484
    %v3557 = vpack.c.bf16 %v3493, %v3485
    %v3558 = vpack.c.bf16 %v3494, %v3486
    %v3559 = vpack.c.bf16 %v3495, %v3487
    %v3560 = vld [vmem:[%s3] sm:$0xff]
    %v3561 = vld [vmem:[%s3 + $0x8] sm:$0xff]
    %v3562 = vld [vmem:[%s3 + $0x10] sm:$0xff]
    %v3563 = vld [vmem:[%s3 + $0x18] sm:$0xff]
    %v3564 = vld [vmem:[%s3 + $0x20] sm:$0xff]
    %v3565 = vld [vmem:[%s3 + $0x28] sm:$0xff]
    %v3566 = vld [vmem:[%s3 + $0x30] sm:$0xff]
    %v3567 = vld [vmem:[%s3 + $0x38] sm:$0xff]
    %v3568 = vld [vmem:[%s3 + $0x40] sm:$0xff]
    %v3569 = vld [vmem:[%s3 + $0x48] sm:$0xff]
    %v3570 = vld [vmem:[%s3 + $0x50] sm:$0xff]
    %v3571 = vld [vmem:[%s3 + $0x58] sm:$0xff]
    %v3572 = vld [vmem:[%s3 + $0x60] sm:$0xff]
    %v3573 = vld [vmem:[%s3 + $0x68] sm:$0xff]
    %v3574 = vld [vmem:[%s3 + $0x70] sm:$0xff]
    %v3575 = vld [vmem:[%s3 + $0x78] sm:$0xff]
    %v3576 = vld [vmem:[%s3 + $0x80] sm:$0xff]
    %v3577 = vld [vmem:[%s3 + $0x88] sm:$0xff]
    %v3578 = vld [vmem:[%s3 + $0x90] sm:$0xff]
    %v3579 = vld [vmem:[%s3 + $0x98] sm:$0xff]
    %v3580 = vld [vmem:[%s3 + $0xa0] sm:$0xff]
    %v3581 = vld [vmem:[%s3 + $0xa8] sm:$0xff]
    %v3582 = vld [vmem:[%s3 + $0xb0] sm:$0xff]
    %v3583 = vld [vmem:[%s3 + $0xb8] sm:$0xff]
    %v3584 = vld [vmem:[%s3 + $0xc0] sm:$0xff]
    %v3585 = vld [vmem:[%s3 + $0xc8] sm:$0xff]
    %v3586 = vld [vmem:[%s3 + $0xd0] sm:$0xff]
    %v3587 = vld [vmem:[%s3 + $0xd8] sm:$0xff]
    %v3588 = vld [vmem:[%s3 + $0xe0] sm:$0xff]
    %v3589 = vld [vmem:[%s3 + $0xe8] sm:$0xff]
    %v3590 = vld [vmem:[%s3 + $0xf0] sm:$0xff]
    %v3591 = vld [vmem:[%s3 + $0xf8] sm:$0xff]
    %v3592 = vld [vmem:[%s3 + $0x100] sm:$0xff]
    %v3593 = vld [vmem:[%s3 + $0x108] sm:$0xff]
    %v3594 = vld [vmem:[%s3 + $0x110] sm:$0xff]
    %v3595 = vld [vmem:[%s3 + $0x118] sm:$0xff]
    %v3596 = vld [vmem:[%s3 + $0x120] sm:$0xff]
    %v3597 = vld [vmem:[%s3 + $0x128] sm:$0xff]
    %v3598 = vld [vmem:[%s3 + $0x130] sm:$0xff]
    %v3599 = vld [vmem:[%s3 + $0x138] sm:$0xff]
    %v3600 = vld [vmem:[%s3 + $0x140] sm:$0xff]
    %v3601 = vld [vmem:[%s3 + $0x148] sm:$0xff]
    %v3602 = vld [vmem:[%s3 + $0x150] sm:$0xff]
    %v3603 = vld [vmem:[%s3 + $0x158] sm:$0xff]
    %v3604 = vld [vmem:[%s3 + $0x160] sm:$0xff]
    %v3605 = vld [vmem:[%s3 + $0x168] sm:$0xff]
    %v3606 = vld [vmem:[%s3 + $0x170] sm:$0xff]
    %v3607 = vld [vmem:[%s3 + $0x178] sm:$0xff]
    %v3608 = vld [vmem:[%s3 + $0x180] sm:$0xff]
    %v3609 = vld [vmem:[%s3 + $0x188] sm:$0xff]
    %v3610 = vld [vmem:[%s3 + $0x190] sm:$0xff]
    %v3611 = vld [vmem:[%s3 + $0x198] sm:$0xff]
    %v3612 = vld [vmem:[%s3 + $0x1a0] sm:$0xff]
    %v3613 = vld [vmem:[%s3 + $0x1a8] sm:$0xff]
    %v3614 = vld [vmem:[%s3 + $0x1b0] sm:$0xff]
    %v3615 = vld [vmem:[%s3 + $0x1b8] sm:$0xff]
    %v3616 = vld [vmem:[%s3 + $0x1c0] sm:$0xff]
    %v3617 = vld [vmem:[%s3 + $0x1c8] sm:$0xff]
    %v3618 = vld [vmem:[%s3 + $0x1d0] sm:$0xff]
    %v3619 = vld [vmem:[%s3 + $0x1d8] sm:$0xff]
    %v3620 = vld [vmem:[%s3 + $0x1e0] sm:$0xff]
    %v3621 = vld [vmem:[%s3 + $0x1e8] sm:$0xff]
    %v3622 = vld [vmem:[%s3 + $0x1f0] sm:$0xff]
    %v3623 = vld [vmem:[%s3 + $0x1f8] sm:$0xff]
    %v3624 = vld [vmem:[%s3 + $0x200] sm:$0xff]
    %v3625 = vld [vmem:[%s3 + $0x208] sm:$0xff]
    %v3626 = vld [vmem:[%s3 + $0x210] sm:$0xff]
    %v3627 = vld [vmem:[%s3 + $0x218] sm:$0xff]
    %v3628 = vld [vmem:[%s3 + $0x220] sm:$0xff]
    %v3629 = vld [vmem:[%s3 + $0x228] sm:$0xff]
    %v3630 = vld [vmem:[%s3 + $0x230] sm:$0xff]
    %v3631 = vld [vmem:[%s3 + $0x238] sm:$0xff]
    %v3632 = vld [vmem:[%s3 + $0x240] sm:$0xff]
    %v3633 = vld [vmem:[%s3 + $0x248] sm:$0xff]
    %v3634 = vld [vmem:[%s3 + $0x250] sm:$0xff]
    %v3635 = vld [vmem:[%s3 + $0x258] sm:$0xff]
    %v3636 = vld [vmem:[%s3 + $0x260] sm:$0xff]
    %v3637 = vld [vmem:[%s3 + $0x268] sm:$0xff]
    %v3638 = vld [vmem:[%s3 + $0x270] sm:$0xff]
    %v3639 = vld [vmem:[%s3 + $0x278] sm:$0xff]
    %v3640 = vld [vmem:[%s3 + $0x280] sm:$0xff]
    %v3641 = vld [vmem:[%s3 + $0x288] sm:$0xff]
    %v3642 = vld [vmem:[%s3 + $0x290] sm:$0xff]
    %v3643 = vld [vmem:[%s3 + $0x298] sm:$0xff]
    %v3644 = vld [vmem:[%s3 + $0x2a0] sm:$0xff]
    %v3645 = vld [vmem:[%s3 + $0x2a8] sm:$0xff]
    %v3646 = vld [vmem:[%s3 + $0x2b0] sm:$0xff]
    %v3647 = vld [vmem:[%s3 + $0x2b8] sm:$0xff]
    %v3648 = vld [vmem:[%s3 + $0x2c0] sm:$0xff]
    %v3649 = vld [vmem:[%s3 + $0x2c8] sm:$0xff]
    %v3650 = vld [vmem:[%s3 + $0x2d0] sm:$0xff]
    %v3651 = vld [vmem:[%s3 + $0x2d8] sm:$0xff]
    %v3652 = vld [vmem:[%s3 + $0x2e0] sm:$0xff]
    %v3653 = vld [vmem:[%s3 + $0x2e8] sm:$0xff]
    %v3654 = vld [vmem:[%s3 + $0x2f0] sm:$0xff]
    %v3655 = vld [vmem:[%s3 + $0x2f8] sm:$0xff]
    %v3656 = vld [vmem:[%s3 + $0x300] sm:$0xff]
    %v3657 = vld [vmem:[%s3 + $0x308] sm:$0xff]
    %v3658 = vld [vmem:[%s3 + $0x310] sm:$0xff]
    %v3659 = vld [vmem:[%s3 + $0x318] sm:$0xff]
    %v3660 = vld [vmem:[%s3 + $0x320] sm:$0xff]
    %v3661 = vld [vmem:[%s3 + $0x328] sm:$0xff]
    %v3662 = vld [vmem:[%s3 + $0x330] sm:$0xff]
    %v3663 = vld [vmem:[%s3 + $0x338] sm:$0xff]
    %v3664 = vld [vmem:[%s3 + $0x340] sm:$0xff]
    %v3665 = vld [vmem:[%s3 + $0x348] sm:$0xff]
    %v3666 = vld [vmem:[%s3 + $0x350] sm:$0xff]
    %v3667 = vld [vmem:[%s3 + $0x358] sm:$0xff]
    %v3668 = vld [vmem:[%s3 + $0x360] sm:$0xff]
    %v3669 = vld [vmem:[%s3 + $0x368] sm:$0xff]
    %v3670 = vld [vmem:[%s3 + $0x370] sm:$0xff]
    %v3671 = vld [vmem:[%s3 + $0x378] sm:$0xff]
    %v3672 = vld [vmem:[%s3 + $0x380] sm:$0xff]
    %v3673 = vld [vmem:[%s3 + $0x388] sm:$0xff]
    %v3674 = vld [vmem:[%s3 + $0x390] sm:$0xff]
    %v3675 = vld [vmem:[%s3 + $0x398] sm:$0xff]
    %v3676 = vld [vmem:[%s3 + $0x3a0] sm:$0xff]
    %v3677 = vld [vmem:[%s3 + $0x3a8] sm:$0xff]
    %v3678 = vld [vmem:[%s3 + $0x3b0] sm:$0xff]
    %v3679 = vld [vmem:[%s3 + $0x3b8] sm:$0xff]
    %v3680 = vld [vmem:[%s3 + $0x3c0] sm:$0xff]
    %v3681 = vld [vmem:[%s3 + $0x3c8] sm:$0xff]
    %v3682 = vld [vmem:[%s3 + $0x3d0] sm:$0xff]
    %v3683 = vld [vmem:[%s3 + $0x3d8] sm:$0xff]
    %v3684 = vld [vmem:[%s3 + $0x3e0] sm:$0xff]
    %v3685 = vld [vmem:[%s3 + $0x3e8] sm:$0xff]
    %v3686 = vld [vmem:[%s3 + $0x3f0] sm:$0xff]
    %v3687 = vld [vmem:[%s3 + $0x3f8] sm:$0xff]
    %v3688 = vld [vmem:[%s3 + $0x400] sm:$0xff]
    %v3689 = vld [vmem:[%s3 + $0x408] sm:$0xff]
    %v3690 = vld [vmem:[%s3 + $0x410] sm:$0xff]
    %v3691 = vld [vmem:[%s3 + $0x418] sm:$0xff]
    %v3692 = vld [vmem:[%s3 + $0x420] sm:$0xff]
    %v3693 = vld [vmem:[%s3 + $0x428] sm:$0xff]
    %v3694 = vld [vmem:[%s3 + $0x430] sm:$0xff]
    %v3695 = vld [vmem:[%s3 + $0x438] sm:$0xff]
    %v3696 = vld [vmem:[%s3 + $0x440] sm:$0xff]
    %v3697 = vld [vmem:[%s3 + $0x448] sm:$0xff]
    %v3698 = vld [vmem:[%s3 + $0x450] sm:$0xff]
    %v3699 = vld [vmem:[%s3 + $0x458] sm:$0xff]
    %v3700 = vld [vmem:[%s3 + $0x460] sm:$0xff]
    %v3701 = vld [vmem:[%s3 + $0x468] sm:$0xff]
    %v3702 = vld [vmem:[%s3 + $0x470] sm:$0xff]
    %v3703 = vld [vmem:[%s3 + $0x478] sm:$0xff]
    %v3704 = vld [vmem:[%s3 + $0x480] sm:$0xff]
    %v3705 = vld [vmem:[%s3 + $0x488] sm:$0xff]
    %v3706 = vld [vmem:[%s3 + $0x490] sm:$0xff]
    %v3707 = vld [vmem:[%s3 + $0x498] sm:$0xff]
    %v3708 = vld [vmem:[%s3 + $0x4a0] sm:$0xff]
    %v3709 = vld [vmem:[%s3 + $0x4a8] sm:$0xff]
    %v3710 = vld [vmem:[%s3 + $0x4b0] sm:$0xff]
    %v3711 = vld [vmem:[%s3 + $0x4b8] sm:$0xff]
    %v3712 = vld [vmem:[%s3 + $0x4c0] sm:$0xff]
    %v3713 = vld [vmem:[%s3 + $0x4c8] sm:$0xff]
    %v3714 = vld [vmem:[%s3 + $0x4d0] sm:$0xff]
    %v3715 = vld [vmem:[%s3 + $0x4d8] sm:$0xff]
    %v3716 = vld [vmem:[%s3 + $0x4e0] sm:$0xff]
    %v3717 = vld [vmem:[%s3 + $0x4e8] sm:$0xff]
    %v3718 = vld [vmem:[%s3 + $0x4f0] sm:$0xff]
    %v3719 = vld [vmem:[%s3 + $0x4f8] sm:$0xff]
    %v3720 = vld [vmem:[%s3 + $0x500] sm:$0xff]
    %v3721 = vld [vmem:[%s3 + $0x508] sm:$0xff]
    %v3722 = vld [vmem:[%s3 + $0x510] sm:$0xff]
    %v3723 = vld [vmem:[%s3 + $0x518] sm:$0xff]
    %v3724 = vld [vmem:[%s3 + $0x520] sm:$0xff]
    %v3725 = vld [vmem:[%s3 + $0x528] sm:$0xff]
    %v3726 = vld [vmem:[%s3 + $0x530] sm:$0xff]
    %v3727 = vld [vmem:[%s3 + $0x538] sm:$0xff]
    %v3728 = vld [vmem:[%s3 + $0x540] sm:$0xff]
    %v3729 = vld [vmem:[%s3 + $0x548] sm:$0xff]
    %v3730 = vld [vmem:[%s3 + $0x550] sm:$0xff]
    %v3731 = vld [vmem:[%s3 + $0x558] sm:$0xff]
    %v3732 = vld [vmem:[%s3 + $0x560] sm:$0xff]
    %v3733 = vld [vmem:[%s3 + $0x568] sm:$0xff]
    %v3734 = vld [vmem:[%s3 + $0x570] sm:$0xff]
    %v3735 = vld [vmem:[%s3 + $0x578] sm:$0xff]
    %v3736 = vld [vmem:[%s3 + $0x580] sm:$0xff]
    %v3737 = vld [vmem:[%s3 + $0x588] sm:$0xff]
    %v3738 = vld [vmem:[%s3 + $0x590] sm:$0xff]
    %v3739 = vld [vmem:[%s3 + $0x598] sm:$0xff]
    %v3740 = vld [vmem:[%s3 + $0x5a0] sm:$0xff]
    %v3741 = vld [vmem:[%s3 + $0x5a8] sm:$0xff]
    %v3742 = vld [vmem:[%s3 + $0x5b0] sm:$0xff]
    %v3743 = vld [vmem:[%s3 + $0x5b8] sm:$0xff]
    %v3744 = vld [vmem:[%s3 + $0x5c0] sm:$0xff]
    %v3745 = vld [vmem:[%s3 + $0x5c8] sm:$0xff]
    %v3746 = vld [vmem:[%s3 + $0x5d0] sm:$0xff]
    %v3747 = vld [vmem:[%s3 + $0x5d8] sm:$0xff]
    %v3748 = vld [vmem:[%s3 + $0x5e0] sm:$0xff]
    %v3749 = vld [vmem:[%s3 + $0x5e8] sm:$0xff]
    %v3750 = vld [vmem:[%s3 + $0x5f0] sm:$0xff]
    %v3751 = vld [vmem:[%s3 + $0x5f8] sm:$0xff]
    %v3752 = vld [vmem:[%s3 + $0x600] sm:$0xff]
    %v3753 = vld [vmem:[%s3 + $0x608] sm:$0xff]
    %v3754 = vld [vmem:[%s3 + $0x610] sm:$0xff]
    %v3755 = vld [vmem:[%s3 + $0x618] sm:$0xff]
    %v3756 = vld [vmem:[%s3 + $0x620] sm:$0xff]
    %v3757 = vld [vmem:[%s3 + $0x628] sm:$0xff]
    %v3758 = vld [vmem:[%s3 + $0x630] sm:$0xff]
    %v3759 = vld [vmem:[%s3 + $0x638] sm:$0xff]
    %v3760 = vld [vmem:[%s3 + $0x640] sm:$0xff]
    %v3761 = vld [vmem:[%s3 + $0x648] sm:$0xff]
    %v3762 = vld [vmem:[%s3 + $0x650] sm:$0xff]
    %v3763 = vld [vmem:[%s3 + $0x658] sm:$0xff]
    %v3764 = vld [vmem:[%s3 + $0x660] sm:$0xff]
    %v3765 = vld [vmem:[%s3 + $0x668] sm:$0xff]
    %v3766 = vld [vmem:[%s3 + $0x670] sm:$0xff]
    %v3767 = vld [vmem:[%s3 + $0x678] sm:$0xff]
    %v3768 = vld [vmem:[%s3 + $0x680] sm:$0xff]
    %v3769 = vld [vmem:[%s3 + $0x688] sm:$0xff]
    %v3770 = vld [vmem:[%s3 + $0x690] sm:$0xff]
    %v3771 = vld [vmem:[%s3 + $0x698] sm:$0xff]
    %v3772 = vld [vmem:[%s3 + $0x6a0] sm:$0xff]
    %v3773 = vld [vmem:[%s3 + $0x6a8] sm:$0xff]
    %v3774 = vld [vmem:[%s3 + $0x6b0] sm:$0xff]
    %v3775 = vld [vmem:[%s3 + $0x6b8] sm:$0xff]
    %v3776 = vld [vmem:[%s3 + $0x6c0] sm:$0xff]
    %v3777 = vld [vmem:[%s3 + $0x6c8] sm:$0xff]
    %v3778 = vld [vmem:[%s3 + $0x6d0] sm:$0xff]
    %v3779 = vld [vmem:[%s3 + $0x6d8] sm:$0xff]
    %v3780 = vld [vmem:[%s3 + $0x6e0] sm:$0xff]
    %v3781 = vld [vmem:[%s3 + $0x6e8] sm:$0xff]
    %v3782 = vld [vmem:[%s3 + $0x6f0] sm:$0xff]
    %v3783 = vld [vmem:[%s3 + $0x6f8] sm:$0xff]
    %v3784 = vld [vmem:[%s3 + $0x700] sm:$0xff]
    %v3785 = vld [vmem:[%s3 + $0x708] sm:$0xff]
    %v3786 = vld [vmem:[%s3 + $0x710] sm:$0xff]
    %v3787 = vld [vmem:[%s3 + $0x718] sm:$0xff]
    %v3788 = vld [vmem:[%s3 + $0x720] sm:$0xff]
    %v3789 = vld [vmem:[%s3 + $0x728] sm:$0xff]
    %v3790 = vld [vmem:[%s3 + $0x730] sm:$0xff]
    %v3791 = vld [vmem:[%s3 + $0x738] sm:$0xff]
    %v3792 = vld [vmem:[%s3 + $0x740] sm:$0xff]
    %v3793 = vld [vmem:[%s3 + $0x748] sm:$0xff]
    %v3794 = vld [vmem:[%s3 + $0x750] sm:$0xff]
    %v3795 = vld [vmem:[%s3 + $0x758] sm:$0xff]
    %v3796 = vld [vmem:[%s3 + $0x760] sm:$0xff]
    %v3797 = vld [vmem:[%s3 + $0x768] sm:$0xff]
    %v3798 = vld [vmem:[%s3 + $0x770] sm:$0xff]
    %v3799 = vld [vmem:[%s3 + $0x778] sm:$0xff]
    %v3800 = vld [vmem:[%s3 + $0x780] sm:$0xff]
    %v3801 = vld [vmem:[%s3 + $0x788] sm:$0xff]
    %v3802 = vld [vmem:[%s3 + $0x790] sm:$0xff]
    %v3803 = vld [vmem:[%s3 + $0x798] sm:$0xff]
    %v3804 = vld [vmem:[%s3 + $0x7a0] sm:$0xff]
    %v3805 = vld [vmem:[%s3 + $0x7a8] sm:$0xff]
    %v3806 = vld [vmem:[%s3 + $0x7b0] sm:$0xff]
    %v3807 = vld [vmem:[%s3 + $0x7b8] sm:$0xff]
    %v3808 = vld [vmem:[%s3 + $0x7c0] sm:$0xff]
    %v3809 = vld [vmem:[%s3 + $0x7c8] sm:$0xff]
    %v3810 = vld [vmem:[%s3 + $0x7d0] sm:$0xff]
    %v3811 = vld [vmem:[%s3 + $0x7d8] sm:$0xff]
    %v3812 = vld [vmem:[%s3 + $0x7e0] sm:$0xff]
    %v3813 = vld [vmem:[%s3 + $0x7e8] sm:$0xff]
    %v3814 = vld [vmem:[%s3 + $0x7f0] sm:$0xff]
    %v3815 = vld [vmem:[%s3 + $0x7f8] sm:$0xff]
    %v3816 = vld [vmem:[%s3 + $0x800] sm:$0xff]
    %v3817 = vld [vmem:[%s3 + $0x808] sm:$0xff]
    %v3818 = vld [vmem:[%s3 + $0x810] sm:$0xff]
    %v3819 = vld [vmem:[%s3 + $0x818] sm:$0xff]
    %v3820 = vld [vmem:[%s3 + $0x820] sm:$0xff]
    %v3821 = vld [vmem:[%s3 + $0x828] sm:$0xff]
    %v3822 = vld [vmem:[%s3 + $0x830] sm:$0xff]
    %v3823 = vld [vmem:[%s3 + $0x838] sm:$0xff]
    %v3824 = vld [vmem:[%s3 + $0x840] sm:$0xff]
    %v3825 = vld [vmem:[%s3 + $0x848] sm:$0xff]
    %v3826 = vld [vmem:[%s3 + $0x850] sm:$0xff]
    %v3827 = vld [vmem:[%s3 + $0x858] sm:$0xff]
    %v3828 = vld [vmem:[%s3 + $0x860] sm:$0xff]
    %v3829 = vld [vmem:[%s3 + $0x868] sm:$0xff]
    %v3830 = vld [vmem:[%s3 + $0x870] sm:$0xff]
    %v3831 = vld [vmem:[%s3 + $0x878] sm:$0xff]
    %v3832 = vld [vmem:[%s3 + $0x880] sm:$0xff]
    %v3833 = vld [vmem:[%s3 + $0x888] sm:$0xff]
    %v3834 = vld [vmem:[%s3 + $0x890] sm:$0xff]
    %v3835 = vld [vmem:[%s3 + $0x898] sm:$0xff]
    %v3836 = vld [vmem:[%s3 + $0x8a0] sm:$0xff]
    %v3837 = vld [vmem:[%s3 + $0x8a8] sm:$0xff]
    %v3838 = vld [vmem:[%s3 + $0x8b0] sm:$0xff]
    %v3839 = vld [vmem:[%s3 + $0x8b8] sm:$0xff]
    %v3840 = vld [vmem:[%s3 + $0x8c0] sm:$0xff]
    %v3841 = vld [vmem:[%s3 + $0x8c8] sm:$0xff]
    %v3842 = vld [vmem:[%s3 + $0x8d0] sm:$0xff]
    %v3843 = vld [vmem:[%s3 + $0x8d8] sm:$0xff]
    %v3844 = vld [vmem:[%s3 + $0x8e0] sm:$0xff]
    %v3845 = vld [vmem:[%s3 + $0x8e8] sm:$0xff]
    %v3846 = vld [vmem:[%s3 + $0x8f0] sm:$0xff]
    %v3847 = vld [vmem:[%s3 + $0x8f8] sm:$0xff]
    %v3848 = vld [vmem:[%s3 + $0x900] sm:$0xff]
    %v3849 = vld [vmem:[%s3 + $0x908] sm:$0xff]
    %v3850 = vld [vmem:[%s3 + $0x910] sm:$0xff]
    %v3851 = vld [vmem:[%s3 + $0x918] sm:$0xff]
    %v3852 = vld [vmem:[%s3 + $0x920] sm:$0xff]
    %v3853 = vld [vmem:[%s3 + $0x928] sm:$0xff]
    %v3854 = vld [vmem:[%s3 + $0x930] sm:$0xff]
    %v3855 = vld [vmem:[%s3 + $0x938] sm:$0xff]
    %v3856 = vld [vmem:[%s3 + $0x940] sm:$0xff]
    %v3857 = vld [vmem:[%s3 + $0x948] sm:$0xff]
    %v3858 = vld [vmem:[%s3 + $0x950] sm:$0xff]
    %v3859 = vld [vmem:[%s3 + $0x958] sm:$0xff]
    %v3860 = vld [vmem:[%s3 + $0x960] sm:$0xff]
    %v3861 = vld [vmem:[%s3 + $0x968] sm:$0xff]
    %v3862 = vld [vmem:[%s3 + $0x970] sm:$0xff]
    %v3863 = vld [vmem:[%s3 + $0x978] sm:$0xff]
    %v3864 = vld [vmem:[%s3 + $0x980] sm:$0xff]
    %v3865 = vld [vmem:[%s3 + $0x988] sm:$0xff]
    %v3866 = vld [vmem:[%s3 + $0x990] sm:$0xff]
    %v3867 = vld [vmem:[%s3 + $0x998] sm:$0xff]
    %v3868 = vld [vmem:[%s3 + $0x9a0] sm:$0xff]
    %v3869 = vld [vmem:[%s3 + $0x9a8] sm:$0xff]
    %v3870 = vld [vmem:[%s3 + $0x9b0] sm:$0xff]
    %v3871 = vld [vmem:[%s3 + $0x9b8] sm:$0xff]
    %v3872 = vld [vmem:[%s3 + $0x9c0] sm:$0xff]
    %v3873 = vld [vmem:[%s3 + $0x9c8] sm:$0xff]
    %v3874 = vld [vmem:[%s3 + $0x9d0] sm:$0xff]
    %v3875 = vld [vmem:[%s3 + $0x9d8] sm:$0xff]
    %v3876 = vld [vmem:[%s3 + $0x9e0] sm:$0xff]
    %v3877 = vld [vmem:[%s3 + $0x9e8] sm:$0xff]
    %v3878 = vld [vmem:[%s3 + $0x9f0] sm:$0xff]
    %v3879 = vld [vmem:[%s3 + $0x9f8] sm:$0xff]
    %v3880 = vld [vmem:[%s3 + $0xa00] sm:$0xff]
    %v3881 = vld [vmem:[%s3 + $0xa08] sm:$0xff]
    %v3882 = vld [vmem:[%s3 + $0xa10] sm:$0xff]
    %v3883 = vld [vmem:[%s3 + $0xa18] sm:$0xff]
    %v3884 = vld [vmem:[%s3 + $0xa20] sm:$0xff]
    %v3885 = vld [vmem:[%s3 + $0xa28] sm:$0xff]
    %v3886 = vld [vmem:[%s3 + $0xa30] sm:$0xff]
    %v3887 = vld [vmem:[%s3 + $0xa38] sm:$0xff]
    %v3888 = vld [vmem:[%s3 + $0xa40] sm:$0xff]
    %v3889 = vld [vmem:[%s3 + $0xa48] sm:$0xff]
    %v3890 = vld [vmem:[%s3 + $0xa50] sm:$0xff]
    %v3891 = vld [vmem:[%s3 + $0xa58] sm:$0xff]
    %v3892 = vld [vmem:[%s3 + $0xa60] sm:$0xff]
    %v3893 = vld [vmem:[%s3 + $0xa68] sm:$0xff]
    %v3894 = vld [vmem:[%s3 + $0xa70] sm:$0xff]
    %v3895 = vld [vmem:[%s3 + $0xa78] sm:$0xff]
    %v3896 = vld [vmem:[%s3 + $0xa80] sm:$0xff]
    %v3897 = vld [vmem:[%s3 + $0xa88] sm:$0xff]
    %v3898 = vld [vmem:[%s3 + $0xa90] sm:$0xff]
    %v3899 = vld [vmem:[%s3 + $0xa98] sm:$0xff]
    %v3900 = vld [vmem:[%s3 + $0xaa0] sm:$0xff]
    %v3901 = vld [vmem:[%s3 + $0xaa8] sm:$0xff]
    %v3902 = vld [vmem:[%s3 + $0xab0] sm:$0xff]
    %v3903 = vld [vmem:[%s3 + $0xab8] sm:$0xff]
    %v3904 = vld [vmem:[%s3 + $0xac0] sm:$0xff]
    %v3905 = vld [vmem:[%s3 + $0xac8] sm:$0xff]
    %v3906 = vld [vmem:[%s3 + $0xad0] sm:$0xff]
    %v3907 = vld [vmem:[%s3 + $0xad8] sm:$0xff]
    %v3908 = vld [vmem:[%s3 + $0xae0] sm:$0xff]
    %v3909 = vld [vmem:[%s3 + $0xae8] sm:$0xff]
    %v3910 = vld [vmem:[%s3 + $0xaf0] sm:$0xff]
    %v3911 = vld [vmem:[%s3 + $0xaf8] sm:$0xff]
    %v3912 = vld [vmem:[%s3 + $0xb00] sm:$0xff]
    %v3913 = vld [vmem:[%s3 + $0xb08] sm:$0xff]
    %v3914 = vld [vmem:[%s3 + $0xb10] sm:$0xff]
    %v3915 = vld [vmem:[%s3 + $0xb18] sm:$0xff]
    %v3916 = vld [vmem:[%s3 + $0xb20] sm:$0xff]
    %v3917 = vld [vmem:[%s3 + $0xb28] sm:$0xff]
    %v3918 = vld [vmem:[%s3 + $0xb30] sm:$0xff]
    %v3919 = vld [vmem:[%s3 + $0xb38] sm:$0xff]
    %v3920 = vld [vmem:[%s3 + $0xb40] sm:$0xff]
    %v3921 = vld [vmem:[%s3 + $0xb48] sm:$0xff]
    %v3922 = vld [vmem:[%s3 + $0xb50] sm:$0xff]
    %v3923 = vld [vmem:[%s3 + $0xb58] sm:$0xff]
    %v3924 = vld [vmem:[%s3 + $0xb60] sm:$0xff]
    %v3925 = vld [vmem:[%s3 + $0xb68] sm:$0xff]
    %v3926 = vld [vmem:[%s3 + $0xb70] sm:$0xff]
    %v3927 = vld [vmem:[%s3 + $0xb78] sm:$0xff]
    %v3928 = vld [vmem:[%s3 + $0xb80] sm:$0xff]
    %v3929 = vld [vmem:[%s3 + $0xb88] sm:$0xff]
    %v3930 = vld [vmem:[%s3 + $0xb90] sm:$0xff]
    %v3931 = vld [vmem:[%s3 + $0xb98] sm:$0xff]
    %v3932 = vld [vmem:[%s3 + $0xba0] sm:$0xff]
    %v3933 = vld [vmem:[%s3 + $0xba8] sm:$0xff]
    %v3934 = vld [vmem:[%s3 + $0xbb0] sm:$0xff]
    %v3935 = vld [vmem:[%s3 + $0xbb8] sm:$0xff]
    %v3936 = vld [vmem:[%s3 + $0xbc0] sm:$0xff]
    %v3937 = vld [vmem:[%s3 + $0xbc8] sm:$0xff]
    %v3938 = vld [vmem:[%s3 + $0xbd0] sm:$0xff]
    %v3939 = vld [vmem:[%s3 + $0xbd8] sm:$0xff]
    %v3940 = vld [vmem:[%s3 + $0xbe0] sm:$0xff]
    %v3941 = vld [vmem:[%s3 + $0xbe8] sm:$0xff]
    %v3942 = vld [vmem:[%s3 + $0xbf0] sm:$0xff]
    %v3943 = vld [vmem:[%s3 + $0xbf8] sm:$0xff]
    %v3944 = vld [vmem:[%s3 + $0xc00] sm:$0xff]
    %v3945 = vld [vmem:[%s3 + $0xc08] sm:$0xff]
    %v3946 = vld [vmem:[%s3 + $0xc10] sm:$0xff]
    %v3947 = vld [vmem:[%s3 + $0xc18] sm:$0xff]
    %v3948 = vld [vmem:[%s3 + $0xc20] sm:$0xff]
    %v3949 = vld [vmem:[%s3 + $0xc28] sm:$0xff]
    %v3950 = vld [vmem:[%s3 + $0xc30] sm:$0xff]
    %v3951 = vld [vmem:[%s3 + $0xc38] sm:$0xff]
    %v3952 = vld [vmem:[%s3 + $0xc40] sm:$0xff]
    %v3953 = vld [vmem:[%s3 + $0xc48] sm:$0xff]
    %v3954 = vld [vmem:[%s3 + $0xc50] sm:$0xff]
    %v3955 = vld [vmem:[%s3 + $0xc58] sm:$0xff]
    %v3956 = vld [vmem:[%s3 + $0xc60] sm:$0xff]
    %v3957 = vld [vmem:[%s3 + $0xc68] sm:$0xff]
    %v3958 = vld [vmem:[%s3 + $0xc70] sm:$0xff]
    %v3959 = vld [vmem:[%s3 + $0xc78] sm:$0xff]
    %v3960 = vld [vmem:[%s3 + $0xc80] sm:$0xff]
    %v3961 = vld [vmem:[%s3 + $0xc88] sm:$0xff]
    %v3962 = vld [vmem:[%s3 + $0xc90] sm:$0xff]
    %v3963 = vld [vmem:[%s3 + $0xc98] sm:$0xff]
    %v3964 = vld [vmem:[%s3 + $0xca0] sm:$0xff]
    %v3965 = vld [vmem:[%s3 + $0xca8] sm:$0xff]
    %v3966 = vld [vmem:[%s3 + $0xcb0] sm:$0xff]
    %v3967 = vld [vmem:[%s3 + $0xcb8] sm:$0xff]
    %v3968 = vld [vmem:[%s3 + $0xcc0] sm:$0xff]
    %v3969 = vld [vmem:[%s3 + $0xcc8] sm:$0xff]
    %v3970 = vld [vmem:[%s3 + $0xcd0] sm:$0xff]
    %v3971 = vld [vmem:[%s3 + $0xcd8] sm:$0xff]
    %v3972 = vld [vmem:[%s3 + $0xce0] sm:$0xff]
    %v3973 = vld [vmem:[%s3 + $0xce8] sm:$0xff]
    %v3974 = vld [vmem:[%s3 + $0xcf0] sm:$0xff]
    %v3975 = vld [vmem:[%s3 + $0xcf8] sm:$0xff]
    %v3976 = vld [vmem:[%s3 + $0xd00] sm:$0xff]
    %v3977 = vld [vmem:[%s3 + $0xd08] sm:$0xff]
    %v3978 = vld [vmem:[%s3 + $0xd10] sm:$0xff]
    %v3979 = vld [vmem:[%s3 + $0xd18] sm:$0xff]
    %v3980 = vld [vmem:[%s3 + $0xd20] sm:$0xff]
    %v3981 = vld [vmem:[%s3 + $0xd28] sm:$0xff]
    %v3982 = vld [vmem:[%s3 + $0xd30] sm:$0xff]
    %v3983 = vld [vmem:[%s3 + $0xd38] sm:$0xff]
    %v3984 = vld [vmem:[%s3 + $0xd40] sm:$0xff]
    %v3985 = vld [vmem:[%s3 + $0xd48] sm:$0xff]
    %v3986 = vld [vmem:[%s3 + $0xd50] sm:$0xff]
    %v3987 = vld [vmem:[%s3 + $0xd58] sm:$0xff]
    %v3988 = vld [vmem:[%s3 + $0xd60] sm:$0xff]
    %v3989 = vld [vmem:[%s3 + $0xd68] sm:$0xff]
    %v3990 = vld [vmem:[%s3 + $0xd70] sm:$0xff]
    %v3991 = vld [vmem:[%s3 + $0xd78] sm:$0xff]
    %v3992 = vld [vmem:[%s3 + $0xd80] sm:$0xff]
    %v3993 = vld [vmem:[%s3 + $0xd88] sm:$0xff]
    %v3994 = vld [vmem:[%s3 + $0xd90] sm:$0xff]
    %v3995 = vld [vmem:[%s3 + $0xd98] sm:$0xff]
    %v3996 = vld [vmem:[%s3 + $0xda0] sm:$0xff]
    %v3997 = vld [vmem:[%s3 + $0xda8] sm:$0xff]
    %v3998 = vld [vmem:[%s3 + $0xdb0] sm:$0xff]
    %v3999 = vld [vmem:[%s3 + $0xdb8] sm:$0xff]
    %v4000 = vld [vmem:[%s3 + $0xdc0] sm:$0xff]
    %v4001 = vld [vmem:[%s3 + $0xdc8] sm:$0xff]
    %v4002 = vld [vmem:[%s3 + $0xdd0] sm:$0xff]
    %v4003 = vld [vmem:[%s3 + $0xdd8] sm:$0xff]
    %v4004 = vld [vmem:[%s3 + $0xde0] sm:$0xff]
    %v4005 = vld [vmem:[%s3 + $0xde8] sm:$0xff]
    %v4006 = vld [vmem:[%s3 + $0xdf0] sm:$0xff]
    %v4007 = vld [vmem:[%s3 + $0xdf8] sm:$0xff]
    %v4008 = vld [vmem:[%s3 + $0xe00] sm:$0xff]
    %v4009 = vld [vmem:[%s3 + $0xe08] sm:$0xff]
    %v4010 = vld [vmem:[%s3 + $0xe10] sm:$0xff]
    %v4011 = vld [vmem:[%s3 + $0xe18] sm:$0xff]
    %v4012 = vld [vmem:[%s3 + $0xe20] sm:$0xff]
    %v4013 = vld [vmem:[%s3 + $0xe28] sm:$0xff]
    %v4014 = vld [vmem:[%s3 + $0xe30] sm:$0xff]
    %v4015 = vld [vmem:[%s3 + $0xe38] sm:$0xff]
    %v4016 = vld [vmem:[%s3 + $0xe40] sm:$0xff]
    %v4017 = vld [vmem:[%s3 + $0xe48] sm:$0xff]
    %v4018 = vld [vmem:[%s3 + $0xe50] sm:$0xff]
    %v4019 = vld [vmem:[%s3 + $0xe58] sm:$0xff]
    %v4020 = vld [vmem:[%s3 + $0xe60] sm:$0xff]
    %v4021 = vld [vmem:[%s3 + $0xe68] sm:$0xff]
    %v4022 = vld [vmem:[%s3 + $0xe70] sm:$0xff]
    %v4023 = vld [vmem:[%s3 + $0xe78] sm:$0xff]
    %v4024 = vld [vmem:[%s3 + $0xe80] sm:$0xff]
    %v4025 = vld [vmem:[%s3 + $0xe88] sm:$0xff]
    %v4026 = vld [vmem:[%s3 + $0xe90] sm:$0xff]
    %v4027 = vld [vmem:[%s3 + $0xe98] sm:$0xff]
    %v4028 = vld [vmem:[%s3 + $0xea0] sm:$0xff]
    %v4029 = vld [vmem:[%s3 + $0xea8] sm:$0xff]
    %v4030 = vld [vmem:[%s3 + $0xeb0] sm:$0xff]
    %v4031 = vld [vmem:[%s3 + $0xeb8] sm:$0xff]
    %v4032 = vld [vmem:[%s3 + $0xec0] sm:$0xff]
    %v4033 = vld [vmem:[%s3 + $0xec8] sm:$0xff]
    %v4034 = vld [vmem:[%s3 + $0xed0] sm:$0xff]
    %v4035 = vld [vmem:[%s3 + $0xed8] sm:$0xff]
    %v4036 = vld [vmem:[%s3 + $0xee0] sm:$0xff]
    %v4037 = vld [vmem:[%s3 + $0xee8] sm:$0xff]
    %v4038 = vld [vmem:[%s3 + $0xef0] sm:$0xff]
    %v4039 = vld [vmem:[%s3 + $0xef8] sm:$0xff]
    %v4040 = vld [vmem:[%s3 + $0xf00] sm:$0xff]
    %v4041 = vld [vmem:[%s3 + $0xf08] sm:$0xff]
    %v4042 = vld [vmem:[%s3 + $0xf10] sm:$0xff]
    %v4043 = vld [vmem:[%s3 + $0xf18] sm:$0xff]
    %v4044 = vld [vmem:[%s3 + $0xf20] sm:$0xff]
    %v4045 = vld [vmem:[%s3 + $0xf28] sm:$0xff]
    %v4046 = vld [vmem:[%s3 + $0xf30] sm:$0xff]
    %v4047 = vld [vmem:[%s3 + $0xf38] sm:$0xff]
    %v4048 = vld [vmem:[%s3 + $0xf40] sm:$0xff]
    %v4049 = vld [vmem:[%s3 + $0xf48] sm:$0xff]
    %v4050 = vld [vmem:[%s3 + $0xf50] sm:$0xff]
    %v4051 = vld [vmem:[%s3 + $0xf58] sm:$0xff]
    %v4052 = vld [vmem:[%s3 + $0xf60] sm:$0xff]
    %v4053 = vld [vmem:[%s3 + $0xf68] sm:$0xff]
    %v4054 = vld [vmem:[%s3 + $0xf70] sm:$0xff]
    %v4055 = vld [vmem:[%s3 + $0xf78] sm:$0xff]
    %v4056 = vld [vmem:[%s3 + $0xf80] sm:$0xff]
    %v4057 = vld [vmem:[%s3 + $0xf88] sm:$0xff]
    %v4058 = vld [vmem:[%s3 + $0xf90] sm:$0xff]
    %v4059 = vld [vmem:[%s3 + $0xf98] sm:$0xff]
    %v4060 = vld [vmem:[%s3 + $0xfa0] sm:$0xff]
    %v4061 = vld [vmem:[%s3 + $0xfa8] sm:$0xff]
    %v4062 = vld [vmem:[%s3 + $0xfb0] sm:$0xff]
    %v4063 = vld [vmem:[%s3 + $0xfb8] sm:$0xff]
    %v4064 = vld [vmem:[%s3 + $0xfc0] sm:$0xff]
    %v4065 = vld [vmem:[%s3 + $0xfc8] sm:$0xff]
    %v4066 = vld [vmem:[%s3 + $0xfd0] sm:$0xff]
    %v4067 = vld [vmem:[%s3 + $0xfd8] sm:$0xff]
    %v4068 = vld [vmem:[%s3 + $0xfe0] sm:$0xff]
    %v4069 = vld [vmem:[%s3 + $0xfe8] sm:$0xff]
    %v4070 = vld [vmem:[%s3 + $0xff0] sm:$0xff]
    %v4071 = vld [vmem:[%s3 + $0xff8] sm:$0xff]
    %v4072 = vld [vmem:[#allocation4] sm:$0xff]
    %v4074 = vperm.slane %v4072, 0
    %v4075 = vperm.slane %v4072, 1
    %v4076 = vperm.slane %v4072, 2
    %v4077 = vperm.slane %v4072, 3
    %v4078 = vperm.slane %v4072, 4
    %v4079 = vperm.slane %v4072, 5
    %v4080 = vperm.slane %v4072, 6
    %v4081 = vperm.slane %v4072, 7
    %v4602 = vunpack.c.l.b16 %v3560
    %v4603 = vunpack.c.h.b16 %v3560
    %v4604 = vunpack.c.l.b16 %v3561
    %v4605 = vunpack.c.h.b16 %v3561
    %v4606 = vunpack.c.l.b16 %v3562
    %v4607 = vunpack.c.h.b16 %v3562
    %v4608 = vunpack.c.l.b16 %v3563
    %v4609 = vunpack.c.h.b16 %v3563
    %v4610 = vunpack.c.l.b16 %v3564
    %v4611 = vunpack.c.h.b16 %v3564
    %v4612 = vunpack.c.l.b16 %v3565
    %v4613 = vunpack.c.h.b16 %v3565
    %v4614 = vunpack.c.l.b16 %v3566
    %v4615 = vunpack.c.h.b16 %v3566
    %v4616 = vunpack.c.l.b16 %v3567
    %v4617 = vunpack.c.h.b16 %v3567
    %v4618 = vunpack.c.l.b16 %v3568
    %v4619 = vunpack.c.h.b16 %v3568
    %v4620 = vunpack.c.l.b16 %v3569
    %v4621 = vunpack.c.h.b16 %v3569
    %v4622 = vunpack.c.l.b16 %v3570
    %v4623 = vunpack.c.h.b16 %v3570
    %v4624 = vunpack.c.l.b16 %v3571
    %v4625 = vunpack.c.h.b16 %v3571
    %v4626 = vunpack.c.l.b16 %v3572
    %v4627 = vunpack.c.h.b16 %v3572
    %v4628 = vunpack.c.l.b16 %v3573
    %v4629 = vunpack.c.h.b16 %v3573
    %v4630 = vunpack.c.l.b16 %v3574
    %v4631 = vunpack.c.h.b16 %v3574
    %v4632 = vunpack.c.l.b16 %v3575
    %v4633 = vunpack.c.h.b16 %v3575
    %v4634 = vunpack.c.l.b16 %v3576
    %v4635 = vunpack.c.h.b16 %v3576
    %v4636 = vunpack.c.l.b16 %v3577
    %v4637 = vunpack.c.h.b16 %v3577
    %v4638 = vunpack.c.l.b16 %v3578
    %v4639 = vunpack.c.h.b16 %v3578
    %v4640 = vunpack.c.l.b16 %v3579
    %v4641 = vunpack.c.h.b16 %v3579
    %v4642 = vunpack.c.l.b16 %v3580
    %v4643 = vunpack.c.h.b16 %v3580
    %v4644 = vunpack.c.l.b16 %v3581
    %v4645 = vunpack.c.h.b16 %v3581
    %v4646 = vunpack.c.l.b16 %v3582
    %v4647 = vunpack.c.h.b16 %v3582
    %v4648 = vunpack.c.l.b16 %v3583
    %v4649 = vunpack.c.h.b16 %v3583
    %v4650 = vunpack.c.l.b16 %v3584
    %v4651 = vunpack.c.h.b16 %v3584
    %v4652 = vunpack.c.l.b16 %v3585
    %v4653 = vunpack.c.h.b16 %v3585
    %v4654 = vunpack.c.l.b16 %v3586
    %v4655 = vunpack.c.h.b16 %v3586
    %v4656 = vunpack.c.l.b16 %v3587
    %v4657 = vunpack.c.h.b16 %v3587
    %v4658 = vunpack.c.l.b16 %v3588
    %v4659 = vunpack.c.h.b16 %v3588
    %v4660 = vunpack.c.l.b16 %v3589
    %v4661 = vunpack.c.h.b16 %v3589
    %v4662 = vunpack.c.l.b16 %v3590
    %v4663 = vunpack.c.h.b16 %v3590
    %v4664 = vunpack.c.l.b16 %v3591
    %v4665 = vunpack.c.h.b16 %v3591
    %v4666 = vunpack.c.l.b16 %v3592
    %v4667 = vunpack.c.h.b16 %v3592
    %v4668 = vunpack.c.l.b16 %v3593
    %v4669 = vunpack.c.h.b16 %v3593
    %v4670 = vunpack.c.l.b16 %v3594
    %v4671 = vunpack.c.h.b16 %v3594
    %v4672 = vunpack.c.l.b16 %v3595
    %v4673 = vunpack.c.h.b16 %v3595
    %v4674 = vunpack.c.l.b16 %v3596
    %v4675 = vunpack.c.h.b16 %v3596
    %v4676 = vunpack.c.l.b16 %v3597
    %v4677 = vunpack.c.h.b16 %v3597
    %v4678 = vunpack.c.l.b16 %v3598
    %v4679 = vunpack.c.h.b16 %v3598
    %v4680 = vunpack.c.l.b16 %v3599
    %v4681 = vunpack.c.h.b16 %v3599
    %v4682 = vunpack.c.l.b16 %v3600
    %v4683 = vunpack.c.h.b16 %v3600
    %v4684 = vunpack.c.l.b16 %v3601
    %v4685 = vunpack.c.h.b16 %v3601
    %v4686 = vunpack.c.l.b16 %v3602
    %v4687 = vunpack.c.h.b16 %v3602
    %v4688 = vunpack.c.l.b16 %v3603
    %v4689 = vunpack.c.h.b16 %v3603
    %v4690 = vunpack.c.l.b16 %v3604
    %v4691 = vunpack.c.h.b16 %v3604
    %v4692 = vunpack.c.l.b16 %v3605
    %v4693 = vunpack.c.h.b16 %v3605
    %v4694 = vunpack.c.l.b16 %v3606
    %v4695 = vunpack.c.h.b16 %v3606
    %v4696 = vunpack.c.l.b16 %v3607
    %v4697 = vunpack.c.h.b16 %v3607
    %v4698 = vunpack.c.l.b16 %v3608
    %v4699 = vunpack.c.h.b16 %v3608
    %v4700 = vunpack.c.l.b16 %v3609
    %v4701 = vunpack.c.h.b16 %v3609
    %v4702 = vunpack.c.l.b16 %v3610
    %v4703 = vunpack.c.h.b16 %v3610
    %v4704 = vunpack.c.l.b16 %v3611
    %v4705 = vunpack.c.h.b16 %v3611
    %v4706 = vunpack.c.l.b16 %v3612
    %v4707 = vunpack.c.h.b16 %v3612
    %v4708 = vunpack.c.l.b16 %v3613
    %v4709 = vunpack.c.h.b16 %v3613
    %v4710 = vunpack.c.l.b16 %v3614
    %v4711 = vunpack.c.h.b16 %v3614
    %v4712 = vunpack.c.l.b16 %v3615
    %v4713 = vunpack.c.h.b16 %v3615
    %v4714 = vunpack.c.l.b16 %v3616
    %v4715 = vunpack.c.h.b16 %v3616
    %v4716 = vunpack.c.l.b16 %v3617
    %v4717 = vunpack.c.h.b16 %v3617
    %v4718 = vunpack.c.l.b16 %v3618
    %v4719 = vunpack.c.h.b16 %v3618
    %v4720 = vunpack.c.l.b16 %v3619
    %v4721 = vunpack.c.h.b16 %v3619
    %v4722 = vunpack.c.l.b16 %v3620
    %v4723 = vunpack.c.h.b16 %v3620
    %v4724 = vunpack.c.l.b16 %v3621
    %v4725 = vunpack.c.h.b16 %v3621
    %v4726 = vunpack.c.l.b16 %v3622
    %v4727 = vunpack.c.h.b16 %v3622
    %v4728 = vunpack.c.l.b16 %v3623
    %v4729 = vunpack.c.h.b16 %v3623
    %v4730 = vunpack.c.l.b16 %v3624
    %v4731 = vunpack.c.h.b16 %v3624
    %v4732 = vunpack.c.l.b16 %v3625
    %v4733 = vunpack.c.h.b16 %v3625
    %v4734 = vunpack.c.l.b16 %v3626
    %v4735 = vunpack.c.h.b16 %v3626
    %v4736 = vunpack.c.l.b16 %v3627
    %v4737 = vunpack.c.h.b16 %v3627
    %v4738 = vunpack.c.l.b16 %v3628
    %v4739 = vunpack.c.h.b16 %v3628
    %v4740 = vunpack.c.l.b16 %v3629
    %v4741 = vunpack.c.h.b16 %v3629
    %v4742 = vunpack.c.l.b16 %v3630
    %v4743 = vunpack.c.h.b16 %v3630
    %v4744 = vunpack.c.l.b16 %v3631
    %v4745 = vunpack.c.h.b16 %v3631
    %v4746 = vunpack.c.l.b16 %v3632
    %v4747 = vunpack.c.h.b16 %v3632
    %v4748 = vunpack.c.l.b16 %v3633
    %v4749 = vunpack.c.h.b16 %v3633
    %v4750 = vunpack.c.l.b16 %v3634
    %v4751 = vunpack.c.h.b16 %v3634
    %v4752 = vunpack.c.l.b16 %v3635
    %v4753 = vunpack.c.h.b16 %v3635
    %v4754 = vunpack.c.l.b16 %v3636
    %v4755 = vunpack.c.h.b16 %v3636
    %v4756 = vunpack.c.l.b16 %v3637
    %v4757 = vunpack.c.h.b16 %v3637
    %v4758 = vunpack.c.l.b16 %v3638
    %v4759 = vunpack.c.h.b16 %v3638
    %v4760 = vunpack.c.l.b16 %v3639
    %v4761 = vunpack.c.h.b16 %v3639
    %v4762 = vunpack.c.l.b16 %v3640
    %v4763 = vunpack.c.h.b16 %v3640
    %v4764 = vunpack.c.l.b16 %v3641
    %v4765 = vunpack.c.h.b16 %v3641
    %v4766 = vunpack.c.l.b16 %v3642
    %v4767 = vunpack.c.h.b16 %v3642
    %v4768 = vunpack.c.l.b16 %v3643
    %v4769 = vunpack.c.h.b16 %v3643
    %v4770 = vunpack.c.l.b16 %v3644
    %v4771 = vunpack.c.h.b16 %v3644
    %v4772 = vunpack.c.l.b16 %v3645
    %v4773 = vunpack.c.h.b16 %v3645
    %v4774 = vunpack.c.l.b16 %v3646
    %v4775 = vunpack.c.h.b16 %v3646
    %v4776 = vunpack.c.l.b16 %v3647
    %v4777 = vunpack.c.h.b16 %v3647
    %v4778 = vunpack.c.l.b16 %v3648
    %v4779 = vunpack.c.h.b16 %v3648
    %v4780 = vunpack.c.l.b16 %v3649
    %v4781 = vunpack.c.h.b16 %v3649
    %v4782 = vunpack.c.l.b16 %v3650
    %v4783 = vunpack.c.h.b16 %v3650
    %v4784 = vunpack.c.l.b16 %v3651
    %v4785 = vunpack.c.h.b16 %v3651
    %v4786 = vunpack.c.l.b16 %v3652
    %v4787 = vunpack.c.h.b16 %v3652
    %v4788 = vunpack.c.l.b16 %v3653
    %v4789 = vunpack.c.h.b16 %v3653
    %v4790 = vunpack.c.l.b16 %v3654
    %v4791 = vunpack.c.h.b16 %v3654
    %v4792 = vunpack.c.l.b16 %v3655
    %v4793 = vunpack.c.h.b16 %v3655
    %v4794 = vunpack.c.l.b16 %v3656
    %v4795 = vunpack.c.h.b16 %v3656
    %v4796 = vunpack.c.l.b16 %v3657
    %v4797 = vunpack.c.h.b16 %v3657
    %v4798 = vunpack.c.l.b16 %v3658
    %v4799 = vunpack.c.h.b16 %v3658
    %v4800 = vunpack.c.l.b16 %v3659
    %v4801 = vunpack.c.h.b16 %v3659
    %v4802 = vunpack.c.l.b16 %v3660
    %v4803 = vunpack.c.h.b16 %v3660
    %v4804 = vunpack.c.l.b16 %v3661
    %v4805 = vunpack.c.h.b16 %v3661
    %v4806 = vunpack.c.l.b16 %v3662
    %v4807 = vunpack.c.h.b16 %v3662
    %v4808 = vunpack.c.l.b16 %v3663
    %v4809 = vunpack.c.h.b16 %v3663
    %v4810 = vunpack.c.l.b16 %v3664
    %v4811 = vunpack.c.h.b16 %v3664
    %v4812 = vunpack.c.l.b16 %v3665
    %v4813 = vunpack.c.h.b16 %v3665
    %v4814 = vunpack.c.l.b16 %v3666
    %v4815 = vunpack.c.h.b16 %v3666
    %v4816 = vunpack.c.l.b16 %v3667
    %v4817 = vunpack.c.h.b16 %v3667
    %v4818 = vunpack.c.l.b16 %v3668
    %v4819 = vunpack.c.h.b16 %v3668
    %v4820 = vunpack.c.l.b16 %v3669
    %v4821 = vunpack.c.h.b16 %v3669
    %v4822 = vunpack.c.l.b16 %v3670
    %v4823 = vunpack.c.h.b16 %v3670
    %v4824 = vunpack.c.l.b16 %v3671
    %v4825 = vunpack.c.h.b16 %v3671
    %v4826 = vunpack.c.l.b16 %v3672
    %v4827 = vunpack.c.h.b16 %v3672
    %v4828 = vunpack.c.l.b16 %v3673
    %v4829 = vunpack.c.h.b16 %v3673
    %v4830 = vunpack.c.l.b16 %v3674
    %v4831 = vunpack.c.h.b16 %v3674
    %v4832 = vunpack.c.l.b16 %v3675
    %v4833 = vunpack.c.h.b16 %v3675
    %v4834 = vunpack.c.l.b16 %v3676
    %v4835 = vunpack.c.h.b16 %v3676
    %v4836 = vunpack.c.l.b16 %v3677
    %v4837 = vunpack.c.h.b16 %v3677
    %v4838 = vunpack.c.l.b16 %v3678
    %v4839 = vunpack.c.h.b16 %v3678
    %v4840 = vunpack.c.l.b16 %v3679
    %v4841 = vunpack.c.h.b16 %v3679
    %v4842 = vunpack.c.l.b16 %v3680
    %v4843 = vunpack.c.h.b16 %v3680
    %v4844 = vunpack.c.l.b16 %v3681
    %v4845 = vunpack.c.h.b16 %v3681
    %v4846 = vunpack.c.l.b16 %v3682
    %v4847 = vunpack.c.h.b16 %v3682
    %v4848 = vunpack.c.l.b16 %v3683
    %v4849 = vunpack.c.h.b16 %v3683
    %v4850 = vunpack.c.l.b16 %v3684
    %v4851 = vunpack.c.h.b16 %v3684
    %v4852 = vunpack.c.l.b16 %v3685
    %v4853 = vunpack.c.h.b16 %v3685
    %v4854 = vunpack.c.l.b16 %v3686
    %v4855 = vunpack.c.h.b16 %v3686
    %v4856 = vunpack.c.l.b16 %v3687
    %v4857 = vunpack.c.h.b16 %v3687
    %v4858 = vunpack.c.l.b16 %v3688
    %v4859 = vunpack.c.h.b16 %v3688
    %v4860 = vunpack.c.l.b16 %v3689
    %v4861 = vunpack.c.h.b16 %v3689
    %v4862 = vunpack.c.l.b16 %v3690
    %v4863 = vunpack.c.h.b16 %v3690
    %v4864 = vunpack.c.l.b16 %v3691
    %v4865 = vunpack.c.h.b16 %v3691
    %v4866 = vunpack.c.l.b16 %v3692
    %v4867 = vunpack.c.h.b16 %v3692
    %v4868 = vunpack.c.l.b16 %v3693
    %v4869 = vunpack.c.h.b16 %v3693
    %v4870 = vunpack.c.l.b16 %v3694
    %v4871 = vunpack.c.h.b16 %v3694
    %v4872 = vunpack.c.l.b16 %v3695
    %v4873 = vunpack.c.h.b16 %v3695
    %v4874 = vunpack.c.l.b16 %v3696
    %v4875 = vunpack.c.h.b16 %v3696
    %v4876 = vunpack.c.l.b16 %v3697
    %v4877 = vunpack.c.h.b16 %v3697
    %v4878 = vunpack.c.l.b16 %v3698
    %v4879 = vunpack.c.h.b16 %v3698
    %v4880 = vunpack.c.l.b16 %v3699
    %v4881 = vunpack.c.h.b16 %v3699
    %v4882 = vunpack.c.l.b16 %v3700
    %v4883 = vunpack.c.h.b16 %v3700
    %v4884 = vunpack.c.l.b16 %v3701
    %v4885 = vunpack.c.h.b16 %v3701
    %v4886 = vunpack.c.l.b16 %v3702
    %v4887 = vunpack.c.h.b16 %v3702
    %v4888 = vunpack.c.l.b16 %v3703
    %v4889 = vunpack.c.h.b16 %v3703
    %v4890 = vunpack.c.l.b16 %v3704
    %v4891 = vunpack.c.h.b16 %v3704
    %v4892 = vunpack.c.l.b16 %v3705
    %v4893 = vunpack.c.h.b16 %v3705
    %v4894 = vunpack.c.l.b16 %v3706
    %v4895 = vunpack.c.h.b16 %v3706
    %v4896 = vunpack.c.l.b16 %v3707
    %v4897 = vunpack.c.h.b16 %v3707
    %v4898 = vunpack.c.l.b16 %v3708
    %v4899 = vunpack.c.h.b16 %v3708
    %v4900 = vunpack.c.l.b16 %v3709
    %v4901 = vunpack.c.h.b16 %v3709
    %v4902 = vunpack.c.l.b16 %v3710
    %v4903 = vunpack.c.h.b16 %v3710
    %v4904 = vunpack.c.l.b16 %v3711
    %v4905 = vunpack.c.h.b16 %v3711
    %v4906 = vunpack.c.l.b16 %v3712
    %v4907 = vunpack.c.h.b16 %v3712
    %v4908 = vunpack.c.l.b16 %v3713
    %v4909 = vunpack.c.h.b16 %v3713
    %v4910 = vunpack.c.l.b16 %v3714
    %v4911 = vunpack.c.h.b16 %v3714
    %v4912 = vunpack.c.l.b16 %v3715
    %v4913 = vunpack.c.h.b16 %v3715
    %v4914 = vunpack.c.l.b16 %v3716
    %v4915 = vunpack.c.h.b16 %v3716
    %v4916 = vunpack.c.l.b16 %v3717
    %v4917 = vunpack.c.h.b16 %v3717
    %v4918 = vunpack.c.l.b16 %v3718
    %v4919 = vunpack.c.h.b16 %v3718
    %v4920 = vunpack.c.l.b16 %v3719
    %v4921 = vunpack.c.h.b16 %v3719
    %v4922 = vunpack.c.l.b16 %v3720
    %v4923 = vunpack.c.h.b16 %v3720
    %v4924 = vunpack.c.l.b16 %v3721
    %v4925 = vunpack.c.h.b16 %v3721
    %v4926 = vunpack.c.l.b16 %v3722
    %v4927 = vunpack.c.h.b16 %v3722
    %v4928 = vunpack.c.l.b16 %v3723
    %v4929 = vunpack.c.h.b16 %v3723
    %v4930 = vunpack.c.l.b16 %v3724
    %v4931 = vunpack.c.h.b16 %v3724
    %v4932 = vunpack.c.l.b16 %v3725
    %v4933 = vunpack.c.h.b16 %v3725
    %v4934 = vunpack.c.l.b16 %v3726
    %v4935 = vunpack.c.h.b16 %v3726
    %v4936 = vunpack.c.l.b16 %v3727
    %v4937 = vunpack.c.h.b16 %v3727
    %v4938 = vunpack.c.l.b16 %v3728
    %v4939 = vunpack.c.h.b16 %v3728
    %v4940 = vunpack.c.l.b16 %v3729
    %v4941 = vunpack.c.h.b16 %v3729
    %v4942 = vunpack.c.l.b16 %v3730
    %v4943 = vunpack.c.h.b16 %v3730
    %v4944 = vunpack.c.l.b16 %v3731
    %v4945 = vunpack.c.h.b16 %v3731
    %v4946 = vunpack.c.l.b16 %v3732
    %v4947 = vunpack.c.h.b16 %v3732
    %v4948 = vunpack.c.l.b16 %v3733
    %v4949 = vunpack.c.h.b16 %v3733
    %v4950 = vunpack.c.l.b16 %v3734
    %v4951 = vunpack.c.h.b16 %v3734
    %v4952 = vunpack.c.l.b16 %v3735
    %v4953 = vunpack.c.h.b16 %v3735
    %v4954 = vunpack.c.l.b16 %v3736
    %v4955 = vunpack.c.h.b16 %v3736
    %v4956 = vunpack.c.l.b16 %v3737
    %v4957 = vunpack.c.h.b16 %v3737
    %v4958 = vunpack.c.l.b16 %v3738
    %v4959 = vunpack.c.h.b16 %v3738
    %v4960 = vunpack.c.l.b16 %v3739
    %v4961 = vunpack.c.h.b16 %v3739
    %v4962 = vunpack.c.l.b16 %v3740
    %v4963 = vunpack.c.h.b16 %v3740
    %v4964 = vunpack.c.l.b16 %v3741
    %v4965 = vunpack.c.h.b16 %v3741
    %v4966 = vunpack.c.l.b16 %v3742
    %v4967 = vunpack.c.h.b16 %v3742
    %v4968 = vunpack.c.l.b16 %v3743
    %v4969 = vunpack.c.h.b16 %v3743
    %v4970 = vunpack.c.l.b16 %v3744
    %v4971 = vunpack.c.h.b16 %v3744
    %v4972 = vunpack.c.l.b16 %v3745
    %v4973 = vunpack.c.h.b16 %v3745
    %v4974 = vunpack.c.l.b16 %v3746
    %v4975 = vunpack.c.h.b16 %v3746
    %v4976 = vunpack.c.l.b16 %v3747
    %v4977 = vunpack.c.h.b16 %v3747
    %v4978 = vunpack.c.l.b16 %v3748
    %v4979 = vunpack.c.h.b16 %v3748
    %v4980 = vunpack.c.l.b16 %v3749
    %v4981 = vunpack.c.h.b16 %v3749
    %v4982 = vunpack.c.l.b16 %v3750
    %v4983 = vunpack.c.h.b16 %v3750
    %v4984 = vunpack.c.l.b16 %v3751
    %v4985 = vunpack.c.h.b16 %v3751
    %v4986 = vunpack.c.l.b16 %v3752
    %v4987 = vunpack.c.h.b16 %v3752
    %v4988 = vunpack.c.l.b16 %v3753
    %v4989 = vunpack.c.h.b16 %v3753
    %v4990 = vunpack.c.l.b16 %v3754
    %v4991 = vunpack.c.h.b16 %v3754
    %v4992 = vunpack.c.l.b16 %v3755
    %v4993 = vunpack.c.h.b16 %v3755
    %v4994 = vunpack.c.l.b16 %v3756
    %v4995 = vunpack.c.h.b16 %v3756
    %v4996 = vunpack.c.l.b16 %v3757
    %v4997 = vunpack.c.h.b16 %v3757
    %v4998 = vunpack.c.l.b16 %v3758
    %v4999 = vunpack.c.h.b16 %v3758
    %v5000 = vunpack.c.l.b16 %v3759
    %v5001 = vunpack.c.h.b16 %v3759
    %v5002 = vunpack.c.l.b16 %v3760
    %v5003 = vunpack.c.h.b16 %v3760
    %v5004 = vunpack.c.l.b16 %v3761
    %v5005 = vunpack.c.h.b16 %v3761
    %v5006 = vunpack.c.l.b16 %v3762
    %v5007 = vunpack.c.h.b16 %v3762
    %v5008 = vunpack.c.l.b16 %v3763
    %v5009 = vunpack.c.h.b16 %v3763
    %v5010 = vunpack.c.l.b16 %v3764
    %v5011 = vunpack.c.h.b16 %v3764
    %v5012 = vunpack.c.l.b16 %v3765
    %v5013 = vunpack.c.h.b16 %v3765
    %v5014 = vunpack.c.l.b16 %v3766
    %v5015 = vunpack.c.h.b16 %v3766
    %v5016 = vunpack.c.l.b16 %v3767
    %v5017 = vunpack.c.h.b16 %v3767
    %v5018 = vunpack.c.l.b16 %v3768
    %v5019 = vunpack.c.h.b16 %v3768
    %v5020 = vunpack.c.l.b16 %v3769
    %v5021 = vunpack.c.h.b16 %v3769
    %v5022 = vunpack.c.l.b16 %v3770
    %v5023 = vunpack.c.h.b16 %v3770
    %v5024 = vunpack.c.l.b16 %v3771
    %v5025 = vunpack.c.h.b16 %v3771
    %v5026 = vunpack.c.l.b16 %v3772
    %v5027 = vunpack.c.h.b16 %v3772
    %v5028 = vunpack.c.l.b16 %v3773
    %v5029 = vunpack.c.h.b16 %v3773
    %v5030 = vunpack.c.l.b16 %v3774
    %v5031 = vunpack.c.h.b16 %v3774
    %v5032 = vunpack.c.l.b16 %v3775
    %v5033 = vunpack.c.h.b16 %v3775
    %v5034 = vunpack.c.l.b16 %v3776
    %v5035 = vunpack.c.h.b16 %v3776
    %v5036 = vunpack.c.l.b16 %v3777
    %v5037 = vunpack.c.h.b16 %v3777
    %v5038 = vunpack.c.l.b16 %v3778
    %v5039 = vunpack.c.h.b16 %v3778
    %v5040 = vunpack.c.l.b16 %v3779
    %v5041 = vunpack.c.h.b16 %v3779
    %v5042 = vunpack.c.l.b16 %v3780
    %v5043 = vunpack.c.h.b16 %v3780
    %v5044 = vunpack.c.l.b16 %v3781
    %v5045 = vunpack.c.h.b16 %v3781
    %v5046 = vunpack.c.l.b16 %v3782
    %v5047 = vunpack.c.h.b16 %v3782
    %v5048 = vunpack.c.l.b16 %v3783
    %v5049 = vunpack.c.h.b16 %v3783
    %v5050 = vunpack.c.l.b16 %v3784
    %v5051 = vunpack.c.h.b16 %v3784
    %v5052 = vunpack.c.l.b16 %v3785
    %v5053 = vunpack.c.h.b16 %v3785
    %v5054 = vunpack.c.l.b16 %v3786
    %v5055 = vunpack.c.h.b16 %v3786
    %v5056 = vunpack.c.l.b16 %v3787
    %v5057 = vunpack.c.h.b16 %v3787
    %v5058 = vunpack.c.l.b16 %v3788
    %v5059 = vunpack.c.h.b16 %v3788
    %v5060 = vunpack.c.l.b16 %v3789
    %v5061 = vunpack.c.h.b16 %v3789
    %v5062 = vunpack.c.l.b16 %v3790
    %v5063 = vunpack.c.h.b16 %v3790
    %v5064 = vunpack.c.l.b16 %v3791
    %v5065 = vunpack.c.h.b16 %v3791
    %v5066 = vunpack.c.l.b16 %v3792
    %v5067 = vunpack.c.h.b16 %v3792
    %v5068 = vunpack.c.l.b16 %v3793
    %v5069 = vunpack.c.h.b16 %v3793
    %v5070 = vunpack.c.l.b16 %v3794
    %v5071 = vunpack.c.h.b16 %v3794
    %v5072 = vunpack.c.l.b16 %v3795
    %v5073 = vunpack.c.h.b16 %v3795
    %v5074 = vunpack.c.l.b16 %v3796
    %v5075 = vunpack.c.h.b16 %v3796
    %v5076 = vunpack.c.l.b16 %v3797
    %v5077 = vunpack.c.h.b16 %v3797
    %v5078 = vunpack.c.l.b16 %v3798
    %v5079 = vunpack.c.h.b16 %v3798
    %v5080 = vunpack.c.l.b16 %v3799
    %v5081 = vunpack.c.h.b16 %v3799
    %v5082 = vunpack.c.l.b16 %v3800
    %v5083 = vunpack.c.h.b16 %v3800
    %v5084 = vunpack.c.l.b16 %v3801
    %v5085 = vunpack.c.h.b16 %v3801
    %v5086 = vunpack.c.l.b16 %v3802
    %v5087 = vunpack.c.h.b16 %v3802
    %v5088 = vunpack.c.l.b16 %v3803
    %v5089 = vunpack.c.h.b16 %v3803
    %v5090 = vunpack.c.l.b16 %v3804
    %v5091 = vunpack.c.h.b16 %v3804
    %v5092 = vunpack.c.l.b16 %v3805
    %v5093 = vunpack.c.h.b16 %v3805
    %v5094 = vunpack.c.l.b16 %v3806
    %v5095 = vunpack.c.h.b16 %v3806
    %v5096 = vunpack.c.l.b16 %v3807
    %v5097 = vunpack.c.h.b16 %v3807
    %v5098 = vunpack.c.l.b16 %v3808
    %v5099 = vunpack.c.h.b16 %v3808
    %v5100 = vunpack.c.l.b16 %v3809
    %v5101 = vunpack.c.h.b16 %v3809
    %v5102 = vunpack.c.l.b16 %v3810
    %v5103 = vunpack.c.h.b16 %v3810
    %v5104 = vunpack.c.l.b16 %v3811
    %v5105 = vunpack.c.h.b16 %v3811
    %v5106 = vunpack.c.l.b16 %v3812
    %v5107 = vunpack.c.h.b16 %v3812
    %v5108 = vunpack.c.l.b16 %v3813
    %v5109 = vunpack.c.h.b16 %v3813
    %v5110 = vunpack.c.l.b16 %v3814
    %v5111 = vunpack.c.h.b16 %v3814
    %v5112 = vunpack.c.l.b16 %v3815
    %v5113 = vunpack.c.h.b16 %v3815
    %v5114 = vunpack.c.l.b16 %v3816
    %v5115 = vunpack.c.h.b16 %v3816
    %v5116 = vunpack.c.l.b16 %v3817
    %v5117 = vunpack.c.h.b16 %v3817
    %v5118 = vunpack.c.l.b16 %v3818
    %v5119 = vunpack.c.h.b16 %v3818
    %v5120 = vunpack.c.l.b16 %v3819
    %v5121 = vunpack.c.h.b16 %v3819
    %v5122 = vunpack.c.l.b16 %v3820
    %v5123 = vunpack.c.h.b16 %v3820
    %v5124 = vunpack.c.l.b16 %v3821
    %v5125 = vunpack.c.h.b16 %v3821
    %v5126 = vunpack.c.l.b16 %v3822
    %v5127 = vunpack.c.h.b16 %v3822
    %v5128 = vunpack.c.l.b16 %v3823
    %v5129 = vunpack.c.h.b16 %v3823
    %v5130 = vunpack.c.l.b16 %v3824
    %v5131 = vunpack.c.h.b16 %v3824
    %v5132 = vunpack.c.l.b16 %v3825
    %v5133 = vunpack.c.h.b16 %v3825
    %v5134 = vunpack.c.l.b16 %v3826
    %v5135 = vunpack.c.h.b16 %v3826
    %v5136 = vunpack.c.l.b16 %v3827
    %v5137 = vunpack.c.h.b16 %v3827
    %v5138 = vunpack.c.l.b16 %v3828
    %v5139 = vunpack.c.h.b16 %v3828
    %v5140 = vunpack.c.l.b16 %v3829
    %v5141 = vunpack.c.h.b16 %v3829
    %v5142 = vunpack.c.l.b16 %v3830
    %v5143 = vunpack.c.h.b16 %v3830
    %v5144 = vunpack.c.l.b16 %v3831
    %v5145 = vunpack.c.h.b16 %v3831
    %v5146 = vunpack.c.l.b16 %v3832
    %v5147 = vunpack.c.h.b16 %v3832
    %v5148 = vunpack.c.l.b16 %v3833
    %v5149 = vunpack.c.h.b16 %v3833
    %v5150 = vunpack.c.l.b16 %v3834
    %v5151 = vunpack.c.h.b16 %v3834
    %v5152 = vunpack.c.l.b16 %v3835
    %v5153 = vunpack.c.h.b16 %v3835
    %v5154 = vunpack.c.l.b16 %v3836
    %v5155 = vunpack.c.h.b16 %v3836
    %v5156 = vunpack.c.l.b16 %v3837
    %v5157 = vunpack.c.h.b16 %v3837
    %v5158 = vunpack.c.l.b16 %v3838
    %v5159 = vunpack.c.h.b16 %v3838
    %v5160 = vunpack.c.l.b16 %v3839
    %v5161 = vunpack.c.h.b16 %v3839
    %v5162 = vunpack.c.l.b16 %v3840
    %v5163 = vunpack.c.h.b16 %v3840
    %v5164 = vunpack.c.l.b16 %v3841
    %v5165 = vunpack.c.h.b16 %v3841
    %v5166 = vunpack.c.l.b16 %v3842
    %v5167 = vunpack.c.h.b16 %v3842
    %v5168 = vunpack.c.l.b16 %v3843
    %v5169 = vunpack.c.h.b16 %v3843
    %v5170 = vunpack.c.l.b16 %v3844
    %v5171 = vunpack.c.h.b16 %v3844
    %v5172 = vunpack.c.l.b16 %v3845
    %v5173 = vunpack.c.h.b16 %v3845
    %v5174 = vunpack.c.l.b16 %v3846
    %v5175 = vunpack.c.h.b16 %v3846
    %v5176 = vunpack.c.l.b16 %v3847
    %v5177 = vunpack.c.h.b16 %v3847
    %v5178 = vunpack.c.l.b16 %v3848
    %v5179 = vunpack.c.h.b16 %v3848
    %v5180 = vunpack.c.l.b16 %v3849
    %v5181 = vunpack.c.h.b16 %v3849
    %v5182 = vunpack.c.l.b16 %v3850
    %v5183 = vunpack.c.h.b16 %v3850
    %v5184 = vunpack.c.l.b16 %v3851
    %v5185 = vunpack.c.h.b16 %v3851
    %v5186 = vunpack.c.l.b16 %v3852
    %v5187 = vunpack.c.h.b16 %v3852
    %v5188 = vunpack.c.l.b16 %v3853
    %v5189 = vunpack.c.h.b16 %v3853
    %v5190 = vunpack.c.l.b16 %v3854
    %v5191 = vunpack.c.h.b16 %v3854
    %v5192 = vunpack.c.l.b16 %v3855
    %v5193 = vunpack.c.h.b16 %v3855
    %v5194 = vunpack.c.l.b16 %v3856
    %v5195 = vunpack.c.h.b16 %v3856
    %v5196 = vunpack.c.l.b16 %v3857
    %v5197 = vunpack.c.h.b16 %v3857
    %v5198 = vunpack.c.l.b16 %v3858
    %v5199 = vunpack.c.h.b16 %v3858
    %v5200 = vunpack.c.l.b16 %v3859
    %v5201 = vunpack.c.h.b16 %v3859
    %v5202 = vunpack.c.l.b16 %v3860
    %v5203 = vunpack.c.h.b16 %v3860
    %v5204 = vunpack.c.l.b16 %v3861
    %v5205 = vunpack.c.h.b16 %v3861
    %v5206 = vunpack.c.l.b16 %v3862
    %v5207 = vunpack.c.h.b16 %v3862
    %v5208 = vunpack.c.l.b16 %v3863
    %v5209 = vunpack.c.h.b16 %v3863
    %v5210 = vunpack.c.l.b16 %v3864
    %v5211 = vunpack.c.h.b16 %v3864
    %v5212 = vunpack.c.l.b16 %v3865
    %v5213 = vunpack.c.h.b16 %v3865
    %v5214 = vunpack.c.l.b16 %v3866
    %v5215 = vunpack.c.h.b16 %v3866
    %v5216 = vunpack.c.l.b16 %v3867
    %v5217 = vunpack.c.h.b16 %v3867
    %v5218 = vunpack.c.l.b16 %v3868
    %v5219 = vunpack.c.h.b16 %v3868
    %v5220 = vunpack.c.l.b16 %v3869
    %v5221 = vunpack.c.h.b16 %v3869
    %v5222 = vunpack.c.l.b16 %v3870
    %v5223 = vunpack.c.h.b16 %v3870
    %v5224 = vunpack.c.l.b16 %v3871
    %v5225 = vunpack.c.h.b16 %v3871
    %v5226 = vunpack.c.l.b16 %v3872
    %v5227 = vunpack.c.h.b16 %v3872
    %v5228 = vunpack.c.l.b16 %v3873
    %v5229 = vunpack.c.h.b16 %v3873
    %v5230 = vunpack.c.l.b16 %v3874
    %v5231 = vunpack.c.h.b16 %v3874
    %v5232 = vunpack.c.l.b16 %v3875
    %v5233 = vunpack.c.h.b16 %v3875
    %v5234 = vunpack.c.l.b16 %v3876
    %v5235 = vunpack.c.h.b16 %v3876
    %v5236 = vunpack.c.l.b16 %v3877
    %v5237 = vunpack.c.h.b16 %v3877
    %v5238 = vunpack.c.l.b16 %v3878
    %v5239 = vunpack.c.h.b16 %v3878
    %v5240 = vunpack.c.l.b16 %v3879
    %v5241 = vunpack.c.h.b16 %v3879
    %v5242 = vunpack.c.l.b16 %v3880
    %v5243 = vunpack.c.h.b16 %v3880
    %v5244 = vunpack.c.l.b16 %v3881
    %v5245 = vunpack.c.h.b16 %v3881
    %v5246 = vunpack.c.l.b16 %v3882
    %v5247 = vunpack.c.h.b16 %v3882
    %v5248 = vunpack.c.l.b16 %v3883
    %v5249 = vunpack.c.h.b16 %v3883
    %v5250 = vunpack.c.l.b16 %v3884
    %v5251 = vunpack.c.h.b16 %v3884
    %v5252 = vunpack.c.l.b16 %v3885
    %v5253 = vunpack.c.h.b16 %v3885
    %v5254 = vunpack.c.l.b16 %v3886
    %v5255 = vunpack.c.h.b16 %v3886
    %v5256 = vunpack.c.l.b16 %v3887
    %v5257 = vunpack.c.h.b16 %v3887
    %v5258 = vunpack.c.l.b16 %v3888
    %v5259 = vunpack.c.h.b16 %v3888
    %v5260 = vunpack.c.l.b16 %v3889
    %v5261 = vunpack.c.h.b16 %v3889
    %v5262 = vunpack.c.l.b16 %v3890
    %v5263 = vunpack.c.h.b16 %v3890
    %v5264 = vunpack.c.l.b16 %v3891
    %v5265 = vunpack.c.h.b16 %v3891
    %v5266 = vunpack.c.l.b16 %v3892
    %v5267 = vunpack.c.h.b16 %v3892
    %v5268 = vunpack.c.l.b16 %v3893
    %v5269 = vunpack.c.h.b16 %v3893
    %v5270 = vunpack.c.l.b16 %v3894
    %v5271 = vunpack.c.h.b16 %v3894
    %v5272 = vunpack.c.l.b16 %v3895
    %v5273 = vunpack.c.h.b16 %v3895
    %v5274 = vunpack.c.l.b16 %v3896
    %v5275 = vunpack.c.h.b16 %v3896
    %v5276 = vunpack.c.l.b16 %v3897
    %v5277 = vunpack.c.h.b16 %v3897
    %v5278 = vunpack.c.l.b16 %v3898
    %v5279 = vunpack.c.h.b16 %v3898
    %v5280 = vunpack.c.l.b16 %v3899
    %v5281 = vunpack.c.h.b16 %v3899
    %v5282 = vunpack.c.l.b16 %v3900
    %v5283 = vunpack.c.h.b16 %v3900
    %v5284 = vunpack.c.l.b16 %v3901
    %v5285 = vunpack.c.h.b16 %v3901
    %v5286 = vunpack.c.l.b16 %v3902
    %v5287 = vunpack.c.h.b16 %v3902
    %v5288 = vunpack.c.l.b16 %v3903
    %v5289 = vunpack.c.h.b16 %v3903
    %v5290 = vunpack.c.l.b16 %v3904
    %v5291 = vunpack.c.h.b16 %v3904
    %v5292 = vunpack.c.l.b16 %v3905
    %v5293 = vunpack.c.h.b16 %v3905
    %v5294 = vunpack.c.l.b16 %v3906
    %v5295 = vunpack.c.h.b16 %v3906
    %v5296 = vunpack.c.l.b16 %v3907
    %v5297 = vunpack.c.h.b16 %v3907
    %v5298 = vunpack.c.l.b16 %v3908
    %v5299 = vunpack.c.h.b16 %v3908
    %v5300 = vunpack.c.l.b16 %v3909
    %v5301 = vunpack.c.h.b16 %v3909
    %v5302 = vunpack.c.l.b16 %v3910
    %v5303 = vunpack.c.h.b16 %v3910
    %v5304 = vunpack.c.l.b16 %v3911
    %v5305 = vunpack.c.h.b16 %v3911
    %v5306 = vunpack.c.l.b16 %v3912
    %v5307 = vunpack.c.h.b16 %v3912
    %v5308 = vunpack.c.l.b16 %v3913
    %v5309 = vunpack.c.h.b16 %v3913
    %v5310 = vunpack.c.l.b16 %v3914
    %v5311 = vunpack.c.h.b16 %v3914
    %v5312 = vunpack.c.l.b16 %v3915
    %v5313 = vunpack.c.h.b16 %v3915
    %v5314 = vunpack.c.l.b16 %v3916
    %v5315 = vunpack.c.h.b16 %v3916
    %v5316 = vunpack.c.l.b16 %v3917
    %v5317 = vunpack.c.h.b16 %v3917
    %v5318 = vunpack.c.l.b16 %v3918
    %v5319 = vunpack.c.h.b16 %v3918
    %v5320 = vunpack.c.l.b16 %v3919
    %v5321 = vunpack.c.h.b16 %v3919
    %v5322 = vunpack.c.l.b16 %v3920
    %v5323 = vunpack.c.h.b16 %v3920
    %v5324 = vunpack.c.l.b16 %v3921
    %v5325 = vunpack.c.h.b16 %v3921
    %v5326 = vunpack.c.l.b16 %v3922
    %v5327 = vunpack.c.h.b16 %v3922
    %v5328 = vunpack.c.l.b16 %v3923
    %v5329 = vunpack.c.h.b16 %v3923
    %v5330 = vunpack.c.l.b16 %v3924
    %v5331 = vunpack.c.h.b16 %v3924
    %v5332 = vunpack.c.l.b16 %v3925
    %v5333 = vunpack.c.h.b16 %v3925
    %v5334 = vunpack.c.l.b16 %v3926
    %v5335 = vunpack.c.h.b16 %v3926
    %v5336 = vunpack.c.l.b16 %v3927
    %v5337 = vunpack.c.h.b16 %v3927
    %v5338 = vunpack.c.l.b16 %v3928
    %v5339 = vunpack.c.h.b16 %v3928
    %v5340 = vunpack.c.l.b16 %v3929
    %v5341 = vunpack.c.h.b16 %v3929
    %v5342 = vunpack.c.l.b16 %v3930
    %v5343 = vunpack.c.h.b16 %v3930
    %v5344 = vunpack.c.l.b16 %v3931
    %v5345 = vunpack.c.h.b16 %v3931
    %v5346 = vunpack.c.l.b16 %v3932
    %v5347 = vunpack.c.h.b16 %v3932
    %v5348 = vunpack.c.l.b16 %v3933
    %v5349 = vunpack.c.h.b16 %v3933
    %v5350 = vunpack.c.l.b16 %v3934
    %v5351 = vunpack.c.h.b16 %v3934
    %v5352 = vunpack.c.l.b16 %v3935
    %v5353 = vunpack.c.h.b16 %v3935
    %v5354 = vunpack.c.l.b16 %v3936
    %v5355 = vunpack.c.h.b16 %v3936
    %v5356 = vunpack.c.l.b16 %v3937
    %v5357 = vunpack.c.h.b16 %v3937
    %v5358 = vunpack.c.l.b16 %v3938
    %v5359 = vunpack.c.h.b16 %v3938
    %v5360 = vunpack.c.l.b16 %v3939
    %v5361 = vunpack.c.h.b16 %v3939
    %v5362 = vunpack.c.l.b16 %v3940
    %v5363 = vunpack.c.h.b16 %v3940
    %v5364 = vunpack.c.l.b16 %v3941
    %v5365 = vunpack.c.h.b16 %v3941
    %v5366 = vunpack.c.l.b16 %v3942
    %v5367 = vunpack.c.h.b16 %v3942
    %v5368 = vunpack.c.l.b16 %v3943
    %v5369 = vunpack.c.h.b16 %v3943
    %v5370 = vunpack.c.l.b16 %v3944
    %v5371 = vunpack.c.h.b16 %v3944
    %v5372 = vunpack.c.l.b16 %v3945
    %v5373 = vunpack.c.h.b16 %v3945
    %v5374 = vunpack.c.l.b16 %v3946
    %v5375 = vunpack.c.h.b16 %v3946
    %v5376 = vunpack.c.l.b16 %v3947
    %v5377 = vunpack.c.h.b16 %v3947
    %v5378 = vunpack.c.l.b16 %v3948
    %v5379 = vunpack.c.h.b16 %v3948
    %v5380 = vunpack.c.l.b16 %v3949
    %v5381 = vunpack.c.h.b16 %v3949
    %v5382 = vunpack.c.l.b16 %v3950
    %v5383 = vunpack.c.h.b16 %v3950
    %v5384 = vunpack.c.l.b16 %v3951
    %v5385 = vunpack.c.h.b16 %v3951
    %v5386 = vunpack.c.l.b16 %v3952
    %v5387 = vunpack.c.h.b16 %v3952
    %v5388 = vunpack.c.l.b16 %v3953
    %v5389 = vunpack.c.h.b16 %v3953
    %v5390 = vunpack.c.l.b16 %v3954
    %v5391 = vunpack.c.h.b16 %v3954
    %v5392 = vunpack.c.l.b16 %v3955
    %v5393 = vunpack.c.h.b16 %v3955
    %v5394 = vunpack.c.l.b16 %v3956
    %v5395 = vunpack.c.h.b16 %v3956
    %v5396 = vunpack.c.l.b16 %v3957
    %v5397 = vunpack.c.h.b16 %v3957
    %v5398 = vunpack.c.l.b16 %v3958
    %v5399 = vunpack.c.h.b16 %v3958
    %v5400 = vunpack.c.l.b16 %v3959
    %v5401 = vunpack.c.h.b16 %v3959
    %v5402 = vunpack.c.l.b16 %v3960
    %v5403 = vunpack.c.h.b16 %v3960
    %v5404 = vunpack.c.l.b16 %v3961
    %v5405 = vunpack.c.h.b16 %v3961
    %v5406 = vunpack.c.l.b16 %v3962
    %v5407 = vunpack.c.h.b16 %v3962
    %v5408 = vunpack.c.l.b16 %v3963
    %v5409 = vunpack.c.h.b16 %v3963
    %v5410 = vunpack.c.l.b16 %v3964
    %v5411 = vunpack.c.h.b16 %v3964
    %v5412 = vunpack.c.l.b16 %v3965
    %v5413 = vunpack.c.h.b16 %v3965
    %v5414 = vunpack.c.l.b16 %v3966
    %v5415 = vunpack.c.h.b16 %v3966
    %v5416 = vunpack.c.l.b16 %v3967
    %v5417 = vunpack.c.h.b16 %v3967
    %v5418 = vunpack.c.l.b16 %v3968
    %v5419 = vunpack.c.h.b16 %v3968
    %v5420 = vunpack.c.l.b16 %v3969
    %v5421 = vunpack.c.h.b16 %v3969
    %v5422 = vunpack.c.l.b16 %v3970
    %v5423 = vunpack.c.h.b16 %v3970
    %v5424 = vunpack.c.l.b16 %v3971
    %v5425 = vunpack.c.h.b16 %v3971
    %v5426 = vunpack.c.l.b16 %v3972
    %v5427 = vunpack.c.h.b16 %v3972
    %v5428 = vunpack.c.l.b16 %v3973
    %v5429 = vunpack.c.h.b16 %v3973
    %v5430 = vunpack.c.l.b16 %v3974
    %v5431 = vunpack.c.h.b16 %v3974
    %v5432 = vunpack.c.l.b16 %v3975
    %v5433 = vunpack.c.h.b16 %v3975
    %v5434 = vunpack.c.l.b16 %v3976
    %v5435 = vunpack.c.h.b16 %v3976
    %v5436 = vunpack.c.l.b16 %v3977
    %v5437 = vunpack.c.h.b16 %v3977
    %v5438 = vunpack.c.l.b16 %v3978
    %v5439 = vunpack.c.h.b16 %v3978
    %v5440 = vunpack.c.l.b16 %v3979
    %v5441 = vunpack.c.h.b16 %v3979
    %v5442 = vunpack.c.l.b16 %v3980
    %v5443 = vunpack.c.h.b16 %v3980
    %v5444 = vunpack.c.l.b16 %v3981
    %v5445 = vunpack.c.h.b16 %v3981
    %v5446 = vunpack.c.l.b16 %v3982
    %v5447 = vunpack.c.h.b16 %v3982
    %v5448 = vunpack.c.l.b16 %v3983
    %v5449 = vunpack.c.h.b16 %v3983
    %v5450 = vunpack.c.l.b16 %v3984
    %v5451 = vunpack.c.h.b16 %v3984
    %v5452 = vunpack.c.l.b16 %v3985
    %v5453 = vunpack.c.h.b16 %v3985
    %v5454 = vunpack.c.l.b16 %v3986
    %v5455 = vunpack.c.h.b16 %v3986
    %v5456 = vunpack.c.l.b16 %v3987
    %v5457 = vunpack.c.h.b16 %v3987
    %v5458 = vunpack.c.l.b16 %v3988
    %v5459 = vunpack.c.h.b16 %v3988
    %v5460 = vunpack.c.l.b16 %v3989
    %v5461 = vunpack.c.h.b16 %v3989
    %v5462 = vunpack.c.l.b16 %v3990
    %v5463 = vunpack.c.h.b16 %v3990
    %v5464 = vunpack.c.l.b16 %v3991
    %v5465 = vunpack.c.h.b16 %v3991
    %v5466 = vunpack.c.l.b16 %v3992
    %v5467 = vunpack.c.h.b16 %v3992
    %v5468 = vunpack.c.l.b16 %v3993
    %v5469 = vunpack.c.h.b16 %v3993
    %v5470 = vunpack.c.l.b16 %v3994
    %v5471 = vunpack.c.h.b16 %v3994
    %v5472 = vunpack.c.l.b16 %v3995
    %v5473 = vunpack.c.h.b16 %v3995
    %v5474 = vunpack.c.l.b16 %v3996
    %v5475 = vunpack.c.h.b16 %v3996
    %v5476 = vunpack.c.l.b16 %v3997
    %v5477 = vunpack.c.h.b16 %v3997
    %v5478 = vunpack.c.l.b16 %v3998
    %v5479 = vunpack.c.h.b16 %v3998
    %v5480 = vunpack.c.l.b16 %v3999
    %v5481 = vunpack.c.h.b16 %v3999
    %v5482 = vunpack.c.l.b16 %v4000
    %v5483 = vunpack.c.h.b16 %v4000
    %v5484 = vunpack.c.l.b16 %v4001
    %v5485 = vunpack.c.h.b16 %v4001
    %v5486 = vunpack.c.l.b16 %v4002
    %v5487 = vunpack.c.h.b16 %v4002
    %v5488 = vunpack.c.l.b16 %v4003
    %v5489 = vunpack.c.h.b16 %v4003
    %v5490 = vunpack.c.l.b16 %v4004
    %v5491 = vunpack.c.h.b16 %v4004
    %v5492 = vunpack.c.l.b16 %v4005
    %v5493 = vunpack.c.h.b16 %v4005
    %v5494 = vunpack.c.l.b16 %v4006
    %v5495 = vunpack.c.h.b16 %v4006
    %v5496 = vunpack.c.l.b16 %v4007
    %v5497 = vunpack.c.h.b16 %v4007
    %v5498 = vunpack.c.l.b16 %v4008
    %v5499 = vunpack.c.h.b16 %v4008
    %v5500 = vunpack.c.l.b16 %v4009
    %v5501 = vunpack.c.h.b16 %v4009
    %v5502 = vunpack.c.l.b16 %v4010
    %v5503 = vunpack.c.h.b16 %v4010
    %v5504 = vunpack.c.l.b16 %v4011
    %v5505 = vunpack.c.h.b16 %v4011
    %v5506 = vunpack.c.l.b16 %v4012
    %v5507 = vunpack.c.h.b16 %v4012
    %v5508 = vunpack.c.l.b16 %v4013
    %v5509 = vunpack.c.h.b16 %v4013
    %v5510 = vunpack.c.l.b16 %v4014
    %v5511 = vunpack.c.h.b16 %v4014
    %v5512 = vunpack.c.l.b16 %v4015
    %v5513 = vunpack.c.h.b16 %v4015
    %v5514 = vunpack.c.l.b16 %v4016
    %v5515 = vunpack.c.h.b16 %v4016
    %v5516 = vunpack.c.l.b16 %v4017
    %v5517 = vunpack.c.h.b16 %v4017
    %v5518 = vunpack.c.l.b16 %v4018
    %v5519 = vunpack.c.h.b16 %v4018
    %v5520 = vunpack.c.l.b16 %v4019
    %v5521 = vunpack.c.h.b16 %v4019
    %v5522 = vunpack.c.l.b16 %v4020
    %v5523 = vunpack.c.h.b16 %v4020
    %v5524 = vunpack.c.l.b16 %v4021
    %v5525 = vunpack.c.h.b16 %v4021
    %v5526 = vunpack.c.l.b16 %v4022
    %v5527 = vunpack.c.h.b16 %v4022
    %v5528 = vunpack.c.l.b16 %v4023
    %v5529 = vunpack.c.h.b16 %v4023
    %v5530 = vunpack.c.l.b16 %v4024
    %v5531 = vunpack.c.h.b16 %v4024
    %v5532 = vunpack.c.l.b16 %v4025
    %v5533 = vunpack.c.h.b16 %v4025
    %v5534 = vunpack.c.l.b16 %v4026
    %v5535 = vunpack.c.h.b16 %v4026
    %v5536 = vunpack.c.l.b16 %v4027
    %v5537 = vunpack.c.h.b16 %v4027
    %v5538 = vunpack.c.l.b16 %v4028
    %v5539 = vunpack.c.h.b16 %v4028
    %v5540 = vunpack.c.l.b16 %v4029
    %v5541 = vunpack.c.h.b16 %v4029
    %v5542 = vunpack.c.l.b16 %v4030
    %v5543 = vunpack.c.h.b16 %v4030
    %v5544 = vunpack.c.l.b16 %v4031
    %v5545 = vunpack.c.h.b16 %v4031
    %v5546 = vunpack.c.l.b16 %v4032
    %v5547 = vunpack.c.h.b16 %v4032
    %v5548 = vunpack.c.l.b16 %v4033
    %v5549 = vunpack.c.h.b16 %v4033
    %v5550 = vunpack.c.l.b16 %v4034
    %v5551 = vunpack.c.h.b16 %v4034
    %v5552 = vunpack.c.l.b16 %v4035
    %v5553 = vunpack.c.h.b16 %v4035
    %v5554 = vunpack.c.l.b16 %v4036
    %v5555 = vunpack.c.h.b16 %v4036
    %v5556 = vunpack.c.l.b16 %v4037
    %v5557 = vunpack.c.h.b16 %v4037
    %v5558 = vunpack.c.l.b16 %v4038
    %v5559 = vunpack.c.h.b16 %v4038
    %v5560 = vunpack.c.l.b16 %v4039
    %v5561 = vunpack.c.h.b16 %v4039
    %v5562 = vunpack.c.l.b16 %v4040
    %v5563 = vunpack.c.h.b16 %v4040
    %v5564 = vunpack.c.l.b16 %v4041
    %v5565 = vunpack.c.h.b16 %v4041
    %v5566 = vunpack.c.l.b16 %v4042
    %v5567 = vunpack.c.h.b16 %v4042
    %v5568 = vunpack.c.l.b16 %v4043
    %v5569 = vunpack.c.h.b16 %v4043
    %v5570 = vunpack.c.l.b16 %v4044
    %v5571 = vunpack.c.h.b16 %v4044
    %v5572 = vunpack.c.l.b16 %v4045
    %v5573 = vunpack.c.h.b16 %v4045
    %v5574 = vunpack.c.l.b16 %v4046
    %v5575 = vunpack.c.h.b16 %v4046
    %v5576 = vunpack.c.l.b16 %v4047
    %v5577 = vunpack.c.h.b16 %v4047
    %v5578 = vunpack.c.l.b16 %v4048
    %v5579 = vunpack.c.h.b16 %v4048
    %v5580 = vunpack.c.l.b16 %v4049
    %v5581 = vunpack.c.h.b16 %v4049
    %v5582 = vunpack.c.l.b16 %v4050
    %v5583 = vunpack.c.h.b16 %v4050
    %v5584 = vunpack.c.l.b16 %v4051
    %v5585 = vunpack.c.h.b16 %v4051
    %v5586 = vunpack.c.l.b16 %v4052
    %v5587 = vunpack.c.h.b16 %v4052
    %v5588 = vunpack.c.l.b16 %v4053
    %v5589 = vunpack.c.h.b16 %v4053
    %v5590 = vunpack.c.l.b16 %v4054
    %v5591 = vunpack.c.h.b16 %v4054
    %v5592 = vunpack.c.l.b16 %v4055
    %v5593 = vunpack.c.h.b16 %v4055
    %v5594 = vunpack.c.l.b16 %v4056
    %v5595 = vunpack.c.h.b16 %v4056
    %v5596 = vunpack.c.l.b16 %v4057
    %v5597 = vunpack.c.h.b16 %v4057
    %v5598 = vunpack.c.l.b16 %v4058
    %v5599 = vunpack.c.h.b16 %v4058
    %v5600 = vunpack.c.l.b16 %v4059
    %v5601 = vunpack.c.h.b16 %v4059
    %v5602 = vunpack.c.l.b16 %v4060
    %v5603 = vunpack.c.h.b16 %v4060
    %v5604 = vunpack.c.l.b16 %v4061
    %v5605 = vunpack.c.h.b16 %v4061
    %v5606 = vunpack.c.l.b16 %v4062
    %v5607 = vunpack.c.h.b16 %v4062
    %v5608 = vunpack.c.l.b16 %v4063
    %v5609 = vunpack.c.h.b16 %v4063
    %v5610 = vunpack.c.l.b16 %v4064
    %v5611 = vunpack.c.h.b16 %v4064
    %v5612 = vunpack.c.l.b16 %v4065
    %v5613 = vunpack.c.h.b16 %v4065
    %v5614 = vunpack.c.l.b16 %v4066
    %v5615 = vunpack.c.h.b16 %v4066
    %v5616 = vunpack.c.l.b16 %v4067
    %v5617 = vunpack.c.h.b16 %v4067
    %v5618 = vunpack.c.l.b16 %v4068
    %v5619 = vunpack.c.h.b16 %v4068
    %v5620 = vunpack.c.l.b16 %v4069
    %v5621 = vunpack.c.h.b16 %v4069
    %v5622 = vunpack.c.l.b16 %v4070
    %v5623 = vunpack.c.h.b16 %v4070
    %v5624 = vunpack.c.l.b16 %v4071
    %v5625 = vunpack.c.h.b16 %v4071
    %v5626 = vpack.c.b16 %v4610, %v4602
    %v5627 = vpack.c.b16 %v4611, %v4603
    %v5628 = vpack.c.b16 %v4612, %v4604
    %v5629 = vpack.c.b16 %v4613, %v4605
    %v5630 = vpack.c.b16 %v4614, %v4606
    %v5631 = vpack.c.b16 %v4615, %v4607
    %v5632 = vpack.c.b16 %v4616, %v4608
    %v5633 = vpack.c.b16 %v4617, %v4609
    %v5634 = vpack.c.b16 %v4626, %v4618
    %v5635 = vpack.c.b16 %v4627, %v4619
    %v5636 = vpack.c.b16 %v4628, %v4620
    %v5637 = vpack.c.b16 %v4629, %v4621
    %v5638 = vpack.c.b16 %v4630, %v4622
    %v5639 = vpack.c.b16 %v4631, %v4623
    %v5640 = vpack.c.b16 %v4632, %v4624
    %v5641 = vpack.c.b16 %v4633, %v4625
    %v5642 = vpack.c.b16 %v4642, %v4634
    %v5643 = vpack.c.b16 %v4643, %v4635
    %v5644 = vpack.c.b16 %v4644, %v4636
    %v5645 = vpack.c.b16 %v4645, %v4637
    %v5646 = vpack.c.b16 %v4646, %v4638
    %v5647 = vpack.c.b16 %v4647, %v4639
    %v5648 = vpack.c.b16 %v4648, %v4640
    %v5649 = vpack.c.b16 %v4649, %v4641
    %v5650 = vpack.c.b16 %v4658, %v4650
    %v5651 = vpack.c.b16 %v4659, %v4651
    %v5652 = vpack.c.b16 %v4660, %v4652
    %v5653 = vpack.c.b16 %v4661, %v4653
    %v5654 = vpack.c.b16 %v4662, %v4654
    %v5655 = vpack.c.b16 %v4663, %v4655
    %v5656 = vpack.c.b16 %v4664, %v4656
    %v5657 = vpack.c.b16 %v4665, %v4657
    %v5658 = vpack.c.b16 %v4674, %v4666
    %v5659 = vpack.c.b16 %v4675, %v4667
    %v5660 = vpack.c.b16 %v4676, %v4668
    %v5661 = vpack.c.b16 %v4677, %v4669
    %v5662 = vpack.c.b16 %v4678, %v4670
    %v5663 = vpack.c.b16 %v4679, %v4671
    %v5664 = vpack.c.b16 %v4680, %v4672
    %v5665 = vpack.c.b16 %v4681, %v4673
    %v5666 = vpack.c.b16 %v4690, %v4682
    %v5667 = vpack.c.b16 %v4691, %v4683
    %v5668 = vpack.c.b16 %v4692, %v4684
    %v5669 = vpack.c.b16 %v4693, %v4685
    %v5670 = vpack.c.b16 %v4694, %v4686
    %v5671 = vpack.c.b16 %v4695, %v4687
    %v5672 = vpack.c.b16 %v4696, %v4688
    %v5673 = vpack.c.b16 %v4697, %v4689
    %v5674 = vpack.c.b16 %v4706, %v4698
    %v5675 = vpack.c.b16 %v4707, %v4699
    %v5676 = vpack.c.b16 %v4708, %v4700
    %v5677 = vpack.c.b16 %v4709, %v4701
    %v5678 = vpack.c.b16 %v4710, %v4702
    %v5679 = vpack.c.b16 %v4711, %v4703
    %v5680 = vpack.c.b16 %v4712, %v4704
    %v5681 = vpack.c.b16 %v4713, %v4705
    %v5682 = vpack.c.b16 %v4722, %v4714
    %v5683 = vpack.c.b16 %v4723, %v4715
    %v5684 = vpack.c.b16 %v4724, %v4716
    %v5685 = vpack.c.b16 %v4725, %v4717
    %v5686 = vpack.c.b16 %v4726, %v4718
    %v5687 = vpack.c.b16 %v4727, %v4719
    %v5688 = vpack.c.b16 %v4728, %v4720
    %v5689 = vpack.c.b16 %v4729, %v4721
    %v5690 = vpack.c.b16 %v4738, %v4730
    %v5691 = vpack.c.b16 %v4739, %v4731
    %v5692 = vpack.c.b16 %v4740, %v4732
    %v5693 = vpack.c.b16 %v4741, %v4733
    %v5694 = vpack.c.b16 %v4742, %v4734
    %v5695 = vpack.c.b16 %v4743, %v4735
    %v5696 = vpack.c.b16 %v4744, %v4736
    %v5697 = vpack.c.b16 %v4745, %v4737
    %v5698 = vpack.c.b16 %v4754, %v4746
    %v5699 = vpack.c.b16 %v4755, %v4747
    %v5700 = vpack.c.b16 %v4756, %v4748
    %v5701 = vpack.c.b16 %v4757, %v4749
    %v5702 = vpack.c.b16 %v4758, %v4750
    %v5703 = vpack.c.b16 %v4759, %v4751
    %v5704 = vpack.c.b16 %v4760, %v4752
    %v5705 = vpack.c.b16 %v4761, %v4753
    %v5706 = vpack.c.b16 %v4770, %v4762
    %v5707 = vpack.c.b16 %v4771, %v4763
    %v5708 = vpack.c.b16 %v4772, %v4764
    %v5709 = vpack.c.b16 %v4773, %v4765
    %v5710 = vpack.c.b16 %v4774, %v4766
    %v5711 = vpack.c.b16 %v4775, %v4767
    %v5712 = vpack.c.b16 %v4776, %v4768
    %v5713 = vpack.c.b16 %v4777, %v4769
    %v5714 = vpack.c.b16 %v4786, %v4778
    %v5715 = vpack.c.b16 %v4787, %v4779
    %v5716 = vpack.c.b16 %v4788, %v4780
    %v5717 = vpack.c.b16 %v4789, %v4781
    %v5718 = vpack.c.b16 %v4790, %v4782
    %v5719 = vpack.c.b16 %v4791, %v4783
    %v5720 = vpack.c.b16 %v4792, %v4784
    %v5721 = vpack.c.b16 %v4793, %v4785
    %v5722 = vpack.c.b16 %v4802, %v4794
    %v5723 = vpack.c.b16 %v4803, %v4795
    %v5724 = vpack.c.b16 %v4804, %v4796
    %v5725 = vpack.c.b16 %v4805, %v4797
    %v5726 = vpack.c.b16 %v4806, %v4798
    %v5727 = vpack.c.b16 %v4807, %v4799
    %v5728 = vpack.c.b16 %v4808, %v4800
    %v5729 = vpack.c.b16 %v4809, %v4801
    %v5730 = vpack.c.b16 %v4818, %v4810
    %v5731 = vpack.c.b16 %v4819, %v4811
    %v5732 = vpack.c.b16 %v4820, %v4812
    %v5733 = vpack.c.b16 %v4821, %v4813
    %v5734 = vpack.c.b16 %v4822, %v4814
    %v5735 = vpack.c.b16 %v4823, %v4815
    %v5736 = vpack.c.b16 %v4824, %v4816
    %v5737 = vpack.c.b16 %v4825, %v4817
    %v5738 = vpack.c.b16 %v4834, %v4826
    %v5739 = vpack.c.b16 %v4835, %v4827
    %v5740 = vpack.c.b16 %v4836, %v4828
    %v5741 = vpack.c.b16 %v4837, %v4829
    %v5742 = vpack.c.b16 %v4838, %v4830
    %v5743 = vpack.c.b16 %v4839, %v4831
    %v5744 = vpack.c.b16 %v4840, %v4832
    %v5745 = vpack.c.b16 %v4841, %v4833
    %v5746 = vpack.c.b16 %v4850, %v4842
    %v5747 = vpack.c.b16 %v4851, %v4843
    %v5748 = vpack.c.b16 %v4852, %v4844
    %v5749 = vpack.c.b16 %v4853, %v4845
    %v5750 = vpack.c.b16 %v4854, %v4846
    %v5751 = vpack.c.b16 %v4855, %v4847
    %v5752 = vpack.c.b16 %v4856, %v4848
    %v5753 = vpack.c.b16 %v4857, %v4849
    %v5754 = vpack.c.b16 %v4866, %v4858
    %v5755 = vpack.c.b16 %v4867, %v4859
    %v5756 = vpack.c.b16 %v4868, %v4860
    %v5757 = vpack.c.b16 %v4869, %v4861
    %v5758 = vpack.c.b16 %v4870, %v4862
    %v5759 = vpack.c.b16 %v4871, %v4863
    %v5760 = vpack.c.b16 %v4872, %v4864
    %v5761 = vpack.c.b16 %v4873, %v4865
    %v5762 = vpack.c.b16 %v4882, %v4874
    %v5763 = vpack.c.b16 %v4883, %v4875
    %v5764 = vpack.c.b16 %v4884, %v4876
    %v5765 = vpack.c.b16 %v4885, %v4877
    %v5766 = vpack.c.b16 %v4886, %v4878
    %v5767 = vpack.c.b16 %v4887, %v4879
    %v5768 = vpack.c.b16 %v4888, %v4880
    %v5769 = vpack.c.b16 %v4889, %v4881
    %v5770 = vpack.c.b16 %v4898, %v4890
    %v5771 = vpack.c.b16 %v4899, %v4891
    %v5772 = vpack.c.b16 %v4900, %v4892
    %v5773 = vpack.c.b16 %v4901, %v4893
    %v5774 = vpack.c.b16 %v4902, %v4894
    %v5775 = vpack.c.b16 %v4903, %v4895
    %v5776 = vpack.c.b16 %v4904, %v4896
    %v5777 = vpack.c.b16 %v4905, %v4897
    %v5778 = vpack.c.b16 %v4914, %v4906
    %v5779 = vpack.c.b16 %v4915, %v4907
    %v5780 = vpack.c.b16 %v4916, %v4908
    %v5781 = vpack.c.b16 %v4917, %v4909
    %v5782 = vpack.c.b16 %v4918, %v4910
    %v5783 = vpack.c.b16 %v4919, %v4911
    %v5784 = vpack.c.b16 %v4920, %v4912
    %v5785 = vpack.c.b16 %v4921, %v4913
    %v5786 = vpack.c.b16 %v4930, %v4922
    %v5787 = vpack.c.b16 %v4931, %v4923
    %v5788 = vpack.c.b16 %v4932, %v4924
    %v5789 = vpack.c.b16 %v4933, %v4925
    %v5790 = vpack.c.b16 %v4934, %v4926
    %v5791 = vpack.c.b16 %v4935, %v4927
    %v5792 = vpack.c.b16 %v4936, %v4928
    %v5793 = vpack.c.b16 %v4937, %v4929
    %v5794 = vpack.c.b16 %v4946, %v4938
    %v5795 = vpack.c.b16 %v4947, %v4939
    %v5796 = vpack.c.b16 %v4948, %v4940
    %v5797 = vpack.c.b16 %v4949, %v4941
    %v5798 = vpack.c.b16 %v4950, %v4942
    %v5799 = vpack.c.b16 %v4951, %v4943
    %v5800 = vpack.c.b16 %v4952, %v4944
    %v5801 = vpack.c.b16 %v4953, %v4945
    %v5802 = vpack.c.b16 %v4962, %v4954
    %v5803 = vpack.c.b16 %v4963, %v4955
    %v5804 = vpack.c.b16 %v4964, %v4956
    %v5805 = vpack.c.b16 %v4965, %v4957
    %v5806 = vpack.c.b16 %v4966, %v4958
    %v5807 = vpack.c.b16 %v4967, %v4959
    %v5808 = vpack.c.b16 %v4968, %v4960
    %v5809 = vpack.c.b16 %v4969, %v4961
    %v5810 = vpack.c.b16 %v4978, %v4970
    %v5811 = vpack.c.b16 %v4979, %v4971
    %v5812 = vpack.c.b16 %v4980, %v4972
    %v5813 = vpack.c.b16 %v4981, %v4973
    %v5814 = vpack.c.b16 %v4982, %v4974
    %v5815 = vpack.c.b16 %v4983, %v4975
    %v5816 = vpack.c.b16 %v4984, %v4976
    %v5817 = vpack.c.b16 %v4985, %v4977
    %v5818 = vpack.c.b16 %v4994, %v4986
    %v5819 = vpack.c.b16 %v4995, %v4987
    %v5820 = vpack.c.b16 %v4996, %v4988
    %v5821 = vpack.c.b16 %v4997, %v4989
    %v5822 = vpack.c.b16 %v4998, %v4990
    %v5823 = vpack.c.b16 %v4999, %v4991
    %v5824 = vpack.c.b16 %v5000, %v4992
    %v5825 = vpack.c.b16 %v5001, %v4993
    %v5826 = vpack.c.b16 %v5010, %v5002
    %v5827 = vpack.c.b16 %v5011, %v5003
    %v5828 = vpack.c.b16 %v5012, %v5004
    %v5829 = vpack.c.b16 %v5013, %v5005
    %v5830 = vpack.c.b16 %v5014, %v5006
    %v5831 = vpack.c.b16 %v5015, %v5007
    %v5832 = vpack.c.b16 %v5016, %v5008
    %v5833 = vpack.c.b16 %v5017, %v5009
    %v5834 = vpack.c.b16 %v5026, %v5018
    %v5835 = vpack.c.b16 %v5027, %v5019
    %v5836 = vpack.c.b16 %v5028, %v5020
    %v5837 = vpack.c.b16 %v5029, %v5021
    %v5838 = vpack.c.b16 %v5030, %v5022
    %v5839 = vpack.c.b16 %v5031, %v5023
    %v5840 = vpack.c.b16 %v5032, %v5024
    %v5841 = vpack.c.b16 %v5033, %v5025
    %v5842 = vpack.c.b16 %v5042, %v5034
    %v5843 = vpack.c.b16 %v5043, %v5035
    %v5844 = vpack.c.b16 %v5044, %v5036
    %v5845 = vpack.c.b16 %v5045, %v5037
    %v5846 = vpack.c.b16 %v5046, %v5038
    %v5847 = vpack.c.b16 %v5047, %v5039
    %v5848 = vpack.c.b16 %v5048, %v5040
    %v5849 = vpack.c.b16 %v5049, %v5041
    %v5850 = vpack.c.b16 %v5058, %v5050
    %v5851 = vpack.c.b16 %v5059, %v5051
    %v5852 = vpack.c.b16 %v5060, %v5052
    %v5853 = vpack.c.b16 %v5061, %v5053
    %v5854 = vpack.c.b16 %v5062, %v5054
    %v5855 = vpack.c.b16 %v5063, %v5055
    %v5856 = vpack.c.b16 %v5064, %v5056
    %v5857 = vpack.c.b16 %v5065, %v5057
    %v5858 = vpack.c.b16 %v5074, %v5066
    %v5859 = vpack.c.b16 %v5075, %v5067
    %v5860 = vpack.c.b16 %v5076, %v5068
    %v5861 = vpack.c.b16 %v5077, %v5069
    %v5862 = vpack.c.b16 %v5078, %v5070
    %v5863 = vpack.c.b16 %v5079, %v5071
    %v5864 = vpack.c.b16 %v5080, %v5072
    %v5865 = vpack.c.b16 %v5081, %v5073
    %v5866 = vpack.c.b16 %v5090, %v5082
    %v5867 = vpack.c.b16 %v5091, %v5083
    %v5868 = vpack.c.b16 %v5092, %v5084
    %v5869 = vpack.c.b16 %v5093, %v5085
    %v5870 = vpack.c.b16 %v5094, %v5086
    %v5871 = vpack.c.b16 %v5095, %v5087
    %v5872 = vpack.c.b16 %v5096, %v5088
    %v5873 = vpack.c.b16 %v5097, %v5089
    %v5874 = vpack.c.b16 %v5106, %v5098
    %v5875 = vpack.c.b16 %v5107, %v5099
    %v5876 = vpack.c.b16 %v5108, %v5100
    %v5877 = vpack.c.b16 %v5109, %v5101
    %v5878 = vpack.c.b16 %v5110, %v5102
    %v5879 = vpack.c.b16 %v5111, %v5103
    %v5880 = vpack.c.b16 %v5112, %v5104
    %v5881 = vpack.c.b16 %v5113, %v5105
    %v5882 = vpack.c.b16 %v5122, %v5114
    %v5883 = vpack.c.b16 %v5123, %v5115
    %v5884 = vpack.c.b16 %v5124, %v5116
    %v5885 = vpack.c.b16 %v5125, %v5117
    %v5886 = vpack.c.b16 %v5126, %v5118
    %v5887 = vpack.c.b16 %v5127, %v5119
    %v5888 = vpack.c.b16 %v5128, %v5120
    %v5889 = vpack.c.b16 %v5129, %v5121
    %v5890 = vpack.c.b16 %v5138, %v5130
    %v5891 = vpack.c.b16 %v5139, %v5131
    %v5892 = vpack.c.b16 %v5140, %v5132
    %v5893 = vpack.c.b16 %v5141, %v5133
    %v5894 = vpack.c.b16 %v5142, %v5134
    %v5895 = vpack.c.b16 %v5143, %v5135
    %v5896 = vpack.c.b16 %v5144, %v5136
    %v5897 = vpack.c.b16 %v5145, %v5137
    %v5898 = vpack.c.b16 %v5154, %v5146
    %v5899 = vpack.c.b16 %v5155, %v5147
    %v5900 = vpack.c.b16 %v5156, %v5148
    %v5901 = vpack.c.b16 %v5157, %v5149
    %v5902 = vpack.c.b16 %v5158, %v5150
    %v5903 = vpack.c.b16 %v5159, %v5151
    %v5904 = vpack.c.b16 %v5160, %v5152
    %v5905 = vpack.c.b16 %v5161, %v5153
    %v5906 = vpack.c.b16 %v5170, %v5162
    %v5907 = vpack.c.b16 %v5171, %v5163
    %v5908 = vpack.c.b16 %v5172, %v5164
    %v5909 = vpack.c.b16 %v5173, %v5165
    %v5910 = vpack.c.b16 %v5174, %v5166
    %v5911 = vpack.c.b16 %v5175, %v5167
    %v5912 = vpack.c.b16 %v5176, %v5168
    %v5913 = vpack.c.b16 %v5177, %v5169
    %v5914 = vpack.c.b16 %v5186, %v5178
    %v5915 = vpack.c.b16 %v5187, %v5179
    %v5916 = vpack.c.b16 %v5188, %v5180
    %v5917 = vpack.c.b16 %v5189, %v5181
    %v5918 = vpack.c.b16 %v5190, %v5182
    %v5919 = vpack.c.b16 %v5191, %v5183
    %v5920 = vpack.c.b16 %v5192, %v5184
    %v5921 = vpack.c.b16 %v5193, %v5185
    %v5922 = vpack.c.b16 %v5202, %v5194
    %v5923 = vpack.c.b16 %v5203, %v5195
    %v5924 = vpack.c.b16 %v5204, %v5196
    %v5925 = vpack.c.b16 %v5205, %v5197
    %v5926 = vpack.c.b16 %v5206, %v5198
    %v5927 = vpack.c.b16 %v5207, %v5199
    %v5928 = vpack.c.b16 %v5208, %v5200
    %v5929 = vpack.c.b16 %v5209, %v5201
    %v5930 = vpack.c.b16 %v5218, %v5210
    %v5931 = vpack.c.b16 %v5219, %v5211
    %v5932 = vpack.c.b16 %v5220, %v5212
    %v5933 = vpack.c.b16 %v5221, %v5213
    %v5934 = vpack.c.b16 %v5222, %v5214
    %v5935 = vpack.c.b16 %v5223, %v5215
    %v5936 = vpack.c.b16 %v5224, %v5216
    %v5937 = vpack.c.b16 %v5225, %v5217
    %v5938 = vpack.c.b16 %v5234, %v5226
    %v5939 = vpack.c.b16 %v5235, %v5227
    %v5940 = vpack.c.b16 %v5236, %v5228
    %v5941 = vpack.c.b16 %v5237, %v5229
    %v5942 = vpack.c.b16 %v5238, %v5230
    %v5943 = vpack.c.b16 %v5239, %v5231
    %v5944 = vpack.c.b16 %v5240, %v5232
    %v5945 = vpack.c.b16 %v5241, %v5233
    %v5946 = vpack.c.b16 %v5250, %v5242
    %v5947 = vpack.c.b16 %v5251, %v5243
    %v5948 = vpack.c.b16 %v5252, %v5244
    %v5949 = vpack.c.b16 %v5253, %v5245
    %v5950 = vpack.c.b16 %v5254, %v5246
    %v5951 = vpack.c.b16 %v5255, %v5247
    %v5952 = vpack.c.b16 %v5256, %v5248
    %v5953 = vpack.c.b16 %v5257, %v5249
    %v5954 = vpack.c.b16 %v5266, %v5258
    %v5955 = vpack.c.b16 %v5267, %v5259
    %v5956 = vpack.c.b16 %v5268, %v5260
    %v5957 = vpack.c.b16 %v5269, %v5261
    %v5958 = vpack.c.b16 %v5270, %v5262
    %v5959 = vpack.c.b16 %v5271, %v5263
    %v5960 = vpack.c.b16 %v5272, %v5264
    %v5961 = vpack.c.b16 %v5273, %v5265
    %v5962 = vpack.c.b16 %v5282, %v5274
    %v5963 = vpack.c.b16 %v5283, %v5275
    %v5964 = vpack.c.b16 %v5284, %v5276
    %v5965 = vpack.c.b16 %v5285, %v5277
    %v5966 = vpack.c.b16 %v5286, %v5278
    %v5967 = vpack.c.b16 %v5287, %v5279
    %v5968 = vpack.c.b16 %v5288, %v5280
    %v5969 = vpack.c.b16 %v5289, %v5281
    %v5970 = vpack.c.b16 %v5298, %v5290
    %v5971 = vpack.c.b16 %v5299, %v5291
    %v5972 = vpack.c.b16 %v5300, %v5292
    %v5973 = vpack.c.b16 %v5301, %v5293
    %v5974 = vpack.c.b16 %v5302, %v5294
    %v5975 = vpack.c.b16 %v5303, %v5295
    %v5976 = vpack.c.b16 %v5304, %v5296
    %v5977 = vpack.c.b16 %v5305, %v5297
    %v5978 = vpack.c.b16 %v5314, %v5306
    %v5979 = vpack.c.b16 %v5315, %v5307
    %v5980 = vpack.c.b16 %v5316, %v5308
    %v5981 = vpack.c.b16 %v5317, %v5309
    %v5982 = vpack.c.b16 %v5318, %v5310
    %v5983 = vpack.c.b16 %v5319, %v5311
    %v5984 = vpack.c.b16 %v5320, %v5312
    %v5985 = vpack.c.b16 %v5321, %v5313
    %v5986 = vpack.c.b16 %v5330, %v5322
    %v5987 = vpack.c.b16 %v5331, %v5323
    %v5988 = vpack.c.b16 %v5332, %v5324
    %v5989 = vpack.c.b16 %v5333, %v5325
    %v5990 = vpack.c.b16 %v5334, %v5326
    %v5991 = vpack.c.b16 %v5335, %v5327
    %v5992 = vpack.c.b16 %v5336, %v5328
    %v5993 = vpack.c.b16 %v5337, %v5329
    %v5994 = vpack.c.b16 %v5346, %v5338
    %v5995 = vpack.c.b16 %v5347, %v5339
    %v5996 = vpack.c.b16 %v5348, %v5340
    %v5997 = vpack.c.b16 %v5349, %v5341
    %v5998 = vpack.c.b16 %v5350, %v5342
    %v5999 = vpack.c.b16 %v5351, %v5343
    %v6000 = vpack.c.b16 %v5352, %v5344
    %v6001 = vpack.c.b16 %v5353, %v5345
    %v6002 = vpack.c.b16 %v5362, %v5354
    %v6003 = vpack.c.b16 %v5363, %v5355
    %v6004 = vpack.c.b16 %v5364, %v5356
    %v6005 = vpack.c.b16 %v5365, %v5357
    %v6006 = vpack.c.b16 %v5366, %v5358
    %v6007 = vpack.c.b16 %v5367, %v5359
    %v6008 = vpack.c.b16 %v5368, %v5360
    %v6009 = vpack.c.b16 %v5369, %v5361
    %v6010 = vpack.c.b16 %v5378, %v5370
    %v6011 = vpack.c.b16 %v5379, %v5371
    %v6012 = vpack.c.b16 %v5380, %v5372
    %v6013 = vpack.c.b16 %v5381, %v5373
    %v6014 = vpack.c.b16 %v5382, %v5374
    %v6015 = vpack.c.b16 %v5383, %v5375
    %v6016 = vpack.c.b16 %v5384, %v5376
    %v6017 = vpack.c.b16 %v5385, %v5377
    %v6018 = vpack.c.b16 %v5394, %v5386
    %v6019 = vpack.c.b16 %v5395, %v5387
    %v6020 = vpack.c.b16 %v5396, %v5388
    %v6021 = vpack.c.b16 %v5397, %v5389
    %v6022 = vpack.c.b16 %v5398, %v5390
    %v6023 = vpack.c.b16 %v5399, %v5391
    %v6024 = vpack.c.b16 %v5400, %v5392
    %v6025 = vpack.c.b16 %v5401, %v5393
    %v6026 = vpack.c.b16 %v5410, %v5402
    %v6027 = vpack.c.b16 %v5411, %v5403
    %v6028 = vpack.c.b16 %v5412, %v5404
    %v6029 = vpack.c.b16 %v5413, %v5405
    %v6030 = vpack.c.b16 %v5414, %v5406
    %v6031 = vpack.c.b16 %v5415, %v5407
    %v6032 = vpack.c.b16 %v5416, %v5408
    %v6033 = vpack.c.b16 %v5417, %v5409
    %v6034 = vpack.c.b16 %v5426, %v5418
    %v6035 = vpack.c.b16 %v5427, %v5419
    %v6036 = vpack.c.b16 %v5428, %v5420
    %v6037 = vpack.c.b16 %v5429, %v5421
    %v6038 = vpack.c.b16 %v5430, %v5422
    %v6039 = vpack.c.b16 %v5431, %v5423
    %v6040 = vpack.c.b16 %v5432, %v5424
    %v6041 = vpack.c.b16 %v5433, %v5425
    %v6042 = vpack.c.b16 %v5442, %v5434
    %v6043 = vpack.c.b16 %v5443, %v5435
    %v6044 = vpack.c.b16 %v5444, %v5436
    %v6045 = vpack.c.b16 %v5445, %v5437
    %v6046 = vpack.c.b16 %v5446, %v5438
    %v6047 = vpack.c.b16 %v5447, %v5439
    %v6048 = vpack.c.b16 %v5448, %v5440
    %v6049 = vpack.c.b16 %v5449, %v5441
    %v6050 = vpack.c.b16 %v5458, %v5450
    %v6051 = vpack.c.b16 %v5459, %v5451
    %v6052 = vpack.c.b16 %v5460, %v5452
    %v6053 = vpack.c.b16 %v5461, %v5453
    %v6054 = vpack.c.b16 %v5462, %v5454
    %v6055 = vpack.c.b16 %v5463, %v5455
    %v6056 = vpack.c.b16 %v5464, %v5456
    %v6057 = vpack.c.b16 %v5465, %v5457
    %v6058 = vpack.c.b16 %v5474, %v5466
    %v6059 = vpack.c.b16 %v5475, %v5467
    %v6060 = vpack.c.b16 %v5476, %v5468
    %v6061 = vpack.c.b16 %v5477, %v5469
    %v6062 = vpack.c.b16 %v5478, %v5470
    %v6063 = vpack.c.b16 %v5479, %v5471
    %v6064 = vpack.c.b16 %v5480, %v5472
    %v6065 = vpack.c.b16 %v5481, %v5473
    %v6066 = vpack.c.b16 %v5490, %v5482
    %v6067 = vpack.c.b16 %v5491, %v5483
    %v6068 = vpack.c.b16 %v5492, %v5484
    %v6069 = vpack.c.b16 %v5493, %v5485
    %v6070 = vpack.c.b16 %v5494, %v5486
    %v6071 = vpack.c.b16 %v5495, %v5487
    %v6072 = vpack.c.b16 %v5496, %v5488
    %v6073 = vpack.c.b16 %v5497, %v5489
    %v6074 = vpack.c.b16 %v5506, %v5498
    %v6075 = vpack.c.b16 %v5507, %v5499
    %v6076 = vpack.c.b16 %v5508, %v5500
    %v6077 = vpack.c.b16 %v5509, %v5501
    %v6078 = vpack.c.b16 %v5510, %v5502
    %v6079 = vpack.c.b16 %v5511, %v5503
    %v6080 = vpack.c.b16 %v5512, %v5504
    %v6081 = vpack.c.b16 %v5513, %v5505
    %v6082 = vpack.c.b16 %v5522, %v5514
    %v6083 = vpack.c.b16 %v5523, %v5515
    %v6084 = vpack.c.b16 %v5524, %v5516
    %v6085 = vpack.c.b16 %v5525, %v5517
    %v6086 = vpack.c.b16 %v5526, %v5518
    %v6087 = vpack.c.b16 %v5527, %v5519
    %v6088 = vpack.c.b16 %v5528, %v5520
    %v6089 = vpack.c.b16 %v5529, %v5521
    %v6090 = vpack.c.b16 %v5538, %v5530
    %v6091 = vpack.c.b16 %v5539, %v5531
    %v6092 = vpack.c.b16 %v5540, %v5532
    %v6093 = vpack.c.b16 %v5541, %v5533
    %v6094 = vpack.c.b16 %v5542, %v5534
    %v6095 = vpack.c.b16 %v5543, %v5535
    %v6096 = vpack.c.b16 %v5544, %v5536
    %v6097 = vpack.c.b16 %v5545, %v5537
    %v6098 = vpack.c.b16 %v5554, %v5546
    %v6099 = vpack.c.b16 %v5555, %v5547
    %v6100 = vpack.c.b16 %v5556, %v5548
    %v6101 = vpack.c.b16 %v5557, %v5549
    %v6102 = vpack.c.b16 %v5558, %v5550
    %v6103 = vpack.c.b16 %v5559, %v5551
    %v6104 = vpack.c.b16 %v5560, %v5552
    %v6105 = vpack.c.b16 %v5561, %v5553
    %v6106 = vpack.c.b16 %v5570, %v5562
    %v6107 = vpack.c.b16 %v5571, %v5563
    %v6108 = vpack.c.b16 %v5572, %v5564
    %v6109 = vpack.c.b16 %v5573, %v5565
    %v6110 = vpack.c.b16 %v5574, %v5566
    %v6111 = vpack.c.b16 %v5575, %v5567
    %v6112 = vpack.c.b16 %v5576, %v5568
    %v6113 = vpack.c.b16 %v5577, %v5569
    %v6114 = vpack.c.b16 %v5586, %v5578
    %v6115 = vpack.c.b16 %v5587, %v5579
    %v6116 = vpack.c.b16 %v5588, %v5580
    %v6117 = vpack.c.b16 %v5589, %v5581
    %v6118 = vpack.c.b16 %v5590, %v5582
    %v6119 = vpack.c.b16 %v5591, %v5583
    %v6120 = vpack.c.b16 %v5592, %v5584
    %v6121 = vpack.c.b16 %v5593, %v5585
    %v6122 = vpack.c.b16 %v5602, %v5594
    %v6123 = vpack.c.b16 %v5603, %v5595
    %v6124 = vpack.c.b16 %v5604, %v5596
    %v6125 = vpack.c.b16 %v5605, %v5597
    %v6126 = vpack.c.b16 %v5606, %v5598
    %v6127 = vpack.c.b16 %v5607, %v5599
    %v6128 = vpack.c.b16 %v5608, %v5600
    %v6129 = vpack.c.b16 %v5609, %v5601
    %v6130 = vpack.c.b16 %v5618, %v5610
    %v6131 = vpack.c.b16 %v5619, %v5611
    %v6132 = vpack.c.b16 %v5620, %v5612
    %v6133 = vpack.c.b16 %v5621, %v5613
    %v6134 = vpack.c.b16 %v5622, %v5614
    %v6135 = vpack.c.b16 %v5623, %v5615
    %v6136 = vpack.c.b16 %v5624, %v5616
    %v6137 = vpack.c.b16 %v5625, %v5617
    %6650 = vmatpush.bf16.msra.mxu0 %v5682
    %6651 = vmatpush.bf16.msra.mxu0 %v5674
    %6652 = vmatpush.bf16.msra.mxu0 %v5666
    %6653 = vmatpush.bf16.msra.mxu0 %v5658
    %6654 = vmatpush.bf16.msra.mxu0 %v5650
    %6655 = vmatpush.bf16.msra.mxu0 %v5642
    %6656 = vmatpush.bf16.msra.mxu0 %v5634
    %6657 = vmatpush.bf16.msra.mxu0 %v5626
    %6658 = vmatmul.bf16.gmra.mxu0 %v3496
    %v6659 = vpop.f32.mrf.mxu0
    %v6660 = vadd.f32 %v4074, %v6659
    %v6661 = vpop.f32.mrf.mxu0
    %v6662 = vadd.f32 %v4074, %v6661
    %6663 = vmatmul.bf16.gmra.mxu0 %v3504
    %v6664 = vpop.f32.mrf.mxu0
    %v6665 = vadd.f32 %v4074, %v6664
    %v6666 = vpop.f32.mrf.mxu0
    %v6667 = vadd.f32 %v4074, %v6666
    %6668 = vmatmul.bf16.gmra.mxu0 %v3512
    %v6669 = vpop.f32.mrf.mxu0
    %v6670 = vadd.f32 %v4074, %v6669
    %v6671 = vpop.f32.mrf.mxu0
    %v6672 = vadd.f32 %v4074, %v6671
    %6673 = vmatmul.bf16.gmra.mxu0 %v3520
    %v6674 = vpop.f32.mrf.mxu0
    %v6675 = vadd.f32 %v4074, %v6674
    %v6676 = vpop.f32.mrf.mxu0
    %v6677 = vadd.f32 %v4074, %v6676
    %6678 = vmatmul.bf16.gmra.mxu0 %v3528
    %v6679 = vpop.f32.mrf.mxu0
    %v6680 = vadd.f32 %v4074, %v6679
    %v6681 = vpop.f32.mrf.mxu0
    %v6682 = vadd.f32 %v4074, %v6681
    %6683 = vmatmul.bf16.gmra.mxu0 %v3536
    %v6684 = vpop.f32.mrf.mxu0
    %v6685 = vadd.f32 %v4074, %v6684
    %v6686 = vpop.f32.mrf.mxu0
    %v6687 = vadd.f32 %v4074, %v6686
    %6688 = vmatmul.bf16.gmra.mxu0 %v3544
    %v6689 = vpop.f32.mrf.mxu0
    %v6690 = vadd.f32 %v4074, %v6689
    %v6691 = vpop.f32.mrf.mxu0
    %v6692 = vadd.f32 %v4074, %v6691
    %6693 = vmatmul.bf16.gmra.mxu0 %v3552
    %v6694 = vpop.f32.mrf.mxu0
    %v6695 = vadd.f32 %v4074, %v6694
    %v6696 = vpop.f32.mrf.mxu0
    %v6697 = vadd.f32 %v4074, %v6696
    %6698 = vdwg.mxu0
    %6699 = vmatpush.bf16.msra.mxu0 %v5746
    %6700 = vmatpush.bf16.msra.mxu0 %v5738
    %6701 = vmatpush.bf16.msra.mxu0 %v5730
    %6702 = vmatpush.bf16.msra.mxu0 %v5722
    %6703 = vmatpush.bf16.msra.mxu0 %v5714
    %6704 = vmatpush.bf16.msra.mxu0 %v5706
    %6705 = vmatpush.bf16.msra.mxu0 %v5698
    %6706 = vmatpush.bf16.msra.mxu0 %v5690
    %6707 = vmatmul.bf16.gmra.mxu0 %v3497
    %v6708 = vpop.f32.mrf.mxu0
    %v6709 = vadd.f32 %v6660, %v6708
    %v6710 = vpop.f32.mrf.mxu0
    %v6711 = vadd.f32 %v6662, %v6710
    %6712 = vmatmul.bf16.gmra.mxu0 %v3505
    %v6713 = vpop.f32.mrf.mxu0
    %v6714 = vadd.f32 %v6665, %v6713
    %v6715 = vpop.f32.mrf.mxu0
    %v6716 = vadd.f32 %v6667, %v6715
    %6717 = vmatmul.bf16.gmra.mxu0 %v3513
    %v6718 = vpop.f32.mrf.mxu0
    %v6719 = vadd.f32 %v6670, %v6718
    %v6720 = vpop.f32.mrf.mxu0
    %v6721 = vadd.f32 %v6672, %v6720
    %6722 = vmatmul.bf16.gmra.mxu0 %v3521
    %v6723 = vpop.f32.mrf.mxu0
    %v6724 = vadd.f32 %v6675, %v6723
    %v6725 = vpop.f32.mrf.mxu0
    %v6726 = vadd.f32 %v6677, %v6725
    %6727 = vmatmul.bf16.gmra.mxu0 %v3529
    %v6728 = vpop.f32.mrf.mxu0
    %v6729 = vadd.f32 %v6680, %v6728
    %v6730 = vpop.f32.mrf.mxu0
    %v6731 = vadd.f32 %v6682, %v6730
    %6732 = vmatmul.bf16.gmra.mxu0 %v3537
    %v6733 = vpop.f32.mrf.mxu0
    %v6734 = vadd.f32 %v6685, %v6733
    %v6735 = vpop.f32.mrf.mxu0
    %v6736 = vadd.f32 %v6687, %v6735
    %6737 = vmatmul.bf16.gmra.mxu0 %v3545
    %v6738 = vpop.f32.mrf.mxu0
    %v6739 = vadd.f32 %v6690, %v6738
    %v6740 = vpop.f32.mrf.mxu0
    %v6741 = vadd.f32 %v6692, %v6740
    %6742 = vmatmul.bf16.gmra.mxu0 %v3553
    %v6743 = vpop.f32.mrf.mxu0
    %v6744 = vadd.f32 %v6695, %v6743
    %v6745 = vpop.f32.mrf.mxu0
    %v6746 = vadd.f32 %v6697, %v6745
    %6747 = vdwg.mxu0
    %6748 = vmatpush.bf16.msra.mxu0 %v5810
    %6749 = vmatpush.bf16.msra.mxu0 %v5802
    %6750 = vmatpush.bf16.msra.mxu0 %v5794
    %6751 = vmatpush.bf16.msra.mxu0 %v5786
    %6752 = vmatpush.bf16.msra.mxu0 %v5778
    %6753 = vmatpush.bf16.msra.mxu0 %v5770
    %6754 = vmatpush.bf16.msra.mxu0 %v5762
    %6755 = vmatpush.bf16.msra.mxu0 %v5754
    %6756 = vmatmul.bf16.gmra.mxu0 %v3498
    %v6757 = vpop.f32.mrf.mxu0
    %v6758 = vadd.f32 %v6709, %v6757
    %v6759 = vpop.f32.mrf.mxu0
    %v6760 = vadd.f32 %v6711, %v6759
    %6761 = vmatmul.bf16.gmra.mxu0 %v3506
    %v6762 = vpop.f32.mrf.mxu0
    %v6763 = vadd.f32 %v6714, %v6762
    %v6764 = vpop.f32.mrf.mxu0
    %v6765 = vadd.f32 %v6716, %v6764
    %6766 = vmatmul.bf16.gmra.mxu0 %v3514
    %v6767 = vpop.f32.mrf.mxu0
    %v6768 = vadd.f32 %v6719, %v6767
    %v6769 = vpop.f32.mrf.mxu0
    %v6770 = vadd.f32 %v6721, %v6769
    %6771 = vmatmul.bf16.gmra.mxu0 %v3522
    %v6772 = vpop.f32.mrf.mxu0
    %v6773 = vadd.f32 %v6724, %v6772
    %v6774 = vpop.f32.mrf.mxu0
    %v6775 = vadd.f32 %v6726, %v6774
    %6776 = vmatmul.bf16.gmra.mxu0 %v3530
    %v6777 = vpop.f32.mrf.mxu0
    %v6778 = vadd.f32 %v6729, %v6777
    %v6779 = vpop.f32.mrf.mxu0
    %v6780 = vadd.f32 %v6731, %v6779
    %6781 = vmatmul.bf16.gmra.mxu0 %v3538
    %v6782 = vpop.f32.mrf.mxu0
    %v6783 = vadd.f32 %v6734, %v6782
    %v6784 = vpop.f32.mrf.mxu0
    %v6785 = vadd.f32 %v6736, %v6784
    %6786 = vmatmul.bf16.gmra.mxu0 %v3546
    %v6787 = vpop.f32.mrf.mxu0
    %v6788 = vadd.f32 %v6739, %v6787
    %v6789 = vpop.f32.mrf.mxu0
    %v6790 = vadd.f32 %v6741, %v6789
    %6791 = vmatmul.bf16.gmra.mxu0 %v3554
    %v6792 = vpop.f32.mrf.mxu0
    %v6793 = vadd.f32 %v6744, %v6792
    %v6794 = vpop.f32.mrf.mxu0
    %v6795 = vadd.f32 %v6746, %v6794
    %6796 = vdwg.mxu0
    %6797 = vmatpush.bf16.msra.mxu0 %v5874
    %6798 = vmatpush.bf16.msra.mxu0 %v5866
    %6799 = vmatpush.bf16.msra.mxu0 %v5858
    %6800 = vmatpush.bf16.msra.mxu0 %v5850
    %6801 = vmatpush.bf16.msra.mxu0 %v5842
    %6802 = vmatpush.bf16.msra.mxu0 %v5834
    %6803 = vmatpush.bf16.msra.mxu0 %v5826
    %6804 = vmatpush.bf16.msra.mxu0 %v5818
    %6805 = vmatmul.bf16.gmra.mxu0 %v3499
    %v6806 = vpop.f32.mrf.mxu0
    %v6807 = vadd.f32 %v6758, %v6806
    %v6808 = vpop.f32.mrf.mxu0
    %v6809 = vadd.f32 %v6760, %v6808
    %6810 = vmatmul.bf16.gmra.mxu0 %v3507
    %v6811 = vpop.f32.mrf.mxu0
    %v6812 = vadd.f32 %v6763, %v6811
    %v6813 = vpop.f32.mrf.mxu0
    %v6814 = vadd.f32 %v6765, %v6813
    %6815 = vmatmul.bf16.gmra.mxu0 %v3515
    %v6816 = vpop.f32.mrf.mxu0
    %v6817 = vadd.f32 %v6768, %v6816
    %v6818 = vpop.f32.mrf.mxu0
    %v6819 = vadd.f32 %v6770, %v6818
    %6820 = vmatmul.bf16.gmra.mxu0 %v3523
    %v6821 = vpop.f32.mrf.mxu0
    %v6822 = vadd.f32 %v6773, %v6821
    %v6823 = vpop.f32.mrf.mxu0
    %v6824 = vadd.f32 %v6775, %v6823
    %6825 = vmatmul.bf16.gmra.mxu0 %v3531
    %v6826 = vpop.f32.mrf.mxu0
    %v6827 = vadd.f32 %v6778, %v6826
    %v6828 = vpop.f32.mrf.mxu0
    %v6829 = vadd.f32 %v6780, %v6828
    %6830 = vmatmul.bf16.gmra.mxu0 %v3539
    %v6831 = vpop.f32.mrf.mxu0
    %v6832 = vadd.f32 %v6783, %v6831
    %v6833 = vpop.f32.mrf.mxu0
    %v6834 = vadd.f32 %v6785, %v6833
    %6835 = vmatmul.bf16.gmra.mxu0 %v3547
    %v6836 = vpop.f32.mrf.mxu0
    %v6837 = vadd.f32 %v6788, %v6836
    %v6838 = vpop.f32.mrf.mxu0
    %v6839 = vadd.f32 %v6790, %v6838
    %6840 = vmatmul.bf16.gmra.mxu0 %v3555
    %v6841 = vpop.f32.mrf.mxu0
    %v6842 = vadd.f32 %v6793, %v6841
    %v6843 = vpop.f32.mrf.mxu0
    %v6844 = vadd.f32 %v6795, %v6843
    %6845 = vdwg.mxu0
    %6846 = vmatpush.bf16.msra.mxu0 %v5938
    %6847 = vmatpush.bf16.msra.mxu0 %v5930
    %6848 = vmatpush.bf16.msra.mxu0 %v5922
    %6849 = vmatpush.bf16.msra.mxu0 %v5914
    %6850 = vmatpush.bf16.msra.mxu0 %v5906
    %6851 = vmatpush.bf16.msra.mxu0 %v5898
    %6852 = vmatpush.bf16.msra.mxu0 %v5890
    %6853 = vmatpush.bf16.msra.mxu0 %v5882
    %6854 = vmatmul.bf16.gmra.mxu0 %v3500
    %v6855 = vpop.f32.mrf.mxu0
    %v6856 = vadd.f32 %v6807, %v6855
    %v6857 = vpop.f32.mrf.mxu0
    %v6858 = vadd.f32 %v6809, %v6857
    %6859 = vmatmul.bf16.gmra.mxu0 %v3508
    %v6860 = vpop.f32.mrf.mxu0
    %v6861 = vadd.f32 %v6812, %v6860
    %v6862 = vpop.f32.mrf.mxu0
    %v6863 = vadd.f32 %v6814, %v6862
    %6864 = vmatmul.bf16.gmra.mxu0 %v3516
    %v6865 = vpop.f32.mrf.mxu0
    %v6866 = vadd.f32 %v6817, %v6865
    %v6867 = vpop.f32.mrf.mxu0
    %v6868 = vadd.f32 %v6819, %v6867
    %6869 = vmatmul.bf16.gmra.mxu0 %v3524
    %v6870 = vpop.f32.mrf.mxu0
    %v6871 = vadd.f32 %v6822, %v6870
    %v6872 = vpop.f32.mrf.mxu0
    %v6873 = vadd.f32 %v6824, %v6872
    %6874 = vmatmul.bf16.gmra.mxu0 %v3532
    %v6875 = vpop.f32.mrf.mxu0
    %v6876 = vadd.f32 %v6827, %v6875
    %v6877 = vpop.f32.mrf.mxu0
    %v6878 = vadd.f32 %v6829, %v6877
    %6879 = vmatmul.bf16.gmra.mxu0 %v3540
    %v6880 = vpop.f32.mrf.mxu0
    %v6881 = vadd.f32 %v6832, %v6880
    %v6882 = vpop.f32.mrf.mxu0
    %v6883 = vadd.f32 %v6834, %v6882
    %6884 = vmatmul.bf16.gmra.mxu0 %v3548
    %v6885 = vpop.f32.mrf.mxu0
    %v6886 = vadd.f32 %v6837, %v6885
    %v6887 = vpop.f32.mrf.mxu0
    %v6888 = vadd.f32 %v6839, %v6887
    %6889 = vmatmul.bf16.gmra.mxu0 %v3556
    %v6890 = vpop.f32.mrf.mxu0
    %v6891 = vadd.f32 %v6842, %v6890
    %v6892 = vpop.f32.mrf.mxu0
    %v6893 = vadd.f32 %v6844, %v6892
    %6894 = vdwg.mxu0
    %6895 = vmatpush.bf16.msra.mxu0 %v6002
    %6896 = vmatpush.bf16.msra.mxu0 %v5994
    %6897 = vmatpush.bf16.msra.mxu0 %v5986
    %6898 = vmatpush.bf16.msra.mxu0 %v5978
    %6899 = vmatpush.bf16.msra.mxu0 %v5970
    %6900 = vmatpush.bf16.msra.mxu0 %v5962
    %6901 = vmatpush.bf16.msra.mxu0 %v5954
    %6902 = vmatpush.bf16.msra.mxu0 %v5946
    %6903 = vmatmul.bf16.gmra.mxu0 %v3501
    %v6904 = vpop.f32.mrf.mxu0
    %v6905 = vadd.f32 %v6856, %v6904
    %v6906 = vpop.f32.mrf.mxu0
    %v6907 = vadd.f32 %v6858, %v6906
    %6908 = vmatmul.bf16.gmra.mxu0 %v3509
    %v6909 = vpop.f32.mrf.mxu0
    %v6910 = vadd.f32 %v6861, %v6909
    %v6911 = vpop.f32.mrf.mxu0
    %v6912 = vadd.f32 %v6863, %v6911
    %6913 = vmatmul.bf16.gmra.mxu0 %v3517
    %v6914 = vpop.f32.mrf.mxu0
    %v6915 = vadd.f32 %v6866, %v6914
    %v6916 = vpop.f32.mrf.mxu0
    %v6917 = vadd.f32 %v6868, %v6916
    %6918 = vmatmul.bf16.gmra.mxu0 %v3525
    %v6919 = vpop.f32.mrf.mxu0
    %v6920 = vadd.f32 %v6871, %v6919
    %v6921 = vpop.f32.mrf.mxu0
    %v6922 = vadd.f32 %v6873, %v6921
    %6923 = vmatmul.bf16.gmra.mxu0 %v3533
    %v6924 = vpop.f32.mrf.mxu0
    %v6925 = vadd.f32 %v6876, %v6924
    %v6926 = vpop.f32.mrf.mxu0
    %v6927 = vadd.f32 %v6878, %v6926
    %6928 = vmatmul.bf16.gmra.mxu0 %v3541
    %v6929 = vpop.f32.mrf.mxu0
    %v6930 = vadd.f32 %v6881, %v6929
    %v6931 = vpop.f32.mrf.mxu0
    %v6932 = vadd.f32 %v6883, %v6931
    %6933 = vmatmul.bf16.gmra.mxu0 %v3549
    %v6934 = vpop.f32.mrf.mxu0
    %v6935 = vadd.f32 %v6886, %v6934
    %v6936 = vpop.f32.mrf.mxu0
    %v6937 = vadd.f32 %v6888, %v6936
    %6938 = vmatmul.bf16.gmra.mxu0 %v3557
    %v6939 = vpop.f32.mrf.mxu0
    %v6940 = vadd.f32 %v6891, %v6939
    %v6941 = vpop.f32.mrf.mxu0
    %v6942 = vadd.f32 %v6893, %v6941
    %6943 = vdwg.mxu0
    %6944 = vmatpush.bf16.msra.mxu0 %v6066
    %6945 = vmatpush.bf16.msra.mxu0 %v6058
    %6946 = vmatpush.bf16.msra.mxu0 %v6050
    %6947 = vmatpush.bf16.msra.mxu0 %v6042
    %6948 = vmatpush.bf16.msra.mxu0 %v6034
    %6949 = vmatpush.bf16.msra.mxu0 %v6026
    %6950 = vmatpush.bf16.msra.mxu0 %v6018
    %6951 = vmatpush.bf16.msra.mxu0 %v6010
    %6952 = vmatmul.bf16.gmra.mxu0 %v3502
    %v6953 = vpop.f32.mrf.mxu0
    %v6954 = vadd.f32 %v6905, %v6953
    %v6955 = vpop.f32.mrf.mxu0
    %v6956 = vadd.f32 %v6907, %v6955
    %6957 = vmatmul.bf16.gmra.mxu0 %v3510
    %v6958 = vpop.f32.mrf.mxu0
    %v6959 = vadd.f32 %v6910, %v6958
    %v6960 = vpop.f32.mrf.mxu0
    %v6961 = vadd.f32 %v6912, %v6960
    %6962 = vmatmul.bf16.gmra.mxu0 %v3518
    %v6963 = vpop.f32.mrf.mxu0
    %v6964 = vadd.f32 %v6915, %v6963
    %v6965 = vpop.f32.mrf.mxu0
    %v6966 = vadd.f32 %v6917, %v6965
    %6967 = vmatmul.bf16.gmra.mxu0 %v3526
    %v6968 = vpop.f32.mrf.mxu0
    %v6969 = vadd.f32 %v6920, %v6968
    %v6970 = vpop.f32.mrf.mxu0
    %v6971 = vadd.f32 %v6922, %v6970
    %6972 = vmatmul.bf16.gmra.mxu0 %v3534
    %v6973 = vpop.f32.mrf.mxu0
    %v6974 = vadd.f32 %v6925, %v6973
    %v6975 = vpop.f32.mrf.mxu0
    %v6976 = vadd.f32 %v6927, %v6975
    %6977 = vmatmul.bf16.gmra.mxu0 %v3542
    %v6978 = vpop.f32.mrf.mxu0
    %v6979 = vadd.f32 %v6930, %v6978
    %v6980 = vpop.f32.mrf.mxu0
    %v6981 = vadd.f32 %v6932, %v6980
    %6982 = vmatmul.bf16.gmra.mxu0 %v3550
    %v6983 = vpop.f32.mrf.mxu0
    %v6984 = vadd.f32 %v6935, %v6983
    %v6985 = vpop.f32.mrf.mxu0
    %v6986 = vadd.f32 %v6937, %v6985
    %6987 = vmatmul.bf16.gmra.mxu0 %v3558
    %v6988 = vpop.f32.mrf.mxu0
    %v6989 = vadd.f32 %v6940, %v6988
    %v6990 = vpop.f32.mrf.mxu0
    %v6991 = vadd.f32 %v6942, %v6990
    %6992 = vdwg.mxu0
    %6993 = vmatpush.bf16.msra.mxu0 %v6130
    %6994 = vmatpush.bf16.msra.mxu0 %v6122
    %6995 = vmatpush.bf16.msra.mxu0 %v6114
    %6996 = vmatpush.bf16.msra.mxu0 %v6106
    %6997 = vmatpush.bf16.msra.mxu0 %v6098
    %6998 = vmatpush.bf16.msra.mxu0 %v6090
    %6999 = vmatpush.bf16.msra.mxu0 %v6082
    %7000 = vmatpush.bf16.msra.mxu0 %v6074
    %7001 = vmatmul.bf16.gmra.mxu0 %v3503
    %v7002 = vpop.f32.mrf.mxu0
    %v7003 = vadd.f32 %v6954, %v7002
    %v7004 = vpop.f32.mrf.mxu0
    %v7005 = vadd.f32 %v6956, %v7004
    %7006 = vmatmul.bf16.gmra.mxu0 %v3511
    %v7007 = vpop.f32.mrf.mxu0
    %v7008 = vadd.f32 %v6959, %v7007
    %v7009 = vpop.f32.mrf.mxu0
    %v7010 = vadd.f32 %v6961, %v7009
    %7011 = vmatmul.bf16.gmra.mxu0 %v3519
    %v7012 = vpop.f32.mrf.mxu0
    %v7013 = vadd.f32 %v6964, %v7012
    %v7014 = vpop.f32.mrf.mxu0
    %v7015 = vadd.f32 %v6966, %v7014
    %7016 = vmatmul.bf16.gmra.mxu0 %v3527
    %v7017 = vpop.f32.mrf.mxu0
    %v7018 = vadd.f32 %v6969, %v7017
    %v7019 = vpop.f32.mrf.mxu0
    %v7020 = vadd.f32 %v6971, %v7019
    %7021 = vmatmul.bf16.gmra.mxu0 %v3535
    %v7022 = vpop.f32.mrf.mxu0
    %v7023 = vadd.f32 %v6974, %v7022
    %v7024 = vpop.f32.mrf.mxu0
    %v7025 = vadd.f32 %v6976, %v7024
    %7026 = vmatmul.bf16.gmra.mxu0 %v3543
    %v7027 = vpop.f32.mrf.mxu0
    %v7028 = vadd.f32 %v6979, %v7027
    %v7029 = vpop.f32.mrf.mxu0
    %v7030 = vadd.f32 %v6981, %v7029
    %7031 = vmatmul.bf16.gmra.mxu0 %v3551
    %v7032 = vpop.f32.mrf.mxu0
    %v7033 = vadd.f32 %v6984, %v7032
    %v7034 = vpop.f32.mrf.mxu0
    %v7035 = vadd.f32 %v6986, %v7034
    %7036 = vmatmul.bf16.gmra.mxu0 %v3559
    %v7037 = vpop.f32.mrf.mxu0
    %v7038 = vadd.f32 %v6989, %v7037
    %v7039 = vpop.f32.mrf.mxu0
    %v7040 = vadd.f32 %v6991, %v7039
    %7041 = vdwg.mxu0
    %7042 = vmatpush.bf16.msra.mxu0 %v5683
    %7043 = vmatpush.bf16.msra.mxu0 %v5675
    %7044 = vmatpush.bf16.msra.mxu0 %v5667
    %7045 = vmatpush.bf16.msra.mxu0 %v5659
    %7046 = vmatpush.bf16.msra.mxu0 %v5651
    %7047 = vmatpush.bf16.msra.mxu0 %v5643
    %7048 = vmatpush.bf16.msra.mxu0 %v5635
    %7049 = vmatpush.bf16.msra.mxu0 %v5627
    %7050 = vmatmul.bf16.gmra.mxu0 %v3496
    %v7051 = vpop.f32.mrf.mxu0
    %v7052 = vadd.f32 %v4075, %v7051
    %v7053 = vpop.f32.mrf.mxu0
    %v7054 = vadd.f32 %v4075, %v7053
    %7055 = vmatmul.bf16.gmra.mxu0 %v3504
    %v7056 = vpop.f32.mrf.mxu0
    %v7057 = vadd.f32 %v4075, %v7056
    %v7058 = vpop.f32.mrf.mxu0
    %v7059 = vadd.f32 %v4075, %v7058
    %7060 = vmatmul.bf16.gmra.mxu0 %v3512
    %v7061 = vpop.f32.mrf.mxu0
    %v7062 = vadd.f32 %v4075, %v7061
    %v7063 = vpop.f32.mrf.mxu0
    %v7064 = vadd.f32 %v4075, %v7063
    %7065 = vmatmul.bf16.gmra.mxu0 %v3520
    %v7066 = vpop.f32.mrf.mxu0
    %v7067 = vadd.f32 %v4075, %v7066
    %v7068 = vpop.f32.mrf.mxu0
    %v7069 = vadd.f32 %v4075, %v7068
    %7070 = vmatmul.bf16.gmra.mxu0 %v3528
    %v7071 = vpop.f32.mrf.mxu0
    %v7072 = vadd.f32 %v4075, %v7071
    %v7073 = vpop.f32.mrf.mxu0
    %v7074 = vadd.f32 %v4075, %v7073
    %7075 = vmatmul.bf16.gmra.mxu0 %v3536
    %v7076 = vpop.f32.mrf.mxu0
    %v7077 = vadd.f32 %v4075, %v7076
    %v7078 = vpop.f32.mrf.mxu0
    %v7079 = vadd.f32 %v4075, %v7078
    %7080 = vmatmul.bf16.gmra.mxu0 %v3544
    %v7081 = vpop.f32.mrf.mxu0
    %v7082 = vadd.f32 %v4075, %v7081
    %v7083 = vpop.f32.mrf.mxu0
    %v7084 = vadd.f32 %v4075, %v7083
    %7085 = vmatmul.bf16.gmra.mxu0 %v3552
    %v7086 = vpop.f32.mrf.mxu0
    %v7087 = vadd.f32 %v4075, %v7086
    %v7088 = vpop.f32.mrf.mxu0
    %v7089 = vadd.f32 %v4075, %v7088
    %7090 = vdwg.mxu0
    %7091 = vmatpush.bf16.msra.mxu0 %v5747
    %7092 = vmatpush.bf16.msra.mxu0 %v5739
    %7093 = vmatpush.bf16.msra.mxu0 %v5731
    %7094 = vmatpush.bf16.msra.mxu0 %v5723
    %7095 = vmatpush.bf16.msra.mxu0 %v5715
    %7096 = vmatpush.bf16.msra.mxu0 %v5707
    %7097 = vmatpush.bf16.msra.mxu0 %v5699
    %7098 = vmatpush.bf16.msra.mxu0 %v5691
    %7099 = vmatmul.bf16.gmra.mxu0 %v3497
    %v7100 = vpop.f32.mrf.mxu0
    %v7101 = vadd.f32 %v7052, %v7100
    %v7102 = vpop.f32.mrf.mxu0
    %v7103 = vadd.f32 %v7054, %v7102
    %7104 = vmatmul.bf16.gmra.mxu0 %v3505
    %v7105 = vpop.f32.mrf.mxu0
    %v7106 = vadd.f32 %v7057, %v7105
    %v7107 = vpop.f32.mrf.mxu0
    %v7108 = vadd.f32 %v7059, %v7107
    %7109 = vmatmul.bf16.gmra.mxu0 %v3513
    %v7110 = vpop.f32.mrf.mxu0
    %v7111 = vadd.f32 %v7062, %v7110
    %v7112 = vpop.f32.mrf.mxu0
    %v7113 = vadd.f32 %v7064, %v7112
    %7114 = vmatmul.bf16.gmra.mxu0 %v3521
    %v7115 = vpop.f32.mrf.mxu0
    %v7116 = vadd.f32 %v7067, %v7115
    %v7117 = vpop.f32.mrf.mxu0
    %v7118 = vadd.f32 %v7069, %v7117
    %7119 = vmatmul.bf16.gmra.mxu0 %v3529
    %v7120 = vpop.f32.mrf.mxu0
    %v7121 = vadd.f32 %v7072, %v7120
    %v7122 = vpop.f32.mrf.mxu0
    %v7123 = vadd.f32 %v7074, %v7122
    %7124 = vmatmul.bf16.gmra.mxu0 %v3537
    %v7125 = vpop.f32.mrf.mxu0
    %v7126 = vadd.f32 %v7077, %v7125
    %v7127 = vpop.f32.mrf.mxu0
    %v7128 = vadd.f32 %v7079, %v7127
    %7129 = vmatmul.bf16.gmra.mxu0 %v3545
    %v7130 = vpop.f32.mrf.mxu0
    %v7131 = vadd.f32 %v7082, %v7130
    %v7132 = vpop.f32.mrf.mxu0
    %v7133 = vadd.f32 %v7084, %v7132
    %7134 = vmatmul.bf16.gmra.mxu0 %v3553
    %v7135 = vpop.f32.mrf.mxu0
    %v7136 = vadd.f32 %v7087, %v7135
    %v7137 = vpop.f32.mrf.mxu0
    %v7138 = vadd.f32 %v7089, %v7137
    %7139 = vdwg.mxu0
    %7140 = vmatpush.bf16.msra.mxu0 %v5811
    %7141 = vmatpush.bf16.msra.mxu0 %v5803
    %7142 = vmatpush.bf16.msra.mxu0 %v5795
    %7143 = vmatpush.bf16.msra.mxu0 %v5787
    %7144 = vmatpush.bf16.msra.mxu0 %v5779
    %7145 = vmatpush.bf16.msra.mxu0 %v5771
    %7146 = vmatpush.bf16.msra.mxu0 %v5763
    %7147 = vmatpush.bf16.msra.mxu0 %v5755
    %7148 = vmatmul.bf16.gmra.mxu0 %v3498
    %v7149 = vpop.f32.mrf.mxu0
    %v7150 = vadd.f32 %v7101, %v7149
    %v7151 = vpop.f32.mrf.mxu0
    %v7152 = vadd.f32 %v7103, %v7151
    %7153 = vmatmul.bf16.gmra.mxu0 %v3506
    %v7154 = vpop.f32.mrf.mxu0
    %v7155 = vadd.f32 %v7106, %v7154
    %v7156 = vpop.f32.mrf.mxu0
    %v7157 = vadd.f32 %v7108, %v7156
    %7158 = vmatmul.bf16.gmra.mxu0 %v3514
    %v7159 = vpop.f32.mrf.mxu0
    %v7160 = vadd.f32 %v7111, %v7159
    %v7161 = vpop.f32.mrf.mxu0
    %v7162 = vadd.f32 %v7113, %v7161
    %7163 = vmatmul.bf16.gmra.mxu0 %v3522
    %v7164 = vpop.f32.mrf.mxu0
    %v7165 = vadd.f32 %v7116, %v7164
    %v7166 = vpop.f32.mrf.mxu0
    %v7167 = vadd.f32 %v7118, %v7166
    %7168 = vmatmul.bf16.gmra.mxu0 %v3530
    %v7169 = vpop.f32.mrf.mxu0
    %v7170 = vadd.f32 %v7121, %v7169
    %v7171 = vpop.f32.mrf.mxu0
    %v7172 = vadd.f32 %v7123, %v7171
    %7173 = vmatmul.bf16.gmra.mxu0 %v3538
    %v7174 = vpop.f32.mrf.mxu0
    %v7175 = vadd.f32 %v7126, %v7174
    %v7176 = vpop.f32.mrf.mxu0
    %v7177 = vadd.f32 %v7128, %v7176
    %7178 = vmatmul.bf16.gmra.mxu0 %v3546
    %v7179 = vpop.f32.mrf.mxu0
    %v7180 = vadd.f32 %v7131, %v7179
    %v7181 = vpop.f32.mrf.mxu0
    %v7182 = vadd.f32 %v7133, %v7181
    %7183 = vmatmul.bf16.gmra.mxu0 %v3554
    %v7184 = vpop.f32.mrf.mxu0
    %v7185 = vadd.f32 %v7136, %v7184
    %v7186 = vpop.f32.mrf.mxu0
    %v7187 = vadd.f32 %v7138, %v7186
    %7188 = vdwg.mxu0
    %7189 = vmatpush.bf16.msra.mxu0 %v5875
    %7190 = vmatpush.bf16.msra.mxu0 %v5867
    %7191 = vmatpush.bf16.msra.mxu0 %v5859
    %7192 = vmatpush.bf16.msra.mxu0 %v5851
    %7193 = vmatpush.bf16.msra.mxu0 %v5843
    %7194 = vmatpush.bf16.msra.mxu0 %v5835
    %7195 = vmatpush.bf16.msra.mxu0 %v5827
    %7196 = vmatpush.bf16.msra.mxu0 %v5819
    %7197 = vmatmul.bf16.gmra.mxu0 %v3499
    %v7198 = vpop.f32.mrf.mxu0
    %v7199 = vadd.f32 %v7150, %v7198
    %v7200 = vpop.f32.mrf.mxu0
    %v7201 = vadd.f32 %v7152, %v7200
    %7202 = vmatmul.bf16.gmra.mxu0 %v3507
    %v7203 = vpop.f32.mrf.mxu0
    %v7204 = vadd.f32 %v7155, %v7203
    %v7205 = vpop.f32.mrf.mxu0
    %v7206 = vadd.f32 %v7157, %v7205
    %7207 = vmatmul.bf16.gmra.mxu0 %v3515
    %v7208 = vpop.f32.mrf.mxu0
    %v7209 = vadd.f32 %v7160, %v7208
    %v7210 = vpop.f32.mrf.mxu0
    %v7211 = vadd.f32 %v7162, %v7210
    %7212 = vmatmul.bf16.gmra.mxu0 %v3523
    %v7213 = vpop.f32.mrf.mxu0
    %v7214 = vadd.f32 %v7165, %v7213
    %v7215 = vpop.f32.mrf.mxu0
    %v7216 = vadd.f32 %v7167, %v7215
    %7217 = vmatmul.bf16.gmra.mxu0 %v3531
    %v7218 = vpop.f32.mrf.mxu0
    %v7219 = vadd.f32 %v7170, %v7218
    %v7220 = vpop.f32.mrf.mxu0
    %v7221 = vadd.f32 %v7172, %v7220
    %7222 = vmatmul.bf16.gmra.mxu0 %v3539
    %v7223 = vpop.f32.mrf.mxu0
    %v7224 = vadd.f32 %v7175, %v7223
    %v7225 = vpop.f32.mrf.mxu0
    %v7226 = vadd.f32 %v7177, %v7225
    %7227 = vmatmul.bf16.gmra.mxu0 %v3547
    %v7228 = vpop.f32.mrf.mxu0
    %v7229 = vadd.f32 %v7180, %v7228
    %v7230 = vpop.f32.mrf.mxu0
    %v7231 = vadd.f32 %v7182, %v7230
    %7232 = vmatmul.bf16.gmra.mxu0 %v3555
    %v7233 = vpop.f32.mrf.mxu0
    %v7234 = vadd.f32 %v7185, %v7233
    %v7235 = vpop.f32.mrf.mxu0
    %v7236 = vadd.f32 %v7187, %v7235
    %7237 = vdwg.mxu0
    %7238 = vmatpush.bf16.msra.mxu0 %v5939
    %7239 = vmatpush.bf16.msra.mxu0 %v5931
    %7240 = vmatpush.bf16.msra.mxu0 %v5923
    %7241 = vmatpush.bf16.msra.mxu0 %v5915
    %7242 = vmatpush.bf16.msra.mxu0 %v5907
    %7243 = vmatpush.bf16.msra.mxu0 %v5899
    %7244 = vmatpush.bf16.msra.mxu0 %v5891
    %7245 = vmatpush.bf16.msra.mxu0 %v5883
    %7246 = vmatmul.bf16.gmra.mxu0 %v3500
    %v7247 = vpop.f32.mrf.mxu0
    %v7248 = vadd.f32 %v7199, %v7247
    %v7249 = vpop.f32.mrf.mxu0
    %v7250 = vadd.f32 %v7201, %v7249
    %7251 = vmatmul.bf16.gmra.mxu0 %v3508
    %v7252 = vpop.f32.mrf.mxu0
    %v7253 = vadd.f32 %v7204, %v7252
    %v7254 = vpop.f32.mrf.mxu0
    %v7255 = vadd.f32 %v7206, %v7254
    %7256 = vmatmul.bf16.gmra.mxu0 %v3516
    %v7257 = vpop.f32.mrf.mxu0
    %v7258 = vadd.f32 %v7209, %v7257
    %v7259 = vpop.f32.mrf.mxu0
    %v7260 = vadd.f32 %v7211, %v7259
    %7261 = vmatmul.bf16.gmra.mxu0 %v3524
    %v7262 = vpop.f32.mrf.mxu0
    %v7263 = vadd.f32 %v7214, %v7262
    %v7264 = vpop.f32.mrf.mxu0
    %v7265 = vadd.f32 %v7216, %v7264
    %7266 = vmatmul.bf16.gmra.mxu0 %v3532
    %v7267 = vpop.f32.mrf.mxu0
    %v7268 = vadd.f32 %v7219, %v7267
    %v7269 = vpop.f32.mrf.mxu0
    %v7270 = vadd.f32 %v7221, %v7269
    %7271 = vmatmul.bf16.gmra.mxu0 %v3540
    %v7272 = vpop.f32.mrf.mxu0
    %v7273 = vadd.f32 %v7224, %v7272
    %v7274 = vpop.f32.mrf.mxu0
    %v7275 = vadd.f32 %v7226, %v7274
    %7276 = vmatmul.bf16.gmra.mxu0 %v3548
    %v7277 = vpop.f32.mrf.mxu0
    %v7278 = vadd.f32 %v7229, %v7277
    %v7279 = vpop.f32.mrf.mxu0
    %v7280 = vadd.f32 %v7231, %v7279
    %7281 = vmatmul.bf16.gmra.mxu0 %v3556
    %v7282 = vpop.f32.mrf.mxu0
    %v7283 = vadd.f32 %v7234, %v7282
    %v7284 = vpop.f32.mrf.mxu0
    %v7285 = vadd.f32 %v7236, %v7284
    %7286 = vdwg.mxu0
    %7287 = vmatpush.bf16.msra.mxu0 %v6003
    %7288 = vmatpush.bf16.msra.mxu0 %v5995
    %7289 = vmatpush.bf16.msra.mxu0 %v5987
    %7290 = vmatpush.bf16.msra.mxu0 %v5979
    %7291 = vmatpush.bf16.msra.mxu0 %v5971
    %7292 = vmatpush.bf16.msra.mxu0 %v5963
    %7293 = vmatpush.bf16.msra.mxu0 %v5955
    %7294 = vmatpush.bf16.msra.mxu0 %v5947
    %7295 = vmatmul.bf16.gmra.mxu0 %v3501
    %v7296 = vpop.f32.mrf.mxu0
    %v7297 = vadd.f32 %v7248, %v7296
    %v7298 = vpop.f32.mrf.mxu0
    %v7299 = vadd.f32 %v7250, %v7298
    %7300 = vmatmul.bf16.gmra.mxu0 %v3509
    %v7301 = vpop.f32.mrf.mxu0
    %v7302 = vadd.f32 %v7253, %v7301
    %v7303 = vpop.f32.mrf.mxu0
    %v7304 = vadd.f32 %v7255, %v7303
    %7305 = vmatmul.bf16.gmra.mxu0 %v3517
    %v7306 = vpop.f32.mrf.mxu0
    %v7307 = vadd.f32 %v7258, %v7306
    %v7308 = vpop.f32.mrf.mxu0
    %v7309 = vadd.f32 %v7260, %v7308
    %7310 = vmatmul.bf16.gmra.mxu0 %v3525
    %v7311 = vpop.f32.mrf.mxu0
    %v7312 = vadd.f32 %v7263, %v7311
    %v7313 = vpop.f32.mrf.mxu0
    %v7314 = vadd.f32 %v7265, %v7313
    %7315 = vmatmul.bf16.gmra.mxu0 %v3533
    %v7316 = vpop.f32.mrf.mxu0
    %v7317 = vadd.f32 %v7268, %v7316
    %v7318 = vpop.f32.mrf.mxu0
    %v7319 = vadd.f32 %v7270, %v7318
    %7320 = vmatmul.bf16.gmra.mxu0 %v3541
    %v7321 = vpop.f32.mrf.mxu0
    %v7322 = vadd.f32 %v7273, %v7321
    %v7323 = vpop.f32.mrf.mxu0
    %v7324 = vadd.f32 %v7275, %v7323
    %7325 = vmatmul.bf16.gmra.mxu0 %v3549
    %v7326 = vpop.f32.mrf.mxu0
    %v7327 = vadd.f32 %v7278, %v7326
    %v7328 = vpop.f32.mrf.mxu0
    %v7329 = vadd.f32 %v7280, %v7328
    %7330 = vmatmul.bf16.gmra.mxu0 %v3557
    %v7331 = vpop.f32.mrf.mxu0
    %v7332 = vadd.f32 %v7283, %v7331
    %v7333 = vpop.f32.mrf.mxu0
    %v7334 = vadd.f32 %v7285, %v7333
    %7335 = vdwg.mxu0
    %7336 = vmatpush.bf16.msra.mxu0 %v6067
    %7337 = vmatpush.bf16.msra.mxu0 %v6059
    %7338 = vmatpush.bf16.msra.mxu0 %v6051
    %7339 = vmatpush.bf16.msra.mxu0 %v6043
    %7340 = vmatpush.bf16.msra.mxu0 %v6035
    %7341 = vmatpush.bf16.msra.mxu0 %v6027
    %7342 = vmatpush.bf16.msra.mxu0 %v6019
    %7343 = vmatpush.bf16.msra.mxu0 %v6011
    %7344 = vmatmul.bf16.gmra.mxu0 %v3502
    %v7345 = vpop.f32.mrf.mxu0
    %v7346 = vadd.f32 %v7297, %v7345
    %v7347 = vpop.f32.mrf.mxu0
    %v7348 = vadd.f32 %v7299, %v7347
    %7349 = vmatmul.bf16.gmra.mxu0 %v3510
    %v7350 = vpop.f32.mrf.mxu0
    %v7351 = vadd.f32 %v7302, %v7350
    %v7352 = vpop.f32.mrf.mxu0
    %v7353 = vadd.f32 %v7304, %v7352
    %7354 = vmatmul.bf16.gmra.mxu0 %v3518
    %v7355 = vpop.f32.mrf.mxu0
    %v7356 = vadd.f32 %v7307, %v7355
    %v7357 = vpop.f32.mrf.mxu0
    %v7358 = vadd.f32 %v7309, %v7357
    %7359 = vmatmul.bf16.gmra.mxu0 %v3526
    %v7360 = vpop.f32.mrf.mxu0
    %v7361 = vadd.f32 %v7312, %v7360
    %v7362 = vpop.f32.mrf.mxu0
    %v7363 = vadd.f32 %v7314, %v7362
    %7364 = vmatmul.bf16.gmra.mxu0 %v3534
    %v7365 = vpop.f32.mrf.mxu0
    %v7366 = vadd.f32 %v7317, %v7365
    %v7367 = vpop.f32.mrf.mxu0
    %v7368 = vadd.f32 %v7319, %v7367
    %7369 = vmatmul.bf16.gmra.mxu0 %v3542
    %v7370 = vpop.f32.mrf.mxu0
    %v7371 = vadd.f32 %v7322, %v7370
    %v7372 = vpop.f32.mrf.mxu0
    %v7373 = vadd.f32 %v7324, %v7372
    %7374 = vmatmul.bf16.gmra.mxu0 %v3550
    %v7375 = vpop.f32.mrf.mxu0
    %v7376 = vadd.f32 %v7327, %v7375
    %v7377 = vpop.f32.mrf.mxu0
    %v7378 = vadd.f32 %v7329, %v7377
    %7379 = vmatmul.bf16.gmra.mxu0 %v3558
    %v7380 = vpop.f32.mrf.mxu0
    %v7381 = vadd.f32 %v7332, %v7380
    %v7382 = vpop.f32.mrf.mxu0
    %v7383 = vadd.f32 %v7334, %v7382
    %7384 = vdwg.mxu0
    %7385 = vmatpush.bf16.msra.mxu0 %v6131
    %7386 = vmatpush.bf16.msra.mxu0 %v6123
    %7387 = vmatpush.bf16.msra.mxu0 %v6115
    %7388 = vmatpush.bf16.msra.mxu0 %v6107
    %7389 = vmatpush.bf16.msra.mxu0 %v6099
    %7390 = vmatpush.bf16.msra.mxu0 %v6091
    %7391 = vmatpush.bf16.msra.mxu0 %v6083
    %7392 = vmatpush.bf16.msra.mxu0 %v6075
    %7393 = vmatmul.bf16.gmra.mxu0 %v3503
    %v7394 = vpop.f32.mrf.mxu0
    %v7395 = vadd.f32 %v7346, %v7394
    %v7396 = vpop.f32.mrf.mxu0
    %v7397 = vadd.f32 %v7348, %v7396
    %7398 = vmatmul.bf16.gmra.mxu0 %v3511
    %v7399 = vpop.f32.mrf.mxu0
    %v7400 = vadd.f32 %v7351, %v7399
    %v7401 = vpop.f32.mrf.mxu0
    %v7402 = vadd.f32 %v7353, %v7401
    %7403 = vmatmul.bf16.gmra.mxu0 %v3519
    %v7404 = vpop.f32.mrf.mxu0
    %v7405 = vadd.f32 %v7356, %v7404
    %v7406 = vpop.f32.mrf.mxu0
    %v7407 = vadd.f32 %v7358, %v7406
    %7408 = vmatmul.bf16.gmra.mxu0 %v3527
    %v7409 = vpop.f32.mrf.mxu0
    %v7410 = vadd.f32 %v7361, %v7409
    %v7411 = vpop.f32.mrf.mxu0
    %v7412 = vadd.f32 %v7363, %v7411
    %7413 = vmatmul.bf16.gmra.mxu0 %v3535
    %v7414 = vpop.f32.mrf.mxu0
    %v7415 = vadd.f32 %v7366, %v7414
    %v7416 = vpop.f32.mrf.mxu0
    %v7417 = vadd.f32 %v7368, %v7416
    %7418 = vmatmul.bf16.gmra.mxu0 %v3543
    %v7419 = vpop.f32.mrf.mxu0
    %v7420 = vadd.f32 %v7371, %v7419
    %v7421 = vpop.f32.mrf.mxu0
    %v7422 = vadd.f32 %v7373, %v7421
    %7423 = vmatmul.bf16.gmra.mxu0 %v3551
    %v7424 = vpop.f32.mrf.mxu0
    %v7425 = vadd.f32 %v7376, %v7424
    %v7426 = vpop.f32.mrf.mxu0
    %v7427 = vadd.f32 %v7378, %v7426
    %7428 = vmatmul.bf16.gmra.mxu0 %v3559
    %v7429 = vpop.f32.mrf.mxu0
    %v7430 = vadd.f32 %v7381, %v7429
    %v7431 = vpop.f32.mrf.mxu0
    %v7432 = vadd.f32 %v7383, %v7431
    %7433 = vdwg.mxu0
    %7434 = vmatpush.bf16.msra.mxu0 %v5684
    %7435 = vmatpush.bf16.msra.mxu0 %v5676
    %7436 = vmatpush.bf16.msra.mxu0 %v5668
    %7437 = vmatpush.bf16.msra.mxu0 %v5660
    %7438 = vmatpush.bf16.msra.mxu0 %v5652
    %7439 = vmatpush.bf16.msra.mxu0 %v5644
    %7440 = vmatpush.bf16.msra.mxu0 %v5636
    %7441 = vmatpush.bf16.msra.mxu0 %v5628
    %7442 = vmatmul.bf16.gmra.mxu0 %v3496
    %v7443 = vpop.f32.mrf.mxu0
    %v7444 = vadd.f32 %v4076, %v7443
    %v7445 = vpop.f32.mrf.mxu0
    %v7446 = vadd.f32 %v4076, %v7445
    %7447 = vmatmul.bf16.gmra.mxu0 %v3504
    %v7448 = vpop.f32.mrf.mxu0
    %v7449 = vadd.f32 %v4076, %v7448
    %v7450 = vpop.f32.mrf.mxu0
    %v7451 = vadd.f32 %v4076, %v7450
    %7452 = vmatmul.bf16.gmra.mxu0 %v3512
    %v7453 = vpop.f32.mrf.mxu0
    %v7454 = vadd.f32 %v4076, %v7453
    %v7455 = vpop.f32.mrf.mxu0
    %v7456 = vadd.f32 %v4076, %v7455
    %7457 = vmatmul.bf16.gmra.mxu0 %v3520
    %v7458 = vpop.f32.mrf.mxu0
    %v7459 = vadd.f32 %v4076, %v7458
    %v7460 = vpop.f32.mrf.mxu0
    %v7461 = vadd.f32 %v4076, %v7460
    %7462 = vmatmul.bf16.gmra.mxu0 %v3528
    %v7463 = vpop.f32.mrf.mxu0
    %v7464 = vadd.f32 %v4076, %v7463
    %v7465 = vpop.f32.mrf.mxu0
    %v7466 = vadd.f32 %v4076, %v7465
    %7467 = vmatmul.bf16.gmra.mxu0 %v3536
    %v7468 = vpop.f32.mrf.mxu0
    %v7469 = vadd.f32 %v4076, %v7468
    %v7470 = vpop.f32.mrf.mxu0
    %v7471 = vadd.f32 %v4076, %v7470
    %7472 = vmatmul.bf16.gmra.mxu0 %v3544
    %v7473 = vpop.f32.mrf.mxu0
    %v7474 = vadd.f32 %v4076, %v7473
    %v7475 = vpop.f32.mrf.mxu0
    %v7476 = vadd.f32 %v4076, %v7475
    %7477 = vmatmul.bf16.gmra.mxu0 %v3552
    %v7478 = vpop.f32.mrf.mxu0
    %v7479 = vadd.f32 %v4076, %v7478
    %v7480 = vpop.f32.mrf.mxu0
    %v7481 = vadd.f32 %v4076, %v7480
    %7482 = vdwg.mxu0
    %7483 = vmatpush.bf16.msra.mxu0 %v5748
    %7484 = vmatpush.bf16.msra.mxu0 %v5740
    %7485 = vmatpush.bf16.msra.mxu0 %v5732
    %7486 = vmatpush.bf16.msra.mxu0 %v5724
    %7487 = vmatpush.bf16.msra.mxu0 %v5716
    %7488 = vmatpush.bf16.msra.mxu0 %v5708
    %7489 = vmatpush.bf16.msra.mxu0 %v5700
    %7490 = vmatpush.bf16.msra.mxu0 %v5692
    %7491 = vmatmul.bf16.gmra.mxu0 %v3497
    %v7492 = vpop.f32.mrf.mxu0
    %v7493 = vadd.f32 %v7444, %v7492
    %v7494 = vpop.f32.mrf.mxu0
    %v7495 = vadd.f32 %v7446, %v7494
    %7496 = vmatmul.bf16.gmra.mxu0 %v3505
    %v7497 = vpop.f32.mrf.mxu0
    %v7498 = vadd.f32 %v7449, %v7497
    %v7499 = vpop.f32.mrf.mxu0
    %v7500 = vadd.f32 %v7451, %v7499
    %7501 = vmatmul.bf16.gmra.mxu0 %v3513
    %v7502 = vpop.f32.mrf.mxu0
    %v7503 = vadd.f32 %v7454, %v7502
    %v7504 = vpop.f32.mrf.mxu0
    %v7505 = vadd.f32 %v7456, %v7504
    %7506 = vmatmul.bf16.gmra.mxu0 %v3521
    %v7507 = vpop.f32.mrf.mxu0
    %v7508 = vadd.f32 %v7459, %v7507
    %v7509 = vpop.f32.mrf.mxu0
    %v7510 = vadd.f32 %v7461, %v7509
    %7511 = vmatmul.bf16.gmra.mxu0 %v3529
    %v7512 = vpop.f32.mrf.mxu0
    %v7513 = vadd.f32 %v7464, %v7512
    %v7514 = vpop.f32.mrf.mxu0
    %v7515 = vadd.f32 %v7466, %v7514
    %7516 = vmatmul.bf16.gmra.mxu0 %v3537
    %v7517 = vpop.f32.mrf.mxu0
    %v7518 = vadd.f32 %v7469, %v7517
    %v7519 = vpop.f32.mrf.mxu0
    %v7520 = vadd.f32 %v7471, %v7519
    %7521 = vmatmul.bf16.gmra.mxu0 %v3545
    %v7522 = vpop.f32.mrf.mxu0
    %v7523 = vadd.f32 %v7474, %v7522
    %v7524 = vpop.f32.mrf.mxu0
    %v7525 = vadd.f32 %v7476, %v7524
    %7526 = vmatmul.bf16.gmra.mxu0 %v3553
    %v7527 = vpop.f32.mrf.mxu0
    %v7528 = vadd.f32 %v7479, %v7527
    %v7529 = vpop.f32.mrf.mxu0
    %v7530 = vadd.f32 %v7481, %v7529
    %7531 = vdwg.mxu0
    %7532 = vmatpush.bf16.msra.mxu0 %v5812
    %7533 = vmatpush.bf16.msra.mxu0 %v5804
    %7534 = vmatpush.bf16.msra.mxu0 %v5796
    %7535 = vmatpush.bf16.msra.mxu0 %v5788
    %7536 = vmatpush.bf16.msra.mxu0 %v5780
    %7537 = vmatpush.bf16.msra.mxu0 %v5772
    %7538 = vmatpush.bf16.msra.mxu0 %v5764
    %7539 = vmatpush.bf16.msra.mxu0 %v5756
    %7540 = vmatmul.bf16.gmra.mxu0 %v3498
    %v7541 = vpop.f32.mrf.mxu0
    %v7542 = vadd.f32 %v7493, %v7541
    %v7543 = vpop.f32.mrf.mxu0
    %v7544 = vadd.f32 %v7495, %v7543
    %7545 = vmatmul.bf16.gmra.mxu0 %v3506
    %v7546 = vpop.f32.mrf.mxu0
    %v7547 = vadd.f32 %v7498, %v7546
    %v7548 = vpop.f32.mrf.mxu0
    %v7549 = vadd.f32 %v7500, %v7548
    %7550 = vmatmul.bf16.gmra.mxu0 %v3514
    %v7551 = vpop.f32.mrf.mxu0
    %v7552 = vadd.f32 %v7503, %v7551
    %v7553 = vpop.f32.mrf.mxu0
    %v7554 = vadd.f32 %v7505, %v7553
    %7555 = vmatmul.bf16.gmra.mxu0 %v3522
    %v7556 = vpop.f32.mrf.mxu0
    %v7557 = vadd.f32 %v7508, %v7556
    %v7558 = vpop.f32.mrf.mxu0
    %v7559 = vadd.f32 %v7510, %v7558
    %7560 = vmatmul.bf16.gmra.mxu0 %v3530
    %v7561 = vpop.f32.mrf.mxu0
    %v7562 = vadd.f32 %v7513, %v7561
    %v7563 = vpop.f32.mrf.mxu0
    %v7564 = vadd.f32 %v7515, %v7563
    %7565 = vmatmul.bf16.gmra.mxu0 %v3538
    %v7566 = vpop.f32.mrf.mxu0
    %v7567 = vadd.f32 %v7518, %v7566
    %v7568 = vpop.f32.mrf.mxu0
    %v7569 = vadd.f32 %v7520, %v7568
    %7570 = vmatmul.bf16.gmra.mxu0 %v3546
    %v7571 = vpop.f32.mrf.mxu0
    %v7572 = vadd.f32 %v7523, %v7571
    %v7573 = vpop.f32.mrf.mxu0
    %v7574 = vadd.f32 %v7525, %v7573
    %7575 = vmatmul.bf16.gmra.mxu0 %v3554
    %v7576 = vpop.f32.mrf.mxu0
    %v7577 = vadd.f32 %v7528, %v7576
    %v7578 = vpop.f32.mrf.mxu0
    %v7579 = vadd.f32 %v7530, %v7578
    %7580 = vdwg.mxu0
    %7581 = vmatpush.bf16.msra.mxu0 %v5876
    %7582 = vmatpush.bf16.msra.mxu0 %v5868
    %7583 = vmatpush.bf16.msra.mxu0 %v5860
    %7584 = vmatpush.bf16.msra.mxu0 %v5852
    %7585 = vmatpush.bf16.msra.mxu0 %v5844
    %7586 = vmatpush.bf16.msra.mxu0 %v5836
    %7587 = vmatpush.bf16.msra.mxu0 %v5828
    %7588 = vmatpush.bf16.msra.mxu0 %v5820
    %7589 = vmatmul.bf16.gmra.mxu0 %v3499
    %v7590 = vpop.f32.mrf.mxu0
    %v7591 = vadd.f32 %v7542, %v7590
    %v7592 = vpop.f32.mrf.mxu0
    %v7593 = vadd.f32 %v7544, %v7592
    %7594 = vmatmul.bf16.gmra.mxu0 %v3507
    %v7595 = vpop.f32.mrf.mxu0
    %v7596 = vadd.f32 %v7547, %v7595
    %v7597 = vpop.f32.mrf.mxu0
    %v7598 = vadd.f32 %v7549, %v7597
    %7599 = vmatmul.bf16.gmra.mxu0 %v3515
    %v7600 = vpop.f32.mrf.mxu0
    %v7601 = vadd.f32 %v7552, %v7600
    %v7602 = vpop.f32.mrf.mxu0
    %v7603 = vadd.f32 %v7554, %v7602
    %7604 = vmatmul.bf16.gmra.mxu0 %v3523
    %v7605 = vpop.f32.mrf.mxu0
    %v7606 = vadd.f32 %v7557, %v7605
    %v7607 = vpop.f32.mrf.mxu0
    %v7608 = vadd.f32 %v7559, %v7607
    %7609 = vmatmul.bf16.gmra.mxu0 %v3531
    %v7610 = vpop.f32.mrf.mxu0
    %v7611 = vadd.f32 %v7562, %v7610
    %v7612 = vpop.f32.mrf.mxu0
    %v7613 = vadd.f32 %v7564, %v7612
    %7614 = vmatmul.bf16.gmra.mxu0 %v3539
    %v7615 = vpop.f32.mrf.mxu0
    %v7616 = vadd.f32 %v7567, %v7615
    %v7617 = vpop.f32.mrf.mxu0
    %v7618 = vadd.f32 %v7569, %v7617
    %7619 = vmatmul.bf16.gmra.mxu0 %v3547
    %v7620 = vpop.f32.mrf.mxu0
    %v7621 = vadd.f32 %v7572, %v7620
    %v7622 = vpop.f32.mrf.mxu0
    %v7623 = vadd.f32 %v7574, %v7622
    %7624 = vmatmul.bf16.gmra.mxu0 %v3555
    %v7625 = vpop.f32.mrf.mxu0
    %v7626 = vadd.f32 %v7577, %v7625
    %v7627 = vpop.f32.mrf.mxu0
    %v7628 = vadd.f32 %v7579, %v7627
    %7629 = vdwg.mxu0
    %7630 = vmatpush.bf16.msra.mxu0 %v5940
    %7631 = vmatpush.bf16.msra.mxu0 %v5932
    %7632 = vmatpush.bf16.msra.mxu0 %v5924
    %7633 = vmatpush.bf16.msra.mxu0 %v5916
    %7634 = vmatpush.bf16.msra.mxu0 %v5908
    %7635 = vmatpush.bf16.msra.mxu0 %v5900
    %7636 = vmatpush.bf16.msra.mxu0 %v5892
    %7637 = vmatpush.bf16.msra.mxu0 %v5884
    %7638 = vmatmul.bf16.gmra.mxu0 %v3500
    %v7639 = vpop.f32.mrf.mxu0
    %v7640 = vadd.f32 %v7591, %v7639
    %v7641 = vpop.f32.mrf.mxu0
    %v7642 = vadd.f32 %v7593, %v7641
    %7643 = vmatmul.bf16.gmra.mxu0 %v3508
    %v7644 = vpop.f32.mrf.mxu0
    %v7645 = vadd.f32 %v7596, %v7644
    %v7646 = vpop.f32.mrf.mxu0
    %v7647 = vadd.f32 %v7598, %v7646
    %7648 = vmatmul.bf16.gmra.mxu0 %v3516
    %v7649 = vpop.f32.mrf.mxu0
    %v7650 = vadd.f32 %v7601, %v7649
    %v7651 = vpop.f32.mrf.mxu0
    %v7652 = vadd.f32 %v7603, %v7651
    %7653 = vmatmul.bf16.gmra.mxu0 %v3524
    %v7654 = vpop.f32.mrf.mxu0
    %v7655 = vadd.f32 %v7606, %v7654
    %v7656 = vpop.f32.mrf.mxu0
    %v7657 = vadd.f32 %v7608, %v7656
    %7658 = vmatmul.bf16.gmra.mxu0 %v3532
    %v7659 = vpop.f32.mrf.mxu0
    %v7660 = vadd.f32 %v7611, %v7659
    %v7661 = vpop.f32.mrf.mxu0
    %v7662 = vadd.f32 %v7613, %v7661
    %7663 = vmatmul.bf16.gmra.mxu0 %v3540
    %v7664 = vpop.f32.mrf.mxu0
    %v7665 = vadd.f32 %v7616, %v7664
    %v7666 = vpop.f32.mrf.mxu0
    %v7667 = vadd.f32 %v7618, %v7666
    %7668 = vmatmul.bf16.gmra.mxu0 %v3548
    %v7669 = vpop.f32.mrf.mxu0
    %v7670 = vadd.f32 %v7621, %v7669
    %v7671 = vpop.f32.mrf.mxu0
    %v7672 = vadd.f32 %v7623, %v7671
    %7673 = vmatmul.bf16.gmra.mxu0 %v3556
    %v7674 = vpop.f32.mrf.mxu0
    %v7675 = vadd.f32 %v7626, %v7674
    %v7676 = vpop.f32.mrf.mxu0
    %v7677 = vadd.f32 %v7628, %v7676
    %7678 = vdwg.mxu0
    %7679 = vmatpush.bf16.msra.mxu0 %v6004
    %7680 = vmatpush.bf16.msra.mxu0 %v5996
    %7681 = vmatpush.bf16.msra.mxu0 %v5988
    %7682 = vmatpush.bf16.msra.mxu0 %v5980
    %7683 = vmatpush.bf16.msra.mxu0 %v5972
    %7684 = vmatpush.bf16.msra.mxu0 %v5964
    %7685 = vmatpush.bf16.msra.mxu0 %v5956
    %7686 = vmatpush.bf16.msra.mxu0 %v5948
    %7687 = vmatmul.bf16.gmra.mxu0 %v3501
    %v7688 = vpop.f32.mrf.mxu0
    %v7689 = vadd.f32 %v7640, %v7688
    %v7690 = vpop.f32.mrf.mxu0
    %v7691 = vadd.f32 %v7642, %v7690
    %7692 = vmatmul.bf16.gmra.mxu0 %v3509
    %v7693 = vpop.f32.mrf.mxu0
    %v7694 = vadd.f32 %v7645, %v7693
    %v7695 = vpop.f32.mrf.mxu0
    %v7696 = vadd.f32 %v7647, %v7695
    %7697 = vmatmul.bf16.gmra.mxu0 %v3517
    %v7698 = vpop.f32.mrf.mxu0
    %v7699 = vadd.f32 %v7650, %v7698
    %v7700 = vpop.f32.mrf.mxu0
    %v7701 = vadd.f32 %v7652, %v7700
    %7702 = vmatmul.bf16.gmra.mxu0 %v3525
    %v7703 = vpop.f32.mrf.mxu0
    %v7704 = vadd.f32 %v7655, %v7703
    %v7705 = vpop.f32.mrf.mxu0
    %v7706 = vadd.f32 %v7657, %v7705
    %7707 = vmatmul.bf16.gmra.mxu0 %v3533
    %v7708 = vpop.f32.mrf.mxu0
    %v7709 = vadd.f32 %v7660, %v7708
    %v7710 = vpop.f32.mrf.mxu0
    %v7711 = vadd.f32 %v7662, %v7710
    %7712 = vmatmul.bf16.gmra.mxu0 %v3541
    %v7713 = vpop.f32.mrf.mxu0
    %v7714 = vadd.f32 %v7665, %v7713
    %v7715 = vpop.f32.mrf.mxu0
    %v7716 = vadd.f32 %v7667, %v7715
    %7717 = vmatmul.bf16.gmra.mxu0 %v3549
    %v7718 = vpop.f32.mrf.mxu0
    %v7719 = vadd.f32 %v7670, %v7718
    %v7720 = vpop.f32.mrf.mxu0
    %v7721 = vadd.f32 %v7672, %v7720
    %7722 = vmatmul.bf16.gmra.mxu0 %v3557
    %v7723 = vpop.f32.mrf.mxu0
    %v7724 = vadd.f32 %v7675, %v7723
    %v7725 = vpop.f32.mrf.mxu0
    %v7726 = vadd.f32 %v7677, %v7725
    %7727 = vdwg.mxu0
    %7728 = vmatpush.bf16.msra.mxu0 %v6068
    %7729 = vmatpush.bf16.msra.mxu0 %v6060
    %7730 = vmatpush.bf16.msra.mxu0 %v6052
    %7731 = vmatpush.bf16.msra.mxu0 %v6044
    %7732 = vmatpush.bf16.msra.mxu0 %v6036
    %7733 = vmatpush.bf16.msra.mxu0 %v6028
    %7734 = vmatpush.bf16.msra.mxu0 %v6020
    %7735 = vmatpush.bf16.msra.mxu0 %v6012
    %7736 = vmatmul.bf16.gmra.mxu0 %v3502
    %v7737 = vpop.f32.mrf.mxu0
    %v7738 = vadd.f32 %v7689, %v7737
    %v7739 = vpop.f32.mrf.mxu0
    %v7740 = vadd.f32 %v7691, %v7739
    %7741 = vmatmul.bf16.gmra.mxu0 %v3510
    %v7742 = vpop.f32.mrf.mxu0
    %v7743 = vadd.f32 %v7694, %v7742
    %v7744 = vpop.f32.mrf.mxu0
    %v7745 = vadd.f32 %v7696, %v7744
    %7746 = vmatmul.bf16.gmra.mxu0 %v3518
    %v7747 = vpop.f32.mrf.mxu0
    %v7748 = vadd.f32 %v7699, %v7747
    %v7749 = vpop.f32.mrf.mxu0
    %v7750 = vadd.f32 %v7701, %v7749
    %7751 = vmatmul.bf16.gmra.mxu0 %v3526
    %v7752 = vpop.f32.mrf.mxu0
    %v7753 = vadd.f32 %v7704, %v7752
    %v7754 = vpop.f32.mrf.mxu0
    %v7755 = vadd.f32 %v7706, %v7754
    %7756 = vmatmul.bf16.gmra.mxu0 %v3534
    %v7757 = vpop.f32.mrf.mxu0
    %v7758 = vadd.f32 %v7709, %v7757
    %v7759 = vpop.f32.mrf.mxu0
    %v7760 = vadd.f32 %v7711, %v7759
    %7761 = vmatmul.bf16.gmra.mxu0 %v3542
    %v7762 = vpop.f32.mrf.mxu0
    %v7763 = vadd.f32 %v7714, %v7762
    %v7764 = vpop.f32.mrf.mxu0
    %v7765 = vadd.f32 %v7716, %v7764
    %7766 = vmatmul.bf16.gmra.mxu0 %v3550
    %v7767 = vpop.f32.mrf.mxu0
    %v7768 = vadd.f32 %v7719, %v7767
    %v7769 = vpop.f32.mrf.mxu0
    %v7770 = vadd.f32 %v7721, %v7769
    %7771 = vmatmul.bf16.gmra.mxu0 %v3558
    %v7772 = vpop.f32.mrf.mxu0
    %v7773 = vadd.f32 %v7724, %v7772
    %v7774 = vpop.f32.mrf.mxu0
    %v7775 = vadd.f32 %v7726, %v7774
    %7776 = vdwg.mxu0
    %7777 = vmatpush.bf16.msra.mxu0 %v6132
    %7778 = vmatpush.bf16.msra.mxu0 %v6124
    %7779 = vmatpush.bf16.msra.mxu0 %v6116
    %7780 = vmatpush.bf16.msra.mxu0 %v6108
    %7781 = vmatpush.bf16.msra.mxu0 %v6100
    %7782 = vmatpush.bf16.msra.mxu0 %v6092
    %7783 = vmatpush.bf16.msra.mxu0 %v6084
    %7784 = vmatpush.bf16.msra.mxu0 %v6076
    %7785 = vmatmul.bf16.gmra.mxu0 %v3503
    %v7786 = vpop.f32.mrf.mxu0
    %v7787 = vadd.f32 %v7738, %v7786
    %v7788 = vpop.f32.mrf.mxu0
    %v7789 = vadd.f32 %v7740, %v7788
    %7790 = vmatmul.bf16.gmra.mxu0 %v3511
    %v7791 = vpop.f32.mrf.mxu0
    %v7792 = vadd.f32 %v7743, %v7791
    %v7793 = vpop.f32.mrf.mxu0
    %v7794 = vadd.f32 %v7745, %v7793
    %7795 = vmatmul.bf16.gmra.mxu0 %v3519
    %v7796 = vpop.f32.mrf.mxu0
    %v7797 = vadd.f32 %v7748, %v7796
    %v7798 = vpop.f32.mrf.mxu0
    %v7799 = vadd.f32 %v7750, %v7798
    %7800 = vmatmul.bf16.gmra.mxu0 %v3527
    %v7801 = vpop.f32.mrf.mxu0
    %v7802 = vadd.f32 %v7753, %v7801
    %v7803 = vpop.f32.mrf.mxu0
    %v7804 = vadd.f32 %v7755, %v7803
    %7805 = vmatmul.bf16.gmra.mxu0 %v3535
    %v7806 = vpop.f32.mrf.mxu0
    %v7807 = vadd.f32 %v7758, %v7806
    %v7808 = vpop.f32.mrf.mxu0
    %v7809 = vadd.f32 %v7760, %v7808
    %7810 = vmatmul.bf16.gmra.mxu0 %v3543
    %v7811 = vpop.f32.mrf.mxu0
    %v7812 = vadd.f32 %v7763, %v7811
    %v7813 = vpop.f32.mrf.mxu0
    %v7814 = vadd.f32 %v7765, %v7813
    %7815 = vmatmul.bf16.gmra.mxu0 %v3551
    %v7816 = vpop.f32.mrf.mxu0
    %v7817 = vadd.f32 %v7768, %v7816
    %v7818 = vpop.f32.mrf.mxu0
    %v7819 = vadd.f32 %v7770, %v7818
    %7820 = vmatmul.bf16.gmra.mxu0 %v3559
    %v7821 = vpop.f32.mrf.mxu0
    %v7822 = vadd.f32 %v7773, %v7821
    %v7823 = vpop.f32.mrf.mxu0
    %v7824 = vadd.f32 %v7775, %v7823
    %7825 = vdwg.mxu0
    %7826 = vmatpush.bf16.msra.mxu0 %v5685
    %7827 = vmatpush.bf16.msra.mxu0 %v5677
    %7828 = vmatpush.bf16.msra.mxu0 %v5669
    %7829 = vmatpush.bf16.msra.mxu0 %v5661
    %7830 = vmatpush.bf16.msra.mxu0 %v5653
    %7831 = vmatpush.bf16.msra.mxu0 %v5645
    %7832 = vmatpush.bf16.msra.mxu0 %v5637
    %7833 = vmatpush.bf16.msra.mxu0 %v5629
    %7834 = vmatmul.bf16.gmra.mxu0 %v3496
    %v7835 = vpop.f32.mrf.mxu0
    %v7836 = vadd.f32 %v4077, %v7835
    %v7837 = vpop.f32.mrf.mxu0
    %v7838 = vadd.f32 %v4077, %v7837
    %7839 = vmatmul.bf16.gmra.mxu0 %v3504
    %v7840 = vpop.f32.mrf.mxu0
    %v7841 = vadd.f32 %v4077, %v7840
    %v7842 = vpop.f32.mrf.mxu0
    %v7843 = vadd.f32 %v4077, %v7842
    %7844 = vmatmul.bf16.gmra.mxu0 %v3512
    %v7845 = vpop.f32.mrf.mxu0
    %v7846 = vadd.f32 %v4077, %v7845
    %v7847 = vpop.f32.mrf.mxu0
    %v7848 = vadd.f32 %v4077, %v7847
    %7849 = vmatmul.bf16.gmra.mxu0 %v3520
    %v7850 = vpop.f32.mrf.mxu0
    %v7851 = vadd.f32 %v4077, %v7850
    %v7852 = vpop.f32.mrf.mxu0
    %v7853 = vadd.f32 %v4077, %v7852
    %7854 = vmatmul.bf16.gmra.mxu0 %v3528
    %v7855 = vpop.f32.mrf.mxu0
    %v7856 = vadd.f32 %v4077, %v7855
    %v7857 = vpop.f32.mrf.mxu0
    %v7858 = vadd.f32 %v4077, %v7857
    %7859 = vmatmul.bf16.gmra.mxu0 %v3536
    %v7860 = vpop.f32.mrf.mxu0
    %v7861 = vadd.f32 %v4077, %v7860
    %v7862 = vpop.f32.mrf.mxu0
    %v7863 = vadd.f32 %v4077, %v7862
    %7864 = vmatmul.bf16.gmra.mxu0 %v3544
    %v7865 = vpop.f32.mrf.mxu0
    %v7866 = vadd.f32 %v4077, %v7865
    %v7867 = vpop.f32.mrf.mxu0
    %v7868 = vadd.f32 %v4077, %v7867
    %7869 = vmatmul.bf16.gmra.mxu0 %v3552
    %v7870 = vpop.f32.mrf.mxu0
    %v7871 = vadd.f32 %v4077, %v7870
    %v7872 = vpop.f32.mrf.mxu0
    %v7873 = vadd.f32 %v4077, %v7872
    %7874 = vdwg.mxu0
    %7875 = vmatpush.bf16.msra.mxu0 %v5749
    %7876 = vmatpush.bf16.msra.mxu0 %v5741
    %7877 = vmatpush.bf16.msra.mxu0 %v5733
    %7878 = vmatpush.bf16.msra.mxu0 %v5725
    %7879 = vmatpush.bf16.msra.mxu0 %v5717
    %7880 = vmatpush.bf16.msra.mxu0 %v5709
    %7881 = vmatpush.bf16.msra.mxu0 %v5701
    %7882 = vmatpush.bf16.msra.mxu0 %v5693
    %7883 = vmatmul.bf16.gmra.mxu0 %v3497
    %v7884 = vpop.f32.mrf.mxu0
    %v7885 = vadd.f32 %v7836, %v7884
    %v7886 = vpop.f32.mrf.mxu0
    %v7887 = vadd.f32 %v7838, %v7886
    %7888 = vmatmul.bf16.gmra.mxu0 %v3505
    %v7889 = vpop.f32.mrf.mxu0
    %v7890 = vadd.f32 %v7841, %v7889
    %v7891 = vpop.f32.mrf.mxu0
    %v7892 = vadd.f32 %v7843, %v7891
    %7893 = vmatmul.bf16.gmra.mxu0 %v3513
    %v7894 = vpop.f32.mrf.mxu0
    %v7895 = vadd.f32 %v7846, %v7894
    %v7896 = vpop.f32.mrf.mxu0
    %v7897 = vadd.f32 %v7848, %v7896
    %7898 = vmatmul.bf16.gmra.mxu0 %v3521
    %v7899 = vpop.f32.mrf.mxu0
    %v7900 = vadd.f32 %v7851, %v7899
    %v7901 = vpop.f32.mrf.mxu0
    %v7902 = vadd.f32 %v7853, %v7901
    %7903 = vmatmul.bf16.gmra.mxu0 %v3529
    %v7904 = vpop.f32.mrf.mxu0
    %v7905 = vadd.f32 %v7856, %v7904
    %v7906 = vpop.f32.mrf.mxu0
    %v7907 = vadd.f32 %v7858, %v7906
    %7908 = vmatmul.bf16.gmra.mxu0 %v3537
    %v7909 = vpop.f32.mrf.mxu0
    %v7910 = vadd.f32 %v7861, %v7909
    %v7911 = vpop.f32.mrf.mxu0
    %v7912 = vadd.f32 %v7863, %v7911
    %7913 = vmatmul.bf16.gmra.mxu0 %v3545
    %v7914 = vpop.f32.mrf.mxu0
    %v7915 = vadd.f32 %v7866, %v7914
    %v7916 = vpop.f32.mrf.mxu0
    %v7917 = vadd.f32 %v7868, %v7916
    %7918 = vmatmul.bf16.gmra.mxu0 %v3553
    %v7919 = vpop.f32.mrf.mxu0
    %v7920 = vadd.f32 %v7871, %v7919
    %v7921 = vpop.f32.mrf.mxu0
    %v7922 = vadd.f32 %v7873, %v7921
    %7923 = vdwg.mxu0
    %7924 = vmatpush.bf16.msra.mxu0 %v5813
    %7925 = vmatpush.bf16.msra.mxu0 %v5805
    %7926 = vmatpush.bf16.msra.mxu0 %v5797
    %7927 = vmatpush.bf16.msra.mxu0 %v5789
    %7928 = vmatpush.bf16.msra.mxu0 %v5781
    %7929 = vmatpush.bf16.msra.mxu0 %v5773
    %7930 = vmatpush.bf16.msra.mxu0 %v5765
    %7931 = vmatpush.bf16.msra.mxu0 %v5757
    %7932 = vmatmul.bf16.gmra.mxu0 %v3498
    %v7933 = vpop.f32.mrf.mxu0
    %v7934 = vadd.f32 %v7885, %v7933
    %v7935 = vpop.f32.mrf.mxu0
    %v7936 = vadd.f32 %v7887, %v7935
    %7937 = vmatmul.bf16.gmra.mxu0 %v3506
    %v7938 = vpop.f32.mrf.mxu0
    %v7939 = vadd.f32 %v7890, %v7938
    %v7940 = vpop.f32.mrf.mxu0
    %v7941 = vadd.f32 %v7892, %v7940
    %7942 = vmatmul.bf16.gmra.mxu0 %v3514
    %v7943 = vpop.f32.mrf.mxu0
    %v7944 = vadd.f32 %v7895, %v7943
    %v7945 = vpop.f32.mrf.mxu0
    %v7946 = vadd.f32 %v7897, %v7945
    %7947 = vmatmul.bf16.gmra.mxu0 %v3522
    %v7948 = vpop.f32.mrf.mxu0
    %v7949 = vadd.f32 %v7900, %v7948
    %v7950 = vpop.f32.mrf.mxu0
    %v7951 = vadd.f32 %v7902, %v7950
    %7952 = vmatmul.bf16.gmra.mxu0 %v3530
    %v7953 = vpop.f32.mrf.mxu0
    %v7954 = vadd.f32 %v7905, %v7953
    %v7955 = vpop.f32.mrf.mxu0
    %v7956 = vadd.f32 %v7907, %v7955
    %7957 = vmatmul.bf16.gmra.mxu0 %v3538
    %v7958 = vpop.f32.mrf.mxu0
    %v7959 = vadd.f32 %v7910, %v7958
    %v7960 = vpop.f32.mrf.mxu0
    %v7961 = vadd.f32 %v7912, %v7960
    %7962 = vmatmul.bf16.gmra.mxu0 %v3546
    %v7963 = vpop.f32.mrf.mxu0
    %v7964 = vadd.f32 %v7915, %v7963
    %v7965 = vpop.f32.mrf.mxu0
    %v7966 = vadd.f32 %v7917, %v7965
    %7967 = vmatmul.bf16.gmra.mxu0 %v3554
    %v7968 = vpop.f32.mrf.mxu0
    %v7969 = vadd.f32 %v7920, %v7968
    %v7970 = vpop.f32.mrf.mxu0
    %v7971 = vadd.f32 %v7922, %v7970
    %7972 = vdwg.mxu0
    %7973 = vmatpush.bf16.msra.mxu0 %v5877
    %7974 = vmatpush.bf16.msra.mxu0 %v5869
    %7975 = vmatpush.bf16.msra.mxu0 %v5861
    %7976 = vmatpush.bf16.msra.mxu0 %v5853
    %7977 = vmatpush.bf16.msra.mxu0 %v5845
    %7978 = vmatpush.bf16.msra.mxu0 %v5837
    %7979 = vmatpush.bf16.msra.mxu0 %v5829
    %7980 = vmatpush.bf16.msra.mxu0 %v5821
    %7981 = vmatmul.bf16.gmra.mxu0 %v3499
    %v7982 = vpop.f32.mrf.mxu0
    %v7983 = vadd.f32 %v7934, %v7982
    %v7984 = vpop.f32.mrf.mxu0
    %v7985 = vadd.f32 %v7936, %v7984
    %7986 = vmatmul.bf16.gmra.mxu0 %v3507
    %v7987 = vpop.f32.mrf.mxu0
    %v7988 = vadd.f32 %v7939, %v7987
    %v7989 = vpop.f32.mrf.mxu0
    %v7990 = vadd.f32 %v7941, %v7989
    %7991 = vmatmul.bf16.gmra.mxu0 %v3515
    %v7992 = vpop.f32.mrf.mxu0
    %v7993 = vadd.f32 %v7944, %v7992
    %v7994 = vpop.f32.mrf.mxu0
    %v7995 = vadd.f32 %v7946, %v7994
    %7996 = vmatmul.bf16.gmra.mxu0 %v3523
    %v7997 = vpop.f32.mrf.mxu0
    %v7998 = vadd.f32 %v7949, %v7997
    %v7999 = vpop.f32.mrf.mxu0
    %v8000 = vadd.f32 %v7951, %v7999
    %8001 = vmatmul.bf16.gmra.mxu0 %v3531
    %v8002 = vpop.f32.mrf.mxu0
    %v8003 = vadd.f32 %v7954, %v8002
    %v8004 = vpop.f32.mrf.mxu0
    %v8005 = vadd.f32 %v7956, %v8004
    %8006 = vmatmul.bf16.gmra.mxu0 %v3539
    %v8007 = vpop.f32.mrf.mxu0
    %v8008 = vadd.f32 %v7959, %v8007
    %v8009 = vpop.f32.mrf.mxu0
    %v8010 = vadd.f32 %v7961, %v8009
    %8011 = vmatmul.bf16.gmra.mxu0 %v3547
    %v8012 = vpop.f32.mrf.mxu0
    %v8013 = vadd.f32 %v7964, %v8012
    %v8014 = vpop.f32.mrf.mxu0
    %v8015 = vadd.f32 %v7966, %v8014
    %8016 = vmatmul.bf16.gmra.mxu0 %v3555
    %v8017 = vpop.f32.mrf.mxu0
    %v8018 = vadd.f32 %v7969, %v8017
    %v8019 = vpop.f32.mrf.mxu0
    %v8020 = vadd.f32 %v7971, %v8019
    %8021 = vdwg.mxu0
    %8022 = vmatpush.bf16.msra.mxu0 %v5941
    %8023 = vmatpush.bf16.msra.mxu0 %v5933
    %8024 = vmatpush.bf16.msra.mxu0 %v5925
    %8025 = vmatpush.bf16.msra.mxu0 %v5917
    %8026 = vmatpush.bf16.msra.mxu0 %v5909
    %8027 = vmatpush.bf16.msra.mxu0 %v5901
    %8028 = vmatpush.bf16.msra.mxu0 %v5893
    %8029 = vmatpush.bf16.msra.mxu0 %v5885
    %8030 = vmatmul.bf16.gmra.mxu0 %v3500
    %v8031 = vpop.f32.mrf.mxu0
    %v8032 = vadd.f32 %v7983, %v8031
    %v8033 = vpop.f32.mrf.mxu0
    %v8034 = vadd.f32 %v7985, %v8033
    %8035 = vmatmul.bf16.gmra.mxu0 %v3508
    %v8036 = vpop.f32.mrf.mxu0
    %v8037 = vadd.f32 %v7988, %v8036
    %v8038 = vpop.f32.mrf.mxu0
    %v8039 = vadd.f32 %v7990, %v8038
    %8040 = vmatmul.bf16.gmra.mxu0 %v3516
    %v8041 = vpop.f32.mrf.mxu0
    %v8042 = vadd.f32 %v7993, %v8041
    %v8043 = vpop.f32.mrf.mxu0
    %v8044 = vadd.f32 %v7995, %v8043
    %8045 = vmatmul.bf16.gmra.mxu0 %v3524
    %v8046 = vpop.f32.mrf.mxu0
    %v8047 = vadd.f32 %v7998, %v8046
    %v8048 = vpop.f32.mrf.mxu0
    %v8049 = vadd.f32 %v8000, %v8048
    %8050 = vmatmul.bf16.gmra.mxu0 %v3532
    %v8051 = vpop.f32.mrf.mxu0
    %v8052 = vadd.f32 %v8003, %v8051
    %v8053 = vpop.f32.mrf.mxu0
    %v8054 = vadd.f32 %v8005, %v8053
    %8055 = vmatmul.bf16.gmra.mxu0 %v3540
    %v8056 = vpop.f32.mrf.mxu0
    %v8057 = vadd.f32 %v8008, %v8056
    %v8058 = vpop.f32.mrf.mxu0
    %v8059 = vadd.f32 %v8010, %v8058
    %8060 = vmatmul.bf16.gmra.mxu0 %v3548
    %v8061 = vpop.f32.mrf.mxu0
    %v8062 = vadd.f32 %v8013, %v8061
    %v8063 = vpop.f32.mrf.mxu0
    %v8064 = vadd.f32 %v8015, %v8063
    %8065 = vmatmul.bf16.gmra.mxu0 %v3556
    %v8066 = vpop.f32.mrf.mxu0
    %v8067 = vadd.f32 %v8018, %v8066
    %v8068 = vpop.f32.mrf.mxu0
    %v8069 = vadd.f32 %v8020, %v8068
    %8070 = vdwg.mxu0
    %8071 = vmatpush.bf16.msra.mxu0 %v6005
    %8072 = vmatpush.bf16.msra.mxu0 %v5997
    %8073 = vmatpush.bf16.msra.mxu0 %v5989
    %8074 = vmatpush.bf16.msra.mxu0 %v5981
    %8075 = vmatpush.bf16.msra.mxu0 %v5973
    %8076 = vmatpush.bf16.msra.mxu0 %v5965
    %8077 = vmatpush.bf16.msra.mxu0 %v5957
    %8078 = vmatpush.bf16.msra.mxu0 %v5949
    %8079 = vmatmul.bf16.gmra.mxu0 %v3501
    %v8080 = vpop.f32.mrf.mxu0
    %v8081 = vadd.f32 %v8032, %v8080
    %v8082 = vpop.f32.mrf.mxu0
    %v8083 = vadd.f32 %v8034, %v8082
    %8084 = vmatmul.bf16.gmra.mxu0 %v3509
    %v8085 = vpop.f32.mrf.mxu0
    %v8086 = vadd.f32 %v8037, %v8085
    %v8087 = vpop.f32.mrf.mxu0
    %v8088 = vadd.f32 %v8039, %v8087
    %8089 = vmatmul.bf16.gmra.mxu0 %v3517
    %v8090 = vpop.f32.mrf.mxu0
    %v8091 = vadd.f32 %v8042, %v8090
    %v8092 = vpop.f32.mrf.mxu0
    %v8093 = vadd.f32 %v8044, %v8092
    %8094 = vmatmul.bf16.gmra.mxu0 %v3525
    %v8095 = vpop.f32.mrf.mxu0
    %v8096 = vadd.f32 %v8047, %v8095
    %v8097 = vpop.f32.mrf.mxu0
    %v8098 = vadd.f32 %v8049, %v8097
    %8099 = vmatmul.bf16.gmra.mxu0 %v3533
    %v8100 = vpop.f32.mrf.mxu0
    %v8101 = vadd.f32 %v8052, %v8100
    %v8102 = vpop.f32.mrf.mxu0
    %v8103 = vadd.f32 %v8054, %v8102
    %8104 = vmatmul.bf16.gmra.mxu0 %v3541
    %v8105 = vpop.f32.mrf.mxu0
    %v8106 = vadd.f32 %v8057, %v8105
    %v8107 = vpop.f32.mrf.mxu0
    %v8108 = vadd.f32 %v8059, %v8107
    %8109 = vmatmul.bf16.gmra.mxu0 %v3549
    %v8110 = vpop.f32.mrf.mxu0
    %v8111 = vadd.f32 %v8062, %v8110
    %v8112 = vpop.f32.mrf.mxu0
    %v8113 = vadd.f32 %v8064, %v8112
    %8114 = vmatmul.bf16.gmra.mxu0 %v3557
    %v8115 = vpop.f32.mrf.mxu0
    %v8116 = vadd.f32 %v8067, %v8115
    %v8117 = vpop.f32.mrf.mxu0
    %v8118 = vadd.f32 %v8069, %v8117
    %8119 = vdwg.mxu0
    %8120 = vmatpush.bf16.msra.mxu0 %v6069
    %8121 = vmatpush.bf16.msra.mxu0 %v6061
    %8122 = vmatpush.bf16.msra.mxu0 %v6053
    %8123 = vmatpush.bf16.msra.mxu0 %v6045
    %8124 = vmatpush.bf16.msra.mxu0 %v6037
    %8125 = vmatpush.bf16.msra.mxu0 %v6029
    %8126 = vmatpush.bf16.msra.mxu0 %v6021
    %8127 = vmatpush.bf16.msra.mxu0 %v6013
    %8128 = vmatmul.bf16.gmra.mxu0 %v3502
    %v8129 = vpop.f32.mrf.mxu0
    %v8130 = vadd.f32 %v8081, %v8129
    %v8131 = vpop.f32.mrf.mxu0
    %v8132 = vadd.f32 %v8083, %v8131
    %8133 = vmatmul.bf16.gmra.mxu0 %v3510
    %v8134 = vpop.f32.mrf.mxu0
    %v8135 = vadd.f32 %v8086, %v8134
    %v8136 = vpop.f32.mrf.mxu0
    %v8137 = vadd.f32 %v8088, %v8136
    %8138 = vmatmul.bf16.gmra.mxu0 %v3518
    %v8139 = vpop.f32.mrf.mxu0
    %v8140 = vadd.f32 %v8091, %v8139
    %v8141 = vpop.f32.mrf.mxu0
    %v8142 = vadd.f32 %v8093, %v8141
    %8143 = vmatmul.bf16.gmra.mxu0 %v3526
    %v8144 = vpop.f32.mrf.mxu0
    %v8145 = vadd.f32 %v8096, %v8144
    %v8146 = vpop.f32.mrf.mxu0
    %v8147 = vadd.f32 %v8098, %v8146
    %8148 = vmatmul.bf16.gmra.mxu0 %v3534
    %v8149 = vpop.f32.mrf.mxu0
    %v8150 = vadd.f32 %v8101, %v8149
    %v8151 = vpop.f32.mrf.mxu0
    %v8152 = vadd.f32 %v8103, %v8151
    %8153 = vmatmul.bf16.gmra.mxu0 %v3542
    %v8154 = vpop.f32.mrf.mxu0
    %v8155 = vadd.f32 %v8106, %v8154
    %v8156 = vpop.f32.mrf.mxu0
    %v8157 = vadd.f32 %v8108, %v8156
    %8158 = vmatmul.bf16.gmra.mxu0 %v3550
    %v8159 = vpop.f32.mrf.mxu0
    %v8160 = vadd.f32 %v8111, %v8159
    %v8161 = vpop.f32.mrf.mxu0
    %v8162 = vadd.f32 %v8113, %v8161
    %8163 = vmatmul.bf16.gmra.mxu0 %v3558
    %v8164 = vpop.f32.mrf.mxu0
    %v8165 = vadd.f32 %v8116, %v8164
    %v8166 = vpop.f32.mrf.mxu0
    %v8167 = vadd.f32 %v8118, %v8166
    %8168 = vdwg.mxu0
    %8169 = vmatpush.bf16.msra.mxu0 %v6133
    %8170 = vmatpush.bf16.msra.mxu0 %v6125
    %8171 = vmatpush.bf16.msra.mxu0 %v6117
    %8172 = vmatpush.bf16.msra.mxu0 %v6109
    %8173 = vmatpush.bf16.msra.mxu0 %v6101
    %8174 = vmatpush.bf16.msra.mxu0 %v6093
    %8175 = vmatpush.bf16.msra.mxu0 %v6085
    %8176 = vmatpush.bf16.msra.mxu0 %v6077
    %8177 = vmatmul.bf16.gmra.mxu0 %v3503
    %v8178 = vpop.f32.mrf.mxu0
    %v8179 = vadd.f32 %v8130, %v8178
    %v8180 = vpop.f32.mrf.mxu0
    %v8181 = vadd.f32 %v8132, %v8180
    %8182 = vmatmul.bf16.gmra.mxu0 %v3511
    %v8183 = vpop.f32.mrf.mxu0
    %v8184 = vadd.f32 %v8135, %v8183
    %v8185 = vpop.f32.mrf.mxu0
    %v8186 = vadd.f32 %v8137, %v8185
    %8187 = vmatmul.bf16.gmra.mxu0 %v3519
    %v8188 = vpop.f32.mrf.mxu0
    %v8189 = vadd.f32 %v8140, %v8188
    %v8190 = vpop.f32.mrf.mxu0
    %v8191 = vadd.f32 %v8142, %v8190
    %8192 = vmatmul.bf16.gmra.mxu0 %v3527
    %v8193 = vpop.f32.mrf.mxu0
    %v8194 = vadd.f32 %v8145, %v8193
    %v8195 = vpop.f32.mrf.mxu0
    %v8196 = vadd.f32 %v8147, %v8195
    %8197 = vmatmul.bf16.gmra.mxu0 %v3535
    %v8198 = vpop.f32.mrf.mxu0
    %v8199 = vadd.f32 %v8150, %v8198
    %v8200 = vpop.f32.mrf.mxu0
    %v8201 = vadd.f32 %v8152, %v8200
    %8202 = vmatmul.bf16.gmra.mxu0 %v3543
    %v8203 = vpop.f32.mrf.mxu0
    %v8204 = vadd.f32 %v8155, %v8203
    %v8205 = vpop.f32.mrf.mxu0
    %v8206 = vadd.f32 %v8157, %v8205
    %8207 = vmatmul.bf16.gmra.mxu0 %v3551
    %v8208 = vpop.f32.mrf.mxu0
    %v8209 = vadd.f32 %v8160, %v8208
    %v8210 = vpop.f32.mrf.mxu0
    %v8211 = vadd.f32 %v8162, %v8210
    %8212 = vmatmul.bf16.gmra.mxu0 %v3559
    %v8213 = vpop.f32.mrf.mxu0
    %v8214 = vadd.f32 %v8165, %v8213
    %v8215 = vpop.f32.mrf.mxu0
    %v8216 = vadd.f32 %v8167, %v8215
    %8217 = vdwg.mxu0
    %8218 = vmatpush.bf16.msra.mxu0 %v5686
    %8219 = vmatpush.bf16.msra.mxu0 %v5678
    %8220 = vmatpush.bf16.msra.mxu0 %v5670
    %8221 = vmatpush.bf16.msra.mxu0 %v5662
    %8222 = vmatpush.bf16.msra.mxu0 %v5654
    %8223 = vmatpush.bf16.msra.mxu0 %v5646
    %8224 = vmatpush.bf16.msra.mxu0 %v5638
    %8225 = vmatpush.bf16.msra.mxu0 %v5630
    %8226 = vmatmul.bf16.gmra.mxu0 %v3496
    %v8227 = vpop.f32.mrf.mxu0
    %v8228 = vadd.f32 %v4078, %v8227
    %v8229 = vpop.f32.mrf.mxu0
    %v8230 = vadd.f32 %v4078, %v8229
    %8231 = vmatmul.bf16.gmra.mxu0 %v3504
    %v8232 = vpop.f32.mrf.mxu0
    %v8233 = vadd.f32 %v4078, %v8232
    %v8234 = vpop.f32.mrf.mxu0
    %v8235 = vadd.f32 %v4078, %v8234
    %8236 = vmatmul.bf16.gmra.mxu0 %v3512
    %v8237 = vpop.f32.mrf.mxu0
    %v8238 = vadd.f32 %v4078, %v8237
    %v8239 = vpop.f32.mrf.mxu0
    %v8240 = vadd.f32 %v4078, %v8239
    %8241 = vmatmul.bf16.gmra.mxu0 %v3520
    %v8242 = vpop.f32.mrf.mxu0
    %v8243 = vadd.f32 %v4078, %v8242
    %v8244 = vpop.f32.mrf.mxu0
    %v8245 = vadd.f32 %v4078, %v8244
    %8246 = vmatmul.bf16.gmra.mxu0 %v3528
    %v8247 = vpop.f32.mrf.mxu0
    %v8248 = vadd.f32 %v4078, %v8247
    %v8249 = vpop.f32.mrf.mxu0
    %v8250 = vadd.f32 %v4078, %v8249
    %8251 = vmatmul.bf16.gmra.mxu0 %v3536
    %v8252 = vpop.f32.mrf.mxu0
    %v8253 = vadd.f32 %v4078, %v8252
    %v8254 = vpop.f32.mrf.mxu0
    %v8255 = vadd.f32 %v4078, %v8254
    %8256 = vmatmul.bf16.gmra.mxu0 %v3544
    %v8257 = vpop.f32.mrf.mxu0
    %v8258 = vadd.f32 %v4078, %v8257
    %v8259 = vpop.f32.mrf.mxu0
    %v8260 = vadd.f32 %v4078, %v8259
    %8261 = vmatmul.bf16.gmra.mxu0 %v3552
    %v8262 = vpop.f32.mrf.mxu0
    %v8263 = vadd.f32 %v4078, %v8262
    %v8264 = vpop.f32.mrf.mxu0
    %v8265 = vadd.f32 %v4078, %v8264
    %8266 = vdwg.mxu0
    %8267 = vmatpush.bf16.msra.mxu0 %v5750
    %8268 = vmatpush.bf16.msra.mxu0 %v5742
    %8269 = vmatpush.bf16.msra.mxu0 %v5734
    %8270 = vmatpush.bf16.msra.mxu0 %v5726
    %8271 = vmatpush.bf16.msra.mxu0 %v5718
    %8272 = vmatpush.bf16.msra.mxu0 %v5710
    %8273 = vmatpush.bf16.msra.mxu0 %v5702
    %8274 = vmatpush.bf16.msra.mxu0 %v5694
    %8275 = vmatmul.bf16.gmra.mxu0 %v3497
    %v8276 = vpop.f32.mrf.mxu0
    %v8277 = vadd.f32 %v8228, %v8276
    %v8278 = vpop.f32.mrf.mxu0
    %v8279 = vadd.f32 %v8230, %v8278
    %8280 = vmatmul.bf16.gmra.mxu0 %v3505
    %v8281 = vpop.f32.mrf.mxu0
    %v8282 = vadd.f32 %v8233, %v8281
    %v8283 = vpop.f32.mrf.mxu0
    %v8284 = vadd.f32 %v8235, %v8283
    %8285 = vmatmul.bf16.gmra.mxu0 %v3513
    %v8286 = vpop.f32.mrf.mxu0
    %v8287 = vadd.f32 %v8238, %v8286
    %v8288 = vpop.f32.mrf.mxu0
    %v8289 = vadd.f32 %v8240, %v8288
    %8290 = vmatmul.bf16.gmra.mxu0 %v3521
    %v8291 = vpop.f32.mrf.mxu0
    %v8292 = vadd.f32 %v8243, %v8291
    %v8293 = vpop.f32.mrf.mxu0
    %v8294 = vadd.f32 %v8245, %v8293
    %8295 = vmatmul.bf16.gmra.mxu0 %v3529
    %v8296 = vpop.f32.mrf.mxu0
    %v8297 = vadd.f32 %v8248, %v8296
    %v8298 = vpop.f32.mrf.mxu0
    %v8299 = vadd.f32 %v8250, %v8298
    %8300 = vmatmul.bf16.gmra.mxu0 %v3537
    %v8301 = vpop.f32.mrf.mxu0
    %v8302 = vadd.f32 %v8253, %v8301
    %v8303 = vpop.f32.mrf.mxu0
    %v8304 = vadd.f32 %v8255, %v8303
    %8305 = vmatmul.bf16.gmra.mxu0 %v3545
    %v8306 = vpop.f32.mrf.mxu0
    %v8307 = vadd.f32 %v8258, %v8306
    %v8308 = vpop.f32.mrf.mxu0
    %v8309 = vadd.f32 %v8260, %v8308
    %8310 = vmatmul.bf16.gmra.mxu0 %v3553
    %v8311 = vpop.f32.mrf.mxu0
    %v8312 = vadd.f32 %v8263, %v8311
    %v8313 = vpop.f32.mrf.mxu0
    %v8314 = vadd.f32 %v8265, %v8313
    %8315 = vdwg.mxu0
    %8316 = vmatpush.bf16.msra.mxu0 %v5814
    %8317 = vmatpush.bf16.msra.mxu0 %v5806
    %8318 = vmatpush.bf16.msra.mxu0 %v5798
    %8319 = vmatpush.bf16.msra.mxu0 %v5790
    %8320 = vmatpush.bf16.msra.mxu0 %v5782
    %8321 = vmatpush.bf16.msra.mxu0 %v5774
    %8322 = vmatpush.bf16.msra.mxu0 %v5766
    %8323 = vmatpush.bf16.msra.mxu0 %v5758
    %8324 = vmatmul.bf16.gmra.mxu0 %v3498
    %v8325 = vpop.f32.mrf.mxu0
    %v8326 = vadd.f32 %v8277, %v8325
    %v8327 = vpop.f32.mrf.mxu0
    %v8328 = vadd.f32 %v8279, %v8327
    %8329 = vmatmul.bf16.gmra.mxu0 %v3506
    %v8330 = vpop.f32.mrf.mxu0
    %v8331 = vadd.f32 %v8282, %v8330
    %v8332 = vpop.f32.mrf.mxu0
    %v8333 = vadd.f32 %v8284, %v8332
    %8334 = vmatmul.bf16.gmra.mxu0 %v3514
    %v8335 = vpop.f32.mrf.mxu0
    %v8336 = vadd.f32 %v8287, %v8335
    %v8337 = vpop.f32.mrf.mxu0
    %v8338 = vadd.f32 %v8289, %v8337
    %8339 = vmatmul.bf16.gmra.mxu0 %v3522
    %v8340 = vpop.f32.mrf.mxu0
    %v8341 = vadd.f32 %v8292, %v8340
    %v8342 = vpop.f32.mrf.mxu0
    %v8343 = vadd.f32 %v8294, %v8342
    %8344 = vmatmul.bf16.gmra.mxu0 %v3530
    %v8345 = vpop.f32.mrf.mxu0
    %v8346 = vadd.f32 %v8297, %v8345
    %v8347 = vpop.f32.mrf.mxu0
    %v8348 = vadd.f32 %v8299, %v8347
    %8349 = vmatmul.bf16.gmra.mxu0 %v3538
    %v8350 = vpop.f32.mrf.mxu0
    %v8351 = vadd.f32 %v8302, %v8350
    %v8352 = vpop.f32.mrf.mxu0
    %v8353 = vadd.f32 %v8304, %v8352
    %8354 = vmatmul.bf16.gmra.mxu0 %v3546
    %v8355 = vpop.f32.mrf.mxu0
    %v8356 = vadd.f32 %v8307, %v8355
    %v8357 = vpop.f32.mrf.mxu0
    %v8358 = vadd.f32 %v8309, %v8357
    %8359 = vmatmul.bf16.gmra.mxu0 %v3554
    %v8360 = vpop.f32.mrf.mxu0
    %v8361 = vadd.f32 %v8312, %v8360
    %v8362 = vpop.f32.mrf.mxu0
    %v8363 = vadd.f32 %v8314, %v8362
    %8364 = vdwg.mxu0
    %8365 = vmatpush.bf16.msra.mxu0 %v5878
    %8366 = vmatpush.bf16.msra.mxu0 %v5870
    %8367 = vmatpush.bf16.msra.mxu0 %v5862
    %8368 = vmatpush.bf16.msra.mxu0 %v5854
    %8369 = vmatpush.bf16.msra.mxu0 %v5846
    %8370 = vmatpush.bf16.msra.mxu0 %v5838
    %8371 = vmatpush.bf16.msra.mxu0 %v5830
    %8372 = vmatpush.bf16.msra.mxu0 %v5822
    %8373 = vmatmul.bf16.gmra.mxu0 %v3499
    %v8374 = vpop.f32.mrf.mxu0
    %v8375 = vadd.f32 %v8326, %v8374
    %v8376 = vpop.f32.mrf.mxu0
    %v8377 = vadd.f32 %v8328, %v8376
    %8378 = vmatmul.bf16.gmra.mxu0 %v3507
    %v8379 = vpop.f32.mrf.mxu0
    %v8380 = vadd.f32 %v8331, %v8379
    %v8381 = vpop.f32.mrf.mxu0
    %v8382 = vadd.f32 %v8333, %v8381
    %8383 = vmatmul.bf16.gmra.mxu0 %v3515
    %v8384 = vpop.f32.mrf.mxu0
    %v8385 = vadd.f32 %v8336, %v8384
    %v8386 = vpop.f32.mrf.mxu0
    %v8387 = vadd.f32 %v8338, %v8386
    %8388 = vmatmul.bf16.gmra.mxu0 %v3523
    %v8389 = vpop.f32.mrf.mxu0
    %v8390 = vadd.f32 %v8341, %v8389
    %v8391 = vpop.f32.mrf.mxu0
    %v8392 = vadd.f32 %v8343, %v8391
    %8393 = vmatmul.bf16.gmra.mxu0 %v3531
    %v8394 = vpop.f32.mrf.mxu0
    %v8395 = vadd.f32 %v8346, %v8394
    %v8396 = vpop.f32.mrf.mxu0
    %v8397 = vadd.f32 %v8348, %v8396
    %8398 = vmatmul.bf16.gmra.mxu0 %v3539
    %v8399 = vpop.f32.mrf.mxu0
    %v8400 = vadd.f32 %v8351, %v8399
    %v8401 = vpop.f32.mrf.mxu0
    %v8402 = vadd.f32 %v8353, %v8401
    %8403 = vmatmul.bf16.gmra.mxu0 %v3547
    %v8404 = vpop.f32.mrf.mxu0
    %v8405 = vadd.f32 %v8356, %v8404
    %v8406 = vpop.f32.mrf.mxu0
    %v8407 = vadd.f32 %v8358, %v8406
    %8408 = vmatmul.bf16.gmra.mxu0 %v3555
    %v8409 = vpop.f32.mrf.mxu0
    %v8410 = vadd.f32 %v8361, %v8409
    %v8411 = vpop.f32.mrf.mxu0
    %v8412 = vadd.f32 %v8363, %v8411
    %8413 = vdwg.mxu0
    %8414 = vmatpush.bf16.msra.mxu0 %v5942
    %8415 = vmatpush.bf16.msra.mxu0 %v5934
    %8416 = vmatpush.bf16.msra.mxu0 %v5926
    %8417 = vmatpush.bf16.msra.mxu0 %v5918
    %8418 = vmatpush.bf16.msra.mxu0 %v5910
    %8419 = vmatpush.bf16.msra.mxu0 %v5902
    %8420 = vmatpush.bf16.msra.mxu0 %v5894
    %8421 = vmatpush.bf16.msra.mxu0 %v5886
    %8422 = vmatmul.bf16.gmra.mxu0 %v3500
    %v8423 = vpop.f32.mrf.mxu0
    %v8424 = vadd.f32 %v8375, %v8423
    %v8425 = vpop.f32.mrf.mxu0
    %v8426 = vadd.f32 %v8377, %v8425
    %8427 = vmatmul.bf16.gmra.mxu0 %v3508
    %v8428 = vpop.f32.mrf.mxu0
    %v8429 = vadd.f32 %v8380, %v8428
    %v8430 = vpop.f32.mrf.mxu0
    %v8431 = vadd.f32 %v8382, %v8430
    %8432 = vmatmul.bf16.gmra.mxu0 %v3516
    %v8433 = vpop.f32.mrf.mxu0
    %v8434 = vadd.f32 %v8385, %v8433
    %v8435 = vpop.f32.mrf.mxu0
    %v8436 = vadd.f32 %v8387, %v8435
    %8437 = vmatmul.bf16.gmra.mxu0 %v3524
    %v8438 = vpop.f32.mrf.mxu0
    %v8439 = vadd.f32 %v8390, %v8438
    %v8440 = vpop.f32.mrf.mxu0
    %v8441 = vadd.f32 %v8392, %v8440
    %8442 = vmatmul.bf16.gmra.mxu0 %v3532
    %v8443 = vpop.f32.mrf.mxu0
    %v8444 = vadd.f32 %v8395, %v8443
    %v8445 = vpop.f32.mrf.mxu0
    %v8446 = vadd.f32 %v8397, %v8445
    %8447 = vmatmul.bf16.gmra.mxu0 %v3540
    %v8448 = vpop.f32.mrf.mxu0
    %v8449 = vadd.f32 %v8400, %v8448
    %v8450 = vpop.f32.mrf.mxu0
    %v8451 = vadd.f32 %v8402, %v8450
    %8452 = vmatmul.bf16.gmra.mxu0 %v3548
    %v8453 = vpop.f32.mrf.mxu0
    %v8454 = vadd.f32 %v8405, %v8453
    %v8455 = vpop.f32.mrf.mxu0
    %v8456 = vadd.f32 %v8407, %v8455
    %8457 = vmatmul.bf16.gmra.mxu0 %v3556
    %v8458 = vpop.f32.mrf.mxu0
    %v8459 = vadd.f32 %v8410, %v8458
    %v8460 = vpop.f32.mrf.mxu0
    %v8461 = vadd.f32 %v8412, %v8460
    %8462 = vdwg.mxu0
    %8463 = vmatpush.bf16.msra.mxu0 %v6006
    %8464 = vmatpush.bf16.msra.mxu0 %v5998
    %8465 = vmatpush.bf16.msra.mxu0 %v5990
    %8466 = vmatpush.bf16.msra.mxu0 %v5982
    %8467 = vmatpush.bf16.msra.mxu0 %v5974
    %8468 = vmatpush.bf16.msra.mxu0 %v5966
    %8469 = vmatpush.bf16.msra.mxu0 %v5958
    %8470 = vmatpush.bf16.msra.mxu0 %v5950
    %8471 = vmatmul.bf16.gmra.mxu0 %v3501
    %v8472 = vpop.f32.mrf.mxu0
    %v8473 = vadd.f32 %v8424, %v8472
    %v8474 = vpop.f32.mrf.mxu0
    %v8475 = vadd.f32 %v8426, %v8474
    %8476 = vmatmul.bf16.gmra.mxu0 %v3509
    %v8477 = vpop.f32.mrf.mxu0
    %v8478 = vadd.f32 %v8429, %v8477
    %v8479 = vpop.f32.mrf.mxu0
    %v8480 = vadd.f32 %v8431, %v8479
    %8481 = vmatmul.bf16.gmra.mxu0 %v3517
    %v8482 = vpop.f32.mrf.mxu0
    %v8483 = vadd.f32 %v8434, %v8482
    %v8484 = vpop.f32.mrf.mxu0
    %v8485 = vadd.f32 %v8436, %v8484
    %8486 = vmatmul.bf16.gmra.mxu0 %v3525
    %v8487 = vpop.f32.mrf.mxu0
    %v8488 = vadd.f32 %v8439, %v8487
    %v8489 = vpop.f32.mrf.mxu0
    %v8490 = vadd.f32 %v8441, %v8489
    %8491 = vmatmul.bf16.gmra.mxu0 %v3533
    %v8492 = vpop.f32.mrf.mxu0
    %v8493 = vadd.f32 %v8444, %v8492
    %v8494 = vpop.f32.mrf.mxu0
    %v8495 = vadd.f32 %v8446, %v8494
    %8496 = vmatmul.bf16.gmra.mxu0 %v3541
    %v8497 = vpop.f32.mrf.mxu0
    %v8498 = vadd.f32 %v8449, %v8497
    %v8499 = vpop.f32.mrf.mxu0
    %v8500 = vadd.f32 %v8451, %v8499
    %8501 = vmatmul.bf16.gmra.mxu0 %v3549
    %v8502 = vpop.f32.mrf.mxu0
    %v8503 = vadd.f32 %v8454, %v8502
    %v8504 = vpop.f32.mrf.mxu0
    %v8505 = vadd.f32 %v8456, %v8504
    %8506 = vmatmul.bf16.gmra.mxu0 %v3557
    %v8507 = vpop.f32.mrf.mxu0
    %v8508 = vadd.f32 %v8459, %v8507
    %v8509 = vpop.f32.mrf.mxu0
    %v8510 = vadd.f32 %v8461, %v8509
    %8511 = vdwg.mxu0
    %8512 = vmatpush.bf16.msra.mxu0 %v6070
    %8513 = vmatpush.bf16.msra.mxu0 %v6062
    %8514 = vmatpush.bf16.msra.mxu0 %v6054
    %8515 = vmatpush.bf16.msra.mxu0 %v6046
    %8516 = vmatpush.bf16.msra.mxu0 %v6038
    %8517 = vmatpush.bf16.msra.mxu0 %v6030
    %8518 = vmatpush.bf16.msra.mxu0 %v6022
    %8519 = vmatpush.bf16.msra.mxu0 %v6014
    %8520 = vmatmul.bf16.gmra.mxu0 %v3502
    %v8521 = vpop.f32.mrf.mxu0
    %v8522 = vadd.f32 %v8473, %v8521
    %v8523 = vpop.f32.mrf.mxu0
    %v8524 = vadd.f32 %v8475, %v8523
    %8525 = vmatmul.bf16.gmra.mxu0 %v3510
    %v8526 = vpop.f32.mrf.mxu0
    %v8527 = vadd.f32 %v8478, %v8526
    %v8528 = vpop.f32.mrf.mxu0
    %v8529 = vadd.f32 %v8480, %v8528
    %8530 = vmatmul.bf16.gmra.mxu0 %v3518
    %v8531 = vpop.f32.mrf.mxu0
    %v8532 = vadd.f32 %v8483, %v8531
    %v8533 = vpop.f32.mrf.mxu0
    %v8534 = vadd.f32 %v8485, %v8533
    %8535 = vmatmul.bf16.gmra.mxu0 %v3526
    %v8536 = vpop.f32.mrf.mxu0
    %v8537 = vadd.f32 %v8488, %v8536
    %v8538 = vpop.f32.mrf.mxu0
    %v8539 = vadd.f32 %v8490, %v8538
    %8540 = vmatmul.bf16.gmra.mxu0 %v3534
    %v8541 = vpop.f32.mrf.mxu0
    %v8542 = vadd.f32 %v8493, %v8541
    %v8543 = vpop.f32.mrf.mxu0
    %v8544 = vadd.f32 %v8495, %v8543
    %8545 = vmatmul.bf16.gmra.mxu0 %v3542
    %v8546 = vpop.f32.mrf.mxu0
    %v8547 = vadd.f32 %v8498, %v8546
    %v8548 = vpop.f32.mrf.mxu0
    %v8549 = vadd.f32 %v8500, %v8548
    %8550 = vmatmul.bf16.gmra.mxu0 %v3550
    %v8551 = vpop.f32.mrf.mxu0
    %v8552 = vadd.f32 %v8503, %v8551
    %v8553 = vpop.f32.mrf.mxu0
    %v8554 = vadd.f32 %v8505, %v8553
    %8555 = vmatmul.bf16.gmra.mxu0 %v3558
    %v8556 = vpop.f32.mrf.mxu0
    %v8557 = vadd.f32 %v8508, %v8556
    %v8558 = vpop.f32.mrf.mxu0
    %v8559 = vadd.f32 %v8510, %v8558
    %8560 = vdwg.mxu0
    %8561 = vmatpush.bf16.msra.mxu0 %v6134
    %8562 = vmatpush.bf16.msra.mxu0 %v6126
    %8563 = vmatpush.bf16.msra.mxu0 %v6118
    %8564 = vmatpush.bf16.msra.mxu0 %v6110
    %8565 = vmatpush.bf16.msra.mxu0 %v6102
    %8566 = vmatpush.bf16.msra.mxu0 %v6094
    %8567 = vmatpush.bf16.msra.mxu0 %v6086
    %8568 = vmatpush.bf16.msra.mxu0 %v6078
    %8569 = vmatmul.bf16.gmra.mxu0 %v3503
    %v8570 = vpop.f32.mrf.mxu0
    %v8571 = vadd.f32 %v8522, %v8570
    %v8572 = vpop.f32.mrf.mxu0
    %v8573 = vadd.f32 %v8524, %v8572
    %8574 = vmatmul.bf16.gmra.mxu0 %v3511
    %v8575 = vpop.f32.mrf.mxu0
    %v8576 = vadd.f32 %v8527, %v8575
    %v8577 = vpop.f32.mrf.mxu0
    %v8578 = vadd.f32 %v8529, %v8577
    %8579 = vmatmul.bf16.gmra.mxu0 %v3519
    %v8580 = vpop.f32.mrf.mxu0
    %v8581 = vadd.f32 %v8532, %v8580
    %v8582 = vpop.f32.mrf.mxu0
    %v8583 = vadd.f32 %v8534, %v8582
    %8584 = vmatmul.bf16.gmra.mxu0 %v3527
    %v8585 = vpop.f32.mrf.mxu0
    %v8586 = vadd.f32 %v8537, %v8585
    %v8587 = vpop.f32.mrf.mxu0
    %v8588 = vadd.f32 %v8539, %v8587
    %8589 = vmatmul.bf16.gmra.mxu0 %v3535
    %v8590 = vpop.f32.mrf.mxu0
    %v8591 = vadd.f32 %v8542, %v8590
    %v8592 = vpop.f32.mrf.mxu0
    %v8593 = vadd.f32 %v8544, %v8592
    %8594 = vmatmul.bf16.gmra.mxu0 %v3543
    %v8595 = vpop.f32.mrf.mxu0
    %v8596 = vadd.f32 %v8547, %v8595
    %v8597 = vpop.f32.mrf.mxu0
    %v8598 = vadd.f32 %v8549, %v8597
    %8599 = vmatmul.bf16.gmra.mxu0 %v3551
    %v8600 = vpop.f32.mrf.mxu0
    %v8601 = vadd.f32 %v8552, %v8600
    %v8602 = vpop.f32.mrf.mxu0
    %v8603 = vadd.f32 %v8554, %v8602
    %8604 = vmatmul.bf16.gmra.mxu0 %v3559
    %v8605 = vpop.f32.mrf.mxu0
    %v8606 = vadd.f32 %v8557, %v8605
    %v8607 = vpop.f32.mrf.mxu0
    %v8608 = vadd.f32 %v8559, %v8607
    %8609 = vdwg.mxu0
    %8610 = vmatpush.bf16.msra.mxu0 %v5687
    %8611 = vmatpush.bf16.msra.mxu0 %v5679
    %8612 = vmatpush.bf16.msra.mxu0 %v5671
    %8613 = vmatpush.bf16.msra.mxu0 %v5663
    %8614 = vmatpush.bf16.msra.mxu0 %v5655
    %8615 = vmatpush.bf16.msra.mxu0 %v5647
    %8616 = vmatpush.bf16.msra.mxu0 %v5639
    %8617 = vmatpush.bf16.msra.mxu0 %v5631
    %8618 = vmatmul.bf16.gmra.mxu0 %v3496
    %v8619 = vpop.f32.mrf.mxu0
    %v8620 = vadd.f32 %v4079, %v8619
    %v8621 = vpop.f32.mrf.mxu0
    %v8622 = vadd.f32 %v4079, %v8621
    %8623 = vmatmul.bf16.gmra.mxu0 %v3504
    %v8624 = vpop.f32.mrf.mxu0
    %v8625 = vadd.f32 %v4079, %v8624
    %v8626 = vpop.f32.mrf.mxu0
    %v8627 = vadd.f32 %v4079, %v8626
    %8628 = vmatmul.bf16.gmra.mxu0 %v3512
    %v8629 = vpop.f32.mrf.mxu0
    %v8630 = vadd.f32 %v4079, %v8629
    %v8631 = vpop.f32.mrf.mxu0
    %v8632 = vadd.f32 %v4079, %v8631
    %8633 = vmatmul.bf16.gmra.mxu0 %v3520
    %v8634 = vpop.f32.mrf.mxu0
    %v8635 = vadd.f32 %v4079, %v8634
    %v8636 = vpop.f32.mrf.mxu0
    %v8637 = vadd.f32 %v4079, %v8636
    %8638 = vmatmul.bf16.gmra.mxu0 %v3528
    %v8639 = vpop.f32.mrf.mxu0
    %v8640 = vadd.f32 %v4079, %v8639
    %v8641 = vpop.f32.mrf.mxu0
    %v8642 = vadd.f32 %v4079, %v8641
    %8643 = vmatmul.bf16.gmra.mxu0 %v3536
    %v8644 = vpop.f32.mrf.mxu0
    %v8645 = vadd.f32 %v4079, %v8644
    %v8646 = vpop.f32.mrf.mxu0
    %v8647 = vadd.f32 %v4079, %v8646
    %8648 = vmatmul.bf16.gmra.mxu0 %v3544
    %v8649 = vpop.f32.mrf.mxu0
    %v8650 = vadd.f32 %v4079, %v8649
    %v8651 = vpop.f32.mrf.mxu0
    %v8652 = vadd.f32 %v4079, %v8651
    %8653 = vmatmul.bf16.gmra.mxu0 %v3552
    %v8654 = vpop.f32.mrf.mxu0
    %v8655 = vadd.f32 %v4079, %v8654
    %v8656 = vpop.f32.mrf.mxu0
    %v8657 = vadd.f32 %v4079, %v8656
    %8658 = vdwg.mxu0
    %8659 = vmatpush.bf16.msra.mxu0 %v5751
    %8660 = vmatpush.bf16.msra.mxu0 %v5743
    %8661 = vmatpush.bf16.msra.mxu0 %v5735
    %8662 = vmatpush.bf16.msra.mxu0 %v5727
    %8663 = vmatpush.bf16.msra.mxu0 %v5719
    %8664 = vmatpush.bf16.msra.mxu0 %v5711
    %8665 = vmatpush.bf16.msra.mxu0 %v5703
    %8666 = vmatpush.bf16.msra.mxu0 %v5695
    %8667 = vmatmul.bf16.gmra.mxu0 %v3497
    %v8668 = vpop.f32.mrf.mxu0
    %v8669 = vadd.f32 %v8620, %v8668
    %v8670 = vpop.f32.mrf.mxu0
    %v8671 = vadd.f32 %v8622, %v8670
    %8672 = vmatmul.bf16.gmra.mxu0 %v3505
    %v8673 = vpop.f32.mrf.mxu0
    %v8674 = vadd.f32 %v8625, %v8673
    %v8675 = vpop.f32.mrf.mxu0
    %v8676 = vadd.f32 %v8627, %v8675
    %8677 = vmatmul.bf16.gmra.mxu0 %v3513
    %v8678 = vpop.f32.mrf.mxu0
    %v8679 = vadd.f32 %v8630, %v8678
    %v8680 = vpop.f32.mrf.mxu0
    %v8681 = vadd.f32 %v8632, %v8680
    %8682 = vmatmul.bf16.gmra.mxu0 %v3521
    %v8683 = vpop.f32.mrf.mxu0
    %v8684 = vadd.f32 %v8635, %v8683
    %v8685 = vpop.f32.mrf.mxu0
    %v8686 = vadd.f32 %v8637, %v8685
    %8687 = vmatmul.bf16.gmra.mxu0 %v3529
    %v8688 = vpop.f32.mrf.mxu0
    %v8689 = vadd.f32 %v8640, %v8688
    %v8690 = vpop.f32.mrf.mxu0
    %v8691 = vadd.f32 %v8642, %v8690
    %8692 = vmatmul.bf16.gmra.mxu0 %v3537
    %v8693 = vpop.f32.mrf.mxu0
    %v8694 = vadd.f32 %v8645, %v8693
    %v8695 = vpop.f32.mrf.mxu0
    %v8696 = vadd.f32 %v8647, %v8695
    %8697 = vmatmul.bf16.gmra.mxu0 %v3545
    %v8698 = vpop.f32.mrf.mxu0
    %v8699 = vadd.f32 %v8650, %v8698
    %v8700 = vpop.f32.mrf.mxu0
    %v8701 = vadd.f32 %v8652, %v8700
    %8702 = vmatmul.bf16.gmra.mxu0 %v3553
    %v8703 = vpop.f32.mrf.mxu0
    %v8704 = vadd.f32 %v8655, %v8703
    %v8705 = vpop.f32.mrf.mxu0
    %v8706 = vadd.f32 %v8657, %v8705
    %8707 = vdwg.mxu0
    %8708 = vmatpush.bf16.msra.mxu0 %v5815
    %8709 = vmatpush.bf16.msra.mxu0 %v5807
    %8710 = vmatpush.bf16.msra.mxu0 %v5799
    %8711 = vmatpush.bf16.msra.mxu0 %v5791
    %8712 = vmatpush.bf16.msra.mxu0 %v5783
    %8713 = vmatpush.bf16.msra.mxu0 %v5775
    %8714 = vmatpush.bf16.msra.mxu0 %v5767
    %8715 = vmatpush.bf16.msra.mxu0 %v5759
    %8716 = vmatmul.bf16.gmra.mxu0 %v3498
    %v8717 = vpop.f32.mrf.mxu0
    %v8718 = vadd.f32 %v8669, %v8717
    %v8719 = vpop.f32.mrf.mxu0
    %v8720 = vadd.f32 %v8671, %v8719
    %8721 = vmatmul.bf16.gmra.mxu0 %v3506
    %v8722 = vpop.f32.mrf.mxu0
    %v8723 = vadd.f32 %v8674, %v8722
    %v8724 = vpop.f32.mrf.mxu0
    %v8725 = vadd.f32 %v8676, %v8724
    %8726 = vmatmul.bf16.gmra.mxu0 %v3514
    %v8727 = vpop.f32.mrf.mxu0
    %v8728 = vadd.f32 %v8679, %v8727
    %v8729 = vpop.f32.mrf.mxu0
    %v8730 = vadd.f32 %v8681, %v8729
    %8731 = vmatmul.bf16.gmra.mxu0 %v3522
    %v8732 = vpop.f32.mrf.mxu0
    %v8733 = vadd.f32 %v8684, %v8732
    %v8734 = vpop.f32.mrf.mxu0
    %v8735 = vadd.f32 %v8686, %v8734
    %8736 = vmatmul.bf16.gmra.mxu0 %v3530
    %v8737 = vpop.f32.mrf.mxu0
    %v8738 = vadd.f32 %v8689, %v8737
    %v8739 = vpop.f32.mrf.mxu0
    %v8740 = vadd.f32 %v8691, %v8739
    %8741 = vmatmul.bf16.gmra.mxu0 %v3538
    %v8742 = vpop.f32.mrf.mxu0
    %v8743 = vadd.f32 %v8694, %v8742
    %v8744 = vpop.f32.mrf.mxu0
    %v8745 = vadd.f32 %v8696, %v8744
    %8746 = vmatmul.bf16.gmra.mxu0 %v3546
    %v8747 = vpop.f32.mrf.mxu0
    %v8748 = vadd.f32 %v8699, %v8747
    %v8749 = vpop.f32.mrf.mxu0
    %v8750 = vadd.f32 %v8701, %v8749
    %8751 = vmatmul.bf16.gmra.mxu0 %v3554
    %v8752 = vpop.f32.mrf.mxu0
    %v8753 = vadd.f32 %v8704, %v8752
    %v8754 = vpop.f32.mrf.mxu0
    %v8755 = vadd.f32 %v8706, %v8754
    %8756 = vdwg.mxu0
    %8757 = vmatpush.bf16.msra.mxu0 %v5879
    %8758 = vmatpush.bf16.msra.mxu0 %v5871
    %8759 = vmatpush.bf16.msra.mxu0 %v5863
    %8760 = vmatpush.bf16.msra.mxu0 %v5855
    %8761 = vmatpush.bf16.msra.mxu0 %v5847
    %8762 = vmatpush.bf16.msra.mxu0 %v5839
    %8763 = vmatpush.bf16.msra.mxu0 %v5831
    %8764 = vmatpush.bf16.msra.mxu0 %v5823
    %8765 = vmatmul.bf16.gmra.mxu0 %v3499
    %v8766 = vpop.f32.mrf.mxu0
    %v8767 = vadd.f32 %v8718, %v8766
    %v8768 = vpop.f32.mrf.mxu0
    %v8769 = vadd.f32 %v8720, %v8768
    %8770 = vmatmul.bf16.gmra.mxu0 %v3507
    %v8771 = vpop.f32.mrf.mxu0
    %v8772 = vadd.f32 %v8723, %v8771
    %v8773 = vpop.f32.mrf.mxu0
    %v8774 = vadd.f32 %v8725, %v8773
    %8775 = vmatmul.bf16.gmra.mxu0 %v3515
    %v8776 = vpop.f32.mrf.mxu0
    %v8777 = vadd.f32 %v8728, %v8776
    %v8778 = vpop.f32.mrf.mxu0
    %v8779 = vadd.f32 %v8730, %v8778
    %8780 = vmatmul.bf16.gmra.mxu0 %v3523
    %v8781 = vpop.f32.mrf.mxu0
    %v8782 = vadd.f32 %v8733, %v8781
    %v8783 = vpop.f32.mrf.mxu0
    %v8784 = vadd.f32 %v8735, %v8783
    %8785 = vmatmul.bf16.gmra.mxu0 %v3531
    %v8786 = vpop.f32.mrf.mxu0
    %v8787 = vadd.f32 %v8738, %v8786
    %v8788 = vpop.f32.mrf.mxu0
    %v8789 = vadd.f32 %v8740, %v8788
    %8790 = vmatmul.bf16.gmra.mxu0 %v3539
    %v8791 = vpop.f32.mrf.mxu0
    %v8792 = vadd.f32 %v8743, %v8791
    %v8793 = vpop.f32.mrf.mxu0
    %v8794 = vadd.f32 %v8745, %v8793
    %8795 = vmatmul.bf16.gmra.mxu0 %v3547
    %v8796 = vpop.f32.mrf.mxu0
    %v8797 = vadd.f32 %v8748, %v8796
    %v8798 = vpop.f32.mrf.mxu0
    %v8799 = vadd.f32 %v8750, %v8798
    %8800 = vmatmul.bf16.gmra.mxu0 %v3555
    %v8801 = vpop.f32.mrf.mxu0
    %v8802 = vadd.f32 %v8753, %v8801
    %v8803 = vpop.f32.mrf.mxu0
    %v8804 = vadd.f32 %v8755, %v8803
    %8805 = vdwg.mxu0
    %8806 = vmatpush.bf16.msra.mxu0 %v5943
    %8807 = vmatpush.bf16.msra.mxu0 %v5935
    %8808 = vmatpush.bf16.msra.mxu0 %v5927
    %8809 = vmatpush.bf16.msra.mxu0 %v5919
    %8810 = vmatpush.bf16.msra.mxu0 %v5911
    %8811 = vmatpush.bf16.msra.mxu0 %v5903
    %8812 = vmatpush.bf16.msra.mxu0 %v5895
    %8813 = vmatpush.bf16.msra.mxu0 %v5887
    %8814 = vmatmul.bf16.gmra.mxu0 %v3500
    %v8815 = vpop.f32.mrf.mxu0
    %v8816 = vadd.f32 %v8767, %v8815
    %v8817 = vpop.f32.mrf.mxu0
    %v8818 = vadd.f32 %v8769, %v8817
    %8819 = vmatmul.bf16.gmra.mxu0 %v3508
    %v8820 = vpop.f32.mrf.mxu0
    %v8821 = vadd.f32 %v8772, %v8820
    %v8822 = vpop.f32.mrf.mxu0
    %v8823 = vadd.f32 %v8774, %v8822
    %8824 = vmatmul.bf16.gmra.mxu0 %v3516
    %v8825 = vpop.f32.mrf.mxu0
    %v8826 = vadd.f32 %v8777, %v8825
    %v8827 = vpop.f32.mrf.mxu0
    %v8828 = vadd.f32 %v8779, %v8827
    %8829 = vmatmul.bf16.gmra.mxu0 %v3524
    %v8830 = vpop.f32.mrf.mxu0
    %v8831 = vadd.f32 %v8782, %v8830
    %v8832 = vpop.f32.mrf.mxu0
    %v8833 = vadd.f32 %v8784, %v8832
    %8834 = vmatmul.bf16.gmra.mxu0 %v3532
    %v8835 = vpop.f32.mrf.mxu0
    %v8836 = vadd.f32 %v8787, %v8835
    %v8837 = vpop.f32.mrf.mxu0
    %v8838 = vadd.f32 %v8789, %v8837
    %8839 = vmatmul.bf16.gmra.mxu0 %v3540
    %v8840 = vpop.f32.mrf.mxu0
    %v8841 = vadd.f32 %v8792, %v8840
    %v8842 = vpop.f32.mrf.mxu0
    %v8843 = vadd.f32 %v8794, %v8842
    %8844 = vmatmul.bf16.gmra.mxu0 %v3548
    %v8845 = vpop.f32.mrf.mxu0
    %v8846 = vadd.f32 %v8797, %v8845
    %v8847 = vpop.f32.mrf.mxu0
    %v8848 = vadd.f32 %v8799, %v8847
    %8849 = vmatmul.bf16.gmra.mxu0 %v3556
    %v8850 = vpop.f32.mrf.mxu0
    %v8851 = vadd.f32 %v8802, %v8850
    %v8852 = vpop.f32.mrf.mxu0
    %v8853 = vadd.f32 %v8804, %v8852
    %8854 = vdwg.mxu0
    %8855 = vmatpush.bf16.msra.mxu0 %v6007
    %8856 = vmatpush.bf16.msra.mxu0 %v5999
    %8857 = vmatpush.bf16.msra.mxu0 %v5991
    %8858 = vmatpush.bf16.msra.mxu0 %v5983
    %8859 = vmatpush.bf16.msra.mxu0 %v5975
    %8860 = vmatpush.bf16.msra.mxu0 %v5967
    %8861 = vmatpush.bf16.msra.mxu0 %v5959
    %8862 = vmatpush.bf16.msra.mxu0 %v5951
    %8863 = vmatmul.bf16.gmra.mxu0 %v3501
    %v8864 = vpop.f32.mrf.mxu0
    %v8865 = vadd.f32 %v8816, %v8864
    %v8866 = vpop.f32.mrf.mxu0
    %v8867 = vadd.f32 %v8818, %v8866
    %8868 = vmatmul.bf16.gmra.mxu0 %v3509
    %v8869 = vpop.f32.mrf.mxu0
    %v8870 = vadd.f32 %v8821, %v8869
    %v8871 = vpop.f32.mrf.mxu0
    %v8872 = vadd.f32 %v8823, %v8871
    %8873 = vmatmul.bf16.gmra.mxu0 %v3517
    %v8874 = vpop.f32.mrf.mxu0
    %v8875 = vadd.f32 %v8826, %v8874
    %v8876 = vpop.f32.mrf.mxu0
    %v8877 = vadd.f32 %v8828, %v8876
    %8878 = vmatmul.bf16.gmra.mxu0 %v3525
    %v8879 = vpop.f32.mrf.mxu0
    %v8880 = vadd.f32 %v8831, %v8879
    %v8881 = vpop.f32.mrf.mxu0
    %v8882 = vadd.f32 %v8833, %v8881
    %8883 = vmatmul.bf16.gmra.mxu0 %v3533
    %v8884 = vpop.f32.mrf.mxu0
    %v8885 = vadd.f32 %v8836, %v8884
    %v8886 = vpop.f32.mrf.mxu0
    %v8887 = vadd.f32 %v8838, %v8886
    %8888 = vmatmul.bf16.gmra.mxu0 %v3541
    %v8889 = vpop.f32.mrf.mxu0
    %v8890 = vadd.f32 %v8841, %v8889
    %v8891 = vpop.f32.mrf.mxu0
    %v8892 = vadd.f32 %v8843, %v8891
    %8893 = vmatmul.bf16.gmra.mxu0 %v3549
    %v8894 = vpop.f32.mrf.mxu0
    %v8895 = vadd.f32 %v8846, %v8894
    %v8896 = vpop.f32.mrf.mxu0
    %v8897 = vadd.f32 %v8848, %v8896
    %8898 = vmatmul.bf16.gmra.mxu0 %v3557
    %v8899 = vpop.f32.mrf.mxu0
    %v8900 = vadd.f32 %v8851, %v8899
    %v8901 = vpop.f32.mrf.mxu0
    %v8902 = vadd.f32 %v8853, %v8901
    %8903 = vdwg.mxu0
    %8904 = vmatpush.bf16.msra.mxu0 %v6071
    %8905 = vmatpush.bf16.msra.mxu0 %v6063
    %8906 = vmatpush.bf16.msra.mxu0 %v6055
    %8907 = vmatpush.bf16.msra.mxu0 %v6047
    %8908 = vmatpush.bf16.msra.mxu0 %v6039
    %8909 = vmatpush.bf16.msra.mxu0 %v6031
    %8910 = vmatpush.bf16.msra.mxu0 %v6023
    %8911 = vmatpush.bf16.msra.mxu0 %v6015
    %8912 = vmatmul.bf16.gmra.mxu0 %v3502
    %v8913 = vpop.f32.mrf.mxu0
    %v8914 = vadd.f32 %v8865, %v8913
    %v8915 = vpop.f32.mrf.mxu0
    %v8916 = vadd.f32 %v8867, %v8915
    %8917 = vmatmul.bf16.gmra.mxu0 %v3510
    %v8918 = vpop.f32.mrf.mxu0
    %v8919 = vadd.f32 %v8870, %v8918
    %v8920 = vpop.f32.mrf.mxu0
    %v8921 = vadd.f32 %v8872, %v8920
    %8922 = vmatmul.bf16.gmra.mxu0 %v3518
    %v8923 = vpop.f32.mrf.mxu0
    %v8924 = vadd.f32 %v8875, %v8923
    %v8925 = vpop.f32.mrf.mxu0
    %v8926 = vadd.f32 %v8877, %v8925
    %8927 = vmatmul.bf16.gmra.mxu0 %v3526
    %v8928 = vpop.f32.mrf.mxu0
    %v8929 = vadd.f32 %v8880, %v8928
    %v8930 = vpop.f32.mrf.mxu0
    %v8931 = vadd.f32 %v8882, %v8930
    %8932 = vmatmul.bf16.gmra.mxu0 %v3534
    %v8933 = vpop.f32.mrf.mxu0
    %v8934 = vadd.f32 %v8885, %v8933
    %v8935 = vpop.f32.mrf.mxu0
    %v8936 = vadd.f32 %v8887, %v8935
    %8937 = vmatmul.bf16.gmra.mxu0 %v3542
    %v8938 = vpop.f32.mrf.mxu0
    %v8939 = vadd.f32 %v8890, %v8938
    %v8940 = vpop.f32.mrf.mxu0
    %v8941 = vadd.f32 %v8892, %v8940
    %8942 = vmatmul.bf16.gmra.mxu0 %v3550
    %v8943 = vpop.f32.mrf.mxu0
    %v8944 = vadd.f32 %v8895, %v8943
    %v8945 = vpop.f32.mrf.mxu0
    %v8946 = vadd.f32 %v8897, %v8945
    %8947 = vmatmul.bf16.gmra.mxu0 %v3558
    %v8948 = vpop.f32.mrf.mxu0
    %v8949 = vadd.f32 %v8900, %v8948
    %v8950 = vpop.f32.mrf.mxu0
    %v8951 = vadd.f32 %v8902, %v8950
    %8952 = vdwg.mxu0
    %8953 = vmatpush.bf16.msra.mxu0 %v6135
    %8954 = vmatpush.bf16.msra.mxu0 %v6127
    %8955 = vmatpush.bf16.msra.mxu0 %v6119
    %8956 = vmatpush.bf16.msra.mxu0 %v6111
    %8957 = vmatpush.bf16.msra.mxu0 %v6103
    %8958 = vmatpush.bf16.msra.mxu0 %v6095
    %8959 = vmatpush.bf16.msra.mxu0 %v6087
    %8960 = vmatpush.bf16.msra.mxu0 %v6079
    %8961 = vmatmul.bf16.gmra.mxu0 %v3503
    %v8962 = vpop.f32.mrf.mxu0
    %v8963 = vadd.f32 %v8914, %v8962
    %v8964 = vpop.f32.mrf.mxu0
    %v8965 = vadd.f32 %v8916, %v8964
    %8966 = vmatmul.bf16.gmra.mxu0 %v3511
    %v8967 = vpop.f32.mrf.mxu0
    %v8968 = vadd.f32 %v8919, %v8967
    %v8969 = vpop.f32.mrf.mxu0
    %v8970 = vadd.f32 %v8921, %v8969
    %8971 = vmatmul.bf16.gmra.mxu0 %v3519
    %v8972 = vpop.f32.mrf.mxu0
    %v8973 = vadd.f32 %v8924, %v8972
    %v8974 = vpop.f32.mrf.mxu0
    %v8975 = vadd.f32 %v8926, %v8974
    %8976 = vmatmul.bf16.gmra.mxu0 %v3527
    %v8977 = vpop.f32.mrf.mxu0
    %v8978 = vadd.f32 %v8929, %v8977
    %v8979 = vpop.f32.mrf.mxu0
    %v8980 = vadd.f32 %v8931, %v8979
    %8981 = vmatmul.bf16.gmra.mxu0 %v3535
    %v8982 = vpop.f32.mrf.mxu0
    %v8983 = vadd.f32 %v8934, %v8982
    %v8984 = vpop.f32.mrf.mxu0
    %v8985 = vadd.f32 %v8936, %v8984
    %8986 = vmatmul.bf16.gmra.mxu0 %v3543
    %v8987 = vpop.f32.mrf.mxu0
    %v8988 = vadd.f32 %v8939, %v8987
    %v8989 = vpop.f32.mrf.mxu0
    %v8990 = vadd.f32 %v8941, %v8989
    %8991 = vmatmul.bf16.gmra.mxu0 %v3551
    %v8992 = vpop.f32.mrf.mxu0
    %v8993 = vadd.f32 %v8944, %v8992
    %v8994 = vpop.f32.mrf.mxu0
    %v8995 = vadd.f32 %v8946, %v8994
    %8996 = vmatmul.bf16.gmra.mxu0 %v3559
    %v8997 = vpop.f32.mrf.mxu0
    %v8998 = vadd.f32 %v8949, %v8997
    %v8999 = vpop.f32.mrf.mxu0
    %v9000 = vadd.f32 %v8951, %v8999
    %9001 = vdwg.mxu0
    %9002 = vmatpush.bf16.msra.mxu0 %v5688
    %9003 = vmatpush.bf16.msra.mxu0 %v5680
    %9004 = vmatpush.bf16.msra.mxu0 %v5672
    %9005 = vmatpush.bf16.msra.mxu0 %v5664
    %9006 = vmatpush.bf16.msra.mxu0 %v5656
    %9007 = vmatpush.bf16.msra.mxu0 %v5648
    %9008 = vmatpush.bf16.msra.mxu0 %v5640
    %9009 = vmatpush.bf16.msra.mxu0 %v5632
    %9010 = vmatmul.bf16.gmra.mxu0 %v3496
    %v9011 = vpop.f32.mrf.mxu0
    %v9012 = vadd.f32 %v4080, %v9011
    %v9013 = vpop.f32.mrf.mxu0
    %v9014 = vadd.f32 %v4080, %v9013
    %9015 = vmatmul.bf16.gmra.mxu0 %v3504
    %v9016 = vpop.f32.mrf.mxu0
    %v9017 = vadd.f32 %v4080, %v9016
    %v9018 = vpop.f32.mrf.mxu0
    %v9019 = vadd.f32 %v4080, %v9018
    %9020 = vmatmul.bf16.gmra.mxu0 %v3512
    %v9021 = vpop.f32.mrf.mxu0
    %v9022 = vadd.f32 %v4080, %v9021
    %v9023 = vpop.f32.mrf.mxu0
    %v9024 = vadd.f32 %v4080, %v9023
    %9025 = vmatmul.bf16.gmra.mxu0 %v3520
    %v9026 = vpop.f32.mrf.mxu0
    %v9027 = vadd.f32 %v4080, %v9026
    %v9028 = vpop.f32.mrf.mxu0
    %v9029 = vadd.f32 %v4080, %v9028
    %9030 = vmatmul.bf16.gmra.mxu0 %v3528
    %v9031 = vpop.f32.mrf.mxu0
    %v9032 = vadd.f32 %v4080, %v9031
    %v9033 = vpop.f32.mrf.mxu0
    %v9034 = vadd.f32 %v4080, %v9033
    %9035 = vmatmul.bf16.gmra.mxu0 %v3536
    %v9036 = vpop.f32.mrf.mxu0
    %v9037 = vadd.f32 %v4080, %v9036
    %v9038 = vpop.f32.mrf.mxu0
    %v9039 = vadd.f32 %v4080, %v9038
    %9040 = vmatmul.bf16.gmra.mxu0 %v3544
    %v9041 = vpop.f32.mrf.mxu0
    %v9042 = vadd.f32 %v4080, %v9041
    %v9043 = vpop.f32.mrf.mxu0
    %v9044 = vadd.f32 %v4080, %v9043
    %9045 = vmatmul.bf16.gmra.mxu0 %v3552
    %v9046 = vpop.f32.mrf.mxu0
    %v9047 = vadd.f32 %v4080, %v9046
    %v9048 = vpop.f32.mrf.mxu0
    %v9049 = vadd.f32 %v4080, %v9048
    %9050 = vdwg.mxu0
    %9051 = vmatpush.bf16.msra.mxu0 %v5752
    %9052 = vmatpush.bf16.msra.mxu0 %v5744
    %9053 = vmatpush.bf16.msra.mxu0 %v5736
    %9054 = vmatpush.bf16.msra.mxu0 %v5728
    %9055 = vmatpush.bf16.msra.mxu0 %v5720
    %9056 = vmatpush.bf16.msra.mxu0 %v5712
    %9057 = vmatpush.bf16.msra.mxu0 %v5704
    %9058 = vmatpush.bf16.msra.mxu0 %v5696
    %9059 = vmatmul.bf16.gmra.mxu0 %v3497
    %v9060 = vpop.f32.mrf.mxu0
    %v9061 = vadd.f32 %v9012, %v9060
    %v9062 = vpop.f32.mrf.mxu0
    %v9063 = vadd.f32 %v9014, %v9062
    %9064 = vmatmul.bf16.gmra.mxu0 %v3505
    %v9065 = vpop.f32.mrf.mxu0
    %v9066 = vadd.f32 %v9017, %v9065
    %v9067 = vpop.f32.mrf.mxu0
    %v9068 = vadd.f32 %v9019, %v9067
    %9069 = vmatmul.bf16.gmra.mxu0 %v3513
    %v9070 = vpop.f32.mrf.mxu0
    %v9071 = vadd.f32 %v9022, %v9070
    %v9072 = vpop.f32.mrf.mxu0
    %v9073 = vadd.f32 %v9024, %v9072
    %9074 = vmatmul.bf16.gmra.mxu0 %v3521
    %v9075 = vpop.f32.mrf.mxu0
    %v9076 = vadd.f32 %v9027, %v9075
    %v9077 = vpop.f32.mrf.mxu0
    %v9078 = vadd.f32 %v9029, %v9077
    %9079 = vmatmul.bf16.gmra.mxu0 %v3529
    %v9080 = vpop.f32.mrf.mxu0
    %v9081 = vadd.f32 %v9032, %v9080
    %v9082 = vpop.f32.mrf.mxu0
    %v9083 = vadd.f32 %v9034, %v9082
    %9084 = vmatmul.bf16.gmra.mxu0 %v3537
    %v9085 = vpop.f32.mrf.mxu0
    %v9086 = vadd.f32 %v9037, %v9085
    %v9087 = vpop.f32.mrf.mxu0
    %v9088 = vadd.f32 %v9039, %v9087
    %9089 = vmatmul.bf16.gmra.mxu0 %v3545
    %v9090 = vpop.f32.mrf.mxu0
    %v9091 = vadd.f32 %v9042, %v9090
    %v9092 = vpop.f32.mrf.mxu0
    %v9093 = vadd.f32 %v9044, %v9092
    %9094 = vmatmul.bf16.gmra.mxu0 %v3553
    %v9095 = vpop.f32.mrf.mxu0
    %v9096 = vadd.f32 %v9047, %v9095
    %v9097 = vpop.f32.mrf.mxu0
    %v9098 = vadd.f32 %v9049, %v9097
    %9099 = vdwg.mxu0
    %9100 = vmatpush.bf16.msra.mxu0 %v5816
    %9101 = vmatpush.bf16.msra.mxu0 %v5808
    %9102 = vmatpush.bf16.msra.mxu0 %v5800
    %9103 = vmatpush.bf16.msra.mxu0 %v5792
    %9104 = vmatpush.bf16.msra.mxu0 %v5784
    %9105 = vmatpush.bf16.msra.mxu0 %v5776
    %9106 = vmatpush.bf16.msra.mxu0 %v5768
    %9107 = vmatpush.bf16.msra.mxu0 %v5760
    %9108 = vmatmul.bf16.gmra.mxu0 %v3498
    %v9109 = vpop.f32.mrf.mxu0
    %v9110 = vadd.f32 %v9061, %v9109
    %v9111 = vpop.f32.mrf.mxu0
    %v9112 = vadd.f32 %v9063, %v9111
    %9113 = vmatmul.bf16.gmra.mxu0 %v3506
    %v9114 = vpop.f32.mrf.mxu0
    %v9115 = vadd.f32 %v9066, %v9114
    %v9116 = vpop.f32.mrf.mxu0
    %v9117 = vadd.f32 %v9068, %v9116
    %9118 = vmatmul.bf16.gmra.mxu0 %v3514
    %v9119 = vpop.f32.mrf.mxu0
    %v9120 = vadd.f32 %v9071, %v9119
    %v9121 = vpop.f32.mrf.mxu0
    %v9122 = vadd.f32 %v9073, %v9121
    %9123 = vmatmul.bf16.gmra.mxu0 %v3522
    %v9124 = vpop.f32.mrf.mxu0
    %v9125 = vadd.f32 %v9076, %v9124
    %v9126 = vpop.f32.mrf.mxu0
    %v9127 = vadd.f32 %v9078, %v9126
    %9128 = vmatmul.bf16.gmra.mxu0 %v3530
    %v9129 = vpop.f32.mrf.mxu0
    %v9130 = vadd.f32 %v9081, %v9129
    %v9131 = vpop.f32.mrf.mxu0
    %v9132 = vadd.f32 %v9083, %v9131
    %9133 = vmatmul.bf16.gmra.mxu0 %v3538
    %v9134 = vpop.f32.mrf.mxu0
    %v9135 = vadd.f32 %v9086, %v9134
    %v9136 = vpop.f32.mrf.mxu0
    %v9137 = vadd.f32 %v9088, %v9136
    %9138 = vmatmul.bf16.gmra.mxu0 %v3546
    %v9139 = vpop.f32.mrf.mxu0
    %v9140 = vadd.f32 %v9091, %v9139
    %v9141 = vpop.f32.mrf.mxu0
    %v9142 = vadd.f32 %v9093, %v9141
    %9143 = vmatmul.bf16.gmra.mxu0 %v3554
    %v9144 = vpop.f32.mrf.mxu0
    %v9145 = vadd.f32 %v9096, %v9144
    %v9146 = vpop.f32.mrf.mxu0
    %v9147 = vadd.f32 %v9098, %v9146
    %9148 = vdwg.mxu0
    %9149 = vmatpush.bf16.msra.mxu0 %v5880
    %9150 = vmatpush.bf16.msra.mxu0 %v5872
    %9151 = vmatpush.bf16.msra.mxu0 %v5864
    %9152 = vmatpush.bf16.msra.mxu0 %v5856
    %9153 = vmatpush.bf16.msra.mxu0 %v5848
    %9154 = vmatpush.bf16.msra.mxu0 %v5840
    %9155 = vmatpush.bf16.msra.mxu0 %v5832
    %9156 = vmatpush.bf16.msra.mxu0 %v5824
    %9157 = vmatmul.bf16.gmra.mxu0 %v3499
    %v9158 = vpop.f32.mrf.mxu0
    %v9159 = vadd.f32 %v9110, %v9158
    %v9160 = vpop.f32.mrf.mxu0
    %v9161 = vadd.f32 %v9112, %v9160
    %9162 = vmatmul.bf16.gmra.mxu0 %v3507
    %v9163 = vpop.f32.mrf.mxu0
    %v9164 = vadd.f32 %v9115, %v9163
    %v9165 = vpop.f32.mrf.mxu0
    %v9166 = vadd.f32 %v9117, %v9165
    %9167 = vmatmul.bf16.gmra.mxu0 %v3515
    %v9168 = vpop.f32.mrf.mxu0
    %v9169 = vadd.f32 %v9120, %v9168
    %v9170 = vpop.f32.mrf.mxu0
    %v9171 = vadd.f32 %v9122, %v9170
    %9172 = vmatmul.bf16.gmra.mxu0 %v3523
    %v9173 = vpop.f32.mrf.mxu0
    %v9174 = vadd.f32 %v9125, %v9173
    %v9175 = vpop.f32.mrf.mxu0
    %v9176 = vadd.f32 %v9127, %v9175
    %9177 = vmatmul.bf16.gmra.mxu0 %v3531
    %v9178 = vpop.f32.mrf.mxu0
    %v9179 = vadd.f32 %v9130, %v9178
    %v9180 = vpop.f32.mrf.mxu0
    %v9181 = vadd.f32 %v9132, %v9180
    %9182 = vmatmul.bf16.gmra.mxu0 %v3539
    %v9183 = vpop.f32.mrf.mxu0
    %v9184 = vadd.f32 %v9135, %v9183
    %v9185 = vpop.f32.mrf.mxu0
    %v9186 = vadd.f32 %v9137, %v9185
    %9187 = vmatmul.bf16.gmra.mxu0 %v3547
    %v9188 = vpop.f32.mrf.mxu0
    %v9189 = vadd.f32 %v9140, %v9188
    %v9190 = vpop.f32.mrf.mxu0
    %v9191 = vadd.f32 %v9142, %v9190
    %9192 = vmatmul.bf16.gmra.mxu0 %v3555
    %v9193 = vpop.f32.mrf.mxu0
    %v9194 = vadd.f32 %v9145, %v9193
    %v9195 = vpop.f32.mrf.mxu0
    %v9196 = vadd.f32 %v9147, %v9195
    %9197 = vdwg.mxu0
    %9198 = vmatpush.bf16.msra.mxu0 %v5944
    %9199 = vmatpush.bf16.msra.mxu0 %v5936
    %9200 = vmatpush.bf16.msra.mxu0 %v5928
    %9201 = vmatpush.bf16.msra.mxu0 %v5920
    %9202 = vmatpush.bf16.msra.mxu0 %v5912
    %9203 = vmatpush.bf16.msra.mxu0 %v5904
    %9204 = vmatpush.bf16.msra.mxu0 %v5896
    %9205 = vmatpush.bf16.msra.mxu0 %v5888
    %9206 = vmatmul.bf16.gmra.mxu0 %v3500
    %v9207 = vpop.f32.mrf.mxu0
    %v9208 = vadd.f32 %v9159, %v9207
    %v9209 = vpop.f32.mrf.mxu0
    %v9210 = vadd.f32 %v9161, %v9209
    %9211 = vmatmul.bf16.gmra.mxu0 %v3508
    %v9212 = vpop.f32.mrf.mxu0
    %v9213 = vadd.f32 %v9164, %v9212
    %v9214 = vpop.f32.mrf.mxu0
    %v9215 = vadd.f32 %v9166, %v9214
    %9216 = vmatmul.bf16.gmra.mxu0 %v3516
    %v9217 = vpop.f32.mrf.mxu0
    %v9218 = vadd.f32 %v9169, %v9217
    %v9219 = vpop.f32.mrf.mxu0
    %v9220 = vadd.f32 %v9171, %v9219
    %9221 = vmatmul.bf16.gmra.mxu0 %v3524
    %v9222 = vpop.f32.mrf.mxu0
    %v9223 = vadd.f32 %v9174, %v9222
    %v9224 = vpop.f32.mrf.mxu0
    %v9225 = vadd.f32 %v9176, %v9224
    %9226 = vmatmul.bf16.gmra.mxu0 %v3532
    %v9227 = vpop.f32.mrf.mxu0
    %v9228 = vadd.f32 %v9179, %v9227
    %v9229 = vpop.f32.mrf.mxu0
    %v9230 = vadd.f32 %v9181, %v9229
    %9231 = vmatmul.bf16.gmra.mxu0 %v3540
    %v9232 = vpop.f32.mrf.mxu0
    %v9233 = vadd.f32 %v9184, %v9232
    %v9234 = vpop.f32.mrf.mxu0
    %v9235 = vadd.f32 %v9186, %v9234
    %9236 = vmatmul.bf16.gmra.mxu0 %v3548
    %v9237 = vpop.f32.mrf.mxu0
    %v9238 = vadd.f32 %v9189, %v9237
    %v9239 = vpop.f32.mrf.mxu0
    %v9240 = vadd.f32 %v9191, %v9239
    %9241 = vmatmul.bf16.gmra.mxu0 %v3556
    %v9242 = vpop.f32.mrf.mxu0
    %v9243 = vadd.f32 %v9194, %v9242
    %v9244 = vpop.f32.mrf.mxu0
    %v9245 = vadd.f32 %v9196, %v9244
    %9246 = vdwg.mxu0
    %9247 = vmatpush.bf16.msra.mxu0 %v6008
    %9248 = vmatpush.bf16.msra.mxu0 %v6000
    %9249 = vmatpush.bf16.msra.mxu0 %v5992
    %9250 = vmatpush.bf16.msra.mxu0 %v5984
    %9251 = vmatpush.bf16.msra.mxu0 %v5976
    %9252 = vmatpush.bf16.msra.mxu0 %v5968
    %9253 = vmatpush.bf16.msra.mxu0 %v5960
    %9254 = vmatpush.bf16.msra.mxu0 %v5952
    %9255 = vmatmul.bf16.gmra.mxu0 %v3501
    %v9256 = vpop.f32.mrf.mxu0
    %v9257 = vadd.f32 %v9208, %v9256
    %v9258 = vpop.f32.mrf.mxu0
    %v9259 = vadd.f32 %v9210, %v9258
    %9260 = vmatmul.bf16.gmra.mxu0 %v3509
    %v9261 = vpop.f32.mrf.mxu0
    %v9262 = vadd.f32 %v9213, %v9261
    %v9263 = vpop.f32.mrf.mxu0
    %v9264 = vadd.f32 %v9215, %v9263
    %9265 = vmatmul.bf16.gmra.mxu0 %v3517
    %v9266 = vpop.f32.mrf.mxu0
    %v9267 = vadd.f32 %v9218, %v9266
    %v9268 = vpop.f32.mrf.mxu0
    %v9269 = vadd.f32 %v9220, %v9268
    %9270 = vmatmul.bf16.gmra.mxu0 %v3525
    %v9271 = vpop.f32.mrf.mxu0
    %v9272 = vadd.f32 %v9223, %v9271
    %v9273 = vpop.f32.mrf.mxu0
    %v9274 = vadd.f32 %v9225, %v9273
    %9275 = vmatmul.bf16.gmra.mxu0 %v3533
    %v9276 = vpop.f32.mrf.mxu0
    %v9277 = vadd.f32 %v9228, %v9276
    %v9278 = vpop.f32.mrf.mxu0
    %v9279 = vadd.f32 %v9230, %v9278
    %9280 = vmatmul.bf16.gmra.mxu0 %v3541
    %v9281 = vpop.f32.mrf.mxu0
    %v9282 = vadd.f32 %v9233, %v9281
    %v9283 = vpop.f32.mrf.mxu0
    %v9284 = vadd.f32 %v9235, %v9283
    %9285 = vmatmul.bf16.gmra.mxu0 %v3549
    %v9286 = vpop.f32.mrf.mxu0
    %v9287 = vadd.f32 %v9238, %v9286
    %v9288 = vpop.f32.mrf.mxu0
    %v9289 = vadd.f32 %v9240, %v9288
    %9290 = vmatmul.bf16.gmra.mxu0 %v3557
    %v9291 = vpop.f32.mrf.mxu0
    %v9292 = vadd.f32 %v9243, %v9291
    %v9293 = vpop.f32.mrf.mxu0
    %v9294 = vadd.f32 %v9245, %v9293
    %9295 = vdwg.mxu0
    %9296 = vmatpush.bf16.msra.mxu0 %v6072
    %9297 = vmatpush.bf16.msra.mxu0 %v6064
    %9298 = vmatpush.bf16.msra.mxu0 %v6056
    %9299 = vmatpush.bf16.msra.mxu0 %v6048
    %9300 = vmatpush.bf16.msra.mxu0 %v6040
    %9301 = vmatpush.bf16.msra.mxu0 %v6032
    %9302 = vmatpush.bf16.msra.mxu0 %v6024
    %9303 = vmatpush.bf16.msra.mxu0 %v6016
    %9304 = vmatmul.bf16.gmra.mxu0 %v3502
    %v9305 = vpop.f32.mrf.mxu0
    %v9306 = vadd.f32 %v9257, %v9305
    %v9307 = vpop.f32.mrf.mxu0
    %v9308 = vadd.f32 %v9259, %v9307
    %9309 = vmatmul.bf16.gmra.mxu0 %v3510
    %v9310 = vpop.f32.mrf.mxu0
    %v9311 = vadd.f32 %v9262, %v9310
    %v9312 = vpop.f32.mrf.mxu0
    %v9313 = vadd.f32 %v9264, %v9312
    %9314 = vmatmul.bf16.gmra.mxu0 %v3518
    %v9315 = vpop.f32.mrf.mxu0
    %v9316 = vadd.f32 %v9267, %v9315
    %v9317 = vpop.f32.mrf.mxu0
    %v9318 = vadd.f32 %v9269, %v9317
    %9319 = vmatmul.bf16.gmra.mxu0 %v3526
    %v9320 = vpop.f32.mrf.mxu0
    %v9321 = vadd.f32 %v9272, %v9320
    %v9322 = vpop.f32.mrf.mxu0
    %v9323 = vadd.f32 %v9274, %v9322
    %9324 = vmatmul.bf16.gmra.mxu0 %v3534
    %v9325 = vpop.f32.mrf.mxu0
    %v9326 = vadd.f32 %v9277, %v9325
    %v9327 = vpop.f32.mrf.mxu0
    %v9328 = vadd.f32 %v9279, %v9327
    %9329 = vmatmul.bf16.gmra.mxu0 %v3542
    %v9330 = vpop.f32.mrf.mxu0
    %v9331 = vadd.f32 %v9282, %v9330
    %v9332 = vpop.f32.mrf.mxu0
    %v9333 = vadd.f32 %v9284, %v9332
    %9334 = vmatmul.bf16.gmra.mxu0 %v3550
    %v9335 = vpop.f32.mrf.mxu0
    %v9336 = vadd.f32 %v9287, %v9335
    %v9337 = vpop.f32.mrf.mxu0
    %v9338 = vadd.f32 %v9289, %v9337
    %9339 = vmatmul.bf16.gmra.mxu0 %v3558
    %v9340 = vpop.f32.mrf.mxu0
    %v9341 = vadd.f32 %v9292, %v9340
    %v9342 = vpop.f32.mrf.mxu0
    %v9343 = vadd.f32 %v9294, %v9342
    %9344 = vdwg.mxu0
    %9345 = vmatpush.bf16.msra.mxu0 %v6136
    %9346 = vmatpush.bf16.msra.mxu0 %v6128
    %9347 = vmatpush.bf16.msra.mxu0 %v6120
    %9348 = vmatpush.bf16.msra.mxu0 %v6112
    %9349 = vmatpush.bf16.msra.mxu0 %v6104
    %9350 = vmatpush.bf16.msra.mxu0 %v6096
    %9351 = vmatpush.bf16.msra.mxu0 %v6088
    %9352 = vmatpush.bf16.msra.mxu0 %v6080
    %9353 = vmatmul.bf16.gmra.mxu0 %v3503
    %v9354 = vpop.f32.mrf.mxu0
    %v9355 = vadd.f32 %v9306, %v9354
    %v9356 = vpop.f32.mrf.mxu0
    %v9357 = vadd.f32 %v9308, %v9356
    %9358 = vmatmul.bf16.gmra.mxu0 %v3511
    %v9359 = vpop.f32.mrf.mxu0
    %v9360 = vadd.f32 %v9311, %v9359
    %v9361 = vpop.f32.mrf.mxu0
    %v9362 = vadd.f32 %v9313, %v9361
    %9363 = vmatmul.bf16.gmra.mxu0 %v3519
    %v9364 = vpop.f32.mrf.mxu0
    %v9365 = vadd.f32 %v9316, %v9364
    %v9366 = vpop.f32.mrf.mxu0
    %v9367 = vadd.f32 %v9318, %v9366
    %9368 = vmatmul.bf16.gmra.mxu0 %v3527
    %v9369 = vpop.f32.mrf.mxu0
    %v9370 = vadd.f32 %v9321, %v9369
    %v9371 = vpop.f32.mrf.mxu0
    %v9372 = vadd.f32 %v9323, %v9371
    %9373 = vmatmul.bf16.gmra.mxu0 %v3535
    %v9374 = vpop.f32.mrf.mxu0
    %v9375 = vadd.f32 %v9326, %v9374
    %v9376 = vpop.f32.mrf.mxu0
    %v9377 = vadd.f32 %v9328, %v9376
    %9378 = vmatmul.bf16.gmra.mxu0 %v3543
    %v9379 = vpop.f32.mrf.mxu0
    %v9380 = vadd.f32 %v9331, %v9379
    %v9381 = vpop.f32.mrf.mxu0
    %v9382 = vadd.f32 %v9333, %v9381
    %9383 = vmatmul.bf16.gmra.mxu0 %v3551
    %v9384 = vpop.f32.mrf.mxu0
    %v9385 = vadd.f32 %v9336, %v9384
    %v9386 = vpop.f32.mrf.mxu0
    %v9387 = vadd.f32 %v9338, %v9386
    %9388 = vmatmul.bf16.gmra.mxu0 %v3559
    %v9389 = vpop.f32.mrf.mxu0
    %v9390 = vadd.f32 %v9341, %v9389
    %v9391 = vpop.f32.mrf.mxu0
    %v9392 = vadd.f32 %v9343, %v9391
    %9393 = vdwg.mxu0
    %9394 = vmatpush.bf16.msra.mxu0 %v5689
    %9395 = vmatpush.bf16.msra.mxu0 %v5681
    %9396 = vmatpush.bf16.msra.mxu0 %v5673
    %9397 = vmatpush.bf16.msra.mxu0 %v5665
    %9398 = vmatpush.bf16.msra.mxu0 %v5657
    %9399 = vmatpush.bf16.msra.mxu0 %v5649
    %9400 = vmatpush.bf16.msra.mxu0 %v5641
    %9401 = vmatpush.bf16.msra.mxu0 %v5633
    %9402 = vmatmul.bf16.gmra.mxu0 %v3496
    %v9403 = vpop.f32.mrf.mxu0
    %v9404 = vadd.f32 %v4081, %v9403
    %v9405 = vpop.f32.mrf.mxu0
    %v9406 = vadd.f32 %v4081, %v9405
    %9407 = vmatmul.bf16.gmra.mxu0 %v3504
    %v9408 = vpop.f32.mrf.mxu0
    %v9409 = vadd.f32 %v4081, %v9408
    %v9410 = vpop.f32.mrf.mxu0
    %v9411 = vadd.f32 %v4081, %v9410
    %9412 = vmatmul.bf16.gmra.mxu0 %v3512
    %v9413 = vpop.f32.mrf.mxu0
    %v9414 = vadd.f32 %v4081, %v9413
    %v9415 = vpop.f32.mrf.mxu0
    %v9416 = vadd.f32 %v4081, %v9415
    %9417 = vmatmul.bf16.gmra.mxu0 %v3520
    %v9418 = vpop.f32.mrf.mxu0
    %v9419 = vadd.f32 %v4081, %v9418
    %v9420 = vpop.f32.mrf.mxu0
    %v9421 = vadd.f32 %v4081, %v9420
    %9422 = vmatmul.bf16.gmra.mxu0 %v3528
    %v9423 = vpop.f32.mrf.mxu0
    %v9424 = vadd.f32 %v4081, %v9423
    %v9425 = vpop.f32.mrf.mxu0
    %v9426 = vadd.f32 %v4081, %v9425
    %9427 = vmatmul.bf16.gmra.mxu0 %v3536
    %v9428 = vpop.f32.mrf.mxu0
    %v9429 = vadd.f32 %v4081, %v9428
    %v9430 = vpop.f32.mrf.mxu0
    %v9431 = vadd.f32 %v4081, %v9430
    %9432 = vmatmul.bf16.gmra.mxu0 %v3544
    %v9433 = vpop.f32.mrf.mxu0
    %v9434 = vadd.f32 %v4081, %v9433
    %v9435 = vpop.f32.mrf.mxu0
    %v9436 = vadd.f32 %v4081, %v9435
    %9437 = vmatmul.bf16.gmra.mxu0 %v3552
    %v9438 = vpop.f32.mrf.mxu0
    %v9439 = vadd.f32 %v4081, %v9438
    %v9440 = vpop.f32.mrf.mxu0
    %v9441 = vadd.f32 %v4081, %v9440
    %9442 = vdwg.mxu0
    %9443 = vmatpush.bf16.msra.mxu0 %v5753
    %9444 = vmatpush.bf16.msra.mxu0 %v5745
    %9445 = vmatpush.bf16.msra.mxu0 %v5737
    %9446 = vmatpush.bf16.msra.mxu0 %v5729
    %9447 = vmatpush.bf16.msra.mxu0 %v5721
    %9448 = vmatpush.bf16.msra.mxu0 %v5713
    %9449 = vmatpush.bf16.msra.mxu0 %v5705
    %9450 = vmatpush.bf16.msra.mxu0 %v5697
    %9451 = vmatmul.bf16.gmra.mxu0 %v3497
    %v9452 = vpop.f32.mrf.mxu0
    %v9453 = vadd.f32 %v9404, %v9452
    %v9454 = vpop.f32.mrf.mxu0
    %v9455 = vadd.f32 %v9406, %v9454
    %9456 = vmatmul.bf16.gmra.mxu0 %v3505
    %v9457 = vpop.f32.mrf.mxu0
    %v9458 = vadd.f32 %v9409, %v9457
    %v9459 = vpop.f32.mrf.mxu0
    %v9460 = vadd.f32 %v9411, %v9459
    %9461 = vmatmul.bf16.gmra.mxu0 %v3513
    %v9462 = vpop.f32.mrf.mxu0
    %v9463 = vadd.f32 %v9414, %v9462
    %v9464 = vpop.f32.mrf.mxu0
    %v9465 = vadd.f32 %v9416, %v9464
    %9466 = vmatmul.bf16.gmra.mxu0 %v3521
    %v9467 = vpop.f32.mrf.mxu0
    %v9468 = vadd.f32 %v9419, %v9467
    %v9469 = vpop.f32.mrf.mxu0
    %v9470 = vadd.f32 %v9421, %v9469
    %9471 = vmatmul.bf16.gmra.mxu0 %v3529
    %v9472 = vpop.f32.mrf.mxu0
    %v9473 = vadd.f32 %v9424, %v9472
    %v9474 = vpop.f32.mrf.mxu0
    %v9475 = vadd.f32 %v9426, %v9474
    %9476 = vmatmul.bf16.gmra.mxu0 %v3537
    %v9477 = vpop.f32.mrf.mxu0
    %v9478 = vadd.f32 %v9429, %v9477
    %v9479 = vpop.f32.mrf.mxu0
    %v9480 = vadd.f32 %v9431, %v9479
    %9481 = vmatmul.bf16.gmra.mxu0 %v3545
    %v9482 = vpop.f32.mrf.mxu0
    %v9483 = vadd.f32 %v9434, %v9482
    %v9484 = vpop.f32.mrf.mxu0
    %v9485 = vadd.f32 %v9436, %v9484
    %9486 = vmatmul.bf16.gmra.mxu0 %v3553
    %v9487 = vpop.f32.mrf.mxu0
    %v9488 = vadd.f32 %v9439, %v9487
    %v9489 = vpop.f32.mrf.mxu0
    %v9490 = vadd.f32 %v9441, %v9489
    %9491 = vdwg.mxu0
    %9492 = vmatpush.bf16.msra.mxu0 %v5817
    %9493 = vmatpush.bf16.msra.mxu0 %v5809
    %9494 = vmatpush.bf16.msra.mxu0 %v5801
    %9495 = vmatpush.bf16.msra.mxu0 %v5793
    %9496 = vmatpush.bf16.msra.mxu0 %v5785
    %9497 = vmatpush.bf16.msra.mxu0 %v5777
    %9498 = vmatpush.bf16.msra.mxu0 %v5769
    %9499 = vmatpush.bf16.msra.mxu0 %v5761
    %9500 = vmatmul.bf16.gmra.mxu0 %v3498
    %v9501 = vpop.f32.mrf.mxu0
    %v9502 = vadd.f32 %v9453, %v9501
    %v9503 = vpop.f32.mrf.mxu0
    %v9504 = vadd.f32 %v9455, %v9503
    %9505 = vmatmul.bf16.gmra.mxu0 %v3506
    %v9506 = vpop.f32.mrf.mxu0
    %v9507 = vadd.f32 %v9458, %v9506
    %v9508 = vpop.f32.mrf.mxu0
    %v9509 = vadd.f32 %v9460, %v9508
    %9510 = vmatmul.bf16.gmra.mxu0 %v3514
    %v9511 = vpop.f32.mrf.mxu0
    %v9512 = vadd.f32 %v9463, %v9511
    %v9513 = vpop.f32.mrf.mxu0
    %v9514 = vadd.f32 %v9465, %v9513
    %9515 = vmatmul.bf16.gmra.mxu0 %v3522
    %v9516 = vpop.f32.mrf.mxu0
    %v9517 = vadd.f32 %v9468, %v9516
    %v9518 = vpop.f32.mrf.mxu0
    %v9519 = vadd.f32 %v9470, %v9518
    %9520 = vmatmul.bf16.gmra.mxu0 %v3530
    %v9521 = vpop.f32.mrf.mxu0
    %v9522 = vadd.f32 %v9473, %v9521
    %v9523 = vpop.f32.mrf.mxu0
    %v9524 = vadd.f32 %v9475, %v9523
    %9525 = vmatmul.bf16.gmra.mxu0 %v3538
    %v9526 = vpop.f32.mrf.mxu0
    %v9527 = vadd.f32 %v9478, %v9526
    %v9528 = vpop.f32.mrf.mxu0
    %v9529 = vadd.f32 %v9480, %v9528
    %9530 = vmatmul.bf16.gmra.mxu0 %v3546
    %v9531 = vpop.f32.mrf.mxu0
    %v9532 = vadd.f32 %v9483, %v9531
    %v9533 = vpop.f32.mrf.mxu0
    %v9534 = vadd.f32 %v9485, %v9533
    %9535 = vmatmul.bf16.gmra.mxu0 %v3554
    %v9536 = vpop.f32.mrf.mxu0
    %v9537 = vadd.f32 %v9488, %v9536
    %v9538 = vpop.f32.mrf.mxu0
    %v9539 = vadd.f32 %v9490, %v9538
    %9540 = vdwg.mxu0
    %9541 = vmatpush.bf16.msra.mxu0 %v5881
    %9542 = vmatpush.bf16.msra.mxu0 %v5873
    %9543 = vmatpush.bf16.msra.mxu0 %v5865
    %9544 = vmatpush.bf16.msra.mxu0 %v5857
    %9545 = vmatpush.bf16.msra.mxu0 %v5849
    %9546 = vmatpush.bf16.msra.mxu0 %v5841
    %9547 = vmatpush.bf16.msra.mxu0 %v5833
    %9548 = vmatpush.bf16.msra.mxu0 %v5825
    %9549 = vmatmul.bf16.gmra.mxu0 %v3499
    %v9550 = vpop.f32.mrf.mxu0
    %v9551 = vadd.f32 %v9502, %v9550
    %v9552 = vpop.f32.mrf.mxu0
    %v9553 = vadd.f32 %v9504, %v9552
    %9554 = vmatmul.bf16.gmra.mxu0 %v3507
    %v9555 = vpop.f32.mrf.mxu0
    %v9556 = vadd.f32 %v9507, %v9555
    %v9557 = vpop.f32.mrf.mxu0
    %v9558 = vadd.f32 %v9509, %v9557
    %9559 = vmatmul.bf16.gmra.mxu0 %v3515
    %v9560 = vpop.f32.mrf.mxu0
    %v9561 = vadd.f32 %v9512, %v9560
    %v9562 = vpop.f32.mrf.mxu0
    %v9563 = vadd.f32 %v9514, %v9562
    %9564 = vmatmul.bf16.gmra.mxu0 %v3523
    %v9565 = vpop.f32.mrf.mxu0
    %v9566 = vadd.f32 %v9517, %v9565
    %v9567 = vpop.f32.mrf.mxu0
    %v9568 = vadd.f32 %v9519, %v9567
    %9569 = vmatmul.bf16.gmra.mxu0 %v3531
    %v9570 = vpop.f32.mrf.mxu0
    %v9571 = vadd.f32 %v9522, %v9570
    %v9572 = vpop.f32.mrf.mxu0
    %v9573 = vadd.f32 %v9524, %v9572
    %9574 = vmatmul.bf16.gmra.mxu0 %v3539
    %v9575 = vpop.f32.mrf.mxu0
    %v9576 = vadd.f32 %v9527, %v9575
    %v9577 = vpop.f32.mrf.mxu0
    %v9578 = vadd.f32 %v9529, %v9577
    %9579 = vmatmul.bf16.gmra.mxu0 %v3547
    %v9580 = vpop.f32.mrf.mxu0
    %v9581 = vadd.f32 %v9532, %v9580
    %v9582 = vpop.f32.mrf.mxu0
    %v9583 = vadd.f32 %v9534, %v9582
    %9584 = vmatmul.bf16.gmra.mxu0 %v3555
    %v9585 = vpop.f32.mrf.mxu0
    %v9586 = vadd.f32 %v9537, %v9585
    %v9587 = vpop.f32.mrf.mxu0
    %v9588 = vadd.f32 %v9539, %v9587
    %9589 = vdwg.mxu0
    %9590 = vmatpush.bf16.msra.mxu0 %v5945
    %9591 = vmatpush.bf16.msra.mxu0 %v5937
    %9592 = vmatpush.bf16.msra.mxu0 %v5929
    %9593 = vmatpush.bf16.msra.mxu0 %v5921
    %9594 = vmatpush.bf16.msra.mxu0 %v5913
    %9595 = vmatpush.bf16.msra.mxu0 %v5905
    %9596 = vmatpush.bf16.msra.mxu0 %v5897
    %9597 = vmatpush.bf16.msra.mxu0 %v5889
    %9598 = vmatmul.bf16.gmra.mxu0 %v3500
    %v9599 = vpop.f32.mrf.mxu0
    %v9600 = vadd.f32 %v9551, %v9599
    %v9601 = vpop.f32.mrf.mxu0
    %v9602 = vadd.f32 %v9553, %v9601
    %9603 = vmatmul.bf16.gmra.mxu0 %v3508
    %v9604 = vpop.f32.mrf.mxu0
    %v9605 = vadd.f32 %v9556, %v9604
    %v9606 = vpop.f32.mrf.mxu0
    %v9607 = vadd.f32 %v9558, %v9606
    %9608 = vmatmul.bf16.gmra.mxu0 %v3516
    %v9609 = vpop.f32.mrf.mxu0
    %v9610 = vadd.f32 %v9561, %v9609
    %v9611 = vpop.f32.mrf.mxu0
    %v9612 = vadd.f32 %v9563, %v9611
    %9613 = vmatmul.bf16.gmra.mxu0 %v3524
    %v9614 = vpop.f32.mrf.mxu0
    %v9615 = vadd.f32 %v9566, %v9614
    %v9616 = vpop.f32.mrf.mxu0
    %v9617 = vadd.f32 %v9568, %v9616
    %9618 = vmatmul.bf16.gmra.mxu0 %v3532
    %v9619 = vpop.f32.mrf.mxu0
    %v9620 = vadd.f32 %v9571, %v9619
    %v9621 = vpop.f32.mrf.mxu0
    %v9622 = vadd.f32 %v9573, %v9621
    %9623 = vmatmul.bf16.gmra.mxu0 %v3540
    %v9624 = vpop.f32.mrf.mxu0
    %v9625 = vadd.f32 %v9576, %v9624
    %v9626 = vpop.f32.mrf.mxu0
    %v9627 = vadd.f32 %v9578, %v9626
    %9628 = vmatmul.bf16.gmra.mxu0 %v3548
    %v9629 = vpop.f32.mrf.mxu0
    %v9630 = vadd.f32 %v9581, %v9629
    %v9631 = vpop.f32.mrf.mxu0
    %v9632 = vadd.f32 %v9583, %v9631
    %9633 = vmatmul.bf16.gmra.mxu0 %v3556
    %v9634 = vpop.f32.mrf.mxu0
    %v9635 = vadd.f32 %v9586, %v9634
    %v9636 = vpop.f32.mrf.mxu0
    %v9637 = vadd.f32 %v9588, %v9636
    %9638 = vdwg.mxu0
    %9639 = vmatpush.bf16.msra.mxu0 %v6009
    %9640 = vmatpush.bf16.msra.mxu0 %v6001
    %9641 = vmatpush.bf16.msra.mxu0 %v5993
    %9642 = vmatpush.bf16.msra.mxu0 %v5985
    %9643 = vmatpush.bf16.msra.mxu0 %v5977
    %9644 = vmatpush.bf16.msra.mxu0 %v5969
    %9645 = vmatpush.bf16.msra.mxu0 %v5961
    %9646 = vmatpush.bf16.msra.mxu0 %v5953
    %9647 = vmatmul.bf16.gmra.mxu0 %v3501
    %v9648 = vpop.f32.mrf.mxu0
    %v9649 = vadd.f32 %v9600, %v9648
    %v9650 = vpop.f32.mrf.mxu0
    %v9651 = vadd.f32 %v9602, %v9650
    %9652 = vmatmul.bf16.gmra.mxu0 %v3509
    %v9653 = vpop.f32.mrf.mxu0
    %v9654 = vadd.f32 %v9605, %v9653
    %v9655 = vpop.f32.mrf.mxu0
    %v9656 = vadd.f32 %v9607, %v9655
    %9657 = vmatmul.bf16.gmra.mxu0 %v3517
    %v9658 = vpop.f32.mrf.mxu0
    %v9659 = vadd.f32 %v9610, %v9658
    %v9660 = vpop.f32.mrf.mxu0
    %v9661 = vadd.f32 %v9612, %v9660
    %9662 = vmatmul.bf16.gmra.mxu0 %v3525
    %v9663 = vpop.f32.mrf.mxu0
    %v9664 = vadd.f32 %v9615, %v9663
    %v9665 = vpop.f32.mrf.mxu0
    %v9666 = vadd.f32 %v9617, %v9665
    %9667 = vmatmul.bf16.gmra.mxu0 %v3533
    %v9668 = vpop.f32.mrf.mxu0
    %v9669 = vadd.f32 %v9620, %v9668
    %v9670 = vpop.f32.mrf.mxu0
    %v9671 = vadd.f32 %v9622, %v9670
    %9672 = vmatmul.bf16.gmra.mxu0 %v3541
    %v9673 = vpop.f32.mrf.mxu0
    %v9674 = vadd.f32 %v9625, %v9673
    %v9675 = vpop.f32.mrf.mxu0
    %v9676 = vadd.f32 %v9627, %v9675
    %9677 = vmatmul.bf16.gmra.mxu0 %v3549
    %v9678 = vpop.f32.mrf.mxu0
    %v9679 = vadd.f32 %v9630, %v9678
    %v9680 = vpop.f32.mrf.mxu0
    %v9681 = vadd.f32 %v9632, %v9680
    %9682 = vmatmul.bf16.gmra.mxu0 %v3557
    %v9683 = vpop.f32.mrf.mxu0
    %v9684 = vadd.f32 %v9635, %v9683
    %v9685 = vpop.f32.mrf.mxu0
    %v9686 = vadd.f32 %v9637, %v9685
    %9687 = vdwg.mxu0
    %9688 = vmatpush.bf16.msra.mxu0 %v6073
    %9689 = vmatpush.bf16.msra.mxu0 %v6065
    %9690 = vmatpush.bf16.msra.mxu0 %v6057
    %9691 = vmatpush.bf16.msra.mxu0 %v6049
    %9692 = vmatpush.bf16.msra.mxu0 %v6041
    %9693 = vmatpush.bf16.msra.mxu0 %v6033
    %9694 = vmatpush.bf16.msra.mxu0 %v6025
    %9695 = vmatpush.bf16.msra.mxu0 %v6017
    %9696 = vmatmul.bf16.gmra.mxu0 %v3502
    %v9697 = vpop.f32.mrf.mxu0
    %v9698 = vadd.f32 %v9649, %v9697
    %v9699 = vpop.f32.mrf.mxu0
    %v9700 = vadd.f32 %v9651, %v9699
    %9701 = vmatmul.bf16.gmra.mxu0 %v3510
    %v9702 = vpop.f32.mrf.mxu0
    %v9703 = vadd.f32 %v9654, %v9702
    %v9704 = vpop.f32.mrf.mxu0
    %v9705 = vadd.f32 %v9656, %v9704
    %9706 = vmatmul.bf16.gmra.mxu0 %v3518
    %v9707 = vpop.f32.mrf.mxu0
    %v9708 = vadd.f32 %v9659, %v9707
    %v9709 = vpop.f32.mrf.mxu0
    %v9710 = vadd.f32 %v9661, %v9709
    %9711 = vmatmul.bf16.gmra.mxu0 %v3526
    %v9712 = vpop.f32.mrf.mxu0
    %v9713 = vadd.f32 %v9664, %v9712
    %v9714 = vpop.f32.mrf.mxu0
    %v9715 = vadd.f32 %v9666, %v9714
    %9716 = vmatmul.bf16.gmra.mxu0 %v3534
    %v9717 = vpop.f32.mrf.mxu0
    %v9718 = vadd.f32 %v9669, %v9717
    %v9719 = vpop.f32.mrf.mxu0
    %v9720 = vadd.f32 %v9671, %v9719
    %9721 = vmatmul.bf16.gmra.mxu0 %v3542
    %v9722 = vpop.f32.mrf.mxu0
    %v9723 = vadd.f32 %v9674, %v9722
    %v9724 = vpop.f32.mrf.mxu0
    %v9725 = vadd.f32 %v9676, %v9724
    %9726 = vmatmul.bf16.gmra.mxu0 %v3550
    %v9727 = vpop.f32.mrf.mxu0
    %v9728 = vadd.f32 %v9679, %v9727
    %v9729 = vpop.f32.mrf.mxu0
    %v9730 = vadd.f32 %v9681, %v9729
    %9731 = vmatmul.bf16.gmra.mxu0 %v3558
    %v9732 = vpop.f32.mrf.mxu0
    %v9733 = vadd.f32 %v9684, %v9732
    %v9734 = vpop.f32.mrf.mxu0
    %v9735 = vadd.f32 %v9686, %v9734
    %9736 = vdwg.mxu0
    %9737 = vmatpush.bf16.msra.mxu0 %v6137
    %9738 = vmatpush.bf16.msra.mxu0 %v6129
    %9739 = vmatpush.bf16.msra.mxu0 %v6121
    %9740 = vmatpush.bf16.msra.mxu0 %v6113
    %9741 = vmatpush.bf16.msra.mxu0 %v6105
    %9742 = vmatpush.bf16.msra.mxu0 %v6097
    %9743 = vmatpush.bf16.msra.mxu0 %v6089
    %9744 = vmatpush.bf16.msra.mxu0 %v6081
    %9745 = vmatmul.bf16.gmra.mxu0 %v3503
    %v9746 = vpop.f32.mrf.mxu0
    %v9747 = vadd.f32 %v9698, %v9746
    %v9748 = vpop.f32.mrf.mxu0
    %v9749 = vadd.f32 %v9700, %v9748
    %9750 = vmatmul.bf16.gmra.mxu0 %v3511
    %v9751 = vpop.f32.mrf.mxu0
    %v9752 = vadd.f32 %v9703, %v9751
    %v9753 = vpop.f32.mrf.mxu0
    %v9754 = vadd.f32 %v9705, %v9753
    %9755 = vmatmul.bf16.gmra.mxu0 %v3519
    %v9756 = vpop.f32.mrf.mxu0
    %v9757 = vadd.f32 %v9708, %v9756
    %v9758 = vpop.f32.mrf.mxu0
    %v9759 = vadd.f32 %v9710, %v9758
    %9760 = vmatmul.bf16.gmra.mxu0 %v3527
    %v9761 = vpop.f32.mrf.mxu0
    %v9762 = vadd.f32 %v9713, %v9761
    %v9763 = vpop.f32.mrf.mxu0
    %v9764 = vadd.f32 %v9715, %v9763
    %9765 = vmatmul.bf16.gmra.mxu0 %v3535
    %v9766 = vpop.f32.mrf.mxu0
    %v9767 = vadd.f32 %v9718, %v9766
    %v9768 = vpop.f32.mrf.mxu0
    %v9769 = vadd.f32 %v9720, %v9768
    %9770 = vmatmul.bf16.gmra.mxu0 %v3543
    %v9771 = vpop.f32.mrf.mxu0
    %v9772 = vadd.f32 %v9723, %v9771
    %v9773 = vpop.f32.mrf.mxu0
    %v9774 = vadd.f32 %v9725, %v9773
    %9775 = vmatmul.bf16.gmra.mxu0 %v3551
    %v9776 = vpop.f32.mrf.mxu0
    %v9777 = vadd.f32 %v9728, %v9776
    %v9778 = vpop.f32.mrf.mxu0
    %v9779 = vadd.f32 %v9730, %v9778
    %9780 = vmatmul.bf16.gmra.mxu0 %v3559
    %v9781 = vpop.f32.mrf.mxu0
    %v9782 = vadd.f32 %v9733, %v9781
    %v9783 = vpop.f32.mrf.mxu0
    %v9784 = vadd.f32 %v9735, %v9783
    %9785 = vdwg.mxu0
    %v9786 = vmax.f32 %v7003, 0.0
    %v9787 = vmax.f32 %v7395, 0.0
    %v9788 = vmax.f32 %v7787, 0.0
    %v9789 = vmax.f32 %v8179, 0.0
    %v9790 = vmax.f32 %v8571, 0.0
    %v9791 = vmax.f32 %v8963, 0.0
    %v9792 = vmax.f32 %v9355, 0.0
    %v9793 = vmax.f32 %v9747, 0.0
    %v9794 = vmax.f32 %v7005, 0.0
    %v9795 = vmax.f32 %v7397, 0.0
    %v9796 = vmax.f32 %v7789, 0.0
    %v9797 = vmax.f32 %v8181, 0.0
    %v9798 = vmax.f32 %v8573, 0.0
    %v9799 = vmax.f32 %v8965, 0.0
    %v9800 = vmax.f32 %v9357, 0.0
    %v9801 = vmax.f32 %v9749, 0.0
    %v9802 = vmax.f32 %v7008, 0.0
    %v9803 = vmax.f32 %v7400, 0.0
    %v9804 = vmax.f32 %v7792, 0.0
    %v9805 = vmax.f32 %v8184, 0.0
    %v9806 = vmax.f32 %v8576, 0.0
    %v9807 = vmax.f32 %v8968, 0.0
    %v9808 = vmax.f32 %v9360, 0.0
    %v9809 = vmax.f32 %v9752, 0.0
    %v9810 = vmax.f32 %v7010, 0.0
    %v9811 = vmax.f32 %v7402, 0.0
    %v9812 = vmax.f32 %v7794, 0.0
    %v9813 = vmax.f32 %v8186, 0.0
    %v9814 = vmax.f32 %v8578, 0.0
    %v9815 = vmax.f32 %v8970, 0.0
    %v9816 = vmax.f32 %v9362, 0.0
    %v9817 = vmax.f32 %v9754, 0.0
    %v9818 = vmax.f32 %v7013, 0.0
    %v9819 = vmax.f32 %v7405, 0.0
    %v9820 = vmax.f32 %v7797, 0.0
    %v9821 = vmax.f32 %v8189, 0.0
    %v9822 = vmax.f32 %v8581, 0.0
    %v9823 = vmax.f32 %v8973, 0.0
    %v9824 = vmax.f32 %v9365, 0.0
    %v9825 = vmax.f32 %v9757, 0.0
    %v9826 = vmax.f32 %v7015, 0.0
    %v9827 = vmax.f32 %v7407, 0.0
    %v9828 = vmax.f32 %v7799, 0.0
    %v9829 = vmax.f32 %v8191, 0.0
    %v9830 = vmax.f32 %v8583, 0.0
    %v9831 = vmax.f32 %v8975, 0.0
    %v9832 = vmax.f32 %v9367, 0.0
    %v9833 = vmax.f32 %v9759, 0.0
    %v9834 = vmax.f32 %v7018, 0.0
    %v9835 = vmax.f32 %v7410, 0.0
    %v9836 = vmax.f32 %v7802, 0.0
    %v9837 = vmax.f32 %v8194, 0.0
    %v9838 = vmax.f32 %v8586, 0.0
    %v9839 = vmax.f32 %v8978, 0.0
    %v9840 = vmax.f32 %v9370, 0.0
    %v9841 = vmax.f32 %v9762, 0.0
    %v9842 = vmax.f32 %v7020, 0.0
    %v9843 = vmax.f32 %v7412, 0.0
    %v9844 = vmax.f32 %v7804, 0.0
    %v9845 = vmax.f32 %v8196, 0.0
    %v9846 = vmax.f32 %v8588, 0.0
    %v9847 = vmax.f32 %v8980, 0.0
    %v9848 = vmax.f32 %v9372, 0.0
    %v9849 = vmax.f32 %v9764, 0.0
    %v9850 = vmax.f32 %v7023, 0.0
    %v9851 = vmax.f32 %v7415, 0.0
    %v9852 = vmax.f32 %v7807, 0.0
    %v9853 = vmax.f32 %v8199, 0.0
    %v9854 = vmax.f32 %v8591, 0.0
    %v9855 = vmax.f32 %v8983, 0.0
    %v9856 = vmax.f32 %v9375, 0.0
    %v9857 = vmax.f32 %v9767, 0.0
    %v9858 = vmax.f32 %v7025, 0.0
    %v9859 = vmax.f32 %v7417, 0.0
    %v9860 = vmax.f32 %v7809, 0.0
    %v9861 = vmax.f32 %v8201, 0.0
    %v9862 = vmax.f32 %v8593, 0.0
    %v9863 = vmax.f32 %v8985, 0.0
    %v9864 = vmax.f32 %v9377, 0.0
    %v9865 = vmax.f32 %v9769, 0.0
    %v9866 = vmax.f32 %v7028, 0.0
    %v9867 = vmax.f32 %v7420, 0.0
    %v9868 = vmax.f32 %v7812, 0.0
    %v9869 = vmax.f32 %v8204, 0.0
    %v9870 = vmax.f32 %v8596, 0.0
    %v9871 = vmax.f32 %v8988, 0.0
    %v9872 = vmax.f32 %v9380, 0.0
    %v9873 = vmax.f32 %v9772, 0.0
    %v9874 = vmax.f32 %v7030, 0.0
    %v9875 = vmax.f32 %v7422, 0.0
    %v9876 = vmax.f32 %v7814, 0.0
    %v9877 = vmax.f32 %v8206, 0.0
    %v9878 = vmax.f32 %v8598, 0.0
    %v9879 = vmax.f32 %v8990, 0.0
    %v9880 = vmax.f32 %v9382, 0.0
    %v9881 = vmax.f32 %v9774, 0.0
    %v9882 = vmax.f32 %v7033, 0.0
    %v9883 = vmax.f32 %v7425, 0.0
    %v9884 = vmax.f32 %v7817, 0.0
    %v9885 = vmax.f32 %v8209, 0.0
    %v9886 = vmax.f32 %v8601, 0.0
    %v9887 = vmax.f32 %v8993, 0.0
    %v9888 = vmax.f32 %v9385, 0.0
    %v9889 = vmax.f32 %v9777, 0.0
    %v9890 = vmax.f32 %v7035, 0.0
    %v9891 = vmax.f32 %v7427, 0.0
    %v9892 = vmax.f32 %v7819, 0.0
    %v9893 = vmax.f32 %v8211, 0.0
    %v9894 = vmax.f32 %v8603, 0.0
    %v9895 = vmax.f32 %v8995, 0.0
    %v9896 = vmax.f32 %v9387, 0.0
    %v9897 = vmax.f32 %v9779, 0.0
    %v9898 = vmax.f32 %v7038, 0.0
    %v9899 = vmax.f32 %v7430, 0.0
    %v9900 = vmax.f32 %v7822, 0.0
    %v9901 = vmax.f32 %v8214, 0.0
    %v9902 = vmax.f32 %v8606, 0.0
    %v9903 = vmax.f32 %v8998, 0.0
    %v9904 = vmax.f32 %v9390, 0.0
    %v9905 = vmax.f32 %v9782, 0.0
    %v9906 = vmax.f32 %v7040, 0.0
    %v9907 = vmax.f32 %v7432, 0.0
    %v9908 = vmax.f32 %v7824, 0.0
    %v9909 = vmax.f32 %v8216, 0.0
    %v9910 = vmax.f32 %v8608, 0.0
    %v9911 = vmax.f32 %v9000, 0.0
    %v9912 = vmax.f32 %v9392, 0.0
    %v9913 = vmax.f32 %v9784, 0.0
    %v9914 = vpack.c.bf16 %v9794, %v9786
    %v9915 = vpack.c.bf16 %v9795, %v9787
    %v9916 = vpack.c.bf16 %v9796, %v9788
    %v9917 = vpack.c.bf16 %v9797, %v9789
    %v9918 = vpack.c.bf16 %v9798, %v9790
    %v9919 = vpack.c.bf16 %v9799, %v9791
    %v9920 = vpack.c.bf16 %v9800, %v9792
    %v9921 = vpack.c.bf16 %v9801, %v9793
    %v9922 = vpack.c.bf16 %v9810, %v9802
    %v9923 = vpack.c.bf16 %v9811, %v9803
    %v9924 = vpack.c.bf16 %v9812, %v9804
    %v9925 = vpack.c.bf16 %v9813, %v9805
    %v9926 = vpack.c.bf16 %v9814, %v9806
    %v9927 = vpack.c.bf16 %v9815, %v9807
    %v9928 = vpack.c.bf16 %v9816, %v9808
    %v9929 = vpack.c.bf16 %v9817, %v9809
    %v9930 = vpack.c.bf16 %v9826, %v9818
    %v9931 = vpack.c.bf16 %v9827, %v9819
    %v9932 = vpack.c.bf16 %v9828, %v9820
    %v9933 = vpack.c.bf16 %v9829, %v9821
    %v9934 = vpack.c.bf16 %v9830, %v9822
    %v9935 = vpack.c.bf16 %v9831, %v9823
    %v9936 = vpack.c.bf16 %v9832, %v9824
    %v9937 = vpack.c.bf16 %v9833, %v9825
    %v9938 = vpack.c.bf16 %v9842, %v9834
    %v9939 = vpack.c.bf16 %v9843, %v9835
    %v9940 = vpack.c.bf16 %v9844, %v9836
    %v9941 = vpack.c.bf16 %v9845, %v9837
    %v9942 = vpack.c.bf16 %v9846, %v9838
    %v9943 = vpack.c.bf16 %v9847, %v9839
    %v9944 = vpack.c.bf16 %v9848, %v9840
    %v9945 = vpack.c.bf16 %v9849, %v9841
    %v9946 = vpack.c.bf16 %v9858, %v9850
    %v9947 = vpack.c.bf16 %v9859, %v9851
    %v9948 = vpack.c.bf16 %v9860, %v9852
    %v9949 = vpack.c.bf16 %v9861, %v9853
    %v9950 = vpack.c.bf16 %v9862, %v9854
    %v9951 = vpack.c.bf16 %v9863, %v9855
    %v9952 = vpack.c.bf16 %v9864, %v9856
    %v9953 = vpack.c.bf16 %v9865, %v9857
    %v9954 = vpack.c.bf16 %v9874, %v9866
    %v9955 = vpack.c.bf16 %v9875, %v9867
    %v9956 = vpack.c.bf16 %v9876, %v9868
    %v9957 = vpack.c.bf16 %v9877, %v9869
    %v9958 = vpack.c.bf16 %v9878, %v9870
    %v9959 = vpack.c.bf16 %v9879, %v9871
    %v9960 = vpack.c.bf16 %v9880, %v9872
    %v9961 = vpack.c.bf16 %v9881, %v9873
    %v9962 = vpack.c.bf16 %v9890, %v9882
    %v9963 = vpack.c.bf16 %v9891, %v9883
    %v9964 = vpack.c.bf16 %v9892, %v9884
    %v9965 = vpack.c.bf16 %v9893, %v9885
    %v9966 = vpack.c.bf16 %v9894, %v9886
    %v9967 = vpack.c.bf16 %v9895, %v9887
    %v9968 = vpack.c.bf16 %v9896, %v9888
    %v9969 = vpack.c.bf16 %v9897, %v9889
    %v9970 = vpack.c.bf16 %v9906, %v9898
    %v9971 = vpack.c.bf16 %v9907, %v9899
    %v9972 = vpack.c.bf16 %v9908, %v9900
    %v9973 = vpack.c.bf16 %v9909, %v9901
    %v9974 = vpack.c.bf16 %v9910, %v9902
    %v9975 = vpack.c.bf16 %v9911, %v9903
    %v9976 = vpack.c.bf16 %v9912, %v9904
    %v9977 = vpack.c.bf16 %v9913, %v9905
    %v9978 = vld [vmem:[%s5] sm:$0xf]
    %v9979 = vld [vmem:[%s5 + $0x4] sm:$0xf]
    %v9980 = vld [vmem:[%s5 + $0x8] sm:$0xf]
    %v9981 = vld [vmem:[%s5 + $0xc] sm:$0xf]
    %v9982 = vld [vmem:[%s5 + $0x10] sm:$0xf]
    %v9983 = vld [vmem:[%s5 + $0x14] sm:$0xf]
    %v9984 = vld [vmem:[%s5 + $0x18] sm:$0xf]
    %v9985 = vld [vmem:[%s5 + $0x1c] sm:$0xf]
    %v9986 = vld [vmem:[%s5 + $0x20] sm:$0xf]
    %v9987 = vld [vmem:[%s5 + $0x24] sm:$0xf]
    %v9988 = vld [vmem:[%s5 + $0x28] sm:$0xf]
    %v9989 = vld [vmem:[%s5 + $0x2c] sm:$0xf]
    %v9990 = vld [vmem:[%s5 + $0x30] sm:$0xf]
    %v9991 = vld [vmem:[%s5 + $0x34] sm:$0xf]
    %v9992 = vld [vmem:[%s5 + $0x38] sm:$0xf]
    %v9993 = vld [vmem:[%s5 + $0x3c] sm:$0xf]
    %v9994 = vld [vmem:[%s5 + $0x40] sm:$0xf]
    %v9995 = vld [vmem:[%s5 + $0x44] sm:$0xf]
    %v9996 = vld [vmem:[%s5 + $0x48] sm:$0xf]
    %v9997 = vld [vmem:[%s5 + $0x4c] sm:$0xf]
    %v9998 = vld [vmem:[%s5 + $0x50] sm:$0xf]
    %v9999 = vld [vmem:[%s5 + $0x54] sm:$0xf]
    %v10000 = vld [vmem:[%s5 + $0x58] sm:$0xf]
    %v10001 = vld [vmem:[%s5 + $0x5c] sm:$0xf]
    %v10002 = vld [vmem:[%s5 + $0x60] sm:$0xf]
    %v10003 = vld [vmem:[%s5 + $0x64] sm:$0xf]
    %v10004 = vld [vmem:[%s5 + $0x68] sm:$0xf]
    %v10005 = vld [vmem:[%s5 + $0x6c] sm:$0xf]
    %v10006 = vld [vmem:[%s5 + $0x70] sm:$0xf]
    %v10007 = vld [vmem:[%s5 + $0x74] sm:$0xf]
    %v10008 = vld [vmem:[%s5 + $0x78] sm:$0xf]
    %v10009 = vld [vmem:[%s5 + $0x7c] sm:$0xf]
    %v10010 = vld [vmem:[%s5 + $0x80] sm:$0xf]
    %v10011 = vld [vmem:[%s5 + $0x84] sm:$0xf]
    %v10012 = vld [vmem:[%s5 + $0x88] sm:$0xf]
    %v10013 = vld [vmem:[%s5 + $0x8c] sm:$0xf]
    %v10014 = vld [vmem:[%s5 + $0x90] sm:$0xf]
    %v10015 = vld [vmem:[%s5 + $0x94] sm:$0xf]
    %v10016 = vld [vmem:[%s5 + $0x98] sm:$0xf]
    %v10017 = vld [vmem:[%s5 + $0x9c] sm:$0xf]
    %v10018 = vld [vmem:[%s5 + $0xa0] sm:$0xf]
    %v10019 = vld [vmem:[%s5 + $0xa4] sm:$0xf]
    %v10020 = vld [vmem:[%s5 + $0xa8] sm:$0xf]
    %v10021 = vld [vmem:[%s5 + $0xac] sm:$0xf]
    %v10022 = vld [vmem:[%s5 + $0xb0] sm:$0xf]
    %v10023 = vld [vmem:[%s5 + $0xb4] sm:$0xf]
    %v10024 = vld [vmem:[%s5 + $0xb8] sm:$0xf]
    %v10025 = vld [vmem:[%s5 + $0xbc] sm:$0xf]
    %v10026 = vld [vmem:[%s5 + $0xc0] sm:$0xf]
    %v10027 = vld [vmem:[%s5 + $0xc4] sm:$0xf]
    %v10028 = vld [vmem:[%s5 + $0xc8] sm:$0xf]
    %v10029 = vld [vmem:[%s5 + $0xcc] sm:$0xf]
    %v10030 = vld [vmem:[%s5 + $0xd0] sm:$0xf]
    %v10031 = vld [vmem:[%s5 + $0xd4] sm:$0xf]
    %v10032 = vld [vmem:[%s5 + $0xd8] sm:$0xf]
    %v10033 = vld [vmem:[%s5 + $0xdc] sm:$0xf]
    %v10034 = vld [vmem:[%s5 + $0xe0] sm:$0xf]
    %v10035 = vld [vmem:[%s5 + $0xe4] sm:$0xf]
    %v10036 = vld [vmem:[%s5 + $0xe8] sm:$0xf]
    %v10037 = vld [vmem:[%s5 + $0xec] sm:$0xf]
    %v10038 = vld [vmem:[%s5 + $0xf0] sm:$0xf]
    %v10039 = vld [vmem:[%s5 + $0xf4] sm:$0xf]
    %v10040 = vld [vmem:[%s5 + $0xf8] sm:$0xf]
    %v10041 = vld [vmem:[%s5 + $0xfc] sm:$0xf]
    %v10042 = vld [vmem:[%s5 + $0x100] sm:$0xf]
    %v10043 = vld [vmem:[%s5 + $0x104] sm:$0xf]
    %v10044 = vld [vmem:[%s5 + $0x108] sm:$0xf]
    %v10045 = vld [vmem:[%s5 + $0x10c] sm:$0xf]
    %v10046 = vld [vmem:[%s5 + $0x110] sm:$0xf]
    %v10047 = vld [vmem:[%s5 + $0x114] sm:$0xf]
    %v10048 = vld [vmem:[%s5 + $0x118] sm:$0xf]
    %v10049 = vld [vmem:[%s5 + $0x11c] sm:$0xf]
    %v10050 = vld [vmem:[%s5 + $0x120] sm:$0xf]
    %v10051 = vld [vmem:[%s5 + $0x124] sm:$0xf]
    %v10052 = vld [vmem:[%s5 + $0x128] sm:$0xf]
    %v10053 = vld [vmem:[%s5 + $0x12c] sm:$0xf]
    %v10054 = vld [vmem:[%s5 + $0x130] sm:$0xf]
    %v10055 = vld [vmem:[%s5 + $0x134] sm:$0xf]
    %v10056 = vld [vmem:[%s5 + $0x138] sm:$0xf]
    %v10057 = vld [vmem:[%s5 + $0x13c] sm:$0xf]
    %v10058 = vld [vmem:[%s5 + $0x140] sm:$0xf]
    %v10059 = vld [vmem:[%s5 + $0x144] sm:$0xf]
    %v10060 = vld [vmem:[%s5 + $0x148] sm:$0xf]
    %v10061 = vld [vmem:[%s5 + $0x14c] sm:$0xf]
    %v10062 = vld [vmem:[%s5 + $0x150] sm:$0xf]
    %v10063 = vld [vmem:[%s5 + $0x154] sm:$0xf]
    %v10064 = vld [vmem:[%s5 + $0x158] sm:$0xf]
    %v10065 = vld [vmem:[%s5 + $0x15c] sm:$0xf]
    %v10066 = vld [vmem:[%s5 + $0x160] sm:$0xf]
    %v10067 = vld [vmem:[%s5 + $0x164] sm:$0xf]
    %v10068 = vld [vmem:[%s5 + $0x168] sm:$0xf]
    %v10069 = vld [vmem:[%s5 + $0x16c] sm:$0xf]
    %v10070 = vld [vmem:[%s5 + $0x170] sm:$0xf]
    %v10071 = vld [vmem:[%s5 + $0x174] sm:$0xf]
    %v10072 = vld [vmem:[%s5 + $0x178] sm:$0xf]
    %v10073 = vld [vmem:[%s5 + $0x17c] sm:$0xf]
    %v10074 = vld [vmem:[%s5 + $0x180] sm:$0xf]
    %v10075 = vld [vmem:[%s5 + $0x184] sm:$0xf]
    %v10076 = vld [vmem:[%s5 + $0x188] sm:$0xf]
    %v10077 = vld [vmem:[%s5 + $0x18c] sm:$0xf]
    %v10078 = vld [vmem:[%s5 + $0x190] sm:$0xf]
    %v10079 = vld [vmem:[%s5 + $0x194] sm:$0xf]
    %v10080 = vld [vmem:[%s5 + $0x198] sm:$0xf]
    %v10081 = vld [vmem:[%s5 + $0x19c] sm:$0xf]
    %v10082 = vld [vmem:[%s5 + $0x1a0] sm:$0xf]
    %v10083 = vld [vmem:[%s5 + $0x1a4] sm:$0xf]
    %v10084 = vld [vmem:[%s5 + $0x1a8] sm:$0xf]
    %v10085 = vld [vmem:[%s5 + $0x1ac] sm:$0xf]
    %v10086 = vld [vmem:[%s5 + $0x1b0] sm:$0xf]
    %v10087 = vld [vmem:[%s5 + $0x1b4] sm:$0xf]
    %v10088 = vld [vmem:[%s5 + $0x1b8] sm:$0xf]
    %v10089 = vld [vmem:[%s5 + $0x1bc] sm:$0xf]
    %v10090 = vld [vmem:[%s5 + $0x1c0] sm:$0xf]
    %v10091 = vld [vmem:[%s5 + $0x1c4] sm:$0xf]
    %v10092 = vld [vmem:[%s5 + $0x1c8] sm:$0xf]
    %v10093 = vld [vmem:[%s5 + $0x1cc] sm:$0xf]
    %v10094 = vld [vmem:[%s5 + $0x1d0] sm:$0xf]
    %v10095 = vld [vmem:[%s5 + $0x1d4] sm:$0xf]
    %v10096 = vld [vmem:[%s5 + $0x1d8] sm:$0xf]
    %v10097 = vld [vmem:[%s5 + $0x1dc] sm:$0xf]
    %v10098 = vld [vmem:[%s5 + $0x1e0] sm:$0xf]
    %v10099 = vld [vmem:[%s5 + $0x1e4] sm:$0xf]
    %v10100 = vld [vmem:[%s5 + $0x1e8] sm:$0xf]
    %v10101 = vld [vmem:[%s5 + $0x1ec] sm:$0xf]
    %v10102 = vld [vmem:[%s5 + $0x1f0] sm:$0xf]
    %v10103 = vld [vmem:[%s5 + $0x1f4] sm:$0xf]
    %v10104 = vld [vmem:[%s5 + $0x1f8] sm:$0xf]
    %v10105 = vld [vmem:[%s5 + $0x1fc] sm:$0xf]
    %v10106 = vld [vmem:[%s6] sm:$0x1]
    %v10108 = vperm.slane %v10106, 0
    %v10238 = vunpack.c.l.b16 %v9978
    %v10239 = vunpack.c.l.b16 %v9979
    %v10240 = vunpack.c.l.b16 %v9980
    %v10241 = vunpack.c.l.b16 %v9981
    %v10242 = vunpack.c.l.b16 %v9982
    %v10243 = vunpack.c.l.b16 %v9983
    %v10244 = vunpack.c.l.b16 %v9984
    %v10245 = vunpack.c.l.b16 %v9985
    %v10246 = vunpack.c.l.b16 %v9986
    %v10247 = vunpack.c.l.b16 %v9987
    %v10248 = vunpack.c.l.b16 %v9988
    %v10249 = vunpack.c.l.b16 %v9989
    %v10250 = vunpack.c.l.b16 %v9990
    %v10251 = vunpack.c.l.b16 %v9991
    %v10252 = vunpack.c.l.b16 %v9992
    %v10253 = vunpack.c.l.b16 %v9993
    %v10254 = vunpack.c.l.b16 %v9994
    %v10255 = vunpack.c.l.b16 %v9995
    %v10256 = vunpack.c.l.b16 %v9996
    %v10257 = vunpack.c.l.b16 %v9997
    %v10258 = vunpack.c.l.b16 %v9998
    %v10259 = vunpack.c.l.b16 %v9999
    %v10260 = vunpack.c.l.b16 %v10000
    %v10261 = vunpack.c.l.b16 %v10001
    %v10262 = vunpack.c.l.b16 %v10002
    %v10263 = vunpack.c.l.b16 %v10003
    %v10264 = vunpack.c.l.b16 %v10004
    %v10265 = vunpack.c.l.b16 %v10005
    %v10266 = vunpack.c.l.b16 %v10006
    %v10267 = vunpack.c.l.b16 %v10007
    %v10268 = vunpack.c.l.b16 %v10008
    %v10269 = vunpack.c.l.b16 %v10009
    %v10270 = vunpack.c.l.b16 %v10010
    %v10271 = vunpack.c.l.b16 %v10011
    %v10272 = vunpack.c.l.b16 %v10012
    %v10273 = vunpack.c.l.b16 %v10013
    %v10274 = vunpack.c.l.b16 %v10014
    %v10275 = vunpack.c.l.b16 %v10015
    %v10276 = vunpack.c.l.b16 %v10016
    %v10277 = vunpack.c.l.b16 %v10017
    %v10278 = vunpack.c.l.b16 %v10018
    %v10279 = vunpack.c.l.b16 %v10019
    %v10280 = vunpack.c.l.b16 %v10020
    %v10281 = vunpack.c.l.b16 %v10021
    %v10282 = vunpack.c.l.b16 %v10022
    %v10283 = vunpack.c.l.b16 %v10023
    %v10284 = vunpack.c.l.b16 %v10024
    %v10285 = vunpack.c.l.b16 %v10025
    %v10286 = vunpack.c.l.b16 %v10026
    %v10287 = vunpack.c.l.b16 %v10027
    %v10288 = vunpack.c.l.b16 %v10028
    %v10289 = vunpack.c.l.b16 %v10029
    %v10290 = vunpack.c.l.b16 %v10030
    %v10291 = vunpack.c.l.b16 %v10031
    %v10292 = vunpack.c.l.b16 %v10032
    %v10293 = vunpack.c.l.b16 %v10033
    %v10294 = vunpack.c.l.b16 %v10034
    %v10295 = vunpack.c.l.b16 %v10035
    %v10296 = vunpack.c.l.b16 %v10036
    %v10297 = vunpack.c.l.b16 %v10037
    %v10298 = vunpack.c.l.b16 %v10038
    %v10299 = vunpack.c.l.b16 %v10039
    %v10300 = vunpack.c.l.b16 %v10040
    %v10301 = vunpack.c.l.b16 %v10041
    %v10302 = vunpack.c.l.b16 %v10042
    %v10303 = vunpack.c.l.b16 %v10043
    %v10304 = vunpack.c.l.b16 %v10044
    %v10305 = vunpack.c.l.b16 %v10045
    %v10306 = vunpack.c.l.b16 %v10046
    %v10307 = vunpack.c.l.b16 %v10047
    %v10308 = vunpack.c.l.b16 %v10048
    %v10309 = vunpack.c.l.b16 %v10049
    %v10310 = vunpack.c.l.b16 %v10050
    %v10311 = vunpack.c.l.b16 %v10051
    %v10312 = vunpack.c.l.b16 %v10052
    %v10313 = vunpack.c.l.b16 %v10053
    %v10314 = vunpack.c.l.b16 %v10054
    %v10315 = vunpack.c.l.b16 %v10055
    %v10316 = vunpack.c.l.b16 %v10056
    %v10317 = vunpack.c.l.b16 %v10057
    %v10318 = vunpack.c.l.b16 %v10058
    %v10319 = vunpack.c.l.b16 %v10059
    %v10320 = vunpack.c.l.b16 %v10060
    %v10321 = vunpack.c.l.b16 %v10061
    %v10322 = vunpack.c.l.b16 %v10062
    %v10323 = vunpack.c.l.b16 %v10063
    %v10324 = vunpack.c.l.b16 %v10064
    %v10325 = vunpack.c.l.b16 %v10065
    %v10326 = vunpack.c.l.b16 %v10066
    %v10327 = vunpack.c.l.b16 %v10067
    %v10328 = vunpack.c.l.b16 %v10068
    %v10329 = vunpack.c.l.b16 %v10069
    %v10330 = vunpack.c.l.b16 %v10070
    %v10331 = vunpack.c.l.b16 %v10071
    %v10332 = vunpack.c.l.b16 %v10072
    %v10333 = vunpack.c.l.b16 %v10073
    %v10334 = vunpack.c.l.b16 %v10074
    %v10335 = vunpack.c.l.b16 %v10075
    %v10336 = vunpack.c.l.b16 %v10076
    %v10337 = vunpack.c.l.b16 %v10077
    %v10338 = vunpack.c.l.b16 %v10078
    %v10339 = vunpack.c.l.b16 %v10079
    %v10340 = vunpack.c.l.b16 %v10080
    %v10341 = vunpack.c.l.b16 %v10081
    %v10342 = vunpack.c.l.b16 %v10082
    %v10343 = vunpack.c.l.b16 %v10083
    %v10344 = vunpack.c.l.b16 %v10084
    %v10345 = vunpack.c.l.b16 %v10085
    %v10346 = vunpack.c.l.b16 %v10086
    %v10347 = vunpack.c.l.b16 %v10087
    %v10348 = vunpack.c.l.b16 %v10088
    %v10349 = vunpack.c.l.b16 %v10089
    %v10350 = vunpack.c.l.b16 %v10090
    %v10351 = vunpack.c.l.b16 %v10091
    %v10352 = vunpack.c.l.b16 %v10092
    %v10353 = vunpack.c.l.b16 %v10093
    %v10354 = vunpack.c.l.b16 %v10094
    %v10355 = vunpack.c.l.b16 %v10095
    %v10356 = vunpack.c.l.b16 %v10096
    %v10357 = vunpack.c.l.b16 %v10097
    %v10358 = vunpack.c.l.b16 %v10098
    %v10359 = vunpack.c.l.b16 %v10099
    %v10360 = vunpack.c.l.b16 %v10100
    %v10361 = vunpack.c.l.b16 %v10101
    %v10362 = vunpack.c.l.b16 %v10102
    %v10363 = vunpack.c.l.b16 %v10103
    %v10364 = vunpack.c.l.b16 %v10104
    %v10365 = vunpack.c.l.b16 %v10105
    %v10366 = vpack.c.b16 %v10239, %v10238
    %v10367 = vpack.c.b16 %v10241, %v10240
    %v10368 = vpack.c.b16 %v10243, %v10242
    %v10369 = vpack.c.b16 %v10245, %v10244
    %v10370 = vpack.c.b16 %v10247, %v10246
    %v10371 = vpack.c.b16 %v10249, %v10248
    %v10372 = vpack.c.b16 %v10251, %v10250
    %v10373 = vpack.c.b16 %v10253, %v10252
    %v10374 = vpack.c.b16 %v10255, %v10254
    %v10375 = vpack.c.b16 %v10257, %v10256
    %v10376 = vpack.c.b16 %v10259, %v10258
    %v10377 = vpack.c.b16 %v10261, %v10260
    %v10378 = vpack.c.b16 %v10263, %v10262
    %v10379 = vpack.c.b16 %v10265, %v10264
    %v10380 = vpack.c.b16 %v10267, %v10266
    %v10381 = vpack.c.b16 %v10269, %v10268
    %v10382 = vpack.c.b16 %v10271, %v10270
    %v10383 = vpack.c.b16 %v10273, %v10272
    %v10384 = vpack.c.b16 %v10275, %v10274
    %v10385 = vpack.c.b16 %v10277, %v10276
    %v10386 = vpack.c.b16 %v10279, %v10278
    %v10387 = vpack.c.b16 %v10281, %v10280
    %v10388 = vpack.c.b16 %v10283, %v10282
    %v10389 = vpack.c.b16 %v10285, %v10284
    %v10390 = vpack.c.b16 %v10287, %v10286
    %v10391 = vpack.c.b16 %v10289, %v10288
    %v10392 = vpack.c.b16 %v10291, %v10290
    %v10393 = vpack.c.b16 %v10293, %v10292
    %v10394 = vpack.c.b16 %v10295, %v10294
    %v10395 = vpack.c.b16 %v10297, %v10296
    %v10396 = vpack.c.b16 %v10299, %v10298
    %v10397 = vpack.c.b16 %v10301, %v10300
    %v10398 = vpack.c.b16 %v10303, %v10302
    %v10399 = vpack.c.b16 %v10305, %v10304
    %v10400 = vpack.c.b16 %v10307, %v10306
    %v10401 = vpack.c.b16 %v10309, %v10308
    %v10402 = vpack.c.b16 %v10311, %v10310
    %v10403 = vpack.c.b16 %v10313, %v10312
    %v10404 = vpack.c.b16 %v10315, %v10314
    %v10405 = vpack.c.b16 %v10317, %v10316
    %v10406 = vpack.c.b16 %v10319, %v10318
    %v10407 = vpack.c.b16 %v10321, %v10320
    %v10408 = vpack.c.b16 %v10323, %v10322
    %v10409 = vpack.c.b16 %v10325, %v10324
    %v10410 = vpack.c.b16 %v10327, %v10326
    %v10411 = vpack.c.b16 %v10329, %v10328
    %v10412 = vpack.c.b16 %v10331, %v10330
    %v10413 = vpack.c.b16 %v10333, %v10332
    %v10414 = vpack.c.b16 %v10335, %v10334
    %v10415 = vpack.c.b16 %v10337, %v10336
    %v10416 = vpack.c.b16 %v10339, %v10338
    %v10417 = vpack.c.b16 %v10341, %v10340
    %v10418 = vpack.c.b16 %v10343, %v10342
    %v10419 = vpack.c.b16 %v10345, %v10344
    %v10420 = vpack.c.b16 %v10347, %v10346
    %v10421 = vpack.c.b16 %v10349, %v10348
    %v10422 = vpack.c.b16 %v10351, %v10350
    %v10423 = vpack.c.b16 %v10353, %v10352
    %v10424 = vpack.c.b16 %v10355, %v10354
    %v10425 = vpack.c.b16 %v10357, %v10356
    %v10426 = vpack.c.b16 %v10359, %v10358
    %v10427 = vpack.c.b16 %v10361, %v10360
    %v10428 = vpack.c.b16 %v10363, %v10362
    %v10429 = vpack.c.b16 %v10365, %v10364
    %10494 = vmatpush.bf16.msra.mxu0 %v10373
    %10495 = vmatpush.bf16.msra.mxu0 %v10372
    %10496 = vmatpush.bf16.msra.mxu0 %v10371
    %10497 = vmatpush.bf16.msra.mxu0 %v10370
    %10498 = vmatpush.bf16.msra.mxu0 %v10369
    %10499 = vmatpush.bf16.msra.mxu0 %v10368
    %10500 = vmatpush.bf16.msra.mxu0 %v10367
    %10501 = vmatpush.bf16.msra.mxu0 %v10366
    %10502 = vmatmul.bf16.gmra.mxu0 %v9914
    %v10503 = vpop.f32.mrf.mxu0
    %v10504 = vadd.f32 %v10108, %v10503
    %v10505 = vpop.f32.mrf.mxu0
    %v10506 = vadd.f32 %v10108, %v10505
    %10507 = vmatmul.bf16.gmra.mxu0 %v9922
    %v10508 = vpop.f32.mrf.mxu0
    %v10509 = vadd.f32 %v10108, %v10508
    %v10510 = vpop.f32.mrf.mxu0
    %v10511 = vadd.f32 %v10108, %v10510
    %10512 = vmatmul.bf16.gmra.mxu0 %v9930
    %v10513 = vpop.f32.mrf.mxu0
    %v10514 = vadd.f32 %v10108, %v10513
    %v10515 = vpop.f32.mrf.mxu0
    %v10516 = vadd.f32 %v10108, %v10515
    %10517 = vmatmul.bf16.gmra.mxu0 %v9938
    %v10518 = vpop.f32.mrf.mxu0
    %v10519 = vadd.f32 %v10108, %v10518
    %v10520 = vpop.f32.mrf.mxu0
    %v10521 = vadd.f32 %v10108, %v10520
    %10522 = vmatmul.bf16.gmra.mxu0 %v9946
    %v10523 = vpop.f32.mrf.mxu0
    %v10524 = vadd.f32 %v10108, %v10523
    %v10525 = vpop.f32.mrf.mxu0
    %v10526 = vadd.f32 %v10108, %v10525
    %10527 = vmatmul.bf16.gmra.mxu0 %v9954
    %v10528 = vpop.f32.mrf.mxu0
    %v10529 = vadd.f32 %v10108, %v10528
    %v10530 = vpop.f32.mrf.mxu0
    %v10531 = vadd.f32 %v10108, %v10530
    %10532 = vmatmul.bf16.gmra.mxu0 %v9962
    %v10533 = vpop.f32.mrf.mxu0
    %v10534 = vadd.f32 %v10108, %v10533
    %v10535 = vpop.f32.mrf.mxu0
    %v10536 = vadd.f32 %v10108, %v10535
    %10537 = vmatmul.bf16.gmra.mxu0 %v9970
    %v10538 = vpop.f32.mrf.mxu0
    %v10539 = vadd.f32 %v10108, %v10538
    %v10540 = vpop.f32.mrf.mxu0
    %v10541 = vadd.f32 %v10108, %v10540
    %10542 = vdwg.mxu0
    %10543 = vmatpush.bf16.msra.mxu0 %v10381
    %10544 = vmatpush.bf16.msra.mxu0 %v10380
    %10545 = vmatpush.bf16.msra.mxu0 %v10379
    %10546 = vmatpush.bf16.msra.mxu0 %v10378
    %10547 = vmatpush.bf16.msra.mxu0 %v10377
    %10548 = vmatpush.bf16.msra.mxu0 %v10376
    %10549 = vmatpush.bf16.msra.mxu0 %v10375
    %10550 = vmatpush.bf16.msra.mxu0 %v10374
    %10551 = vmatmul.bf16.gmra.mxu0 %v9915
    %v10552 = vpop.f32.mrf.mxu0
    %v10553 = vadd.f32 %v10504, %v10552
    %v10554 = vpop.f32.mrf.mxu0
    %v10555 = vadd.f32 %v10506, %v10554
    %10556 = vmatmul.bf16.gmra.mxu0 %v9923
    %v10557 = vpop.f32.mrf.mxu0
    %v10558 = vadd.f32 %v10509, %v10557
    %v10559 = vpop.f32.mrf.mxu0
    %v10560 = vadd.f32 %v10511, %v10559
    %10561 = vmatmul.bf16.gmra.mxu0 %v9931
    %v10562 = vpop.f32.mrf.mxu0
    %v10563 = vadd.f32 %v10514, %v10562
    %v10564 = vpop.f32.mrf.mxu0
    %v10565 = vadd.f32 %v10516, %v10564
    %10566 = vmatmul.bf16.gmra.mxu0 %v9939
    %v10567 = vpop.f32.mrf.mxu0
    %v10568 = vadd.f32 %v10519, %v10567
    %v10569 = vpop.f32.mrf.mxu0
    %v10570 = vadd.f32 %v10521, %v10569
    %10571 = vmatmul.bf16.gmra.mxu0 %v9947
    %v10572 = vpop.f32.mrf.mxu0
    %v10573 = vadd.f32 %v10524, %v10572
    %v10574 = vpop.f32.mrf.mxu0
    %v10575 = vadd.f32 %v10526, %v10574
    %10576 = vmatmul.bf16.gmra.mxu0 %v9955
    %v10577 = vpop.f32.mrf.mxu0
    %v10578 = vadd.f32 %v10529, %v10577
    %v10579 = vpop.f32.mrf.mxu0
    %v10580 = vadd.f32 %v10531, %v10579
    %10581 = vmatmul.bf16.gmra.mxu0 %v9963
    %v10582 = vpop.f32.mrf.mxu0
    %v10583 = vadd.f32 %v10534, %v10582
    %v10584 = vpop.f32.mrf.mxu0
    %v10585 = vadd.f32 %v10536, %v10584
    %10586 = vmatmul.bf16.gmra.mxu0 %v9971
    %v10587 = vpop.f32.mrf.mxu0
    %v10588 = vadd.f32 %v10539, %v10587
    %v10589 = vpop.f32.mrf.mxu0
    %v10590 = vadd.f32 %v10541, %v10589
    %10591 = vdwg.mxu0
    %10592 = vmatpush.bf16.msra.mxu0 %v10389
    %10593 = vmatpush.bf16.msra.mxu0 %v10388
    %10594 = vmatpush.bf16.msra.mxu0 %v10387
    %10595 = vmatpush.bf16.msra.mxu0 %v10386
    %10596 = vmatpush.bf16.msra.mxu0 %v10385
    %10597 = vmatpush.bf16.msra.mxu0 %v10384
    %10598 = vmatpush.bf16.msra.mxu0 %v10383
    %10599 = vmatpush.bf16.msra.mxu0 %v10382
    %10600 = vmatmul.bf16.gmra.mxu0 %v9916
    %v10601 = vpop.f32.mrf.mxu0
    %v10602 = vadd.f32 %v10553, %v10601
    %v10603 = vpop.f32.mrf.mxu0
    %v10604 = vadd.f32 %v10555, %v10603
    %10605 = vmatmul.bf16.gmra.mxu0 %v9924
    %v10606 = vpop.f32.mrf.mxu0
    %v10607 = vadd.f32 %v10558, %v10606
    %v10608 = vpop.f32.mrf.mxu0
    %v10609 = vadd.f32 %v10560, %v10608
    %10610 = vmatmul.bf16.gmra.mxu0 %v9932
    %v10611 = vpop.f32.mrf.mxu0
    %v10612 = vadd.f32 %v10563, %v10611
    %v10613 = vpop.f32.mrf.mxu0
    %v10614 = vadd.f32 %v10565, %v10613
    %10615 = vmatmul.bf16.gmra.mxu0 %v9940
    %v10616 = vpop.f32.mrf.mxu0
    %v10617 = vadd.f32 %v10568, %v10616
    %v10618 = vpop.f32.mrf.mxu0
    %v10619 = vadd.f32 %v10570, %v10618
    %10620 = vmatmul.bf16.gmra.mxu0 %v9948
    %v10621 = vpop.f32.mrf.mxu0
    %v10622 = vadd.f32 %v10573, %v10621
    %v10623 = vpop.f32.mrf.mxu0
    %v10624 = vadd.f32 %v10575, %v10623
    %10625 = vmatmul.bf16.gmra.mxu0 %v9956
    %v10626 = vpop.f32.mrf.mxu0
    %v10627 = vadd.f32 %v10578, %v10626
    %v10628 = vpop.f32.mrf.mxu0
    %v10629 = vadd.f32 %v10580, %v10628
    %10630 = vmatmul.bf16.gmra.mxu0 %v9964
    %v10631 = vpop.f32.mrf.mxu0
    %v10632 = vadd.f32 %v10583, %v10631
    %v10633 = vpop.f32.mrf.mxu0
    %v10634 = vadd.f32 %v10585, %v10633
    %10635 = vmatmul.bf16.gmra.mxu0 %v9972
    %v10636 = vpop.f32.mrf.mxu0
    %v10637 = vadd.f32 %v10588, %v10636
    %v10638 = vpop.f32.mrf.mxu0
    %v10639 = vadd.f32 %v10590, %v10638
    %10640 = vdwg.mxu0
    %10641 = vmatpush.bf16.msra.mxu0 %v10397
    %10642 = vmatpush.bf16.msra.mxu0 %v10396
    %10643 = vmatpush.bf16.msra.mxu0 %v10395
    %10644 = vmatpush.bf16.msra.mxu0 %v10394
    %10645 = vmatpush.bf16.msra.mxu0 %v10393
    %10646 = vmatpush.bf16.msra.mxu0 %v10392
    %10647 = vmatpush.bf16.msra.mxu0 %v10391
    %10648 = vmatpush.bf16.msra.mxu0 %v10390
    %10649 = vmatmul.bf16.gmra.mxu0 %v9917
    %v10650 = vpop.f32.mrf.mxu0
    %v10651 = vadd.f32 %v10602, %v10650
    %v10652 = vpop.f32.mrf.mxu0
    %v10653 = vadd.f32 %v10604, %v10652
    %10654 = vmatmul.bf16.gmra.mxu0 %v9925
    %v10655 = vpop.f32.mrf.mxu0
    %v10656 = vadd.f32 %v10607, %v10655
    %v10657 = vpop.f32.mrf.mxu0
    %v10658 = vadd.f32 %v10609, %v10657
    %10659 = vmatmul.bf16.gmra.mxu0 %v9933
    %v10660 = vpop.f32.mrf.mxu0
    %v10661 = vadd.f32 %v10612, %v10660
    %v10662 = vpop.f32.mrf.mxu0
    %v10663 = vadd.f32 %v10614, %v10662
    %10664 = vmatmul.bf16.gmra.mxu0 %v9941
    %v10665 = vpop.f32.mrf.mxu0
    %v10666 = vadd.f32 %v10617, %v10665
    %v10667 = vpop.f32.mrf.mxu0
    %v10668 = vadd.f32 %v10619, %v10667
    %10669 = vmatmul.bf16.gmra.mxu0 %v9949
    %v10670 = vpop.f32.mrf.mxu0
    %v10671 = vadd.f32 %v10622, %v10670
    %v10672 = vpop.f32.mrf.mxu0
    %v10673 = vadd.f32 %v10624, %v10672
    %10674 = vmatmul.bf16.gmra.mxu0 %v9957
    %v10675 = vpop.f32.mrf.mxu0
    %v10676 = vadd.f32 %v10627, %v10675
    %v10677 = vpop.f32.mrf.mxu0
    %v10678 = vadd.f32 %v10629, %v10677
    %10679 = vmatmul.bf16.gmra.mxu0 %v9965
    %v10680 = vpop.f32.mrf.mxu0
    %v10681 = vadd.f32 %v10632, %v10680
    %v10682 = vpop.f32.mrf.mxu0
    %v10683 = vadd.f32 %v10634, %v10682
    %10684 = vmatmul.bf16.gmra.mxu0 %v9973
    %v10685 = vpop.f32.mrf.mxu0
    %v10686 = vadd.f32 %v10637, %v10685
    %v10687 = vpop.f32.mrf.mxu0
    %v10688 = vadd.f32 %v10639, %v10687
    %10689 = vdwg.mxu0
    %10690 = vmatpush.bf16.msra.mxu0 %v10405
    %10691 = vmatpush.bf16.msra.mxu0 %v10404
    %10692 = vmatpush.bf16.msra.mxu0 %v10403
    %10693 = vmatpush.bf16.msra.mxu0 %v10402
    %10694 = vmatpush.bf16.msra.mxu0 %v10401
    %10695 = vmatpush.bf16.msra.mxu0 %v10400
    %10696 = vmatpush.bf16.msra.mxu0 %v10399
    %10697 = vmatpush.bf16.msra.mxu0 %v10398
    %10698 = vmatmul.bf16.gmra.mxu0 %v9918
    %v10699 = vpop.f32.mrf.mxu0
    %v10700 = vadd.f32 %v10651, %v10699
    %v10701 = vpop.f32.mrf.mxu0
    %v10702 = vadd.f32 %v10653, %v10701
    %10703 = vmatmul.bf16.gmra.mxu0 %v9926
    %v10704 = vpop.f32.mrf.mxu0
    %v10705 = vadd.f32 %v10656, %v10704
    %v10706 = vpop.f32.mrf.mxu0
    %v10707 = vadd.f32 %v10658, %v10706
    %10708 = vmatmul.bf16.gmra.mxu0 %v9934
    %v10709 = vpop.f32.mrf.mxu0
    %v10710 = vadd.f32 %v10661, %v10709
    %v10711 = vpop.f32.mrf.mxu0
    %v10712 = vadd.f32 %v10663, %v10711
    %10713 = vmatmul.bf16.gmra.mxu0 %v9942
    %v10714 = vpop.f32.mrf.mxu0
    %v10715 = vadd.f32 %v10666, %v10714
    %v10716 = vpop.f32.mrf.mxu0
    %v10717 = vadd.f32 %v10668, %v10716
    %10718 = vmatmul.bf16.gmra.mxu0 %v9950
    %v10719 = vpop.f32.mrf.mxu0
    %v10720 = vadd.f32 %v10671, %v10719
    %v10721 = vpop.f32.mrf.mxu0
    %v10722 = vadd.f32 %v10673, %v10721
    %10723 = vmatmul.bf16.gmra.mxu0 %v9958
    %v10724 = vpop.f32.mrf.mxu0
    %v10725 = vadd.f32 %v10676, %v10724
    %v10726 = vpop.f32.mrf.mxu0
    %v10727 = vadd.f32 %v10678, %v10726
    %10728 = vmatmul.bf16.gmra.mxu0 %v9966
    %v10729 = vpop.f32.mrf.mxu0
    %v10730 = vadd.f32 %v10681, %v10729
    %v10731 = vpop.f32.mrf.mxu0
    %v10732 = vadd.f32 %v10683, %v10731
    %10733 = vmatmul.bf16.gmra.mxu0 %v9974
    %v10734 = vpop.f32.mrf.mxu0
    %v10735 = vadd.f32 %v10686, %v10734
    %v10736 = vpop.f32.mrf.mxu0
    %v10737 = vadd.f32 %v10688, %v10736
    %10738 = vdwg.mxu0
    %10739 = vmatpush.bf16.msra.mxu0 %v10413
    %10740 = vmatpush.bf16.msra.mxu0 %v10412
    %10741 = vmatpush.bf16.msra.mxu0 %v10411
    %10742 = vmatpush.bf16.msra.mxu0 %v10410
    %10743 = vmatpush.bf16.msra.mxu0 %v10409
    %10744 = vmatpush.bf16.msra.mxu0 %v10408
    %10745 = vmatpush.bf16.msra.mxu0 %v10407
    %10746 = vmatpush.bf16.msra.mxu0 %v10406
    %10747 = vmatmul.bf16.gmra.mxu0 %v9919
    %v10748 = vpop.f32.mrf.mxu0
    %v10749 = vadd.f32 %v10700, %v10748
    %v10750 = vpop.f32.mrf.mxu0
    %v10751 = vadd.f32 %v10702, %v10750
    %10752 = vmatmul.bf16.gmra.mxu0 %v9927
    %v10753 = vpop.f32.mrf.mxu0
    %v10754 = vadd.f32 %v10705, %v10753
    %v10755 = vpop.f32.mrf.mxu0
    %v10756 = vadd.f32 %v10707, %v10755
    %10757 = vmatmul.bf16.gmra.mxu0 %v9935
    %v10758 = vpop.f32.mrf.mxu0
    %v10759 = vadd.f32 %v10710, %v10758
    %v10760 = vpop.f32.mrf.mxu0
    %v10761 = vadd.f32 %v10712, %v10760
    %10762 = vmatmul.bf16.gmra.mxu0 %v9943
    %v10763 = vpop.f32.mrf.mxu0
    %v10764 = vadd.f32 %v10715, %v10763
    %v10765 = vpop.f32.mrf.mxu0
    %v10766 = vadd.f32 %v10717, %v10765
    %10767 = vmatmul.bf16.gmra.mxu0 %v9951
    %v10768 = vpop.f32.mrf.mxu0
    %v10769 = vadd.f32 %v10720, %v10768
    %v10770 = vpop.f32.mrf.mxu0
    %v10771 = vadd.f32 %v10722, %v10770
    %10772 = vmatmul.bf16.gmra.mxu0 %v9959
    %v10773 = vpop.f32.mrf.mxu0
    %v10774 = vadd.f32 %v10725, %v10773
    %v10775 = vpop.f32.mrf.mxu0
    %v10776 = vadd.f32 %v10727, %v10775
    %10777 = vmatmul.bf16.gmra.mxu0 %v9967
    %v10778 = vpop.f32.mrf.mxu0
    %v10779 = vadd.f32 %v10730, %v10778
    %v10780 = vpop.f32.mrf.mxu0
    %v10781 = vadd.f32 %v10732, %v10780
    %10782 = vmatmul.bf16.gmra.mxu0 %v9975
    %v10783 = vpop.f32.mrf.mxu0
    %v10784 = vadd.f32 %v10735, %v10783
    %v10785 = vpop.f32.mrf.mxu0
    %v10786 = vadd.f32 %v10737, %v10785
    %10787 = vdwg.mxu0
    %10788 = vmatpush.bf16.msra.mxu0 %v10421
    %10789 = vmatpush.bf16.msra.mxu0 %v10420
    %10790 = vmatpush.bf16.msra.mxu0 %v10419
    %10791 = vmatpush.bf16.msra.mxu0 %v10418
    %10792 = vmatpush.bf16.msra.mxu0 %v10417
    %10793 = vmatpush.bf16.msra.mxu0 %v10416
    %10794 = vmatpush.bf16.msra.mxu0 %v10415
    %10795 = vmatpush.bf16.msra.mxu0 %v10414
    %10796 = vmatmul.bf16.gmra.mxu0 %v9920
    %v10797 = vpop.f32.mrf.mxu0
    %v10798 = vadd.f32 %v10749, %v10797
    %v10799 = vpop.f32.mrf.mxu0
    %v10800 = vadd.f32 %v10751, %v10799
    %10801 = vmatmul.bf16.gmra.mxu0 %v9928
    %v10802 = vpop.f32.mrf.mxu0
    %v10803 = vadd.f32 %v10754, %v10802
    %v10804 = vpop.f32.mrf.mxu0
    %v10805 = vadd.f32 %v10756, %v10804
    %10806 = vmatmul.bf16.gmra.mxu0 %v9936
    %v10807 = vpop.f32.mrf.mxu0
    %v10808 = vadd.f32 %v10759, %v10807
    %v10809 = vpop.f32.mrf.mxu0
    %v10810 = vadd.f32 %v10761, %v10809
    %10811 = vmatmul.bf16.gmra.mxu0 %v9944
    %v10812 = vpop.f32.mrf.mxu0
    %v10813 = vadd.f32 %v10764, %v10812
    %v10814 = vpop.f32.mrf.mxu0
    %v10815 = vadd.f32 %v10766, %v10814
    %10816 = vmatmul.bf16.gmra.mxu0 %v9952
    %v10817 = vpop.f32.mrf.mxu0
    %v10818 = vadd.f32 %v10769, %v10817
    %v10819 = vpop.f32.mrf.mxu0
    %v10820 = vadd.f32 %v10771, %v10819
    %10821 = vmatmul.bf16.gmra.mxu0 %v9960
    %v10822 = vpop.f32.mrf.mxu0
    %v10823 = vadd.f32 %v10774, %v10822
    %v10824 = vpop.f32.mrf.mxu0
    %v10825 = vadd.f32 %v10776, %v10824
    %10826 = vmatmul.bf16.gmra.mxu0 %v9968
    %v10827 = vpop.f32.mrf.mxu0
    %v10828 = vadd.f32 %v10779, %v10827
    %v10829 = vpop.f32.mrf.mxu0
    %v10830 = vadd.f32 %v10781, %v10829
    %10831 = vmatmul.bf16.gmra.mxu0 %v9976
    %v10832 = vpop.f32.mrf.mxu0
    %v10833 = vadd.f32 %v10784, %v10832
    %v10834 = vpop.f32.mrf.mxu0
    %v10835 = vadd.f32 %v10786, %v10834
    %10836 = vdwg.mxu0
    %10837 = vmatpush.bf16.msra.mxu0 %v10429
    %10838 = vmatpush.bf16.msra.mxu0 %v10428
    %10839 = vmatpush.bf16.msra.mxu0 %v10427
    %10840 = vmatpush.bf16.msra.mxu0 %v10426
    %10841 = vmatpush.bf16.msra.mxu0 %v10425
    %10842 = vmatpush.bf16.msra.mxu0 %v10424
    %10843 = vmatpush.bf16.msra.mxu0 %v10423
    %10844 = vmatpush.bf16.msra.mxu0 %v10422
    %10845 = vmatmul.bf16.gmra.mxu0 %v9921
    %v10846 = vpop.f32.mrf.mxu0
    %v10847 = vadd.f32 %v10798, %v10846
    %v10848 = vpop.f32.mrf.mxu0
    %v10849 = vadd.f32 %v10800, %v10848
    %10850 = vmatmul.bf16.gmra.mxu0 %v9929
    %v10851 = vpop.f32.mrf.mxu0
    %v10852 = vadd.f32 %v10803, %v10851
    %v10853 = vpop.f32.mrf.mxu0
    %v10854 = vadd.f32 %v10805, %v10853
    %10855 = vmatmul.bf16.gmra.mxu0 %v9937
    %v10856 = vpop.f32.mrf.mxu0
    %v10857 = vadd.f32 %v10808, %v10856
    %v10858 = vpop.f32.mrf.mxu0
    %v10859 = vadd.f32 %v10810, %v10858
    %10860 = vmatmul.bf16.gmra.mxu0 %v9945
    %v10861 = vpop.f32.mrf.mxu0
    %v10862 = vadd.f32 %v10813, %v10861
    %v10863 = vpop.f32.mrf.mxu0
    %v10864 = vadd.f32 %v10815, %v10863
    %10865 = vmatmul.bf16.gmra.mxu0 %v9953
    %v10866 = vpop.f32.mrf.mxu0
    %v10867 = vadd.f32 %v10818, %v10866
    %v10868 = vpop.f32.mrf.mxu0
    %v10869 = vadd.f32 %v10820, %v10868
    %10870 = vmatmul.bf16.gmra.mxu0 %v9961
    %v10871 = vpop.f32.mrf.mxu0
    %v10872 = vadd.f32 %v10823, %v10871
    %v10873 = vpop.f32.mrf.mxu0
    %v10874 = vadd.f32 %v10825, %v10873
    %10875 = vmatmul.bf16.gmra.mxu0 %v9969
    %v10876 = vpop.f32.mrf.mxu0
    %v10877 = vadd.f32 %v10828, %v10876
    %v10878 = vpop.f32.mrf.mxu0
    %v10879 = vadd.f32 %v10830, %v10878
    %10880 = vmatmul.bf16.gmra.mxu0 %v9977
    %v10881 = vpop.f32.mrf.mxu0
    %v10882 = vadd.f32 %v10833, %v10881
    %v10883 = vpop.f32.mrf.mxu0
    %v10884 = vadd.f32 %v10835, %v10883
    %10885 = vdwg.mxu0
    %10886 = vst [vmem:[%s7] sm:$0xff] %v10847
    %10887 = vst [vmem:[%s7 + $0x8] sm:$0xff] %v10849
    %10888 = vst [vmem:[%s7 + $0x10] sm:$0xff] %v10852
    %10889 = vst [vmem:[%s7 + $0x18] sm:$0xff] %v10854
    %10890 = vst [vmem:[%s7 + $0x20] sm:$0xff] %v10857
    %10891 = vst [vmem:[%s7 + $0x28] sm:$0xff] %v10859
    %10892 = vst [vmem:[%s7 + $0x30] sm:$0xff] %v10862
    %10893 = vst [vmem:[%s7 + $0x38] sm:$0xff] %v10864
    %10894 = vst [vmem:[%s7 + $0x40] sm:$0xff] %v10867
    %10895 = vst [vmem:[%s7 + $0x48] sm:$0xff] %v10869
    %10896 = vst [vmem:[%s7 + $0x50] sm:$0xff] %v10872
    %10897 = vst [vmem:[%s7 + $0x58] sm:$0xff] %v10874
    %10898 = vst [vmem:[%s7 + $0x60] sm:$0xff] %v10877
    %10899 = vst [vmem:[%s7 + $0x68] sm:$0xff] %v10879
    %10900 = vst [vmem:[%s7 + $0x70] sm:$0xff] %v10882
    %10901 = vst [vmem:[%s7 + $0x78] sm:$0xff] %v10884
    // Predicated region
    $region38: #{classifier_forward.1} parent=1 // pred_check
      _
    $region39: #{classifier_forward.1} parent=1 // pred_check_branch
      %10903 = sbr.rel (0) target = $region41
    $region40: #{classifier_forward.1} parent=1 // pred_region
      _
    $region41: #{classifier_forward.1} parent=1 // pred_fallthru
      _
    // Predicated region
    $region42: #{classifier_forward.1} parent=1 // pred_check
      _
    $region43: #{classifier_forward.1} parent=1 // pred_check_branch
      %10905 = sbr.rel (0) target = $region45
    $region44: #{classifier_forward.1} parent=1 // pred_region
      _
    $region45: #{classifier_forward.1} parent=1 // pred_fallthru
      _
    %10906 = vsyncpa [#allocation3], 1
    %10907 = vsyncpa [#allocation5], 1

</llo_original>
